<compile_context>
chip_gen: v7x
topology: tpu7x:2x2x1
jax: 0.10.0
libtpu: 0.0.40
codegen_flags: <defaults>
</compile_context>

<pallas_src>
import jax
import jax.numpy as jnp
from jax.experimental import pallas as pl
from jax.experimental.pallas import tpu as pltpu

# ----------------------------- problem sizes --------------------------------
B = 2                     # batch
L_SEQ = 16                # sequence length
E = 3072                  # embedding dim (== conv kernel width in the module)
F = 100                   # num_filters
C = 4                     # num_classes (small, synthetic)
CP = 128                  # classes padded to lane width for the fc/output
KS = (3, 4, 5)            # filter sizes
NTAP = sum(KS)            # 12 real conv taps
KMAX = max(KS)
L_PAD = L_SEQ + KMAX - 1  # 20: every shift 0..4 has a full T-row window
T = L_PAD - KMAX + 1      # 16 conv positions computed per group (masked later)
TB = T * B                # 32 interleaved (position, batch) rows

TAPS_PER_STEP = 4
assert NTAP % TAPS_PER_STEP == 0
NSTEPS = NTAP // TAPS_PER_STEP   # 3 — one epilogue (group end) per step


# ------------------------------- kernel -------------------------------------
def textcnn_kernel(shift_ref, first_ref, last_ref, vlen_ref,
                   x_ref, wconv_ref, bconv_ref, wfc_ref, bfc_ref,
                   out_ref, acc_ref):
    step = pl.program_id(0)

    # initialize the resident output with the fc bias once
    @pl.when(step == 0)
    def _():
        out_ref[...] = jnp.broadcast_to(bfc_ref[...], out_ref.shape)

    # statically unrolled loop over the 4 taps of this step
    for j in range(TAPS_PER_STEP):
        t = step * TAPS_PER_STEP + j

        # zero the per-group conv accumulator at the first tap of each group
        @pl.when(first_ref[t] == 1)
        def _():
            acc_ref[...] = jnp.zeros_like(acc_ref)

        # aligned leading-axis index into the pre-shifted resident x views
        xs = x_ref[shift_ref[t]]                     # (T*B, E) bf16
        wt = wconv_ref[j]                            # (F, E)   bf16 (lane-dense)
        # contract E on both operands (trans_b matmul), f32 accumulation
        acc_ref[...] += jax.lax.dot_general(
            xs, wt, dimension_numbers=(((1,), (1,)), ((), ())),
            preferred_element_type=jnp.float32)      # (T*B, F)

        # last tap of the group: bias + relu + validity mask + max-pool + fc slice
        @pl.when(last_ref[t] == 1)
        def _():
            vlen = vlen_ref[t]                                     # L - k + 1
            conv = jnp.maximum(acc_ref[...] + bconv_ref[...], 0.0)  # (T*B, F)
            rows = jax.lax.broadcasted_iota(jnp.int32, (TB, F), 0)
            # positions >= vlen touch zero padding -> mask to 0
            # (safe only because ReLU has already been applied: conv >= 0)
            conv = jnp.where(rows < vlen * B, conv, 0.0)
            # per-batch global max-pool over positions (rows with row % B == b)
            pooled = jnp.concatenate(
                [jnp.max(jnp.where(rows % B == b, conv, 0.0),
                         axis=0, keepdims=True) for b in range(B)],
                axis=0)                                            # (B, F)
            out_ref[...] += jnp.dot(pooled.astype(jnp.bfloat16), wfc_ref[...],
                                    preferred_element_type=jnp.float32)

    # TODO(synk): nn.Dropout(0.5) is identity at inference; training-mode
    # Bernoulli masking is not implemented.


@jax.jit
def textcnn_forward(tap_shift, tap_first, tap_last, tap_vlen,
                    x_sh, w_conv, b_conv, w_fc, b_fc):
    return pl.pallas_call(
        textcnn_kernel,
        out_shape=jax.ShapeDtypeStruct((B, CP), jnp.float32),
        grid_spec=pltpu.PrefetchScalarGridSpec(
            num_scalar_prefetch=4,
            grid=(NSTEPS,),
            in_specs=[
                # x: KMAX pre-shifted views, resident across all steps
                pl.BlockSpec((KMAX, TB, E), lambda s, *_: (0, 0, 0)),
                # 4 lane-dense (F, E) bf16 conv-weight taps streamed per step
                pl.BlockSpec((TAPS_PER_STEP, F, E), lambda s, *_: (s, 0, 0)),
                # per-group conv bias (group == step: one group ends per step)
                pl.BlockSpec((None, 1, F), lambda s, *_: (s, 0, 0)),
                # per-group fc weight slice (classes padded to lane width)
                pl.BlockSpec((None, F, CP), lambda s, *_: (s, 0, 0)),
                # fc bias
                pl.BlockSpec((1, CP), lambda s, *_: (0, 0)),
            ],
            out_specs=pl.BlockSpec((B, CP), lambda s, *_: (0, 0)),
            scratch_shapes=[pltpu.VMEM((TB, F), jnp.float32)],
        ),
        compiler_params=pltpu.CompilerParams(
            dimension_semantics=("arbitrary",),
        ),
    )(tap_shift, tap_first, tap_last, tap_vlen,
      x_sh, w_conv, b_conv, w_fc, b_fc)


# ------------------------- reference (plain JAX) -----------------------------
def ref_forward(x, wconv_list, bconv_list, w_fc, b_fc):
    feats = []
    for s, k in enumerate(KS):
        W = wconv_list[s].reshape(F, k * E)                 # (F, k*E)
        b = bconv_list[s]                                   # (F,)
        Tk = L_SEQ - k + 1
        wins = jnp.stack(
            [x[:, t:t + k, :].reshape(B, k * E) for t in range(Tk)], axis=1)
        conv = jnp.einsum("btd,fd->btf", wins, W,
                          precision=jax.lax.Precision.HIGHEST) + b
        feats.append(jnp.max(jax.nn.relu(conv), axis=1))    # (B, F)
    feat = jnp.concatenate(feats, axis=1)                   # (B, 3F)
    return jnp.dot(feat, w_fc.T, precision=jax.lax.Precision.HIGHEST) + b_fc


# --------------------------------- main --------------------------------------
if __name__ == "__main__":
    key = jax.random.PRNGKey(0)
    kx, *kw = jax.random.split(key, 9)

    # input: (B, L, E) == PyTorch x before unsqueeze(1)
    x = jax.random.normal(kx, (B, L_SEQ, E), dtype=jnp.float32)

    # deterministic synthetic parameters (shapes match nn.Conv2d / nn.Linear)
    wconv_list = [0.02 * jax.random.normal(kw[i], (F, k, E), dtype=jnp.float32)
                  for i, k in enumerate(KS)]
    bconv_list = [0.02 * jax.random.normal(kw[3 + i], (F,), dtype=jnp.float32)
                  for i in range(len(KS))]
    w_fc = 0.02 * jax.random.normal(kw[6], (C, F * len(KS)), dtype=jnp.float32)
    b_fc = 0.02 * jax.random.normal(kw[7], (C,), dtype=jnp.float32)

    # ----- pack parameters for the kernel ------------------------------------
    # 12 real taps packed contiguously, bf16, lane-dense (F, E) per tap
    tap_meta, w_taps = [], []
    for g, k in enumerate(KS):
        for i in range(k):
            w_taps.append(wconv_list[g][:, i, :])           # (F, E)
            tap_meta.append((i, int(i == 0), int(i == k - 1), L_SEQ - k + 1))
    w_conv_p = jnp.stack(w_taps, axis=0).astype(jnp.bfloat16)    # (12, F, E)
    tap_shift = jnp.array([m[0] for m in tap_meta], jnp.int32)
    tap_first = jnp.array([m[1] for m in tap_meta], jnp.int32)
    tap_last = jnp.array([m[2] for m in tap_meta], jnp.int32)
    tap_vlen = jnp.array([m[3] for m in tap_meta], jnp.int32)

    b_conv_p = jnp.stack([b[None, :] for b in bconv_list], axis=0)  # (3,1,F) f32
    w_fc_p = jnp.zeros((len(KS), F, CP), jnp.float32)
    for g in range(len(KS)):
        w_fc_p = w_fc_p.at[g, :, :C].set(w_fc[:, g * F:(g + 1) * F].T)
    w_fc_p = w_fc_p.astype(jnp.bfloat16)                            # (3,F,CP)
    b_fc_p = jnp.zeros((1, CP), jnp.float32).at[0, :C].set(b_fc)

    # x: zero-pad the sequence, build KMAX aligned shifted views with
    # (position, batch)-interleaved rows ((l, b) -> row l*B + b), bf16
    x_pad = jnp.zeros((B, L_PAD, E), jnp.float32).at[:, :L_SEQ, :].set(x)
    x_sh = jnp.stack(
        [jnp.transpose(x_pad[:, s:s + T, :], (1, 0, 2)).reshape(TB, E)
         for s in range(KMAX)], axis=0).astype(jnp.bfloat16)        # (5, 32, E)

    out = textcnn_forward(tap_shift, tap_first, tap_last, tap_vlen,
                          x_sh, w_conv_p, b_conv_p, w_fc_p, b_fc_p)
    out = jax.block_until_ready(out)
    logits = out[:, :C]

    # reference computed on the same bf16-rounded x / conv / fc weights (the
    # kernel feeds bf16 operands to the MXU and accumulates in f32)
    x_r = x.astype(jnp.bfloat16).astype(jnp.float32)
    wconv_r = [w.astype(jnp.bfloat16).astype(jnp.float32) for w in wconv_list]
    w_fc_r = w_fc.astype(jnp.bfloat16).astype(jnp.float32)
    ref = ref_forward(x_r, wconv_r, bconv_list, w_fc_r, b_fc)

    assert logits.shape == (B, C)
    max_diff = float(jnp.max(jnp.abs(logits - ref)))
    assert bool(jnp.allclose(logits, ref, rtol=2e-2, atol=2e-2)), (
        f"mismatch: max abs diff {max_diff}")

    print("KERNEL_OK")
</pallas_src>

<mosaic_0001>
module attributes {stable_mosaic.version = 11 : i64} {
  func.func @textcnn_kernel(%arg0: i32, %arg1: memref<12xi32, #tpu.memory_space<smem>>, %arg2: memref<12xi32, #tpu.memory_space<smem>>, %arg3: memref<12xi32, #tpu.memory_space<smem>>, %arg4: memref<12xi32, #tpu.memory_space<smem>>, %arg5: memref<5x32x3072xbf16, #tpu.memory_space<vmem>>, %arg6: memref<4x100x3072xbf16, #tpu.memory_space<vmem>>, %arg7: memref<1x1x100xf32, #tpu.memory_space<vmem>>, %arg8: memref<1x100x128xbf16, #tpu.memory_space<vmem>>, %arg9: memref<1x128xf32, #tpu.memory_space<vmem>>, %arg10: memref<2x128xf32, #tpu.memory_space<vmem>>, %arg11: memref<32x100xf32, #tpu.memory_space<vmem>>) attributes {dimension_semantics = [#tpu.dimension_semantics<arbitrary>], iteration_bounds = array<i64: 3>, scalar_prefetch = 4 : i64, scratch_operands = 1 : i64, tpu.core_type = #tpu.core_type<tc>, window_params = [{pipeline_mode = #tpu.pipeline_mode<synchronous>, transform_indices = @transform_0, window_bounds = array<i64: 5, 32, 3072>}, {transform_indices = @transform_1, window_bounds = array<i64: 4, 100, 3072>}, {transform_indices = @transform_2, window_bounds = array<i64: 1, 1, 100>}, {transform_indices = @transform_3, window_bounds = array<i64: 1, 100, 128>}, {pipeline_mode = #tpu.pipeline_mode<synchronous>, transform_indices = @transform_4, window_bounds = array<i64: 1, 128>}, {pipeline_mode = #tpu.pipeline_mode<synchronous>, transform_indices = @transform_5, window_bounds = array<i64: 2, 128>}]} {
    %c0_i32 = arith.constant 0 : i32
    %0 = arith.cmpi eq, %arg0, %c0_i32 : i32
    %1 = arith.extui %0 : i1 to i32
    %c0_i32_0 = arith.constant 0 : i32
    %2 = arith.cmpi ne, %1, %c0_i32_0 : i32
    scf.if %2 {
      %c0_56 = arith.constant 0 : index
      %c0_57 = arith.constant 0 : index
      %95 = vector.load %arg9[%c0_56, %c0_57] : memref<1x128xf32, #tpu.memory_space<vmem>>, vector<1x128xf32>
      %96 = vector.shape_cast %95 : vector<1x128xf32> to vector<1x128xf32>
      %97 = vector.broadcast %96 : vector<1x128xf32> to vector<2x128xf32>
      %c0_58 = arith.constant 0 : index
      %c0_59 = arith.constant 0 : index
      %98 = vector.load %arg10[%c0_58, %c0_59] : memref<2x128xf32, #tpu.memory_space<vmem>>, vector<2x128xf32>
      tpu.vector_store %arg10[%c0_58, %c0_59], %97 {strides = array<i32>} : memref<2x128xf32, #tpu.memory_space<vmem>>, vector<2x128xf32>,
    } else {
    }
    %c4_i32 = arith.constant 4 : i32
    %3 = arith.muli %arg0, %c4_i32 : i32
    %c0_i32_1 = arith.constant 0 : i32
    %4 = arith.addi %3, %c0_i32_1 : i32
    %5 = arith.index_cast %4 : i32 to index
    %6 = memref.load %arg2[%5] : memref<12xi32, #tpu.memory_space<smem>>
    %c1_i32 = arith.constant 1 : i32
    %7 = arith.cmpi eq, %6, %c1_i32 : i32
    %8 = arith.extui %7 : i1 to i32
    %c0_i32_2 = arith.constant 0 : i32
    %9 = arith.cmpi ne, %8, %c0_i32_2 : i32
    scf.if %9 {
      %cst_56 = arith.constant 0.000000e+00 : f32
      %95 = vector.broadcast %cst_56 : f32 to vector<32x100xf32>
      %c0_57 = arith.constant 0 : index
      %c0_58 = arith.constant 0 : index
      %96 = vector.load %arg11[%c0_57, %c0_58] : memref<32x100xf32, #tpu.memory_space<vmem>>, vector<32x100xf32>
      tpu.vector_store %arg11[%c0_57, %c0_58], %95 {strides = array<i32>} : memref<32x100xf32, #tpu.memory_space<vmem>>, vector<32x100xf32>,
    } else {
    }
    %10 = arith.index_cast %4 : i32 to index
    %11 = memref.load %arg1[%10] : memref<12xi32, #tpu.memory_space<smem>>
    %12 = arith.index_cast %11 : i32 to index
    %c0 = arith.constant 0 : index
    %c0_3 = arith.constant 0 : index
    %13 = vector.load %arg5[%12, %c0, %c0_3] : memref<5x32x3072xbf16, #tpu.memory_space<vmem>>, vector<1x32x3072xbf16>
    %14 = vector.shape_cast %13 : vector<1x32x3072xbf16> to vector<32x3072xbf16>
    %c0_4 = arith.constant 0 : index
    %c0_5 = arith.constant 0 : index
    %c0_6 = arith.constant 0 : index
    %15 = vector.load %arg6[%c0_4, %c0_5, %c0_6] : memref<4x100x3072xbf16, #tpu.memory_space<vmem>>, vector<1x100x3072xbf16>
    %16 = vector.shape_cast %15 : vector<1x100x3072xbf16> to vector<100x3072xbf16>
    %c0_7 = arith.constant 0 : index
    %c0_8 = arith.constant 0 : index
    %17 = vector.load %arg11[%c0_7, %c0_8] : memref<32x100xf32, #tpu.memory_space<vmem>>, vector<32x100xf32>
    %cst = arith.constant dense<0.000000e+00> : vector<32x100xf32>
    %18 = tpu.matmul %14, %16, %cst {dimension_numbers = #tpu.dot_dimension_numbers<[1], [1], [0], [0], [0, 0, 1, 0], [], []>} : vector<32x3072xbf16>, vector<100x3072xbf16>, vector<32x100xf32> -> vector<32x100xf32>
    %19 = arith.addf %17, %18 : vector<32x100xf32>
    %c0_9 = arith.constant 0 : index
    %c0_10 = arith.constant 0 : index
    %20 = vector.load %arg11[%c0_9, %c0_10] : memref<32x100xf32, #tpu.memory_space<vmem>>, vector<32x100xf32>
    tpu.vector_store %arg11[%c0_9, %c0_10], %19 {strides = array<i32>} : memref<32x100xf32, #tpu.memory_space<vmem>>, vector<32x100xf32>,
    %21 = arith.index_cast %4 : i32 to index
    %22 = memref.load %arg3[%21] : memref<12xi32, #tpu.memory_space<smem>>
    %c1_i32_11 = arith.constant 1 : i32
    %23 = arith.cmpi eq, %22, %c1_i32_11 : i32
    %24 = arith.extui %23 : i1 to i32
    %c0_i32_12 = arith.constant 0 : i32
    %25 = arith.cmpi ne, %24, %c0_i32_12 : i32
    scf.if %25 {
      %95 = arith.index_cast %4 : i32 to index
      %96 = memref.load %arg4[%95] : memref<12xi32, #tpu.memory_space<smem>>
      %c0_56 = arith.constant 0 : index
      %c0_57 = arith.constant 0 : index
      %97 = vector.load %arg11[%c0_56, %c0_57] : memref<32x100xf32, #tpu.memory_space<vmem>>, vector<32x100xf32>
      %c0_58 = arith.constant 0 : index
      %c0_59 = arith.constant 0 : index
      %c0_60 = arith.constant 0 : index
      %98 = vector.load %arg7[%c0_58, %c0_59, %c0_60] : memref<1x1x100xf32, #tpu.memory_space<vmem>>, vector<1x1x100xf32>
      %99 = vector.shape_cast %98 : vector<1x1x100xf32> to vector<1x100xf32>
      %100 = vector.broadcast %99 : vector<1x100xf32> to vector<32x100xf32>
      %101 = arith.addf %97, %100 : vector<32x100xf32>
      %cst_61 = arith.constant 0.000000e+00 : f32
      %102 = vector.broadcast %cst_61 : f32 to vector<32x100xf32>
      %103 = arith.maximumf %101, %102 : vector<32x100xf32>
      %104 = tpu.iota {dimensions = array<i32: 0>} : vector<32x100xi32>
      %c2_i32_62 = arith.constant 2 : i32
      %105 = arith.muli %96, %c2_i32_62 : i32
      %106 = vector.broadcast %105 : i32 to vector<32x100xi32>
      %107 = arith.cmpi slt, %104, %106 : vector<32x100xi32>
      %cst_63 = arith.constant 0.000000e+00 : f32
      %108 = vector.broadcast %cst_63 : f32 to vector<32x100xf32>
      %109 = arith.select %107, %103, %108 : vector<32x100xi1>, vector<32x100xf32>
      %c2_i32_64 = arith.constant 2 : i32
      %c0_i32_65 = arith.constant 0 : i32
      %110 = arith.cmpi eq, %c2_i32_64, %c0_i32_65 : i32
      %c1_i32_66 = arith.constant 1 : i32
      %111 = arith.select %110, %c1_i32_66, %c2_i32_64 : i32
      %112 = vector.broadcast %111 : i32 to vector<32x100xi32>
      %113 = arith.remsi %104, %112 : vector<32x100xi32>
      %c0_i32_67 = arith.constant 0 : i32
      %114 = vector.broadcast %c0_i32_67 : i32 to vector<32x100xi32>
      %115 = arith.cmpi ne, %113, %114 : vector<32x100xi32>
      %c0_i32_68 = arith.constant 0 : i32
      %116 = vector.broadcast %c0_i32_68 : i32 to vector<32x100xi32>
      %117 = arith.cmpi slt, %113, %116 : vector<32x100xi32>
      %c0_i32_69 = arith.constant 0 : i32
      %118 = arith.cmpi slt, %111, %c0_i32_69 : i32
      %119 = vector.broadcast %118 : i1 to vector<32x100xi1>
      %120 = vector.broadcast %119 : vector<32x100xi1> to vector<32x100xi1>
      %121 = arith.xori %117, %120 : vector<32x100xi1>
      %122 = arith.andi %121, %115 : vector<32x100xi1>
      %123 = vector.broadcast %111 : i32 to vector<32x100xi32>
      %124 = arith.addi %113, %123 : vector<32x100xi32>
      %125 = arith.select %122, %124, %113 : vector<32x100xi1>, vector<32x100xi32>
      %c0_i32_70 = arith.constant 0 : i32
      %126 = vector.broadcast %c0_i32_70 : i32 to vector<32x100xi32>
      %127 = arith.cmpi eq, %125, %126 : vector<32x100xi32>
      %cst_71 = arith.constant 0.000000e+00 : f32
      %128 = vector.broadcast %cst_71 : f32 to vector<32x100xf32>
      %129 = arith.select %127, %109, %128 : vector<32x100xi1>, vector<32x100xf32>
      %cst_72 = arith.constant dense<0xFF800000> : vector<100xf32>
      %130 = vector.multi_reduction <maximumf>, %129, %cst_72 [0] : vector<32x100xf32> to vector<100xf32>
      %131 = vector.shape_cast %130 : vector<100xf32> to vector<1x100xf32>
      %c2_i32_73 = arith.constant 2 : i32
      %c0_i32_74 = arith.constant 0 : i32
      %132 = arith.cmpi eq, %c2_i32_73, %c0_i32_74 : i32
      %c1_i32_75 = arith.constant 1 : i32
      %133 = arith.select %132, %c1_i32_75, %c2_i32_73 : i32
      %134 = vector.broadcast %133 : i32 to vector<32x100xi32>
      %135 = arith.remsi %104, %134 : vector<32x100xi32>
      %c0_i32_76 = arith.constant 0 : i32
      %136 = vector.broadcast %c0_i32_76 : i32 to vector<32x100xi32>
      %137 = arith.cmpi ne, %135, %136 : vector<32x100xi32>
      %c0_i32_77 = arith.constant 0 : i32
      %138 = vector.broadcast %c0_i32_77 : i32 to vector<32x100xi32>
      %139 = arith.cmpi slt, %135, %138 : vector<32x100xi32>
      %c0_i32_78 = arith.constant 0 : i32
      %140 = arith.cmpi slt, %133, %c0_i32_78 : i32
      %141 = vector.broadcast %140 : i1 to vector<32x100xi1>
      %142 = vector.broadcast %141 : vector<32x100xi1> to vector<32x100xi1>
      %143 = arith.xori %139, %142 : vector<32x100xi1>
      %144 = arith.andi %143, %137 : vector<32x100xi1>
      %145 = vector.broadcast %133 : i32 to vector<32x100xi32>
      %146 = arith.addi %135, %145 : vector<32x100xi32>
      %147 = arith.select %144, %146, %135 : vector<32x100xi1>, vector<32x100xi32>
      %c1_i32_79 = arith.constant 1 : i32
      %148 = vector.broadcast %c1_i32_79 : i32 to vector<32x100xi32>
      %149 = arith.cmpi eq, %147, %148 : vector<32x100xi32>
      %cst_80 = arith.constant 0.000000e+00 : f32
      %150 = vector.broadcast %cst_80 : f32 to vector<32x100xf32>
      %151 = arith.select %149, %109, %150 : vector<32x100xi1>, vector<32x100xf32>
      %cst_81 = arith.constant dense<0xFF800000> : vector<100xf32>
      %152 = vector.multi_reduction <maximumf>, %151, %cst_81 [0] : vector<32x100xf32> to vector<100xf32>
      %153 = vector.shape_cast %152 : vector<100xf32> to vector<1x100xf32>
      %154 = tpu.concatenate %131, %153 in 0 : vector<1x100xf32>, vector<1x100xf32> -> vector<2x100xf32>
      %c0_82 = arith.constant 0 : index
      %c0_83 = arith.constant 0 : index
      %155 = vector.load %arg10[%c0_82, %c0_83] : memref<2x128xf32, #tpu.memory_space<vmem>>, vector<2x128xf32>
      %156 = arith.truncf %154 : vector<2x100xf32> to vector<2x100xbf16>
      %c0_84 = arith.constant 0 : index
      %c0_85 = arith.constant 0 : index
      %c0_86 = arith.constant 0 : index
      %157 = vector.load %arg8[%c0_84, %c0_85, %c0_86] : memref<1x100x128xbf16, #tpu.memory_space<vmem>>, vector<1x100x128xbf16>
      %158 = vector.shape_cast %157 : vector<1x100x128xbf16> to vector<100x128xbf16>
      %cst_87 = arith.constant dense<0.000000e+00> : vector<2x128xf32>
      %159 = tpu.matmul %156, %158, %cst_87 {dimension_numbers = #tpu.dot_dimension_numbers<[1], [0], [0], [1], [0, 0, 1, 1], [], []>} : vector<2x100xbf16>, vector<100x128xbf16>, vector<2x128xf32> -> vector<2x128xf32>
      %160 = arith.addf %155, %159 : vector<2x128xf32>
      %c0_88 = arith.constant 0 : index
      %c0_89 = arith.constant 0 : index
      %161 = vector.load %arg10[%c0_88, %c0_89] : memref<2x128xf32, #tpu.memory_space<vmem>>, vector<2x128xf32>
      tpu.vector_store %arg10[%c0_88, %c0_89], %160 {strides = array<i32>} : memref<2x128xf32, #tpu.memory_space<vmem>>, vector<2x128xf32>,
    } else {
    }
    %c4_i32_13 = arith.constant 4 : i32
    %26 = arith.muli %arg0, %c4_i32_13 : i32
    %c1_i32_14 = arith.constant 1 : i32
    %27 = arith.addi %26, %c1_i32_14 : i32
    %28 = arith.index_cast %27 : i32 to index
    %29 = memref.load %arg2[%28] : memref<12xi32, #tpu.memory_space<smem>>
    %c1_i32_15 = arith.constant 1 : i32
    %30 = arith.cmpi eq, %29, %c1_i32_15 : i32
    %31 = arith.extui %30 : i1 to i32
    %c0_i32_16 = arith.constant 0 : i32
    %32 = arith.cmpi ne, %31, %c0_i32_16 : i32
    scf.if %32 {
      %cst_56 = arith.constant 0.000000e+00 : f32
      %95 = vector.broadcast %cst_56 : f32 to vector<32x100xf32>
      %c0_57 = arith.constant 0 : index
      %c0_58 = arith.constant 0 : index
      %96 = vector.load %arg11[%c0_57, %c0_58] : memref<32x100xf32, #tpu.memory_space<vmem>>, vector<32x100xf32>
      tpu.vector_store %arg11[%c0_57, %c0_58], %95 {strides = array<i32>} : memref<32x100xf32, #tpu.memory_space<vmem>>, vector<32x100xf32>,
    } else {
    }
    %33 = arith.index_cast %27 : i32 to index
    %34 = memref.load %arg1[%33] : memref<12xi32, #tpu.memory_space<smem>>
    %35 = arith.index_cast %34 : i32 to index
    %c0_17 = arith.constant 0 : index
    %c0_18 = arith.constant 0 : index
    %36 = vector.load %arg5[%35, %c0_17, %c0_18] : memref<5x32x3072xbf16, #tpu.memory_space<vmem>>, vector<1x32x3072xbf16>
    %37 = vector.shape_cast %36 : vector<1x32x3072xbf16> to vector<32x3072xbf16>
    %c1 = arith.constant 1 : index
    %c0_19 = arith.constant 0 : index
    %c0_20 = arith.constant 0 : index
    %38 = vector.load %arg6[%c1, %c0_19, %c0_20] : memref<4x100x3072xbf16, #tpu.memory_space<vmem>>, vector<1x100x3072xbf16>
    %39 = vector.shape_cast %38 : vector<1x100x3072xbf16> to vector<100x3072xbf16>
    %c0_21 = arith.constant 0 : index
    %c0_22 = arith.constant 0 : index
    %40 = vector.load %arg11[%c0_21, %c0_22] : memref<32x100xf32, #tpu.memory_space<vmem>>, vector<32x100xf32>
    %cst_23 = arith.constant dense<0.000000e+00> : vector<32x100xf32>
    %41 = tpu.matmul %37, %39, %cst_23 {dimension_numbers = #tpu.dot_dimension_numbers<[1], [1], [0], [0], [0, 0, 1, 0], [], []>} : vector<32x3072xbf16>, vector<100x3072xbf16>, vector<32x100xf32> -> vector<32x100xf32>
    %42 = arith.addf %40, %41 : vector<32x100xf32>
    %c0_24 = arith.constant 0 : index
    %c0_25 = arith.constant 0 : index
    %43 = vector.load %arg11[%c0_24, %c0_25] : memref<32x100xf32, #tpu.memory_space<vmem>>, vector<32x100xf32>
    tpu.vector_store %arg11[%c0_24, %c0_25], %42 {strides = array<i32>} : memref<32x100xf32, #tpu.memory_space<vmem>>, vector<32x100xf32>,
    %44 = arith.index_cast %27 : i32 to index
    %45 = memref.load %arg3[%44] : memref<12xi32, #tpu.memory_space<smem>>
    %c1_i32_26 = arith.constant 1 : i32
    %46 = arith.cmpi eq, %45, %c1_i32_26 : i32
    %47 = arith.extui %46 : i1 to i32
    %c0_i32_27 = arith.constant 0 : i32
    %48 = arith.cmpi ne, %47, %c0_i32_27 : i32
    scf.if %48 {
      %95 = arith.index_cast %27 : i32 to index
      %96 = memref.load %arg4[%95] : memref<12xi32, #tpu.memory_space<smem>>
      %c0_56 = arith.constant 0 : index
      %c0_57 = arith.constant 0 : index
      %97 = vector.load %arg11[%c0_56, %c0_57] : memref<32x100xf32, #tpu.memory_space<vmem>>, vector<32x100xf32>
      %c0_58 = arith.constant 0 : index
      %c0_59 = arith.constant 0 : index
      %c0_60 = arith.constant 0 : index
      %98 = vector.load %arg7[%c0_58, %c0_59, %c0_60] : memref<1x1x100xf32, #tpu.memory_space<vmem>>, vector<1x1x100xf32>
      %99 = vector.shape_cast %98 : vector<1x1x100xf32> to vector<1x100xf32>
      %100 = vector.broadcast %99 : vector<1x100xf32> to vector<32x100xf32>
      %101 = arith.addf %97, %100 : vector<32x100xf32>
      %cst_61 = arith.constant 0.000000e+00 : f32
      %102 = vector.broadcast %cst_61 : f32 to vector<32x100xf32>
      %103 = arith.maximumf %101, %102 : vector<32x100xf32>
      %104 = tpu.iota {dimensions = array<i32: 0>} : vector<32x100xi32>
      %c2_i32_62 = arith.constant 2 : i32
      %105 = arith.muli %96, %c2_i32_62 : i32
      %106 = vector.broadcast %105 : i32 to vector<32x100xi32>
      %107 = arith.cmpi slt, %104, %106 : vector<32x100xi32>
      %cst_63 = arith.constant 0.000000e+00 : f32
      %108 = vector.broadcast %cst_63 : f32 to vector<32x100xf32>
      %109 = arith.select %107, %103, %108 : vector<32x100xi1>, vector<32x100xf32>
      %c2_i32_64 = arith.constant 2 : i32
      %c0_i32_65 = arith.constant 0 : i32
      %110 = arith.cmpi eq, %c2_i32_64, %c0_i32_65 : i32
      %c1_i32_66 = arith.constant 1 : i32
      %111 = arith.select %110, %c1_i32_66, %c2_i32_64 : i32
      %112 = vector.broadcast %111 : i32 to vector<32x100xi32>
      %113 = arith.remsi %104, %112 : vector<32x100xi32>
      %c0_i32_67 = arith.constant 0 : i32
      %114 = vector.broadcast %c0_i32_67 : i32 to vector<32x100xi32>
      %115 = arith.cmpi ne, %113, %114 : vector<32x100xi32>
      %c0_i32_68 = arith.constant 0 : i32
      %116 = vector.broadcast %c0_i32_68 : i32 to vector<32x100xi32>
      %117 = arith.cmpi slt, %113, %116 : vector<32x100xi32>
      %c0_i32_69 = arith.constant 0 : i32
      %118 = arith.cmpi slt, %111, %c0_i32_69 : i32
      %119 = vector.broadcast %118 : i1 to vector<32x100xi1>
      %120 = vector.broadcast %119 : vector<32x100xi1> to vector<32x100xi1>
      %121 = arith.xori %117, %120 : vector<32x100xi1>
      %122 = arith.andi %121, %115 : vector<32x100xi1>
      %123 = vector.broadcast %111 : i32 to vector<32x100xi32>
      %124 = arith.addi %113, %123 : vector<32x100xi32>
      %125 = arith.select %122, %124, %113 : vector<32x100xi1>, vector<32x100xi32>
      %c0_i32_70 = arith.constant 0 : i32
      %126 = vector.broadcast %c0_i32_70 : i32 to vector<32x100xi32>
      %127 = arith.cmpi eq, %125, %126 : vector<32x100xi32>
      %cst_71 = arith.constant 0.000000e+00 : f32
      %128 = vector.broadcast %cst_71 : f32 to vector<32x100xf32>
      %129 = arith.select %127, %109, %128 : vector<32x100xi1>, vector<32x100xf32>
      %cst_72 = arith.constant dense<0xFF800000> : vector<100xf32>
      %130 = vector.multi_reduction <maximumf>, %129, %cst_72 [0] : vector<32x100xf32> to vector<100xf32>
      %131 = vector.shape_cast %130 : vector<100xf32> to vector<1x100xf32>
      %c2_i32_73 = arith.constant 2 : i32
      %c0_i32_74 = arith.constant 0 : i32
      %132 = arith.cmpi eq, %c2_i32_73, %c0_i32_74 : i32
      %c1_i32_75 = arith.constant 1 : i32
      %133 = arith.select %132, %c1_i32_75, %c2_i32_73 : i32
      %134 = vector.broadcast %133 : i32 to vector<32x100xi32>
      %135 = arith.remsi %104, %134 : vector<32x100xi32>
      %c0_i32_76 = arith.constant 0 : i32
      %136 = vector.broadcast %c0_i32_76 : i32 to vector<32x100xi32>
      %137 = arith.cmpi ne, %135, %136 : vector<32x100xi32>
      %c0_i32_77 = arith.constant 0 : i32
      %138 = vector.broadcast %c0_i32_77 : i32 to vector<32x100xi32>
      %139 = arith.cmpi slt, %135, %138 : vector<32x100xi32>
      %c0_i32_78 = arith.constant 0 : i32
      %140 = arith.cmpi slt, %133, %c0_i32_78 : i32
      %141 = vector.broadcast %140 : i1 to vector<32x100xi1>
      %142 = vector.broadcast %141 : vector<32x100xi1> to vector<32x100xi1>
      %143 = arith.xori %139, %142 : vector<32x100xi1>
      %144 = arith.andi %143, %137 : vector<32x100xi1>
      %145 = vector.broadcast %133 : i32 to vector<32x100xi32>
      %146 = arith.addi %135, %145 : vector<32x100xi32>
      %147 = arith.select %144, %146, %135 : vector<32x100xi1>, vector<32x100xi32>
      %c1_i32_79 = arith.constant 1 : i32
      %148 = vector.broadcast %c1_i32_79 : i32 to vector<32x100xi32>
      %149 = arith.cmpi eq, %147, %148 : vector<32x100xi32>
      %cst_80 = arith.constant 0.000000e+00 : f32
      %150 = vector.broadcast %cst_80 : f32 to vector<32x100xf32>
      %151 = arith.select %149, %109, %150 : vector<32x100xi1>, vector<32x100xf32>
      %cst_81 = arith.constant dense<0xFF800000> : vector<100xf32>
      %152 = vector.multi_reduction <maximumf>, %151, %cst_81 [0] : vector<32x100xf32> to vector<100xf32>
      %153 = vector.shape_cast %152 : vector<100xf32> to vector<1x100xf32>
      %154 = tpu.concatenate %131, %153 in 0 : vector<1x100xf32>, vector<1x100xf32> -> vector<2x100xf32>
      %c0_82 = arith.constant 0 : index
      %c0_83 = arith.constant 0 : index
      %155 = vector.load %arg10[%c0_82, %c0_83] : memref<2x128xf32, #tpu.memory_space<vmem>>, vector<2x128xf32>
      %156 = arith.truncf %154 : vector<2x100xf32> to vector<2x100xbf16>
      %c0_84 = arith.constant 0 : index
      %c0_85 = arith.constant 0 : index
      %c0_86 = arith.constant 0 : index
      %157 = vector.load %arg8[%c0_84, %c0_85, %c0_86] : memref<1x100x128xbf16, #tpu.memory_space<vmem>>, vector<1x100x128xbf16>
      %158 = vector.shape_cast %157 : vector<1x100x128xbf16> to vector<100x128xbf16>
      %cst_87 = arith.constant dense<0.000000e+00> : vector<2x128xf32>
      %159 = tpu.matmul %156, %158, %cst_87 {dimension_numbers = #tpu.dot_dimension_numbers<[1], [0], [0], [1], [0, 0, 1, 1], [], []>} : vector<2x100xbf16>, vector<100x128xbf16>, vector<2x128xf32> -> vector<2x128xf32>
      %160 = arith.addf %155, %159 : vector<2x128xf32>
      %c0_88 = arith.constant 0 : index
      %c0_89 = arith.constant 0 : index
      %161 = vector.load %arg10[%c0_88, %c0_89] : memref<2x128xf32, #tpu.memory_space<vmem>>, vector<2x128xf32>
      tpu.vector_store %arg10[%c0_88, %c0_89], %160 {strides = array<i32>} : memref<2x128xf32, #tpu.memory_space<vmem>>, vector<2x128xf32>,
    } else {
    }
    %c4_i32_28 = arith.constant 4 : i32
    %49 = arith.muli %arg0, %c4_i32_28 : i32
    %c2_i32 = arith.constant 2 : i32
    %50 = arith.addi %49, %c2_i32 : i32
    %51 = arith.index_cast %50 : i32 to index
    %52 = memref.load %arg2[%51] : memref<12xi32, #tpu.memory_space<smem>>
    %c1_i32_29 = arith.constant 1 : i32
    %53 = arith.cmpi eq, %52, %c1_i32_29 : i32
    %54 = arith.extui %53 : i1 to i32
    %c0_i32_30 = arith.constant 0 : i32
    %55 = arith.cmpi ne, %54, %c0_i32_30 : i32
    scf.if %55 {
      %cst_56 = arith.constant 0.000000e+00 : f32
      %95 = vector.broadcast %cst_56 : f32 to vector<32x100xf32>
      %c0_57 = arith.constant 0 : index
      %c0_58 = arith.constant 0 : index
      %96 = vector.load %arg11[%c0_57, %c0_58] : memref<32x100xf32, #tpu.memory_space<vmem>>, vector<32x100xf32>
      tpu.vector_store %arg11[%c0_57, %c0_58], %95 {strides = array<i32>} : memref<32x100xf32, #tpu.memory_space<vmem>>, vector<32x100xf32>,
    } else {
    }
    %56 = arith.index_cast %50 : i32 to index
    %57 = memref.load %arg1[%56] : memref<12xi32, #tpu.memory_space<smem>>
    %58 = arith.index_cast %57 : i32 to index
    %c0_31 = arith.constant 0 : index
    %c0_32 = arith.constant 0 : index
    %59 = vector.load %arg5[%58, %c0_31, %c0_32] : memref<5x32x3072xbf16, #tpu.memory_space<vmem>>, vector<1x32x3072xbf16>
    %60 = vector.shape_cast %59 : vector<1x32x3072xbf16> to vector<32x3072xbf16>
    %c2 = arith.constant 2 : index
    %c0_33 = arith.constant 0 : index
    %c0_34 = arith.constant 0 : index
    %61 = vector.load %arg6[%c2, %c0_33, %c0_34] : memref<4x100x3072xbf16, #tpu.memory_space<vmem>>, vector<1x100x3072xbf16>
    %62 = vector.shape_cast %61 : vector<1x100x3072xbf16> to vector<100x3072xbf16>
    %c0_35 = arith.constant 0 : index
    %c0_36 = arith.constant 0 : index
    %63 = vector.load %arg11[%c0_35, %c0_36] : memref<32x100xf32, #tpu.memory_space<vmem>>, vector<32x100xf32>
    %cst_37 = arith.constant dense<0.000000e+00> : vector<32x100xf32>
    %64 = tpu.matmul %60, %62, %cst_37 {dimension_numbers = #tpu.dot_dimension_numbers<[1], [1], [0], [0], [0, 0, 1, 0], [], []>} : vector<32x3072xbf16>, vector<100x3072xbf16>, vector<32x100xf32> -> vector<32x100xf32>
    %65 = arith.addf %63, %64 : vector<32x100xf32>
    %c0_38 = arith.constant 0 : index
    %c0_39 = arith.constant 0 : index
    %66 = vector.load %arg11[%c0_38, %c0_39] : memref<32x100xf32, #tpu.memory_space<vmem>>, vector<32x100xf32>
    tpu.vector_store %arg11[%c0_38, %c0_39], %65 {strides = array<i32>} : memref<32x100xf32, #tpu.memory_space<vmem>>, vector<32x100xf32>,
    %67 = arith.index_cast %50 : i32 to index
    %68 = memref.load %arg3[%67] : memref<12xi32, #tpu.memory_space<smem>>
    %c1_i32_40 = arith.constant 1 : i32
    %69 = arith.cmpi eq, %68, %c1_i32_40 : i32
    %70 = arith.extui %69 : i1 to i32
    %c0_i32_41 = arith.constant 0 : i32
    %71 = arith.cmpi ne, %70, %c0_i32_41 : i32
    scf.if %71 {
      %95 = arith.index_cast %50 : i32 to index
      %96 = memref.load %arg4[%95] : memref<12xi32, #tpu.memory_space<smem>>
      %c0_56 = arith.constant 0 : index
      %c0_57 = arith.constant 0 : index
      %97 = vector.load %arg11[%c0_56, %c0_57] : memref<32x100xf32, #tpu.memory_space<vmem>>, vector<32x100xf32>
      %c0_58 = arith.constant 0 : index
      %c0_59 = arith.constant 0 : index
      %c0_60 = arith.constant 0 : index
      %98 = vector.load %arg7[%c0_58, %c0_59, %c0_60] : memref<1x1x100xf32, #tpu.memory_space<vmem>>, vector<1x1x100xf32>
      %99 = vector.shape_cast %98 : vector<1x1x100xf32> to vector<1x100xf32>
      %100 = vector.broadcast %99 : vector<1x100xf32> to vector<32x100xf32>
      %101 = arith.addf %97, %100 : vector<32x100xf32>
      %cst_61 = arith.constant 0.000000e+00 : f32
      %102 = vector.broadcast %cst_61 : f32 to vector<32x100xf32>
      %103 = arith.maximumf %101, %102 : vector<32x100xf32>
      %104 = tpu.iota {dimensions = array<i32: 0>} : vector<32x100xi32>
      %c2_i32_62 = arith.constant 2 : i32
      %105 = arith.muli %96, %c2_i32_62 : i32
      %106 = vector.broadcast %105 : i32 to vector<32x100xi32>
      %107 = arith.cmpi slt, %104, %106 : vector<32x100xi32>
      %cst_63 = arith.constant 0.000000e+00 : f32
      %108 = vector.broadcast %cst_63 : f32 to vector<32x100xf32>
      %109 = arith.select %107, %103, %108 : vector<32x100xi1>, vector<32x100xf32>
      %c2_i32_64 = arith.constant 2 : i32
      %c0_i32_65 = arith.constant 0 : i32
      %110 = arith.cmpi eq, %c2_i32_64, %c0_i32_65 : i32
      %c1_i32_66 = arith.constant 1 : i32
      %111 = arith.select %110, %c1_i32_66, %c2_i32_64 : i32
      %112 = vector.broadcast %111 : i32 to vector<32x100xi32>
      %113 = arith.remsi %104, %112 : vector<32x100xi32>
      %c0_i32_67 = arith.constant 0 : i32
      %114 = vector.broadcast %c0_i32_67 : i32 to vector<32x100xi32>
      %115 = arith.cmpi ne, %113, %114 : vector<32x100xi32>
      %c0_i32_68 = arith.constant 0 : i32
      %116 = vector.broadcast %c0_i32_68 : i32 to vector<32x100xi32>
      %117 = arith.cmpi slt, %113, %116 : vector<32x100xi32>
      %c0_i32_69 = arith.constant 0 : i32
      %118 = arith.cmpi slt, %111, %c0_i32_69 : i32
      %119 = vector.broadcast %118 : i1 to vector<32x100xi1>
      %120 = vector.broadcast %119 : vector<32x100xi1> to vector<32x100xi1>
      %121 = arith.xori %117, %120 : vector<32x100xi1>
      %122 = arith.andi %121, %115 : vector<32x100xi1>
      %123 = vector.broadcast %111 : i32 to vector<32x100xi32>
      %124 = arith.addi %113, %123 : vector<32x100xi32>
      %125 = arith.select %122, %124, %113 : vector<32x100xi1>, vector<32x100xi32>
      %c0_i32_70 = arith.constant 0 : i32
      %126 = vector.broadcast %c0_i32_70 : i32 to vector<32x100xi32>
      %127 = arith.cmpi eq, %125, %126 : vector<32x100xi32>
      %cst_71 = arith.constant 0.000000e+00 : f32
      %128 = vector.broadcast %cst_71 : f32 to vector<32x100xf32>
      %129 = arith.select %127, %109, %128 : vector<32x100xi1>, vector<32x100xf32>
      %cst_72 = arith.constant dense<0xFF800000> : vector<100xf32>
      %130 = vector.multi_reduction <maximumf>, %129, %cst_72 [0] : vector<32x100xf32> to vector<100xf32>
      %131 = vector.shape_cast %130 : vector<100xf32> to vector<1x100xf32>
      %c2_i32_73 = arith.constant 2 : i32
      %c0_i32_74 = arith.constant 0 : i32
      %132 = arith.cmpi eq, %c2_i32_73, %c0_i32_74 : i32
      %c1_i32_75 = arith.constant 1 : i32
      %133 = arith.select %132, %c1_i32_75, %c2_i32_73 : i32
      %134 = vector.broadcast %133 : i32 to vector<32x100xi32>
      %135 = arith.remsi %104, %134 : vector<32x100xi32>
      %c0_i32_76 = arith.constant 0 : i32
      %136 = vector.broadcast %c0_i32_76 : i32 to vector<32x100xi32>
      %137 = arith.cmpi ne, %135, %136 : vector<32x100xi32>
      %c0_i32_77 = arith.constant 0 : i32
      %138 = vector.broadcast %c0_i32_77 : i32 to vector<32x100xi32>
      %139 = arith.cmpi slt, %135, %138 : vector<32x100xi32>
      %c0_i32_78 = arith.constant 0 : i32
      %140 = arith.cmpi slt, %133, %c0_i32_78 : i32
      %141 = vector.broadcast %140 : i1 to vector<32x100xi1>
      %142 = vector.broadcast %141 : vector<32x100xi1> to vector<32x100xi1>
      %143 = arith.xori %139, %142 : vector<32x100xi1>
      %144 = arith.andi %143, %137 : vector<32x100xi1>
      %145 = vector.broadcast %133 : i32 to vector<32x100xi32>
      %146 = arith.addi %135, %145 : vector<32x100xi32>
      %147 = arith.select %144, %146, %135 : vector<32x100xi1>, vector<32x100xi32>
      %c1_i32_79 = arith.constant 1 : i32
      %148 = vector.broadcast %c1_i32_79 : i32 to vector<32x100xi32>
      %149 = arith.cmpi eq, %147, %148 : vector<32x100xi32>
      %cst_80 = arith.constant 0.000000e+00 : f32
      %150 = vector.broadcast %cst_80 : f32 to vector<32x100xf32>
      %151 = arith.select %149, %109, %150 : vector<32x100xi1>, vector<32x100xf32>
      %cst_81 = arith.constant dense<0xFF800000> : vector<100xf32>
      %152 = vector.multi_reduction <maximumf>, %151, %cst_81 [0] : vector<32x100xf32> to vector<100xf32>
      %153 = vector.shape_cast %152 : vector<100xf32> to vector<1x100xf32>
      %154 = tpu.concatenate %131, %153 in 0 : vector<1x100xf32>, vector<1x100xf32> -> vector<2x100xf32>
      %c0_82 = arith.constant 0 : index
      %c0_83 = arith.constant 0 : index
      %155 = vector.load %arg10[%c0_82, %c0_83] : memref<2x128xf32, #tpu.memory_space<vmem>>, vector<2x128xf32>
      %156 = arith.truncf %154 : vector<2x100xf32> to vector<2x100xbf16>
      %c0_84 = arith.constant 0 : index
      %c0_85 = arith.constant 0 : index
      %c0_86 = arith.constant 0 : index
      %157 = vector.load %arg8[%c0_84, %c0_85, %c0_86] : memref<1x100x128xbf16, #tpu.memory_space<vmem>>, vector<1x100x128xbf16>
      %158 = vector.shape_cast %157 : vector<1x100x128xbf16> to vector<100x128xbf16>
      %cst_87 = arith.constant dense<0.000000e+00> : vector<2x128xf32>
      %159 = tpu.matmul %156, %158, %cst_87 {dimension_numbers = #tpu.dot_dimension_numbers<[1], [0], [0], [1], [0, 0, 1, 1], [], []>} : vector<2x100xbf16>, vector<100x128xbf16>, vector<2x128xf32> -> vector<2x128xf32>
      %160 = arith.addf %155, %159 : vector<2x128xf32>
      %c0_88 = arith.constant 0 : index
      %c0_89 = arith.constant 0 : index
      %161 = vector.load %arg10[%c0_88, %c0_89] : memref<2x128xf32, #tpu.memory_space<vmem>>, vector<2x128xf32>
      tpu.vector_store %arg10[%c0_88, %c0_89], %160 {strides = array<i32>} : memref<2x128xf32, #tpu.memory_space<vmem>>, vector<2x128xf32>,
    } else {
    }
    %c4_i32_42 = arith.constant 4 : i32
    %72 = arith.muli %arg0, %c4_i32_42 : i32
    %c3_i32 = arith.constant 3 : i32
    %73 = arith.addi %72, %c3_i32 : i32
    %74 = arith.index_cast %73 : i32 to index
    %75 = memref.load %arg2[%74] : memref<12xi32, #tpu.memory_space<smem>>
    %c1_i32_43 = arith.constant 1 : i32
    %76 = arith.cmpi eq, %75, %c1_i32_43 : i32
    %77 = arith.extui %76 : i1 to i32
    %c0_i32_44 = arith.constant 0 : i32
    %78 = arith.cmpi ne, %77, %c0_i32_44 : i32
    scf.if %78 {
      %cst_56 = arith.constant 0.000000e+00 : f32
      %95 = vector.broadcast %cst_56 : f32 to vector<32x100xf32>
      %c0_57 = arith.constant 0 : index
      %c0_58 = arith.constant 0 : index
      %96 = vector.load %arg11[%c0_57, %c0_58] : memref<32x100xf32, #tpu.memory_space<vmem>>, vector<32x100xf32>
      tpu.vector_store %arg11[%c0_57, %c0_58], %95 {strides = array<i32>} : memref<32x100xf32, #tpu.memory_space<vmem>>, vector<32x100xf32>,
    } else {
    }
    %79 = arith.index_cast %73 : i32 to index
    %80 = memref.load %arg1[%79] : memref<12xi32, #tpu.memory_space<smem>>
    %81 = arith.index_cast %80 : i32 to index
    %c0_45 = arith.constant 0 : index
    %c0_46 = arith.constant 0 : index
    %82 = vector.load %arg5[%81, %c0_45, %c0_46] : memref<5x32x3072xbf16, #tpu.memory_space<vmem>>, vector<1x32x3072xbf16>
    %83 = vector.shape_cast %82 : vector<1x32x3072xbf16> to vector<32x3072xbf16>
    %c3 = arith.constant 3 : index
    %c0_47 = arith.constant 0 : index
    %c0_48 = arith.constant 0 : index
    %84 = vector.load %arg6[%c3, %c0_47, %c0_48] : memref<4x100x3072xbf16, #tpu.memory_space<vmem>>, vector<1x100x3072xbf16>
    %85 = vector.shape_cast %84 : vector<1x100x3072xbf16> to vector<100x3072xbf16>
    %c0_49 = arith.constant 0 : index
    %c0_50 = arith.constant 0 : index
    %86 = vector.load %arg11[%c0_49, %c0_50] : memref<32x100xf32, #tpu.memory_space<vmem>>, vector<32x100xf32>
    %cst_51 = arith.constant dense<0.000000e+00> : vector<32x100xf32>
    %87 = tpu.matmul %83, %85, %cst_51 {dimension_numbers = #tpu.dot_dimension_numbers<[1], [1], [0], [0], [0, 0, 1, 0], [], []>} : vector<32x3072xbf16>, vector<100x3072xbf16>, vector<32x100xf32> -> vector<32x100xf32>
    %88 = arith.addf %86, %87 : vector<32x100xf32>
    %c0_52 = arith.constant 0 : index
    %c0_53 = arith.constant 0 : index
    %89 = vector.load %arg11[%c0_52, %c0_53] : memref<32x100xf32, #tpu.memory_space<vmem>>, vector<32x100xf32>
    tpu.vector_store %arg11[%c0_52, %c0_53], %88 {strides = array<i32>} : memref<32x100xf32, #tpu.memory_space<vmem>>, vector<32x100xf32>,
    %90 = arith.index_cast %73 : i32 to index
    %91 = memref.load %arg3[%90] : memref<12xi32, #tpu.memory_space<smem>>
    %c1_i32_54 = arith.constant 1 : i32
    %92 = arith.cmpi eq, %91, %c1_i32_54 : i32
    %93 = arith.extui %92 : i1 to i32
    %c0_i32_55 = arith.constant 0 : i32
    %94 = arith.cmpi ne, %93, %c0_i32_55 : i32
    scf.if %94 {
      %95 = arith.index_cast %73 : i32 to index
      %96 = memref.load %arg4[%95] : memref<12xi32, #tpu.memory_space<smem>>
      %c0_56 = arith.constant 0 : index
      %c0_57 = arith.constant 0 : index
      %97 = vector.load %arg11[%c0_56, %c0_57] : memref<32x100xf32, #tpu.memory_space<vmem>>, vector<32x100xf32>
      %c0_58 = arith.constant 0 : index
      %c0_59 = arith.constant 0 : index
      %c0_60 = arith.constant 0 : index
      %98 = vector.load %arg7[%c0_58, %c0_59, %c0_60] : memref<1x1x100xf32, #tpu.memory_space<vmem>>, vector<1x1x100xf32>
      %99 = vector.shape_cast %98 : vector<1x1x100xf32> to vector<1x100xf32>
      %100 = vector.broadcast %99 : vector<1x100xf32> to vector<32x100xf32>
      %101 = arith.addf %97, %100 : vector<32x100xf32>
      %cst_61 = arith.constant 0.000000e+00 : f32
      %102 = vector.broadcast %cst_61 : f32 to vector<32x100xf32>
      %103 = arith.maximumf %101, %102 : vector<32x100xf32>
      %104 = tpu.iota {dimensions = array<i32: 0>} : vector<32x100xi32>
      %c2_i32_62 = arith.constant 2 : i32
      %105 = arith.muli %96, %c2_i32_62 : i32
      %106 = vector.broadcast %105 : i32 to vector<32x100xi32>
      %107 = arith.cmpi slt, %104, %106 : vector<32x100xi32>
      %cst_63 = arith.constant 0.000000e+00 : f32
      %108 = vector.broadcast %cst_63 : f32 to vector<32x100xf32>
      %109 = arith.select %107, %103, %108 : vector<32x100xi1>, vector<32x100xf32>
      %c2_i32_64 = arith.constant 2 : i32
      %c0_i32_65 = arith.constant 0 : i32
      %110 = arith.cmpi eq, %c2_i32_64, %c0_i32_65 : i32
      %c1_i32_66 = arith.constant 1 : i32
      %111 = arith.select %110, %c1_i32_66, %c2_i32_64 : i32
      %112 = vector.broadcast %111 : i32 to vector<32x100xi32>
      %113 = arith.remsi %104, %112 : vector<32x100xi32>
      %c0_i32_67 = arith.constant 0 : i32
      %114 = vector.broadcast %c0_i32_67 : i32 to vector<32x100xi32>
      %115 = arith.cmpi ne, %113, %114 : vector<32x100xi32>
      %c0_i32_68 = arith.constant 0 : i32
      %116 = vector.broadcast %c0_i32_68 : i32 to vector<32x100xi32>
      %117 = arith.cmpi slt, %113, %116 : vector<32x100xi32>
      %c0_i32_69 = arith.constant 0 : i32
      %118 = arith.cmpi slt, %111, %c0_i32_69 : i32
      %119 = vector.broadcast %118 : i1 to vector<32x100xi1>
      %120 = vector.broadcast %119 : vector<32x100xi1> to vector<32x100xi1>
      %121 = arith.xori %117, %120 : vector<32x100xi1>
      %122 = arith.andi %121, %115 : vector<32x100xi1>
      %123 = vector.broadcast %111 : i32 to vector<32x100xi32>
      %124 = arith.addi %113, %123 : vector<32x100xi32>
      %125 = arith.select %122, %124, %113 : vector<32x100xi1>, vector<32x100xi32>
      %c0_i32_70 = arith.constant 0 : i32
      %126 = vector.broadcast %c0_i32_70 : i32 to vector<32x100xi32>
      %127 = arith.cmpi eq, %125, %126 : vector<32x100xi32>
      %cst_71 = arith.constant 0.000000e+00 : f32
      %128 = vector.broadcast %cst_71 : f32 to vector<32x100xf32>
      %129 = arith.select %127, %109, %128 : vector<32x100xi1>, vector<32x100xf32>
      %cst_72 = arith.constant dense<0xFF800000> : vector<100xf32>
      %130 = vector.multi_reduction <maximumf>, %129, %cst_72 [0] : vector<32x100xf32> to vector<100xf32>
      %131 = vector.shape_cast %130 : vector<100xf32> to vector<1x100xf32>
      %c2_i32_73 = arith.constant 2 : i32
      %c0_i32_74 = arith.constant 0 : i32
      %132 = arith.cmpi eq, %c2_i32_73, %c0_i32_74 : i32
      %c1_i32_75 = arith.constant 1 : i32
      %133 = arith.select %132, %c1_i32_75, %c2_i32_73 : i32
      %134 = vector.broadcast %133 : i32 to vector<32x100xi32>
      %135 = arith.remsi %104, %134 : vector<32x100xi32>
      %c0_i32_76 = arith.constant 0 : i32
      %136 = vector.broadcast %c0_i32_76 : i32 to vector<32x100xi32>
      %137 = arith.cmpi ne, %135, %136 : vector<32x100xi32>
      %c0_i32_77 = arith.constant 0 : i32
      %138 = vector.broadcast %c0_i32_77 : i32 to vector<32x100xi32>
      %139 = arith.cmpi slt, %135, %138 : vector<32x100xi32>
      %c0_i32_78 = arith.constant 0 : i32
      %140 = arith.cmpi slt, %133, %c0_i32_78 : i32
      %141 = vector.broadcast %140 : i1 to vector<32x100xi1>
      %142 = vector.broadcast %141 : vector<32x100xi1> to vector<32x100xi1>
      %143 = arith.xori %139, %142 : vector<32x100xi1>
      %144 = arith.andi %143, %137 : vector<32x100xi1>
      %145 = vector.broadcast %133 : i32 to vector<32x100xi32>
      %146 = arith.addi %135, %145 : vector<32x100xi32>
      %147 = arith.select %144, %146, %135 : vector<32x100xi1>, vector<32x100xi32>
      %c1_i32_79 = arith.constant 1 : i32
      %148 = vector.broadcast %c1_i32_79 : i32 to vector<32x100xi32>
      %149 = arith.cmpi eq, %147, %148 : vector<32x100xi32>
      %cst_80 = arith.constant 0.000000e+00 : f32
      %150 = vector.broadcast %cst_80 : f32 to vector<32x100xf32>
      %151 = arith.select %149, %109, %150 : vector<32x100xi1>, vector<32x100xf32>
      %cst_81 = arith.constant dense<0xFF800000> : vector<100xf32>
      %152 = vector.multi_reduction <maximumf>, %151, %cst_81 [0] : vector<32x100xf32> to vector<100xf32>
      %153 = vector.shape_cast %152 : vector<100xf32> to vector<1x100xf32>
      %154 = tpu.concatenate %131, %153 in 0 : vector<1x100xf32>, vector<1x100xf32> -> vector<2x100xf32>
      %c0_82 = arith.constant 0 : index
      %c0_83 = arith.constant 0 : index
      %155 = vector.load %arg10[%c0_82, %c0_83] : memref<2x128xf32, #tpu.memory_space<vmem>>, vector<2x128xf32>
      %156 = arith.truncf %154 : vector<2x100xf32> to vector<2x100xbf16>
      %c0_84 = arith.constant 0 : index
      %c0_85 = arith.constant 0 : index
      %c0_86 = arith.constant 0 : index
      %157 = vector.load %arg8[%c0_84, %c0_85, %c0_86] : memref<1x100x128xbf16, #tpu.memory_space<vmem>>, vector<1x100x128xbf16>
      %158 = vector.shape_cast %157 : vector<1x100x128xbf16> to vector<100x128xbf16>
      %cst_87 = arith.constant dense<0.000000e+00> : vector<2x128xf32>
      %159 = tpu.matmul %156, %158, %cst_87 {dimension_numbers = #tpu.dot_dimension_numbers<[1], [0], [0], [1], [0, 0, 1, 1], [], []>} : vector<2x100xbf16>, vector<100x128xbf16>, vector<2x128xf32> -> vector<2x128xf32>
      %160 = arith.addf %155, %159 : vector<2x128xf32>
      %c0_88 = arith.constant 0 : index
      %c0_89 = arith.constant 0 : index
      %161 = vector.load %arg10[%c0_88, %c0_89] : memref<2x128xf32, #tpu.memory_space<vmem>>, vector<2x128xf32>
      tpu.vector_store %arg10[%c0_88, %c0_89], %160 {strides = array<i32>} : memref<2x128xf32, #tpu.memory_space<vmem>>, vector<2x128xf32>,
    } else {
    }
    return
  }
  func.func @transform_0(%arg0: i32, %arg1: memref<12xi32, #tpu.memory_space<smem>>, %arg2: memref<12xi32, #tpu.memory_space<smem>>, %arg3: memref<12xi32, #tpu.memory_space<smem>>, %arg4: memref<12xi32, #tpu.memory_space<smem>>) -> (i32, i32, i32) {
    %c0_i32 = arith.constant 0 : i32
    %c0_i32_0 = arith.constant 0 : i32
    %c0_i32_1 = arith.constant 0 : i32
    %c0_i32_2 = arith.constant 0 : i32
    return %c0_i32, %c0_i32_0, %c0_i32_1 : i32, i32, i32
  }
  func.func @transform_1(%arg0: i32, %arg1: memref<12xi32, #tpu.memory_space<smem>>, %arg2: memref<12xi32, #tpu.memory_space<smem>>, %arg3: memref<12xi32, #tpu.memory_space<smem>>, %arg4: memref<12xi32, #tpu.memory_space<smem>>) -> (i32, i32, i32) {
    %c0_i32 = arith.constant 0 : i32
    %c0_i32_0 = arith.constant 0 : i32
    %c0_i32_1 = arith.constant 0 : i32
    return %arg0, %c0_i32, %c0_i32_0 : i32, i32, i32
  }
  func.func @transform_2(%arg0: i32, %arg1: memref<12xi32, #tpu.memory_space<smem>>, %arg2: memref<12xi32, #tpu.memory_space<smem>>, %arg3: memref<12xi32, #tpu.memory_space<smem>>, %arg4: memref<12xi32, #tpu.memory_space<smem>>) -> (i32, i32, i32) {
    %c0_i32 = arith.constant 0 : i32
    %c0_i32_0 = arith.constant 0 : i32
    %c0_i32_1 = arith.constant 0 : i32
    return %arg0, %c0_i32, %c0_i32_0 : i32, i32, i32
  }
  func.func @transform_3(%arg0: i32, %arg1: memref<12xi32, #tpu.memory_space<smem>>, %arg2: memref<12xi32, #tpu.memory_space<smem>>, %arg3: memref<12xi32, #tpu.memory_space<smem>>, %arg4: memref<12xi32, #tpu.memory_space<smem>>) -> (i32, i32, i32) {
    %c0_i32 = arith.constant 0 : i32
    %c0_i32_0 = arith.constant 0 : i32
    %c0_i32_1 = arith.constant 0 : i32
    return %arg0, %c0_i32, %c0_i32_0 : i32, i32, i32
  }
  func.func @transform_4(%arg0: i32, %arg1: memref<12xi32, #tpu.memory_space<smem>>, %arg2: memref<12xi32, #tpu.memory_space<smem>>, %arg3: memref<12xi32, #tpu.memory_space<smem>>, %arg4: memref<12xi32, #tpu.memory_space<smem>>) -> (i32, i32) {
    %c0_i32 = arith.constant 0 : i32
    %c0_i32_0 = arith.constant 0 : i32
    %c0_i32_1 = arith.constant 0 : i32
    return %c0_i32, %c0_i32_0 : i32, i32
  }
  func.func @transform_5(%arg0: i32, %arg1: memref<12xi32, #tpu.memory_space<smem>>, %arg2: memref<12xi32, #tpu.memory_space<smem>>, %arg3: memref<12xi32, #tpu.memory_space<smem>>, %arg4: memref<12xi32, #tpu.memory_space<smem>>) -> (i32, i32) {
    %c0_i32 = arith.constant 0 : i32
    %c0_i32_0 = arith.constant 0 : i32
    %c0_i32_1 = arith.constant 0 : i32
    return %c0_i32, %c0_i32_0 : i32, i32
  }
}

</mosaic_0001>

<llo_original>
// kernel: textcnn_forward.1
$region0: #{textcnn_forward.1}
  #allocation0 [shape = 'u32[]', space=smem, size = 0x4, offset = 0x4, fixed_abs, tag = 'smem constant byte address 0x4 - core index']
  #allocation1 [shape = 'u32[144,128]{1,0:T(1,128)}', space=vmem, size = 0x12000, scoped, tag = 'internal scratch']
  #allocation2 [shape = 'f32[32,100]{1,0:T(8,128)}', space=vmem, size = 0x4000, scoped, tag = 'scratch operand']
  #allocation3 [shape = 's32[1]{0}', space=sflag, size = 0x4, scoped, tag = 'scoped memory for textcnn_forward.1']
  #allocation4 [shape = 'u8[512]{0}', space=smem, size = 0x200, scoped, tag = 'prefetched SMEM operand 0']
  #allocation5 [shape = 'u8[512]{0}', space=smem, size = 0x200, scoped, tag = 'prefetched SMEM operand 1']
  #allocation6 [shape = 'u8[512]{0}', space=smem, size = 0x200, scoped, tag = 'prefetched SMEM operand 2']
  #allocation7 [shape = 'u8[512]{0}', space=smem, size = 0x200, scoped, tag = 'prefetched SMEM operand 3']
  %s0 = inlined_call_operand.hbm [shape: s32[12], index: 0, kind: input, shape index: {}]
  %s1 = inlined_call_operand.hbm [shape: s32[12], index: 1, kind: input, shape index: {}]
  %s2 = inlined_call_operand.hbm [shape: s32[12], index: 2, kind: input, shape index: {}]
  %s3 = inlined_call_operand.hbm [shape: s32[12], index: 3, kind: input, shape index: {}]
  %s4 = inlined_call_operand.hbm [shape: bf16[5,32,3072], index: 4, kind: input, shape index: {}]
  %s5 = inlined_call_operand.hbm [shape: bf16[12,100,3072], index: 5, kind: input, shape index: {}]
  %s6 = inlined_call_operand.hbm [shape: f32[3,1,100], index: 6, kind: input, shape index: {}]
  %s7 = inlined_call_operand.hbm [shape: bf16[3,100,128], index: 7, kind: input, shape index: {}]
  %s8 = inlined_call_operand.hbm [shape: f32[1,128], index: 8, kind: input, shape index: {}]
  %s9 = inlined_call_operand.hbm [shape: f32[2,128], index: 9, kind: output, shape index: {}]
  %s10 = sld [smem:[#allocation0]]
  $region109: #{textcnn_forward.1} parent=0
    _
  %s12 = ssub.s32 1, %s10
  %s13 = scalar_select 0, %s12, %s10
  %15 = dma.hbm_to_smem %s0, 16, [#allocation4], [#allocation3]
  %17 = dma.hbm_to_smem %s1, 16, [#allocation5], [#allocation3]
  %19 = dma.hbm_to_smem %s2, 16, [#allocation6], [#allocation3]
  %21 = dma.hbm_to_smem %s3, 16, [#allocation7], [#allocation3]
  %22 = dma.done [#allocation3], 64
  %23 = sfence
  $region1: #{textcnn_forward.1} parent=0
    #allocation8 [shape = 'u8[983040]{0}', space=vmem, size = 0xf0000, scoped, tag = 'input window, operand 4, single buffered']
    #allocation9 [shape = 's32[2]{0}', space=sflag, size = 0x8, scoped, tag = 'scoped memory for textcnn_forward.1']
    #allocation10 [shape = 's32[2]{0}', space=sflag, size = 0x8, scoped, tag = 'scoped memory for textcnn_forward.1']
    #allocation11 [shape = 'u8[5111808]{0}', space=vmem, size = 0x4e0000, scoped, tag = 'input window, operand 5']
    #allocation12 [shape = 's32[2]{0}', space=sflag, size = 0x8, scoped, tag = 'scoped memory for textcnn_forward.1']
    #allocation13 [shape = 'u8[1024]{0}', space=vmem, size = 0x400, scoped, tag = 'input window, operand 6']
    #allocation14 [shape = 'u8[53248]{0}', space=vmem, size = 0xd000, scoped, tag = 'input window, operand 7']
    #allocation15 [shape = 's32[2]{0}', space=sflag, size = 0x8, scoped, tag = 'scoped memory for textcnn_forward.1']
    #allocation16 [shape = 'u8[512]{0}', space=vmem, size = 0x400, scoped, tag = 'input window, operand 8, single buffered']
    #allocation17 [shape = 'u8[1024]{0}', space=vmem, size = 0x400, scoped, tag = 'output window, operand 0, single buffered']
    %24 = vsyncpa [#allocation9], 0
    %25 = vsyncpa [#allocation12], 0
    %s26 = scalar_lea.sflag [#allocation12], 1
    %27 = vsyncpa %s26, 0
    %28 = vsyncpa [#allocation15], 0
    %s29 = scalar_lea.sflag [#allocation15], 1
    %30 = vsyncpa %s29, 0
    %31 = vsyncpa [#allocation10], 0
    loop: start=0, step=1, limit=5
    $region2: #{textcnn_forward.1} parent=1 // loop_pre_header
      _
    $region3: #{textcnn_forward.1} parent=1 // loop_header
      %s33 = sphi 0, %s37
      %p34 = scmp.ge.s32.totalorder %s33, 5
      %s41 = sphi 0, %s41
      %s43 = sphi 0, %s41
      %s44 = sphi 0, %s43
      %s58 = sphi 0, %s44
      %s64 = sphi 0, %s66
      %s67 = sphi 0, %s64
      %s68 = sphi 0, %s67
      %s84 = sphi 0, %s68
      %s90 = sphi 0, %s92
      %s93 = sphi 0, %s90
      %s94 = sphi 0, %s93
      %s110 = sphi 0, %s94
      %s116 = sphi 0, %s118
      %s119 = sphi 0, %s116
      %s120 = sphi 0, %s119
      %s136 = sphi 0, %s120
      %s140 = sphi 0, %s140
      %s142 = sphi 0, %s140
      %s143 = sphi 0, %s142
      %s157 = sphi 0, %s143
      %s161 = sphi 0, %s161
      %s163 = sphi 0, %s161
      %s164 = sphi 0, %s163
      %s178 = sphi 0, %s164
    $region4: #{textcnn_forward.1} parent=1 // loop_header_branch
      %36 = sbr.rel (%p34) target = $region8
    $region5: #{textcnn_forward.1} parent=1 // loop_body
      %s38 = ssub.s32 %s33, 1
      %s39 = ssub.s32 %s33, 2
      %s40 = sadd.s32 %s33, 1
      %s42 = sadd.s32 %s41, 1
      %p45 = scmp.eq.s32.totalorder %s33, 2
      %p46 = scmp.ne.s32.totalorder %s41, %s43
      %p47 = scmp.eq.s32.totalorder %s33, 0
      %p48 = por %p46, %p47
      %p49 = scmp.ne.s32.totalorder %s41, %s43
      %p50 = scmp.eq.s32.totalorder %s38, 2
      %p51 = por %p49, %p50
      %p52 = scmp.ne.s32.totalorder %s43, %s44
      %p53 = scmp.eq.s32.totalorder %s38, 0
      %p54 = por %p52, %p53
      %p55 = scmp.ne.s32.totalorder %s43, %s44
      %p56 = scmp.eq.s32.totalorder %s39, 2
      %p57 = por %p55, %p56
      %p59 = scmp.ne.s32.totalorder %s44, %s58
      %p60 = scmp.eq.s32.totalorder %s39, 0
      %p61 = por %p59, %p60
      %s62 = ssub.s32 %s33, %s40
      %p63 = scmp.eq.s32.totalorder %s62, 0
      %s65 = sadd.s32 %s64, 1
      %s66 = scalar_select %p63, %s64, %s65
      %p69 = pneg %p63
      %p70 = scmp.eq.s32.totalorder %s33, 2
      %p71 = por %p69, %p70
      %p72 = scmp.ne.s32.totalorder %s64, %s67
      %p73 = scmp.eq.s32.totalorder %s33, 0
      %p74 = por %p72, %p73
      %p75 = scmp.ne.s32.totalorder %s64, %s67
      %p76 = scmp.eq.s32.totalorder %s38, 2
      %p77 = por %p75, %p76
      %p78 = scmp.ne.s32.totalorder %s67, %s68
      %p79 = scmp.eq.s32.totalorder %s38, 0
      %p80 = por %p78, %p79
      %p81 = scmp.ne.s32.totalorder %s67, %s68
      %p82 = scmp.eq.s32.totalorder %s39, 2
      %p83 = por %p81, %p82
      %p85 = scmp.ne.s32.totalorder %s68, %s84
      %p86 = scmp.eq.s32.totalorder %s39, 0
      %p87 = por %p85, %p86
      %s88 = ssub.s32 %s33, %s40
      %p89 = scmp.eq.s32.totalorder %s88, 0
      %s91 = sadd.s32 %s90, 1
      %s92 = scalar_select %p89, %s90, %s91
      %p95 = pneg %p89
      %p96 = scmp.eq.s32.totalorder %s33, 2
      %p97 = por %p95, %p96
      %p98 = scmp.ne.s32.totalorder %s90, %s93
      %p99 = scmp.eq.s32.totalorder %s33, 0
      %p100 = por %p98, %p99
      %p101 = scmp.ne.s32.totalorder %s90, %s93
      %p102 = scmp.eq.s32.totalorder %s38, 2
      %p103 = por %p101, %p102
      %p104 = scmp.ne.s32.totalorder %s93, %s94
      %p105 = scmp.eq.s32.totalorder %s38, 0
      %p106 = por %p104, %p105
      %p107 = scmp.ne.s32.totalorder %s93, %s94
      %p108 = scmp.eq.s32.totalorder %s39, 2
      %p109 = por %p107, %p108
      %p111 = scmp.ne.s32.totalorder %s94, %s110
      %p112 = scmp.eq.s32.totalorder %s39, 0
      %p113 = por %p111, %p112
      %s114 = ssub.s32 %s33, %s40
      %p115 = scmp.eq.s32.totalorder %s114, 0
      %s117 = sadd.s32 %s116, 1
      %s118 = scalar_select %p115, %s116, %s117
      %p121 = pneg %p115
      %p122 = scmp.eq.s32.totalorder %s33, 2
      %p123 = por %p121, %p122
      %p124 = scmp.ne.s32.totalorder %s116, %s119
      %p125 = scmp.eq.s32.totalorder %s33, 0
      %p126 = por %p124, %p125
      %p127 = scmp.ne.s32.totalorder %s116, %s119
      %p128 = scmp.eq.s32.totalorder %s38, 2
      %p129 = por %p127, %p128
      %p130 = scmp.ne.s32.totalorder %s119, %s120
      %p131 = scmp.eq.s32.totalorder %s38, 0
      %p132 = por %p130, %p131
      %p133 = scmp.ne.s32.totalorder %s119, %s120
      %p134 = scmp.eq.s32.totalorder %s39, 2
      %p135 = por %p133, %p134
      %p137 = scmp.ne.s32.totalorder %s120, %s136
      %p138 = scmp.eq.s32.totalorder %s39, 0
      %p139 = por %p137, %p138
      %s141 = sadd.s32 %s140, 1
      %p144 = scmp.eq.s32.totalorder %s33, 2
      %p145 = scmp.ne.s32.totalorder %s140, %s142
      %p146 = scmp.eq.s32.totalorder %s33, 0
      %p147 = por %p145, %p146
      %p148 = scmp.ne.s32.totalorder %s140, %s142
      %p149 = scmp.eq.s32.totalorder %s38, 2
      %p150 = por %p148, %p149
      %p151 = scmp.ne.s32.totalorder %s142, %s143
      %p152 = scmp.eq.s32.totalorder %s38, 0
      %p153 = por %p151, %p152
      %p154 = scmp.ne.s32.totalorder %s142, %s143
      %p155 = scmp.eq.s32.totalorder %s39, 2
      %p156 = por %p154, %p155
      %p158 = scmp.ne.s32.totalorder %s143, %s157
      %p159 = scmp.eq.s32.totalorder %s39, 0
      %p160 = por %p158, %p159
      %s162 = sadd.s32 %s161, 1
      %p165 = scmp.eq.s32.totalorder %s33, 2
      %p166 = scmp.ne.s32.totalorder %s161, %s163
      %p167 = scmp.eq.s32.totalorder %s33, 0
      %p168 = por %p166, %p167
      %p169 = scmp.ne.s32.totalorder %s161, %s163
      %p170 = scmp.eq.s32.totalorder %s38, 2
      %p171 = por %p169, %p170
      %p172 = scmp.ne.s32.totalorder %s163, %s164
      %p173 = scmp.eq.s32.totalorder %s38, 0
      %p174 = por %p172, %p173
      %p175 = scmp.ne.s32.totalorder %s163, %s164
      %p176 = scmp.eq.s32.totalorder %s39, 2
      %p177 = por %p175, %p176
      %p179 = scmp.ne.s32.totalorder %s164, %s178
      %p180 = scmp.eq.s32.totalorder %s39, 0
      %p181 = por %p179, %p180
      %p182 = scmp.le.s32.totalorder 1, %s33
      %p183 = scmp.lt.s32.totalorder %s33, 4
      %p184 = pnand %p182, %p183
      %p185 = pneg %p184
      // Predicated region
      $region9: #{textcnn_forward.1} parent=5 // pred_check
        _
      $region10: #{textcnn_forward.1} parent=5 // pred_check_branch
        %187 = sbr.rel (%p184) target = $region12
      $region11: #{textcnn_forward.1} parent=5 // pred_region
        %s188 = ssub.s32 %s33, 1
        // Predicated region
        $region13: #{textcnn_forward.1} parent=11 // pred_check
          %p189 = pneg %p54
        $region14: #{textcnn_forward.1} parent=11 // pred_check_branch
          %191 = sbr.rel (%p189) target = $region16
        $region15: #{textcnn_forward.1} parent=11 // pred_region
          %s193 = ssub.s32 30720, 30720
          %194 = vsyncadd [#allocation9], %s193
          %s195 = sshll.u32 [#allocation8], 4
          %s196 = int_to_ptr.vmem [resolvable:$true] %s195
          %201 = dma.hbm_to_vmem [thread:$0]  %s4, 30720, %s196, [#allocation9], 1536, 1536, 96
        $region16: #{textcnn_forward.1} parent=11 // pred_fallthru
          _
        // Predicated region
        $region17: #{textcnn_forward.1} parent=11 // pred_check
          %p202 = pneg %p153
        $region18: #{textcnn_forward.1} parent=11 // pred_check_branch
          %204 = sbr.rel (%p202) target = $region20
        $region19: #{textcnn_forward.1} parent=11 // pred_region
          %s206 = ssub.s32 16, 16
          %207 = vsyncadd [#allocation15], %s206
          %s209 = sshll.u32 [#allocation16], 4
          %s210 = int_to_ptr.vmem [resolvable:$true] %s209
          %212 = dma.hbm_to_vmem [thread:$0]  %s8, 16, %s210, [#allocation15]
        $region20: #{textcnn_forward.1} parent=11 // pred_fallthru
          _
      $region12: #{textcnn_forward.1} parent=5 // pred_fallthru
        _
      %p213 = scmp.lt.s32.totalorder %s33, 3
      // Predicated region
      $region21: #{textcnn_forward.1} parent=5 // pred_check
        %p214 = pneg %p213
      $region22: #{textcnn_forward.1} parent=5 // pred_check_branch
        %216 = sbr.rel (%p214) target = $region24
      $region23: #{textcnn_forward.1} parent=5 // pred_region
        // Predicated region
        $region25: #{textcnn_forward.1} parent=23 // pred_check
          %p217 = pneg %p74
        $region26: #{textcnn_forward.1} parent=23 // pred_check_branch
          %219 = sbr.rel (%p217) target = $region28
        $region27: #{textcnn_forward.1} parent=23 // pred_region
          %s220 = sand.u32 %s33, 1
          %s221 = scalar_lea.sflag [#allocation12], %s220
          %s222 = sand.u32 %s64, 1
          %s223 = smul.addr %s222, 4992
          %s224 = scalar_lea.vmem [#allocation11], %s223
          %s225 = smul.u32 4, %s33
          %s227 = ssub.s32 79872, 79872
          %228 = vsyncadd %s221, %s227
          %s229 = smul.addr %s225, 312
          %s230 = smul.addr %s229, 64
          %s231 = scalar_lea.hbm %s5, %s230
          %s232 = sshll.u32 %s224, 4
          %s233 = int_to_ptr.vmem [resolvable:$true] %s232
          %238 = dma.hbm_to_vmem [thread:$0]  %s231, 79872, %s233, %s221, 1536, 1536, 96
        $region28: #{textcnn_forward.1} parent=23 // pred_fallthru
          _
        // Predicated region
        $region29: #{textcnn_forward.1} parent=23 // pred_check
          %p239 = pneg %p100
        $region30: #{textcnn_forward.1} parent=23 // pred_check_branch
          %241 = sbr.rel (%p239) target = $region32
        $region31: #{textcnn_forward.1} parent=23 // pred_region
          %s242 = sand.u32 %s33, 1
          %s243 = scalar_lea.sflag [#allocation12], %s242
          %s244 = sand.u32 %s90, 1
          %s245 = scalar_lea.vmem [#allocation13], %s244
          %s247 = ssub.s32 16, 16
          %248 = vsyncadd %s243, %s247
          %s249 = smul.addr %s33, 16
          %s250 = scalar_lea.hbm %s6, %s249
          %s252 = sshll.u32 %s245, 4
          %s253 = int_to_ptr.vmem [resolvable:$true] %s252
          %255 = dma.hbm_to_vmem [thread:$0]  %s250, 16, %s253, %s243
        $region32: #{textcnn_forward.1} parent=23 // pred_fallthru
          _
        // Predicated region
        $region33: #{textcnn_forward.1} parent=23 // pred_check
          %p256 = pneg %p126
        $region34: #{textcnn_forward.1} parent=23 // pred_check_branch
          %258 = sbr.rel (%p256) target = $region36
        $region35: #{textcnn_forward.1} parent=23 // pred_region
          %s259 = sand.u32 %s33, 1
          %s260 = scalar_lea.sflag [#allocation15], %s259
          %s261 = sand.u32 %s116, 1
          %s262 = smul.addr %s261, 52
          %s263 = scalar_lea.vmem [#allocation14], %s262
          %s265 = ssub.s32 832, 832
          %266 = vsyncadd %s260, %s265
          %s267 = smul.addr %s33, 13
          %s268 = smul.addr %s267, 64
          %s269 = scalar_lea.hbm %s7, %s268
          %s270 = sshll.u32 %s263, 4
          %s271 = int_to_ptr.vmem [resolvable:$true] %s270
          %276 = dma.hbm_to_vmem [thread:$0]  %s269, 832, %s271, %s260, 64, 64, 4
        $region36: #{textcnn_forward.1} parent=23 // pred_fallthru
          _
      $region24: #{textcnn_forward.1} parent=5 // pred_fallthru
        _
      %p277 = scmp.le.s32.totalorder 1, %s33
      %p278 = scmp.lt.s32.totalorder %s33, 4
      %p279 = pnand %p277, %p278
      %p280 = pneg %p279
      // Predicated region
      $region37: #{textcnn_forward.1} parent=5 // pred_check
        _
      $region38: #{textcnn_forward.1} parent=5 // pred_check_branch
        %282 = sbr.rel (%p279) target = $region40
      $region39: #{textcnn_forward.1} parent=5 // pred_region
        %s283 = ssub.s32 %s33, 1
        // Predicated region
        $region41: #{textcnn_forward.1} parent=39 // pred_check
          %p284 = pneg %p54
        $region42: #{textcnn_forward.1} parent=39 // pred_check_branch
          %286 = sbr.rel (%p284) target = $region44
        $region43: #{textcnn_forward.1} parent=39 // pred_region
          %287 = dma.done [#allocation9], 30720
        $region44: #{textcnn_forward.1} parent=39 // pred_fallthru
          _
        %s288 = sand.u32 %s38, 1
        %s289 = scalar_lea.sflag [#allocation12], %s288
        %s290 = sand.u32 %s67, 1
        %s291 = smul.addr %s290, 4992
        %s292 = scalar_lea.vmem [#allocation11], %s291
        // Predicated region
        $region45: #{textcnn_forward.1} parent=39 // pred_check
          %p293 = pneg %p80
        $region46: #{textcnn_forward.1} parent=39 // pred_check_branch
          %295 = sbr.rel (%p293) target = $region48
        $region47: #{textcnn_forward.1} parent=39 // pred_region
          %296 = dma.done %s289, 79872
        $region48: #{textcnn_forward.1} parent=39 // pred_fallthru
          _
        %s297 = sand.u32 %s38, 1
        %s298 = scalar_lea.sflag [#allocation12], %s297
        %s299 = sand.u32 %s93, 1
        %s300 = scalar_lea.vmem [#allocation13], %s299
        // Predicated region
        $region49: #{textcnn_forward.1} parent=39 // pred_check
          %p301 = pneg %p106
        $region50: #{textcnn_forward.1} parent=39 // pred_check_branch
          %303 = sbr.rel (%p301) target = $region52
        $region51: #{textcnn_forward.1} parent=39 // pred_region
          %304 = dma.done %s298, 16
        $region52: #{textcnn_forward.1} parent=39 // pred_fallthru
          _
        %s305 = sand.u32 %s38, 1
        %s306 = scalar_lea.sflag [#allocation15], %s305
        %s307 = sand.u32 %s119, 1
        %s308 = smul.addr %s307, 52
        %s309 = scalar_lea.vmem [#allocation14], %s308
        // Predicated region
        $region53: #{textcnn_forward.1} parent=39 // pred_check
          %p310 = pneg %p132
        $region54: #{textcnn_forward.1} parent=39 // pred_check_branch
          %312 = sbr.rel (%p310) target = $region56
        $region55: #{textcnn_forward.1} parent=39 // pred_region
          %313 = dma.done %s306, 832
        $region56: #{textcnn_forward.1} parent=39 // pred_fallthru
          _
        // Predicated region
        $region57: #{textcnn_forward.1} parent=39 // pred_check
          %p314 = pneg %p153
        $region58: #{textcnn_forward.1} parent=39 // pred_check_branch
          %316 = sbr.rel (%p314) target = $region60
        $region59: #{textcnn_forward.1} parent=39 // pred_region
          %317 = dma.done [#allocation15], 16
        $region60: #{textcnn_forward.1} parent=39 // pred_fallthru
          _
        %p318 = pneg %p54
        %p319 = pneg %p51
        %s320 = sand.u32 %s38, 1
        %s321 = scalar_lea.sflag [#allocation12], %s320
        %s322 = sand.u32 %s67, 1
        %s323 = smul.addr %s322, 4992
        %s324 = scalar_lea.vmem [#allocation11], %s323
        %p325 = pneg %p80
        %p326 = pneg %p77
        %s327 = sand.u32 %s38, 1
        %s328 = scalar_lea.sflag [#allocation12], %s327
        %s329 = sand.u32 %s93, 1
        %s330 = scalar_lea.vmem [#allocation13], %s329
        %p331 = pneg %p106
        %p332 = pneg %p103
        %s333 = sand.u32 %s38, 1
        %s334 = scalar_lea.sflag [#allocation15], %s333
        %s335 = sand.u32 %s119, 1
        %s336 = smul.addr %s335, 52
        %s337 = scalar_lea.vmem [#allocation14], %s336
        %p338 = pneg %p132
        %p339 = pneg %p129
        %p340 = pneg %p153
        %p341 = pneg %p150
        %p342 = pneg %p174
        %p343 = pneg %p171
        %s344 = smul.u32 4, %s38
        %p346 = scmp.eq.s32.totalorder %s38, 0
        // Predicated region
        $region61: #{textcnn_forward.1} parent=39 // pred_check
          %p347 = pneg %p346
        $region62: #{textcnn_forward.1} parent=39 // pred_check_branch
          %349 = sbr.rel (%p347) target = $region64
        $region63: #{textcnn_forward.1} parent=39 // pred_region
          %v350 = vld [vmem:[#allocation16] sm:$0x1]
          %v352 = vlaneseq
          %v353 = vshrl.u32 %v352, 7
          %v354 = vsub.s32 0, %v353
          %v355 = vrot.slane %v350, %v354
          %357 = vst [vmem:[#allocation17] sm:$0x3] %v355
        $region64: #{textcnn_forward.1} parent=39 // pred_fallthru
          _
        %s358 = smul.u32 %s38, 4
        %s359 = sld [smem:[#allocation5 + %s358]]
        %p360 = scmp.eq.s32.totalorder %s359, 1
        // Predicated region
        $region65: #{textcnn_forward.1} parent=39 // pred_check
          %p361 = pneg %p360
        $region66: #{textcnn_forward.1} parent=39 // pred_check_branch
          %363 = sbr.rel (%p361) target = $region68
        $region67: #{textcnn_forward.1} parent=39 // pred_region
          %vm364 = vcmask 818176
          %365 = vst.msk [vmem:[#allocation2] sm:$0xff] %vm364, 0.0
          %366 = vst.msk [vmem:[#allocation2 + $0x8] sm:$0xff] %vm364, 0.0
          %367 = vst.msk [vmem:[#allocation2 + $0x10] sm:$0xff] %vm364, 0.0
          %368 = vst.msk [vmem:[#allocation2 + $0x18] sm:$0xff] %vm364, 0.0
        $region68: #{textcnn_forward.1} parent=39 // pred_fallthru
          _
        %s369 = sld [smem:[#allocation4 + %s358]]
        %s370 = smul.u32 %s369, 96
        %s371 = smul.addr %s370, 4
        %s372 = scalar_lea.vmem [#allocation8], %s371
        %v373 = vld [vmem:[%s372] sm:$0xff]
        %v374 = vld [vmem:[%s372 + $0x8] sm:$0xff]
        %v375 = vld [vmem:[%s372 + $0x10] sm:$0xff]
        %v376 = vld [vmem:[%s372 + $0x18] sm:$0xff]
        %v377 = vld [vmem:[%s372 + $0x20] sm:$0xff]
        %v378 = vld [vmem:[%s372 + $0x28] sm:$0xff]
        %v379 = vld [vmem:[%s372 + $0x30] sm:$0xff]
        %v380 = vld [vmem:[%s372 + $0x38] sm:$0xff]
        %v381 = vld [vmem:[%s372 + $0x40] sm:$0xff]
        %v382 = vld [vmem:[%s372 + $0x48] sm:$0xff]
        %v383 = vld [vmem:[%s372 + $0x50] sm:$0xff]
        %v384 = vld [vmem:[%s372 + $0x58] sm:$0xff]
        %v385 = vld [vmem:[%s372 + $0x60] sm:$0xff]
        %v386 = vld [vmem:[%s372 + $0x68] sm:$0xff]
        %v387 = vld [vmem:[%s372 + $0x70] sm:$0xff]
        %v388 = vld [vmem:[%s372 + $0x78] sm:$0xff]
        %v389 = vld [vmem:[%s372 + $0x80] sm:$0xff]
        %v390 = vld [vmem:[%s372 + $0x88] sm:$0xff]
        %v391 = vld [vmem:[%s372 + $0x90] sm:$0xff]
        %v392 = vld [vmem:[%s372 + $0x98] sm:$0xff]
        %v393 = vld [vmem:[%s372 + $0xa0] sm:$0xff]
        %v394 = vld [vmem:[%s372 + $0xa8] sm:$0xff]
        %v395 = vld [vmem:[%s372 + $0xb0] sm:$0xff]
        %v396 = vld [vmem:[%s372 + $0xb8] sm:$0xff]
        %v397 = vld [vmem:[%s372 + $0xc0] sm:$0xff]
        %v398 = vld [vmem:[%s372 + $0xc8] sm:$0xff]
        %v399 = vld [vmem:[%s372 + $0xd0] sm:$0xff]
        %v400 = vld [vmem:[%s372 + $0xd8] sm:$0xff]
        %v401 = vld [vmem:[%s372 + $0xe0] sm:$0xff]
        %v402 = vld [vmem:[%s372 + $0xe8] sm:$0xff]
        %v403 = vld [vmem:[%s372 + $0xf0] sm:$0xff]
        %v404 = vld [vmem:[%s372 + $0xf8] sm:$0xff]
        %v405 = vld [vmem:[%s372 + $0x100] sm:$0xff]
        %v406 = vld [vmem:[%s372 + $0x108] sm:$0xff]
        %v407 = vld [vmem:[%s372 + $0x110] sm:$0xff]
        %v408 = vld [vmem:[%s372 + $0x118] sm:$0xff]
        %v409 = vld [vmem:[%s372 + $0x120] sm:$0xff]
        %v410 = vld [vmem:[%s372 + $0x128] sm:$0xff]
        %v411 = vld [vmem:[%s372 + $0x130] sm:$0xff]
        %v412 = vld [vmem:[%s372 + $0x138] sm:$0xff]
        %v413 = vld [vmem:[%s372 + $0x140] sm:$0xff]
        %v414 = vld [vmem:[%s372 + $0x148] sm:$0xff]
        %v415 = vld [vmem:[%s372 + $0x150] sm:$0xff]
        %v416 = vld [vmem:[%s372 + $0x158] sm:$0xff]
        %v417 = vld [vmem:[%s372 + $0x160] sm:$0xff]
        %v418 = vld [vmem:[%s372 + $0x168] sm:$0xff]
        %v419 = vld [vmem:[%s372 + $0x170] sm:$0xff]
        %v420 = vld [vmem:[%s372 + $0x178] sm:$0xff]
        %v421 = vld [vmem:[%s292] sm:$0xff]
        %v422 = vld [vmem:[%s292 + $0x8] sm:$0xff]
        %v423 = vld [vmem:[%s292 + $0x10] sm:$0xff]
        %v424 = vld [vmem:[%s292 + $0x18] sm:$0xff]
        %v425 = vld [vmem:[%s292 + $0x20] sm:$0xff]
        %v426 = vld [vmem:[%s292 + $0x28] sm:$0xff]
        %v427 = vld [vmem:[%s292 + $0x30] sm:$0xff]
        %v428 = vld [vmem:[%s292 + $0x38] sm:$0xff]
        %v429 = vld [vmem:[%s292 + $0x40] sm:$0xff]
        %v430 = vld [vmem:[%s292 + $0x48] sm:$0xff]
        %v431 = vld [vmem:[%s292 + $0x50] sm:$0xff]
        %v432 = vld [vmem:[%s292 + $0x58] sm:$0xff]
        %v433 = vld [vmem:[%s292 + $0x60] sm:$0xff]
        %v434 = vld [vmem:[%s292 + $0x68] sm:$0xff]
        %v435 = vld [vmem:[%s292 + $0x70] sm:$0xff]
        %v436 = vld [vmem:[%s292 + $0x78] sm:$0xff]
        %v437 = vld [vmem:[%s292 + $0x80] sm:$0xff]
        %v438 = vld [vmem:[%s292 + $0x88] sm:$0xff]
        %v439 = vld [vmem:[%s292 + $0x90] sm:$0xff]
        %v440 = vld [vmem:[%s292 + $0x98] sm:$0xff]
        %v441 = vld [vmem:[%s292 + $0xa0] sm:$0xff]
        %v442 = vld [vmem:[%s292 + $0xa8] sm:$0xff]
        %v443 = vld [vmem:[%s292 + $0xb0] sm:$0xff]
        %v444 = vld [vmem:[%s292 + $0xb8] sm:$0xff]
        %v445 = vld [vmem:[%s292 + $0xc0] sm:$0xff]
        %v446 = vld [vmem:[%s292 + $0xc8] sm:$0xff]
        %v447 = vld [vmem:[%s292 + $0xd0] sm:$0xff]
        %v448 = vld [vmem:[%s292 + $0xd8] sm:$0xff]
        %v449 = vld [vmem:[%s292 + $0xe0] sm:$0xff]
        %v450 = vld [vmem:[%s292 + $0xe8] sm:$0xff]
        %v451 = vld [vmem:[%s292 + $0xf0] sm:$0xff]
        %v452 = vld [vmem:[%s292 + $0xf8] sm:$0xff]
        %v453 = vld [vmem:[%s292 + $0x100] sm:$0xff]
        %v454 = vld [vmem:[%s292 + $0x108] sm:$0xff]
        %v455 = vld [vmem:[%s292 + $0x110] sm:$0xff]
        %v456 = vld [vmem:[%s292 + $0x118] sm:$0xff]
        %v457 = vld [vmem:[%s292 + $0x120] sm:$0xff]
        %v458 = vld [vmem:[%s292 + $0x128] sm:$0xff]
        %v459 = vld [vmem:[%s292 + $0x130] sm:$0xff]
        %v460 = vld [vmem:[%s292 + $0x138] sm:$0xff]
        %v461 = vld [vmem:[%s292 + $0x140] sm:$0xff]
        %v462 = vld [vmem:[%s292 + $0x148] sm:$0xff]
        %v463 = vld [vmem:[%s292 + $0x150] sm:$0xff]
        %v464 = vld [vmem:[%s292 + $0x158] sm:$0xff]
        %v465 = vld [vmem:[%s292 + $0x160] sm:$0xff]
        %v466 = vld [vmem:[%s292 + $0x168] sm:$0xff]
        %v467 = vld [vmem:[%s292 + $0x170] sm:$0xff]
        %v468 = vld [vmem:[%s292 + $0x178] sm:$0xff]
        %v469 = vld [vmem:[%s292 + $0x180] sm:$0xff]
        %v470 = vld [vmem:[%s292 + $0x188] sm:$0xff]
        %v471 = vld [vmem:[%s292 + $0x190] sm:$0xff]
        %v472 = vld [vmem:[%s292 + $0x198] sm:$0xff]
        %v473 = vld [vmem:[%s292 + $0x1a0] sm:$0xff]
        %v474 = vld [vmem:[%s292 + $0x1a8] sm:$0xff]
        %v475 = vld [vmem:[%s292 + $0x1b0] sm:$0xff]
        %v476 = vld [vmem:[%s292 + $0x1b8] sm:$0xff]
        %v477 = vld [vmem:[%s292 + $0x1c0] sm:$0xff]
        %v478 = vld [vmem:[%s292 + $0x1c8] sm:$0xff]
        %v479 = vld [vmem:[%s292 + $0x1d0] sm:$0xff]
        %v480 = vld [vmem:[%s292 + $0x1d8] sm:$0xff]
        %v481 = vld [vmem:[%s292 + $0x1e0] sm:$0xff]
        %v482 = vld [vmem:[%s292 + $0x1e8] sm:$0xff]
        %v483 = vld [vmem:[%s292 + $0x1f0] sm:$0xff]
        %v484 = vld [vmem:[%s292 + $0x1f8] sm:$0xff]
        %v485 = vld [vmem:[%s292 + $0x200] sm:$0xff]
        %v486 = vld [vmem:[%s292 + $0x208] sm:$0xff]
        %v487 = vld [vmem:[%s292 + $0x210] sm:$0xff]
        %v488 = vld [vmem:[%s292 + $0x218] sm:$0xff]
        %v489 = vld [vmem:[%s292 + $0x220] sm:$0xff]
        %v490 = vld [vmem:[%s292 + $0x228] sm:$0xff]
        %v491 = vld [vmem:[%s292 + $0x230] sm:$0xff]
        %v492 = vld [vmem:[%s292 + $0x238] sm:$0xff]
        %v493 = vld [vmem:[%s292 + $0x240] sm:$0xff]
        %v494 = vld [vmem:[%s292 + $0x248] sm:$0xff]
        %v495 = vld [vmem:[%s292 + $0x250] sm:$0xff]
        %v496 = vld [vmem:[%s292 + $0x258] sm:$0xff]
        %v497 = vld [vmem:[%s292 + $0x260] sm:$0xff]
        %v498 = vld [vmem:[%s292 + $0x268] sm:$0xff]
        %v499 = vld [vmem:[%s292 + $0x270] sm:$0xff]
        %v500 = vld [vmem:[%s292 + $0x278] sm:$0xff]
        %v501 = vld [vmem:[%s292 + $0x280] sm:$0xff]
        %v502 = vld [vmem:[%s292 + $0x288] sm:$0xff]
        %v503 = vld [vmem:[%s292 + $0x290] sm:$0xff]
        %v504 = vld [vmem:[%s292 + $0x298] sm:$0xff]
        %v505 = vld [vmem:[%s292 + $0x2a0] sm:$0xff]
        %v506 = vld [vmem:[%s292 + $0x2a8] sm:$0xff]
        %v507 = vld [vmem:[%s292 + $0x2b0] sm:$0xff]
        %v508 = vld [vmem:[%s292 + $0x2b8] sm:$0xff]
        %v509 = vld [vmem:[%s292 + $0x2c0] sm:$0xff]
        %v510 = vld [vmem:[%s292 + $0x2c8] sm:$0xff]
        %v511 = vld [vmem:[%s292 + $0x2d0] sm:$0xff]
        %v512 = vld [vmem:[%s292 + $0x2d8] sm:$0xff]
        %v513 = vld [vmem:[%s292 + $0x2e0] sm:$0xff]
        %v514 = vld [vmem:[%s292 + $0x2e8] sm:$0xff]
        %v515 = vld [vmem:[%s292 + $0x2f0] sm:$0xff]
        %v516 = vld [vmem:[%s292 + $0x2f8] sm:$0xff]
        %v517 = vld [vmem:[%s292 + $0x300] sm:$0xff]
        %v518 = vld [vmem:[%s292 + $0x308] sm:$0xff]
        %v519 = vld [vmem:[%s292 + $0x310] sm:$0xff]
        %v520 = vld [vmem:[%s292 + $0x318] sm:$0xff]
        %v521 = vld [vmem:[%s292 + $0x320] sm:$0xff]
        %v522 = vld [vmem:[%s292 + $0x328] sm:$0xff]
        %v523 = vld [vmem:[%s292 + $0x330] sm:$0xff]
        %v524 = vld [vmem:[%s292 + $0x338] sm:$0xff]
        %v525 = vld [vmem:[%s292 + $0x340] sm:$0xff]
        %v526 = vld [vmem:[%s292 + $0x348] sm:$0xff]
        %v527 = vld [vmem:[%s292 + $0x350] sm:$0xff]
        %v528 = vld [vmem:[%s292 + $0x358] sm:$0xff]
        %v529 = vld [vmem:[%s292 + $0x360] sm:$0xff]
        %v530 = vld [vmem:[%s292 + $0x368] sm:$0xff]
        %v531 = vld [vmem:[%s292 + $0x370] sm:$0xff]
        %v532 = vld [vmem:[%s292 + $0x378] sm:$0xff]
        %v533 = vld [vmem:[%s292 + $0x380] sm:$0xff]
        %v534 = vld [vmem:[%s292 + $0x388] sm:$0xff]
        %v535 = vld [vmem:[%s292 + $0x390] sm:$0xff]
        %v536 = vld [vmem:[%s292 + $0x398] sm:$0xff]
        %v537 = vld [vmem:[%s292 + $0x3a0] sm:$0xff]
        %v538 = vld [vmem:[%s292 + $0x3a8] sm:$0xff]
        %v539 = vld [vmem:[%s292 + $0x3b0] sm:$0xff]
        %v540 = vld [vmem:[%s292 + $0x3b8] sm:$0xff]
        %v541 = vld [vmem:[%s292 + $0x3c0] sm:$0xff]
        %v542 = vld [vmem:[%s292 + $0x3c8] sm:$0xff]
        %v543 = vld [vmem:[%s292 + $0x3d0] sm:$0xff]
        %v544 = vld [vmem:[%s292 + $0x3d8] sm:$0xff]
        %v545 = vld [vmem:[%s292 + $0x3e0] sm:$0xff]
        %v546 = vld [vmem:[%s292 + $0x3e8] sm:$0xff]
        %v547 = vld [vmem:[%s292 + $0x3f0] sm:$0xff]
        %v548 = vld [vmem:[%s292 + $0x3f8] sm:$0xff]
        %v549 = vld [vmem:[%s292 + $0x400] sm:$0xff]
        %v550 = vld [vmem:[%s292 + $0x408] sm:$0xff]
        %v551 = vld [vmem:[%s292 + $0x410] sm:$0xff]
        %v552 = vld [vmem:[%s292 + $0x418] sm:$0xff]
        %v553 = vld [vmem:[%s292 + $0x420] sm:$0xff]
        %v554 = vld [vmem:[%s292 + $0x428] sm:$0xff]
        %v555 = vld [vmem:[%s292 + $0x430] sm:$0xff]
        %v556 = vld [vmem:[%s292 + $0x438] sm:$0xff]
        %v557 = vld [vmem:[%s292 + $0x440] sm:$0xff]
        %v558 = vld [vmem:[%s292 + $0x448] sm:$0xff]
        %v559 = vld [vmem:[%s292 + $0x450] sm:$0xff]
        %v560 = vld [vmem:[%s292 + $0x458] sm:$0xff]
        %v561 = vld [vmem:[%s292 + $0x460] sm:$0xff]
        %v562 = vld [vmem:[%s292 + $0x468] sm:$0xff]
        %v563 = vld [vmem:[%s292 + $0x470] sm:$0xff]
        %v564 = vld [vmem:[%s292 + $0x478] sm:$0xff]
        %v565 = vld [vmem:[%s292 + $0x480] sm:$0x33]
        %v566 = vld [vmem:[%s292 + $0x488] sm:$0x33]
        %v567 = vld [vmem:[%s292 + $0x490] sm:$0x33]
        %v568 = vld [vmem:[%s292 + $0x498] sm:$0x33]
        %v569 = vld [vmem:[%s292 + $0x4a0] sm:$0x33]
        %v570 = vld [vmem:[%s292 + $0x4a8] sm:$0x33]
        %v571 = vld [vmem:[%s292 + $0x4b0] sm:$0x33]
        %v572 = vld [vmem:[%s292 + $0x4b8] sm:$0x33]
        %v573 = vld [vmem:[%s292 + $0x4c0] sm:$0x33]
        %v574 = vld [vmem:[%s292 + $0x4c8] sm:$0x33]
        %v575 = vld [vmem:[%s292 + $0x4d0] sm:$0x33]
        %v576 = vld [vmem:[%s292 + $0x4d8] sm:$0x33]
        %v577 = vld [vmem:[#allocation2] sm:$0xff]
        %v578 = vld [vmem:[#allocation2 + $0x8] sm:$0xff]
        %v579 = vld [vmem:[#allocation2 + $0x10] sm:$0xff]
        %v580 = vld [vmem:[#allocation2 + $0x18] sm:$0xff]
        %v629 = vunpack.c.l.b16 %v373
        %v630 = vunpack.c.h.b16 %v373
        %v631 = vunpack.c.l.b16 %v374
        %v632 = vunpack.c.h.b16 %v374
        %v633 = vunpack.c.l.b16 %v375
        %v634 = vunpack.c.h.b16 %v375
        %v635 = vunpack.c.l.b16 %v376
        %v636 = vunpack.c.h.b16 %v376
        %v637 = vunpack.c.l.b16 %v377
        %v638 = vunpack.c.h.b16 %v377
        %v639 = vunpack.c.l.b16 %v378
        %v640 = vunpack.c.h.b16 %v378
        %v641 = vunpack.c.l.b16 %v379
        %v642 = vunpack.c.h.b16 %v379
        %v643 = vunpack.c.l.b16 %v380
        %v644 = vunpack.c.h.b16 %v380
        %v645 = vunpack.c.l.b16 %v381
        %v646 = vunpack.c.h.b16 %v381
        %v647 = vunpack.c.l.b16 %v382
        %v648 = vunpack.c.h.b16 %v382
        %v649 = vunpack.c.l.b16 %v383
        %v650 = vunpack.c.h.b16 %v383
        %v651 = vunpack.c.l.b16 %v384
        %v652 = vunpack.c.h.b16 %v384
        %v653 = vunpack.c.l.b16 %v385
        %v654 = vunpack.c.h.b16 %v385
        %v655 = vunpack.c.l.b16 %v386
        %v656 = vunpack.c.h.b16 %v386
        %v657 = vunpack.c.l.b16 %v387
        %v658 = vunpack.c.h.b16 %v387
        %v659 = vunpack.c.l.b16 %v388
        %v660 = vunpack.c.h.b16 %v388
        %v661 = vunpack.c.l.b16 %v389
        %v662 = vunpack.c.h.b16 %v389
        %v663 = vunpack.c.l.b16 %v390
        %v664 = vunpack.c.h.b16 %v390
        %v665 = vunpack.c.l.b16 %v391
        %v666 = vunpack.c.h.b16 %v391
        %v667 = vunpack.c.l.b16 %v392
        %v668 = vunpack.c.h.b16 %v392
        %v669 = vunpack.c.l.b16 %v393
        %v670 = vunpack.c.h.b16 %v393
        %v671 = vunpack.c.l.b16 %v394
        %v672 = vunpack.c.h.b16 %v394
        %v673 = vunpack.c.l.b16 %v395
        %v674 = vunpack.c.h.b16 %v395
        %v675 = vunpack.c.l.b16 %v396
        %v676 = vunpack.c.h.b16 %v396
        %v677 = vunpack.c.l.b16 %v397
        %v678 = vunpack.c.h.b16 %v397
        %v679 = vunpack.c.l.b16 %v398
        %v680 = vunpack.c.h.b16 %v398
        %v681 = vunpack.c.l.b16 %v399
        %v682 = vunpack.c.h.b16 %v399
        %v683 = vunpack.c.l.b16 %v400
        %v684 = vunpack.c.h.b16 %v400
        %v685 = vunpack.c.l.b16 %v401
        %v686 = vunpack.c.h.b16 %v401
        %v687 = vunpack.c.l.b16 %v402
        %v688 = vunpack.c.h.b16 %v402
        %v689 = vunpack.c.l.b16 %v403
        %v690 = vunpack.c.h.b16 %v403
        %v691 = vunpack.c.l.b16 %v404
        %v692 = vunpack.c.h.b16 %v404
        %v693 = vunpack.c.l.b16 %v405
        %v694 = vunpack.c.h.b16 %v405
        %v695 = vunpack.c.l.b16 %v406
        %v696 = vunpack.c.h.b16 %v406
        %v697 = vunpack.c.l.b16 %v407
        %v698 = vunpack.c.h.b16 %v407
        %v699 = vunpack.c.l.b16 %v408
        %v700 = vunpack.c.h.b16 %v408
        %v701 = vunpack.c.l.b16 %v409
        %v702 = vunpack.c.h.b16 %v409
        %v703 = vunpack.c.l.b16 %v410
        %v704 = vunpack.c.h.b16 %v410
        %v705 = vunpack.c.l.b16 %v411
        %v706 = vunpack.c.h.b16 %v411
        %v707 = vunpack.c.l.b16 %v412
        %v708 = vunpack.c.h.b16 %v412
        %v709 = vunpack.c.l.b16 %v413
        %v710 = vunpack.c.h.b16 %v413
        %v711 = vunpack.c.l.b16 %v414
        %v712 = vunpack.c.h.b16 %v414
        %v713 = vunpack.c.l.b16 %v415
        %v714 = vunpack.c.h.b16 %v415
        %v715 = vunpack.c.l.b16 %v416
        %v716 = vunpack.c.h.b16 %v416
        %v717 = vunpack.c.l.b16 %v417
        %v718 = vunpack.c.h.b16 %v417
        %v719 = vunpack.c.l.b16 %v418
        %v720 = vunpack.c.h.b16 %v418
        %v721 = vunpack.c.l.b16 %v419
        %v722 = vunpack.c.h.b16 %v419
        %v723 = vunpack.c.l.b16 %v420
        %v724 = vunpack.c.h.b16 %v420
        %v725 = vpack.c.b16 %v653, %v629
        %v726 = vpack.c.b16 %v654, %v630
        %v727 = vpack.c.b16 %v655, %v631
        %v728 = vpack.c.b16 %v656, %v632
        %v729 = vpack.c.b16 %v657, %v633
        %v730 = vpack.c.b16 %v658, %v634
        %v731 = vpack.c.b16 %v659, %v635
        %v732 = vpack.c.b16 %v660, %v636
        %v733 = vpack.c.b16 %v661, %v637
        %v734 = vpack.c.b16 %v662, %v638
        %v735 = vpack.c.b16 %v663, %v639
        %v736 = vpack.c.b16 %v664, %v640
        %v737 = vpack.c.b16 %v665, %v641
        %v738 = vpack.c.b16 %v666, %v642
        %v739 = vpack.c.b16 %v667, %v643
        %v740 = vpack.c.b16 %v668, %v644
        %v741 = vpack.c.b16 %v669, %v645
        %v742 = vpack.c.b16 %v670, %v646
        %v743 = vpack.c.b16 %v671, %v647
        %v744 = vpack.c.b16 %v672, %v648
        %v745 = vpack.c.b16 %v673, %v649
        %v746 = vpack.c.b16 %v674, %v650
        %v747 = vpack.c.b16 %v675, %v651
        %v748 = vpack.c.b16 %v676, %v652
        %v749 = vpack.c.b16 %v701, %v677
        %v750 = vpack.c.b16 %v702, %v678
        %v751 = vpack.c.b16 %v703, %v679
        %v752 = vpack.c.b16 %v704, %v680
        %v753 = vpack.c.b16 %v705, %v681
        %v754 = vpack.c.b16 %v706, %v682
        %v755 = vpack.c.b16 %v707, %v683
        %v756 = vpack.c.b16 %v708, %v684
        %v757 = vpack.c.b16 %v709, %v685
        %v758 = vpack.c.b16 %v710, %v686
        %v759 = vpack.c.b16 %v711, %v687
        %v760 = vpack.c.b16 %v712, %v688
        %v761 = vpack.c.b16 %v713, %v689
        %v762 = vpack.c.b16 %v714, %v690
        %v763 = vpack.c.b16 %v715, %v691
        %v764 = vpack.c.b16 %v716, %v692
        %v765 = vpack.c.b16 %v717, %v693
        %v766 = vpack.c.b16 %v718, %v694
        %v767 = vpack.c.b16 %v719, %v695
        %v768 = vpack.c.b16 %v720, %v696
        %v769 = vpack.c.b16 %v721, %v697
        %v770 = vpack.c.b16 %v722, %v698
        %v771 = vpack.c.b16 %v723, %v699
        %v772 = vpack.c.b16 %v724, %v700
        %v977 = vunpack.c.l.b16 %v421
        %v978 = vunpack.c.h.b16 %v421
        %v979 = vunpack.c.l.b16 %v422
        %v980 = vunpack.c.h.b16 %v422
        %v981 = vunpack.c.l.b16 %v423
        %v982 = vunpack.c.h.b16 %v423
        %v983 = vunpack.c.l.b16 %v424
        %v984 = vunpack.c.h.b16 %v424
        %v985 = vunpack.c.l.b16 %v425
        %v986 = vunpack.c.h.b16 %v425
        %v987 = vunpack.c.l.b16 %v426
        %v988 = vunpack.c.h.b16 %v426
        %v989 = vunpack.c.l.b16 %v427
        %v990 = vunpack.c.h.b16 %v427
        %v991 = vunpack.c.l.b16 %v428
        %v992 = vunpack.c.h.b16 %v428
        %v993 = vunpack.c.l.b16 %v429
        %v994 = vunpack.c.h.b16 %v429
        %v995 = vunpack.c.l.b16 %v430
        %v996 = vunpack.c.h.b16 %v430
        %v997 = vunpack.c.l.b16 %v431
        %v998 = vunpack.c.h.b16 %v431
        %v999 = vunpack.c.l.b16 %v432
        %v1000 = vunpack.c.h.b16 %v432
        %v1001 = vunpack.c.l.b16 %v433
        %v1002 = vunpack.c.h.b16 %v433
        %v1003 = vunpack.c.l.b16 %v434
        %v1004 = vunpack.c.h.b16 %v434
        %v1005 = vunpack.c.l.b16 %v435
        %v1006 = vunpack.c.h.b16 %v435
        %v1007 = vunpack.c.l.b16 %v436
        %v1008 = vunpack.c.h.b16 %v436
        %v1009 = vunpack.c.l.b16 %v437
        %v1010 = vunpack.c.h.b16 %v437
        %v1011 = vunpack.c.l.b16 %v438
        %v1012 = vunpack.c.h.b16 %v438
        %v1013 = vunpack.c.l.b16 %v439
        %v1014 = vunpack.c.h.b16 %v439
        %v1015 = vunpack.c.l.b16 %v440
        %v1016 = vunpack.c.h.b16 %v440
        %v1017 = vunpack.c.l.b16 %v441
        %v1018 = vunpack.c.h.b16 %v441
        %v1019 = vunpack.c.l.b16 %v442
        %v1020 = vunpack.c.h.b16 %v442
        %v1021 = vunpack.c.l.b16 %v443
        %v1022 = vunpack.c.h.b16 %v443
        %v1023 = vunpack.c.l.b16 %v444
        %v1024 = vunpack.c.h.b16 %v444
        %v1025 = vunpack.c.l.b16 %v445
        %v1026 = vunpack.c.h.b16 %v445
        %v1027 = vunpack.c.l.b16 %v446
        %v1028 = vunpack.c.h.b16 %v446
        %v1029 = vunpack.c.l.b16 %v447
        %v1030 = vunpack.c.h.b16 %v447
        %v1031 = vunpack.c.l.b16 %v448
        %v1032 = vunpack.c.h.b16 %v448
        %v1033 = vunpack.c.l.b16 %v449
        %v1034 = vunpack.c.h.b16 %v449
        %v1035 = vunpack.c.l.b16 %v450
        %v1036 = vunpack.c.h.b16 %v450
        %v1037 = vunpack.c.l.b16 %v451
        %v1038 = vunpack.c.h.b16 %v451
        %v1039 = vunpack.c.l.b16 %v452
        %v1040 = vunpack.c.h.b16 %v452
        %v1041 = vunpack.c.l.b16 %v453
        %v1042 = vunpack.c.h.b16 %v453
        %v1043 = vunpack.c.l.b16 %v454
        %v1044 = vunpack.c.h.b16 %v454
        %v1045 = vunpack.c.l.b16 %v455
        %v1046 = vunpack.c.h.b16 %v455
        %v1047 = vunpack.c.l.b16 %v456
        %v1048 = vunpack.c.h.b16 %v456
        %v1049 = vunpack.c.l.b16 %v457
        %v1050 = vunpack.c.h.b16 %v457
        %v1051 = vunpack.c.l.b16 %v458
        %v1052 = vunpack.c.h.b16 %v458
        %v1053 = vunpack.c.l.b16 %v459
        %v1054 = vunpack.c.h.b16 %v459
        %v1055 = vunpack.c.l.b16 %v460
        %v1056 = vunpack.c.h.b16 %v460
        %v1057 = vunpack.c.l.b16 %v461
        %v1058 = vunpack.c.h.b16 %v461
        %v1059 = vunpack.c.l.b16 %v462
        %v1060 = vunpack.c.h.b16 %v462
        %v1061 = vunpack.c.l.b16 %v463
        %v1062 = vunpack.c.h.b16 %v463
        %v1063 = vunpack.c.l.b16 %v464
        %v1064 = vunpack.c.h.b16 %v464
        %v1065 = vunpack.c.l.b16 %v465
        %v1066 = vunpack.c.h.b16 %v465
        %v1067 = vunpack.c.l.b16 %v466
        %v1068 = vunpack.c.h.b16 %v466
        %v1069 = vunpack.c.l.b16 %v467
        %v1070 = vunpack.c.h.b16 %v467
        %v1071 = vunpack.c.l.b16 %v468
        %v1072 = vunpack.c.h.b16 %v468
        %v1073 = vunpack.c.l.b16 %v469
        %v1074 = vunpack.c.h.b16 %v469
        %v1075 = vunpack.c.l.b16 %v470
        %v1076 = vunpack.c.h.b16 %v470
        %v1077 = vunpack.c.l.b16 %v471
        %v1078 = vunpack.c.h.b16 %v471
        %v1079 = vunpack.c.l.b16 %v472
        %v1080 = vunpack.c.h.b16 %v472
        %v1081 = vunpack.c.l.b16 %v473
        %v1082 = vunpack.c.h.b16 %v473
        %v1083 = vunpack.c.l.b16 %v474
        %v1084 = vunpack.c.h.b16 %v474
        %v1085 = vunpack.c.l.b16 %v475
        %v1086 = vunpack.c.h.b16 %v475
        %v1087 = vunpack.c.l.b16 %v476
        %v1088 = vunpack.c.h.b16 %v476
        %v1089 = vunpack.c.l.b16 %v477
        %v1090 = vunpack.c.h.b16 %v477
        %v1091 = vunpack.c.l.b16 %v478
        %v1092 = vunpack.c.h.b16 %v478
        %v1093 = vunpack.c.l.b16 %v479
        %v1094 = vunpack.c.h.b16 %v479
        %v1095 = vunpack.c.l.b16 %v480
        %v1096 = vunpack.c.h.b16 %v480
        %v1097 = vunpack.c.l.b16 %v481
        %v1098 = vunpack.c.h.b16 %v481
        %v1099 = vunpack.c.l.b16 %v482
        %v1100 = vunpack.c.h.b16 %v482
        %v1101 = vunpack.c.l.b16 %v483
        %v1102 = vunpack.c.h.b16 %v483
        %v1103 = vunpack.c.l.b16 %v484
        %v1104 = vunpack.c.h.b16 %v484
        %v1105 = vunpack.c.l.b16 %v485
        %v1106 = vunpack.c.h.b16 %v485
        %v1107 = vunpack.c.l.b16 %v486
        %v1108 = vunpack.c.h.b16 %v486
        %v1109 = vunpack.c.l.b16 %v487
        %v1110 = vunpack.c.h.b16 %v487
        %v1111 = vunpack.c.l.b16 %v488
        %v1112 = vunpack.c.h.b16 %v488
        %v1113 = vunpack.c.l.b16 %v489
        %v1114 = vunpack.c.h.b16 %v489
        %v1115 = vunpack.c.l.b16 %v490
        %v1116 = vunpack.c.h.b16 %v490
        %v1117 = vunpack.c.l.b16 %v491
        %v1118 = vunpack.c.h.b16 %v491
        %v1119 = vunpack.c.l.b16 %v492
        %v1120 = vunpack.c.h.b16 %v492
        %v1121 = vunpack.c.l.b16 %v493
        %v1122 = vunpack.c.h.b16 %v493
        %v1123 = vunpack.c.l.b16 %v494
        %v1124 = vunpack.c.h.b16 %v494
        %v1125 = vunpack.c.l.b16 %v495
        %v1126 = vunpack.c.h.b16 %v495
        %v1127 = vunpack.c.l.b16 %v496
        %v1128 = vunpack.c.h.b16 %v496
        %v1129 = vunpack.c.l.b16 %v497
        %v1130 = vunpack.c.h.b16 %v497
        %v1131 = vunpack.c.l.b16 %v498
        %v1132 = vunpack.c.h.b16 %v498
        %v1133 = vunpack.c.l.b16 %v499
        %v1134 = vunpack.c.h.b16 %v499
        %v1135 = vunpack.c.l.b16 %v500
        %v1136 = vunpack.c.h.b16 %v500
        %v1137 = vunpack.c.l.b16 %v501
        %v1138 = vunpack.c.h.b16 %v501
        %v1139 = vunpack.c.l.b16 %v502
        %v1140 = vunpack.c.h.b16 %v502
        %v1141 = vunpack.c.l.b16 %v503
        %v1142 = vunpack.c.h.b16 %v503
        %v1143 = vunpack.c.l.b16 %v504
        %v1144 = vunpack.c.h.b16 %v504
        %v1145 = vunpack.c.l.b16 %v505
        %v1146 = vunpack.c.h.b16 %v505
        %v1147 = vunpack.c.l.b16 %v506
        %v1148 = vunpack.c.h.b16 %v506
        %v1149 = vunpack.c.l.b16 %v507
        %v1150 = vunpack.c.h.b16 %v507
        %v1151 = vunpack.c.l.b16 %v508
        %v1152 = vunpack.c.h.b16 %v508
        %v1153 = vunpack.c.l.b16 %v509
        %v1154 = vunpack.c.h.b16 %v509
        %v1155 = vunpack.c.l.b16 %v510
        %v1156 = vunpack.c.h.b16 %v510
        %v1157 = vunpack.c.l.b16 %v511
        %v1158 = vunpack.c.h.b16 %v511
        %v1159 = vunpack.c.l.b16 %v512
        %v1160 = vunpack.c.h.b16 %v512
        %v1161 = vunpack.c.l.b16 %v513
        %v1162 = vunpack.c.h.b16 %v513
        %v1163 = vunpack.c.l.b16 %v514
        %v1164 = vunpack.c.h.b16 %v514
        %v1165 = vunpack.c.l.b16 %v515
        %v1166 = vunpack.c.h.b16 %v515
        %v1167 = vunpack.c.l.b16 %v516
        %v1168 = vunpack.c.h.b16 %v516
        %v1169 = vunpack.c.l.b16 %v517
        %v1170 = vunpack.c.h.b16 %v517
        %v1171 = vunpack.c.l.b16 %v518
        %v1172 = vunpack.c.h.b16 %v518
        %v1173 = vunpack.c.l.b16 %v519
        %v1174 = vunpack.c.h.b16 %v519
        %v1175 = vunpack.c.l.b16 %v520
        %v1176 = vunpack.c.h.b16 %v520
        %v1177 = vunpack.c.l.b16 %v521
        %v1178 = vunpack.c.h.b16 %v521
        %v1179 = vunpack.c.l.b16 %v522
        %v1180 = vunpack.c.h.b16 %v522
        %v1181 = vunpack.c.l.b16 %v523
        %v1182 = vunpack.c.h.b16 %v523
        %v1183 = vunpack.c.l.b16 %v524
        %v1184 = vunpack.c.h.b16 %v524
        %v1185 = vunpack.c.l.b16 %v525
        %v1186 = vunpack.c.h.b16 %v525
        %v1187 = vunpack.c.l.b16 %v526
        %v1188 = vunpack.c.h.b16 %v526
        %v1189 = vunpack.c.l.b16 %v527
        %v1190 = vunpack.c.h.b16 %v527
        %v1191 = vunpack.c.l.b16 %v528
        %v1192 = vunpack.c.h.b16 %v528
        %v1193 = vunpack.c.l.b16 %v529
        %v1194 = vunpack.c.h.b16 %v529
        %v1195 = vunpack.c.l.b16 %v530
        %v1196 = vunpack.c.h.b16 %v530
        %v1197 = vunpack.c.l.b16 %v531
        %v1198 = vunpack.c.h.b16 %v531
        %v1199 = vunpack.c.l.b16 %v532
        %v1200 = vunpack.c.h.b16 %v532
        %v1201 = vunpack.c.l.b16 %v533
        %v1202 = vunpack.c.h.b16 %v533
        %v1203 = vunpack.c.l.b16 %v534
        %v1204 = vunpack.c.h.b16 %v534
        %v1205 = vunpack.c.l.b16 %v535
        %v1206 = vunpack.c.h.b16 %v535
        %v1207 = vunpack.c.l.b16 %v536
        %v1208 = vunpack.c.h.b16 %v536
        %v1209 = vunpack.c.l.b16 %v537
        %v1210 = vunpack.c.h.b16 %v537
        %v1211 = vunpack.c.l.b16 %v538
        %v1212 = vunpack.c.h.b16 %v538
        %v1213 = vunpack.c.l.b16 %v539
        %v1214 = vunpack.c.h.b16 %v539
        %v1215 = vunpack.c.l.b16 %v540
        %v1216 = vunpack.c.h.b16 %v540
        %v1217 = vunpack.c.l.b16 %v541
        %v1218 = vunpack.c.h.b16 %v541
        %v1219 = vunpack.c.l.b16 %v542
        %v1220 = vunpack.c.h.b16 %v542
        %v1221 = vunpack.c.l.b16 %v543
        %v1222 = vunpack.c.h.b16 %v543
        %v1223 = vunpack.c.l.b16 %v544
        %v1224 = vunpack.c.h.b16 %v544
        %v1225 = vunpack.c.l.b16 %v545
        %v1226 = vunpack.c.h.b16 %v545
        %v1227 = vunpack.c.l.b16 %v546
        %v1228 = vunpack.c.h.b16 %v546
        %v1229 = vunpack.c.l.b16 %v547
        %v1230 = vunpack.c.h.b16 %v547
        %v1231 = vunpack.c.l.b16 %v548
        %v1232 = vunpack.c.h.b16 %v548
        %v1233 = vunpack.c.l.b16 %v549
        %v1234 = vunpack.c.h.b16 %v549
        %v1235 = vunpack.c.l.b16 %v550
        %v1236 = vunpack.c.h.b16 %v550
        %v1237 = vunpack.c.l.b16 %v551
        %v1238 = vunpack.c.h.b16 %v551
        %v1239 = vunpack.c.l.b16 %v552
        %v1240 = vunpack.c.h.b16 %v552
        %v1241 = vunpack.c.l.b16 %v553
        %v1242 = vunpack.c.h.b16 %v553
        %v1243 = vunpack.c.l.b16 %v554
        %v1244 = vunpack.c.h.b16 %v554
        %v1245 = vunpack.c.l.b16 %v555
        %v1246 = vunpack.c.h.b16 %v555
        %v1247 = vunpack.c.l.b16 %v556
        %v1248 = vunpack.c.h.b16 %v556
        %v1249 = vunpack.c.l.b16 %v557
        %v1250 = vunpack.c.h.b16 %v557
        %v1251 = vunpack.c.l.b16 %v558
        %v1252 = vunpack.c.h.b16 %v558
        %v1253 = vunpack.c.l.b16 %v559
        %v1254 = vunpack.c.h.b16 %v559
        %v1255 = vunpack.c.l.b16 %v560
        %v1256 = vunpack.c.h.b16 %v560
        %v1257 = vunpack.c.l.b16 %v561
        %v1258 = vunpack.c.h.b16 %v561
        %v1259 = vunpack.c.l.b16 %v562
        %v1260 = vunpack.c.h.b16 %v562
        %v1261 = vunpack.c.l.b16 %v563
        %v1262 = vunpack.c.h.b16 %v563
        %v1263 = vunpack.c.l.b16 %v564
        %v1264 = vunpack.c.h.b16 %v564
        %v1265 = vunpack.c.l.b16 %v565
        %v1266 = vunpack.c.h.b16 %v565
        %v1267 = vunpack.c.l.b16 %v566
        %v1268 = vunpack.c.h.b16 %v566
        %v1269 = vunpack.c.l.b16 %v567
        %v1270 = vunpack.c.h.b16 %v567
        %v1271 = vunpack.c.l.b16 %v568
        %v1272 = vunpack.c.h.b16 %v568
        %v1273 = vunpack.c.l.b16 %v569
        %v1274 = vunpack.c.h.b16 %v569
        %v1275 = vunpack.c.l.b16 %v570
        %v1276 = vunpack.c.h.b16 %v570
        %v1277 = vunpack.c.l.b16 %v571
        %v1278 = vunpack.c.h.b16 %v571
        %v1279 = vunpack.c.l.b16 %v572
        %v1280 = vunpack.c.h.b16 %v572
        %v1281 = vunpack.c.l.b16 %v573
        %v1282 = vunpack.c.h.b16 %v573
        %v1283 = vunpack.c.l.b16 %v574
        %v1284 = vunpack.c.h.b16 %v574
        %v1285 = vunpack.c.l.b16 %v575
        %v1286 = vunpack.c.h.b16 %v575
        %v1287 = vunpack.c.l.b16 %v576
        %v1288 = vunpack.c.h.b16 %v576
        %v1289 = vpack.c.b16 %v1001, %v977
        %v1290 = vpack.c.b16 %v1002, %v978
        %v1291 = vpack.c.b16 %v1003, %v979
        %v1292 = vpack.c.b16 %v1004, %v980
        %v1293 = vpack.c.b16 %v1005, %v981
        %v1294 = vpack.c.b16 %v1006, %v982
        %v1295 = vpack.c.b16 %v1007, %v983
        %v1296 = vpack.c.b16 %v1008, %v984
        %v1297 = vpack.c.b16 %v1009, %v985
        %v1298 = vpack.c.b16 %v1010, %v986
        %v1299 = vpack.c.b16 %v1011, %v987
        %v1300 = vpack.c.b16 %v1012, %v988
        %v1301 = vpack.c.b16 %v1013, %v989
        %v1302 = vpack.c.b16 %v1014, %v990
        %v1303 = vpack.c.b16 %v1015, %v991
        %v1304 = vpack.c.b16 %v1016, %v992
        %v1305 = vpack.c.b16 %v1017, %v993
        %v1306 = vpack.c.b16 %v1018, %v994
        %v1307 = vpack.c.b16 %v1019, %v995
        %v1308 = vpack.c.b16 %v1020, %v996
        %v1309 = vpack.c.b16 %v1021, %v997
        %v1310 = vpack.c.b16 %v1022, %v998
        %v1311 = vpack.c.b16 %v1023, %v999
        %v1312 = vpack.c.b16 %v1024, %v1000
        %v1313 = vpack.c.b16 %v1049, %v1025
        %v1314 = vpack.c.b16 %v1050, %v1026
        %v1315 = vpack.c.b16 %v1051, %v1027
        %v1316 = vpack.c.b16 %v1052, %v1028
        %v1317 = vpack.c.b16 %v1053, %v1029
        %v1318 = vpack.c.b16 %v1054, %v1030
        %v1319 = vpack.c.b16 %v1055, %v1031
        %v1320 = vpack.c.b16 %v1056, %v1032
        %v1321 = vpack.c.b16 %v1057, %v1033
        %v1322 = vpack.c.b16 %v1058, %v1034
        %v1323 = vpack.c.b16 %v1059, %v1035
        %v1324 = vpack.c.b16 %v1060, %v1036
        %v1325 = vpack.c.b16 %v1061, %v1037
        %v1326 = vpack.c.b16 %v1062, %v1038
        %v1327 = vpack.c.b16 %v1063, %v1039
        %v1328 = vpack.c.b16 %v1064, %v1040
        %v1329 = vpack.c.b16 %v1065, %v1041
        %v1330 = vpack.c.b16 %v1066, %v1042
        %v1331 = vpack.c.b16 %v1067, %v1043
        %v1332 = vpack.c.b16 %v1068, %v1044
        %v1333 = vpack.c.b16 %v1069, %v1045
        %v1334 = vpack.c.b16 %v1070, %v1046
        %v1335 = vpack.c.b16 %v1071, %v1047
        %v1336 = vpack.c.b16 %v1072, %v1048
        %v1337 = vpack.c.b16 %v1097, %v1073
        %v1338 = vpack.c.b16 %v1098, %v1074
        %v1339 = vpack.c.b16 %v1099, %v1075
        %v1340 = vpack.c.b16 %v1100, %v1076
        %v1341 = vpack.c.b16 %v1101, %v1077
        %v1342 = vpack.c.b16 %v1102, %v1078
        %v1343 = vpack.c.b16 %v1103, %v1079
        %v1344 = vpack.c.b16 %v1104, %v1080
        %v1345 = vpack.c.b16 %v1105, %v1081
        %v1346 = vpack.c.b16 %v1106, %v1082
        %v1347 = vpack.c.b16 %v1107, %v1083
        %v1348 = vpack.c.b16 %v1108, %v1084
        %v1349 = vpack.c.b16 %v1109, %v1085
        %v1350 = vpack.c.b16 %v1110, %v1086
        %v1351 = vpack.c.b16 %v1111, %v1087
        %v1352 = vpack.c.b16 %v1112, %v1088
        %v1353 = vpack.c.b16 %v1113, %v1089
        %v1354 = vpack.c.b16 %v1114, %v1090
        %v1355 = vpack.c.b16 %v1115, %v1091
        %v1356 = vpack.c.b16 %v1116, %v1092
        %v1357 = vpack.c.b16 %v1117, %v1093
        %v1358 = vpack.c.b16 %v1118, %v1094
        %v1359 = vpack.c.b16 %v1119, %v1095
        %v1360 = vpack.c.b16 %v1120, %v1096
        %v1361 = vpack.c.b16 %v1145, %v1121
        %v1362 = vpack.c.b16 %v1146, %v1122
        %v1363 = vpack.c.b16 %v1147, %v1123
        %v1364 = vpack.c.b16 %v1148, %v1124
        %v1365 = vpack.c.b16 %v1149, %v1125
        %v1366 = vpack.c.b16 %v1150, %v1126
        %v1367 = vpack.c.b16 %v1151, %v1127
        %v1368 = vpack.c.b16 %v1152, %v1128
        %v1369 = vpack.c.b16 %v1153, %v1129
        %v1370 = vpack.c.b16 %v1154, %v1130
        %v1371 = vpack.c.b16 %v1155, %v1131
        %v1372 = vpack.c.b16 %v1156, %v1132
        %v1373 = vpack.c.b16 %v1157, %v1133
        %v1374 = vpack.c.b16 %v1158, %v1134
        %v1375 = vpack.c.b16 %v1159, %v1135
        %v1376 = vpack.c.b16 %v1160, %v1136
        %v1377 = vpack.c.b16 %v1161, %v1137
        %v1378 = vpack.c.b16 %v1162, %v1138
        %v1379 = vpack.c.b16 %v1163, %v1139
        %v1380 = vpack.c.b16 %v1164, %v1140
        %v1381 = vpack.c.b16 %v1165, %v1141
        %v1382 = vpack.c.b16 %v1166, %v1142
        %v1383 = vpack.c.b16 %v1167, %v1143
        %v1384 = vpack.c.b16 %v1168, %v1144
        %v1385 = vpack.c.b16 %v1193, %v1169
        %v1386 = vpack.c.b16 %v1194, %v1170
        %v1387 = vpack.c.b16 %v1195, %v1171
        %v1388 = vpack.c.b16 %v1196, %v1172
        %v1389 = vpack.c.b16 %v1197, %v1173
        %v1390 = vpack.c.b16 %v1198, %v1174
        %v1391 = vpack.c.b16 %v1199, %v1175
        %v1392 = vpack.c.b16 %v1200, %v1176
        %v1393 = vpack.c.b16 %v1201, %v1177
        %v1394 = vpack.c.b16 %v1202, %v1178
        %v1395 = vpack.c.b16 %v1203, %v1179
        %v1396 = vpack.c.b16 %v1204, %v1180
        %v1397 = vpack.c.b16 %v1205, %v1181
        %v1398 = vpack.c.b16 %v1206, %v1182
        %v1399 = vpack.c.b16 %v1207, %v1183
        %v1400 = vpack.c.b16 %v1208, %v1184
        %v1401 = vpack.c.b16 %v1209, %v1185
        %v1402 = vpack.c.b16 %v1210, %v1186
        %v1403 = vpack.c.b16 %v1211, %v1187
        %v1404 = vpack.c.b16 %v1212, %v1188
        %v1405 = vpack.c.b16 %v1213, %v1189
        %v1406 = vpack.c.b16 %v1214, %v1190
        %v1407 = vpack.c.b16 %v1215, %v1191
        %v1408 = vpack.c.b16 %v1216, %v1192
        %v1409 = vpack.c.b16 %v1241, %v1217
        %v1410 = vpack.c.b16 %v1242, %v1218
        %v1411 = vpack.c.b16 %v1243, %v1219
        %v1412 = vpack.c.b16 %v1244, %v1220
        %v1413 = vpack.c.b16 %v1245, %v1221
        %v1414 = vpack.c.b16 %v1246, %v1222
        %v1415 = vpack.c.b16 %v1247, %v1223
        %v1416 = vpack.c.b16 %v1248, %v1224
        %v1417 = vpack.c.b16 %v1249, %v1225
        %v1418 = vpack.c.b16 %v1250, %v1226
        %v1419 = vpack.c.b16 %v1251, %v1227
        %v1420 = vpack.c.b16 %v1252, %v1228
        %v1421 = vpack.c.b16 %v1253, %v1229
        %v1422 = vpack.c.b16 %v1254, %v1230
        %v1423 = vpack.c.b16 %v1255, %v1231
        %v1424 = vpack.c.b16 %v1256, %v1232
        %v1425 = vpack.c.b16 %v1257, %v1233
        %v1426 = vpack.c.b16 %v1258, %v1234
        %v1427 = vpack.c.b16 %v1259, %v1235
        %v1428 = vpack.c.b16 %v1260, %v1236
        %v1429 = vpack.c.b16 %v1261, %v1237
        %v1430 = vpack.c.b16 %v1262, %v1238
        %v1431 = vpack.c.b16 %v1263, %v1239
        %v1432 = vpack.c.b16 %v1264, %v1240
        %v1433 = vpack.c.b16 %v1265, %v1265
        %v1434 = vpack.c.b16 %v1266, %v1266
        %v1435 = vpack.c.b16 %v1267, %v1267
        %v1436 = vpack.c.b16 %v1268, %v1268
        %v1437 = vpack.c.b16 %v1269, %v1269
        %v1438 = vpack.c.b16 %v1270, %v1270
        %v1439 = vpack.c.b16 %v1271, %v1271
        %v1440 = vpack.c.b16 %v1272, %v1272
        %v1441 = vpack.c.b16 %v1273, %v1273
        %v1442 = vpack.c.b16 %v1274, %v1274
        %v1443 = vpack.c.b16 %v1275, %v1275
        %v1444 = vpack.c.b16 %v1276, %v1276
        %v1445 = vpack.c.b16 %v1277, %v1277
        %v1446 = vpack.c.b16 %v1278, %v1278
        %v1447 = vpack.c.b16 %v1279, %v1279
        %v1448 = vpack.c.b16 %v1280, %v1280
        %v1449 = vpack.c.b16 %v1281, %v1281
        %v1450 = vpack.c.b16 %v1282, %v1282
        %v1451 = vpack.c.b16 %v1283, %v1283
        %v1452 = vpack.c.b16 %v1284, %v1284
        %v1453 = vpack.c.b16 %v1285, %v1285
        %v1454 = vpack.c.b16 %v1286, %v1286
        %v1455 = vpack.c.b16 %v1287, %v1287
        %v1456 = vpack.c.b16 %v1288, %v1288
        %1625 = vmatprep.subr.bf16.mxu0 %v1290
        %1626 = vmatpush1.bf16.xpose.msra.mxu0 %v1289
        %1627 = vmatprep.subr.bf16.mxu0 %v1314
        %1628 = vmatpush1.bf16.xpose.msra.mxu0 %v1313
        %1629 = vmatprep.subr.bf16.mxu0 %v1338
        %1630 = vmatpush1.bf16.xpose.msra.mxu0 %v1337
        %1631 = vmatprep.subr.bf16.mxu0 %v1362
        %1632 = vmatpush1.bf16.xpose.msra.mxu0 %v1361
        %1633 = vmatprep.subr.bf16.mxu0 %v1386
        %1634 = vmatpush1.bf16.xpose.msra.mxu0 %v1385
        %1635 = vmatprep.subr.bf16.mxu0 %v1410
        %1636 = vmatpush1.bf16.xpose.msra.mxu0 %v1409
        %1637 = vmatprep.subr.bf16.mxu0 %v1434
        %1638 = vmatpush1.bf16.xpose.msra.mxu0 %v1433
        %1639 = vmatprep.subr.bf16.mxu0 0
        %1640 = vmatpush1.bf16.xpose.msra.mxu0 0
        %1641 = vmatprep.subr.bf16.mxu0 0
        %1642 = vmatpush1.bf16.xpose.msra.mxu0 0
        %1643 = vmatprep.subr.bf16.mxu0 0
        %1644 = vmatpush1.bf16.xpose.msra.mxu0 0
        %1645 = vmatprep.subr.bf16.mxu0 0
        %1646 = vmatpush1.bf16.xpose.msra.mxu0 0
        %1647 = vmatprep.subr.bf16.mxu0 0
        %1648 = vmatpush1.bf16.xpose.msra.mxu0 0
        %1649 = vmatprep.subr.bf16.mxu0 0
        %1650 = vmatpush1.bf16.xpose.msra.mxu0 0
        %1651 = vmatprep.subr.bf16.mxu0 0
        %1652 = vmatpush1.bf16.xpose.msra.mxu0 0
        %1653 = vmatprep.subr.bf16.mxu0 0
        %1654 = vmatpush1.bf16.xpose.msra.mxu0 0
        %1655 = vmatprep.subr.bf16.mxu0 0
        %1656 = vmatpush1.bf16.xpose.msra.mxu0 0
        %1657 = vmatprep.mubr.bf16.mxu0 %v726
        %1658 = vmatmul.mubr.bf16.gmra.mrb[0].mxu0 %v725
        %v1659 = vpop.f32.mrb[0].mxu0
        %v1660 = vadd.f32 0.0, %v1659
        %v1661 = vpop.f32.mrb[0].mxu0
        %v1662 = vpop.f32.mrb[0].mxu0
        %v1663 = vadd.f32 0.0, %v1662
        %v1664 = vpop.f32.mrb[0].mxu0
        %1665 = vmatprep.mubr.bf16.mxu0 %v750
        %1666 = vmatmul.mubr.bf16.gmra.mrb[0].mxu0 %v749
        %v1667 = vpop.f32.mrb[0].mxu0
        %v1668 = vadd.f32 0.0, %v1667
        %v1669 = vpop.f32.mrb[0].mxu0
        %v1670 = vpop.f32.mrb[0].mxu0
        %v1671 = vadd.f32 0.0, %v1670
        %v1672 = vpop.f32.mrb[0].mxu0
        %1673 = vdwg.mxu0
        %1674 = vmatprep.subr.bf16.mxu0 %v1292
        %1675 = vmatpush1.bf16.xpose.msra.mxu0 %v1291
        %1676 = vmatprep.subr.bf16.mxu0 %v1316
        %1677 = vmatpush1.bf16.xpose.msra.mxu0 %v1315
        %1678 = vmatprep.subr.bf16.mxu0 %v1340
        %1679 = vmatpush1.bf16.xpose.msra.mxu0 %v1339
        %1680 = vmatprep.subr.bf16.mxu0 %v1364
        %1681 = vmatpush1.bf16.xpose.msra.mxu0 %v1363
        %1682 = vmatprep.subr.bf16.mxu0 %v1388
        %1683 = vmatpush1.bf16.xpose.msra.mxu0 %v1387
        %1684 = vmatprep.subr.bf16.mxu0 %v1412
        %1685 = vmatpush1.bf16.xpose.msra.mxu0 %v1411
        %1686 = vmatprep.subr.bf16.mxu0 %v1436
        %1687 = vmatpush1.bf16.xpose.msra.mxu0 %v1435
        %1688 = vmatprep.subr.bf16.mxu0 0
        %1689 = vmatpush1.bf16.xpose.msra.mxu0 0
        %1690 = vmatprep.subr.bf16.mxu0 0
        %1691 = vmatpush1.bf16.xpose.msra.mxu0 0
        %1692 = vmatprep.subr.bf16.mxu0 0
        %1693 = vmatpush1.bf16.xpose.msra.mxu0 0
        %1694 = vmatprep.subr.bf16.mxu0 0
        %1695 = vmatpush1.bf16.xpose.msra.mxu0 0
        %1696 = vmatprep.subr.bf16.mxu0 0
        %1697 = vmatpush1.bf16.xpose.msra.mxu0 0
        %1698 = vmatprep.subr.bf16.mxu0 0
        %1699 = vmatpush1.bf16.xpose.msra.mxu0 0
        %1700 = vmatprep.subr.bf16.mxu0 0
        %1701 = vmatpush1.bf16.xpose.msra.mxu0 0
        %1702 = vmatprep.subr.bf16.mxu0 0
        %1703 = vmatpush1.bf16.xpose.msra.mxu0 0
        %1704 = vmatprep.subr.bf16.mxu0 0
        %1705 = vmatpush1.bf16.xpose.msra.mxu0 0
        %1706 = vmatprep.mubr.bf16.mxu0 %v728
        %1707 = vmatmul.mubr.bf16.gmra.mrb[0].mxu0 %v727
        %v1708 = vpop.f32.mrb[0].mxu0
        %v1709 = vadd.f32 %v1660, %v1708
        %v1710 = vpop.f32.mrb[0].mxu0
        %v1711 = vpop.f32.mrb[0].mxu0
        %v1712 = vadd.f32 %v1663, %v1711
        %v1713 = vpop.f32.mrb[0].mxu0
        %1714 = vmatprep.mubr.bf16.mxu0 %v752
        %1715 = vmatmul.mubr.bf16.gmra.mrb[0].mxu0 %v751
        %v1716 = vpop.f32.mrb[0].mxu0
        %v1717 = vadd.f32 %v1668, %v1716
        %v1718 = vpop.f32.mrb[0].mxu0
        %v1719 = vpop.f32.mrb[0].mxu0
        %v1720 = vadd.f32 %v1671, %v1719
        %v1721 = vpop.f32.mrb[0].mxu0
        %1722 = vdwg.mxu0
        %1723 = vmatprep.subr.bf16.mxu0 %v1294
        %1724 = vmatpush1.bf16.xpose.msra.mxu0 %v1293
        %1725 = vmatprep.subr.bf16.mxu0 %v1318
        %1726 = vmatpush1.bf16.xpose.msra.mxu0 %v1317
        %1727 = vmatprep.subr.bf16.mxu0 %v1342
        %1728 = vmatpush1.bf16.xpose.msra.mxu0 %v1341
        %1729 = vmatprep.subr.bf16.mxu0 %v1366
        %1730 = vmatpush1.bf16.xpose.msra.mxu0 %v1365
        %1731 = vmatprep.subr.bf16.mxu0 %v1390
        %1732 = vmatpush1.bf16.xpose.msra.mxu0 %v1389
        %1733 = vmatprep.subr.bf16.mxu0 %v1414
        %1734 = vmatpush1.bf16.xpose.msra.mxu0 %v1413
        %1735 = vmatprep.subr.bf16.mxu0 %v1438
        %1736 = vmatpush1.bf16.xpose.msra.mxu0 %v1437
        %1737 = vmatprep.subr.bf16.mxu0 0
        %1738 = vmatpush1.bf16.xpose.msra.mxu0 0
        %1739 = vmatprep.subr.bf16.mxu0 0
        %1740 = vmatpush1.bf16.xpose.msra.mxu0 0
        %1741 = vmatprep.subr.bf16.mxu0 0
        %1742 = vmatpush1.bf16.xpose.msra.mxu0 0
        %1743 = vmatprep.subr.bf16.mxu0 0
        %1744 = vmatpush1.bf16.xpose.msra.mxu0 0
        %1745 = vmatprep.subr.bf16.mxu0 0
        %1746 = vmatpush1.bf16.xpose.msra.mxu0 0
        %1747 = vmatprep.subr.bf16.mxu0 0
        %1748 = vmatpush1.bf16.xpose.msra.mxu0 0
        %1749 = vmatprep.subr.bf16.mxu0 0
        %1750 = vmatpush1.bf16.xpose.msra.mxu0 0
        %1751 = vmatprep.subr.bf16.mxu0 0
        %1752 = vmatpush1.bf16.xpose.msra.mxu0 0
        %1753 = vmatprep.subr.bf16.mxu0 0
        %1754 = vmatpush1.bf16.xpose.msra.mxu0 0
        %1755 = vmatprep.mubr.bf16.mxu0 %v730
        %1756 = vmatmul.mubr.bf16.gmra.mrb[0].mxu0 %v729
        %v1757 = vpop.f32.mrb[0].mxu0
        %v1758 = vadd.f32 %v1709, %v1757
        %v1759 = vpop.f32.mrb[0].mxu0
        %v1760 = vpop.f32.mrb[0].mxu0
        %v1761 = vadd.f32 %v1712, %v1760
        %v1762 = vpop.f32.mrb[0].mxu0
        %1763 = vmatprep.mubr.bf16.mxu0 %v754
        %1764 = vmatmul.mubr.bf16.gmra.mrb[0].mxu0 %v753
        %v1765 = vpop.f32.mrb[0].mxu0
        %v1766 = vadd.f32 %v1717, %v1765
        %v1767 = vpop.f32.mrb[0].mxu0
        %v1768 = vpop.f32.mrb[0].mxu0
        %v1769 = vadd.f32 %v1720, %v1768
        %v1770 = vpop.f32.mrb[0].mxu0
        %1771 = vdwg.mxu0
        %1772 = vmatprep.subr.bf16.mxu0 %v1296
        %1773 = vmatpush1.bf16.xpose.msra.mxu0 %v1295
        %1774 = vmatprep.subr.bf16.mxu0 %v1320
        %1775 = vmatpush1.bf16.xpose.msra.mxu0 %v1319
        %1776 = vmatprep.subr.bf16.mxu0 %v1344
        %1777 = vmatpush1.bf16.xpose.msra.mxu0 %v1343
        %1778 = vmatprep.subr.bf16.mxu0 %v1368
        %1779 = vmatpush1.bf16.xpose.msra.mxu0 %v1367
        %1780 = vmatprep.subr.bf16.mxu0 %v1392
        %1781 = vmatpush1.bf16.xpose.msra.mxu0 %v1391
        %1782 = vmatprep.subr.bf16.mxu0 %v1416
        %1783 = vmatpush1.bf16.xpose.msra.mxu0 %v1415
        %1784 = vmatprep.subr.bf16.mxu0 %v1440
        %1785 = vmatpush1.bf16.xpose.msra.mxu0 %v1439
        %1786 = vmatprep.subr.bf16.mxu0 0
        %1787 = vmatpush1.bf16.xpose.msra.mxu0 0
        %1788 = vmatprep.subr.bf16.mxu0 0
        %1789 = vmatpush1.bf16.xpose.msra.mxu0 0
        %1790 = vmatprep.subr.bf16.mxu0 0
        %1791 = vmatpush1.bf16.xpose.msra.mxu0 0
        %1792 = vmatprep.subr.bf16.mxu0 0
        %1793 = vmatpush1.bf16.xpose.msra.mxu0 0
        %1794 = vmatprep.subr.bf16.mxu0 0
        %1795 = vmatpush1.bf16.xpose.msra.mxu0 0
        %1796 = vmatprep.subr.bf16.mxu0 0
        %1797 = vmatpush1.bf16.xpose.msra.mxu0 0
        %1798 = vmatprep.subr.bf16.mxu0 0
        %1799 = vmatpush1.bf16.xpose.msra.mxu0 0
        %1800 = vmatprep.subr.bf16.mxu0 0
        %1801 = vmatpush1.bf16.xpose.msra.mxu0 0
        %1802 = vmatprep.subr.bf16.mxu0 0
        %1803 = vmatpush1.bf16.xpose.msra.mxu0 0
        %1804 = vmatprep.mubr.bf16.mxu0 %v732
        %1805 = vmatmul.mubr.bf16.gmra.mrb[0].mxu0 %v731
        %v1806 = vpop.f32.mrb[0].mxu0
        %v1807 = vadd.f32 %v1758, %v1806
        %v1808 = vpop.f32.mrb[0].mxu0
        %v1809 = vpop.f32.mrb[0].mxu0
        %v1810 = vadd.f32 %v1761, %v1809
        %v1811 = vpop.f32.mrb[0].mxu0
        %1812 = vmatprep.mubr.bf16.mxu0 %v756
        %1813 = vmatmul.mubr.bf16.gmra.mrb[0].mxu0 %v755
        %v1814 = vpop.f32.mrb[0].mxu0
        %v1815 = vadd.f32 %v1766, %v1814
        %v1816 = vpop.f32.mrb[0].mxu0
        %v1817 = vpop.f32.mrb[0].mxu0
        %v1818 = vadd.f32 %v1769, %v1817
        %v1819 = vpop.f32.mrb[0].mxu0
        %1820 = vdwg.mxu0
        %1821 = vmatprep.subr.bf16.mxu0 %v1298
        %1822 = vmatpush1.bf16.xpose.msra.mxu0 %v1297
        %1823 = vmatprep.subr.bf16.mxu0 %v1322
        %1824 = vmatpush1.bf16.xpose.msra.mxu0 %v1321
        %1825 = vmatprep.subr.bf16.mxu0 %v1346
        %1826 = vmatpush1.bf16.xpose.msra.mxu0 %v1345
        %1827 = vmatprep.subr.bf16.mxu0 %v1370
        %1828 = vmatpush1.bf16.xpose.msra.mxu0 %v1369
        %1829 = vmatprep.subr.bf16.mxu0 %v1394
        %1830 = vmatpush1.bf16.xpose.msra.mxu0 %v1393
        %1831 = vmatprep.subr.bf16.mxu0 %v1418
        %1832 = vmatpush1.bf16.xpose.msra.mxu0 %v1417
        %1833 = vmatprep.subr.bf16.mxu0 %v1442
        %1834 = vmatpush1.bf16.xpose.msra.mxu0 %v1441
        %1835 = vmatprep.subr.bf16.mxu0 0
        %1836 = vmatpush1.bf16.xpose.msra.mxu0 0
        %1837 = vmatprep.subr.bf16.mxu0 0
        %1838 = vmatpush1.bf16.xpose.msra.mxu0 0
        %1839 = vmatprep.subr.bf16.mxu0 0
        %1840 = vmatpush1.bf16.xpose.msra.mxu0 0
        %1841 = vmatprep.subr.bf16.mxu0 0
        %1842 = vmatpush1.bf16.xpose.msra.mxu0 0
        %1843 = vmatprep.subr.bf16.mxu0 0
        %1844 = vmatpush1.bf16.xpose.msra.mxu0 0
        %1845 = vmatprep.subr.bf16.mxu0 0
        %1846 = vmatpush1.bf16.xpose.msra.mxu0 0
        %1847 = vmatprep.subr.bf16.mxu0 0
        %1848 = vmatpush1.bf16.xpose.msra.mxu0 0
        %1849 = vmatprep.subr.bf16.mxu0 0
        %1850 = vmatpush1.bf16.xpose.msra.mxu0 0
        %1851 = vmatprep.subr.bf16.mxu0 0
        %1852 = vmatpush1.bf16.xpose.msra.mxu0 0
        %1853 = vmatprep.mubr.bf16.mxu0 %v734
        %1854 = vmatmul.mubr.bf16.gmra.mrb[0].mxu0 %v733
        %v1855 = vpop.f32.mrb[0].mxu0
        %v1856 = vadd.f32 %v1807, %v1855
        %v1857 = vpop.f32.mrb[0].mxu0
        %v1858 = vpop.f32.mrb[0].mxu0
        %v1859 = vadd.f32 %v1810, %v1858
        %v1860 = vpop.f32.mrb[0].mxu0
        %1861 = vmatprep.mubr.bf16.mxu0 %v758
        %1862 = vmatmul.mubr.bf16.gmra.mrb[0].mxu0 %v757
        %v1863 = vpop.f32.mrb[0].mxu0
        %v1864 = vadd.f32 %v1815, %v1863
        %v1865 = vpop.f32.mrb[0].mxu0
        %v1866 = vpop.f32.mrb[0].mxu0
        %v1867 = vadd.f32 %v1818, %v1866
        %v1868 = vpop.f32.mrb[0].mxu0
        %1869 = vdwg.mxu0
        %1870 = vmatprep.subr.bf16.mxu0 %v1300
        %1871 = vmatpush1.bf16.xpose.msra.mxu0 %v1299
        %1872 = vmatprep.subr.bf16.mxu0 %v1324
        %1873 = vmatpush1.bf16.xpose.msra.mxu0 %v1323
        %1874 = vmatprep.subr.bf16.mxu0 %v1348
        %1875 = vmatpush1.bf16.xpose.msra.mxu0 %v1347
        %1876 = vmatprep.subr.bf16.mxu0 %v1372
        %1877 = vmatpush1.bf16.xpose.msra.mxu0 %v1371
        %1878 = vmatprep.subr.bf16.mxu0 %v1396
        %1879 = vmatpush1.bf16.xpose.msra.mxu0 %v1395
        %1880 = vmatprep.subr.bf16.mxu0 %v1420
        %1881 = vmatpush1.bf16.xpose.msra.mxu0 %v1419
        %1882 = vmatprep.subr.bf16.mxu0 %v1444
        %1883 = vmatpush1.bf16.xpose.msra.mxu0 %v1443
        %1884 = vmatprep.subr.bf16.mxu0 0
        %1885 = vmatpush1.bf16.xpose.msra.mxu0 0
        %1886 = vmatprep.subr.bf16.mxu0 0
        %1887 = vmatpush1.bf16.xpose.msra.mxu0 0
        %1888 = vmatprep.subr.bf16.mxu0 0
        %1889 = vmatpush1.bf16.xpose.msra.mxu0 0
        %1890 = vmatprep.subr.bf16.mxu0 0
        %1891 = vmatpush1.bf16.xpose.msra.mxu0 0
        %1892 = vmatprep.subr.bf16.mxu0 0
        %1893 = vmatpush1.bf16.xpose.msra.mxu0 0
        %1894 = vmatprep.subr.bf16.mxu0 0
        %1895 = vmatpush1.bf16.xpose.msra.mxu0 0
        %1896 = vmatprep.subr.bf16.mxu0 0
        %1897 = vmatpush1.bf16.xpose.msra.mxu0 0
        %1898 = vmatprep.subr.bf16.mxu0 0
        %1899 = vmatpush1.bf16.xpose.msra.mxu0 0
        %1900 = vmatprep.subr.bf16.mxu0 0
        %1901 = vmatpush1.bf16.xpose.msra.mxu0 0
        %1902 = vmatprep.mubr.bf16.mxu0 %v736
        %1903 = vmatmul.mubr.bf16.gmra.mrb[0].mxu0 %v735
        %v1904 = vpop.f32.mrb[0].mxu0
        %v1905 = vadd.f32 %v1856, %v1904
        %v1906 = vpop.f32.mrb[0].mxu0
        %v1907 = vpop.f32.mrb[0].mxu0
        %v1908 = vadd.f32 %v1859, %v1907
        %v1909 = vpop.f32.mrb[0].mxu0
        %1910 = vmatprep.mubr.bf16.mxu0 %v760
        %1911 = vmatmul.mubr.bf16.gmra.mrb[0].mxu0 %v759
        %v1912 = vpop.f32.mrb[0].mxu0
        %v1913 = vadd.f32 %v1864, %v1912
        %v1914 = vpop.f32.mrb[0].mxu0
        %v1915 = vpop.f32.mrb[0].mxu0
        %v1916 = vadd.f32 %v1867, %v1915
        %v1917 = vpop.f32.mrb[0].mxu0
        %1918 = vdwg.mxu0
        %1919 = vmatprep.subr.bf16.mxu0 %v1302
        %1920 = vmatpush1.bf16.xpose.msra.mxu0 %v1301
        %1921 = vmatprep.subr.bf16.mxu0 %v1326
        %1922 = vmatpush1.bf16.xpose.msra.mxu0 %v1325
        %1923 = vmatprep.subr.bf16.mxu0 %v1350
        %1924 = vmatpush1.bf16.xpose.msra.mxu0 %v1349
        %1925 = vmatprep.subr.bf16.mxu0 %v1374
        %1926 = vmatpush1.bf16.xpose.msra.mxu0 %v1373
        %1927 = vmatprep.subr.bf16.mxu0 %v1398
        %1928 = vmatpush1.bf16.xpose.msra.mxu0 %v1397
        %1929 = vmatprep.subr.bf16.mxu0 %v1422
        %1930 = vmatpush1.bf16.xpose.msra.mxu0 %v1421
        %1931 = vmatprep.subr.bf16.mxu0 %v1446
        %1932 = vmatpush1.bf16.xpose.msra.mxu0 %v1445
        %1933 = vmatprep.subr.bf16.mxu0 0
        %1934 = vmatpush1.bf16.xpose.msra.mxu0 0
        %1935 = vmatprep.subr.bf16.mxu0 0
        %1936 = vmatpush1.bf16.xpose.msra.mxu0 0
        %1937 = vmatprep.subr.bf16.mxu0 0
        %1938 = vmatpush1.bf16.xpose.msra.mxu0 0
        %1939 = vmatprep.subr.bf16.mxu0 0
        %1940 = vmatpush1.bf16.xpose.msra.mxu0 0
        %1941 = vmatprep.subr.bf16.mxu0 0
        %1942 = vmatpush1.bf16.xpose.msra.mxu0 0
        %1943 = vmatprep.subr.bf16.mxu0 0
        %1944 = vmatpush1.bf16.xpose.msra.mxu0 0
        %1945 = vmatprep.subr.bf16.mxu0 0
        %1946 = vmatpush1.bf16.xpose.msra.mxu0 0
        %1947 = vmatprep.subr.bf16.mxu0 0
        %1948 = vmatpush1.bf16.xpose.msra.mxu0 0
        %1949 = vmatprep.subr.bf16.mxu0 0
        %1950 = vmatpush1.bf16.xpose.msra.mxu0 0
        %1951 = vmatprep.mubr.bf16.mxu0 %v738
        %1952 = vmatmul.mubr.bf16.gmra.mrb[0].mxu0 %v737
        %v1953 = vpop.f32.mrb[0].mxu0
        %v1954 = vadd.f32 %v1905, %v1953
        %v1955 = vpop.f32.mrb[0].mxu0
        %v1956 = vpop.f32.mrb[0].mxu0
        %v1957 = vadd.f32 %v1908, %v1956
        %v1958 = vpop.f32.mrb[0].mxu0
        %1959 = vmatprep.mubr.bf16.mxu0 %v762
        %1960 = vmatmul.mubr.bf16.gmra.mrb[0].mxu0 %v761
        %v1961 = vpop.f32.mrb[0].mxu0
        %v1962 = vadd.f32 %v1913, %v1961
        %v1963 = vpop.f32.mrb[0].mxu0
        %v1964 = vpop.f32.mrb[0].mxu0
        %v1965 = vadd.f32 %v1916, %v1964
        %v1966 = vpop.f32.mrb[0].mxu0
        %1967 = vdwg.mxu0
        %1968 = vmatprep.subr.bf16.mxu0 %v1304
        %1969 = vmatpush1.bf16.xpose.msra.mxu0 %v1303
        %1970 = vmatprep.subr.bf16.mxu0 %v1328
        %1971 = vmatpush1.bf16.xpose.msra.mxu0 %v1327
        %1972 = vmatprep.subr.bf16.mxu0 %v1352
        %1973 = vmatpush1.bf16.xpose.msra.mxu0 %v1351
        %1974 = vmatprep.subr.bf16.mxu0 %v1376
        %1975 = vmatpush1.bf16.xpose.msra.mxu0 %v1375
        %1976 = vmatprep.subr.bf16.mxu0 %v1400
        %1977 = vmatpush1.bf16.xpose.msra.mxu0 %v1399
        %1978 = vmatprep.subr.bf16.mxu0 %v1424
        %1979 = vmatpush1.bf16.xpose.msra.mxu0 %v1423
        %1980 = vmatprep.subr.bf16.mxu0 %v1448
        %1981 = vmatpush1.bf16.xpose.msra.mxu0 %v1447
        %1982 = vmatprep.subr.bf16.mxu0 0
        %1983 = vmatpush1.bf16.xpose.msra.mxu0 0
        %1984 = vmatprep.subr.bf16.mxu0 0
        %1985 = vmatpush1.bf16.xpose.msra.mxu0 0
        %1986 = vmatprep.subr.bf16.mxu0 0
        %1987 = vmatpush1.bf16.xpose.msra.mxu0 0
        %1988 = vmatprep.subr.bf16.mxu0 0
        %1989 = vmatpush1.bf16.xpose.msra.mxu0 0
        %1990 = vmatprep.subr.bf16.mxu0 0
        %1991 = vmatpush1.bf16.xpose.msra.mxu0 0
        %1992 = vmatprep.subr.bf16.mxu0 0
        %1993 = vmatpush1.bf16.xpose.msra.mxu0 0
        %1994 = vmatprep.subr.bf16.mxu0 0
        %1995 = vmatpush1.bf16.xpose.msra.mxu0 0
        %1996 = vmatprep.subr.bf16.mxu0 0
        %1997 = vmatpush1.bf16.xpose.msra.mxu0 0
        %1998 = vmatprep.subr.bf16.mxu0 0
        %1999 = vmatpush1.bf16.xpose.msra.mxu0 0
        %2000 = vmatprep.mubr.bf16.mxu0 %v740
        %2001 = vmatmul.mubr.bf16.gmra.mrb[0].mxu0 %v739
        %v2002 = vpop.f32.mrb[0].mxu0
        %v2003 = vadd.f32 %v1954, %v2002
        %v2004 = vpop.f32.mrb[0].mxu0
        %v2005 = vpop.f32.mrb[0].mxu0
        %v2006 = vadd.f32 %v1957, %v2005
        %v2007 = vpop.f32.mrb[0].mxu0
        %2008 = vmatprep.mubr.bf16.mxu0 %v764
        %2009 = vmatmul.mubr.bf16.gmra.mrb[0].mxu0 %v763
        %v2010 = vpop.f32.mrb[0].mxu0
        %v2011 = vadd.f32 %v1962, %v2010
        %v2012 = vpop.f32.mrb[0].mxu0
        %v2013 = vpop.f32.mrb[0].mxu0
        %v2014 = vadd.f32 %v1965, %v2013
        %v2015 = vpop.f32.mrb[0].mxu0
        %2016 = vdwg.mxu0
        %2017 = vmatprep.subr.bf16.mxu0 %v1306
        %2018 = vmatpush1.bf16.xpose.msra.mxu0 %v1305
        %2019 = vmatprep.subr.bf16.mxu0 %v1330
        %2020 = vmatpush1.bf16.xpose.msra.mxu0 %v1329
        %2021 = vmatprep.subr.bf16.mxu0 %v1354
        %2022 = vmatpush1.bf16.xpose.msra.mxu0 %v1353
        %2023 = vmatprep.subr.bf16.mxu0 %v1378
        %2024 = vmatpush1.bf16.xpose.msra.mxu0 %v1377
        %2025 = vmatprep.subr.bf16.mxu0 %v1402
        %2026 = vmatpush1.bf16.xpose.msra.mxu0 %v1401
        %2027 = vmatprep.subr.bf16.mxu0 %v1426
        %2028 = vmatpush1.bf16.xpose.msra.mxu0 %v1425
        %2029 = vmatprep.subr.bf16.mxu0 %v1450
        %2030 = vmatpush1.bf16.xpose.msra.mxu0 %v1449
        %2031 = vmatprep.subr.bf16.mxu0 0
        %2032 = vmatpush1.bf16.xpose.msra.mxu0 0
        %2033 = vmatprep.subr.bf16.mxu0 0
        %2034 = vmatpush1.bf16.xpose.msra.mxu0 0
        %2035 = vmatprep.subr.bf16.mxu0 0
        %2036 = vmatpush1.bf16.xpose.msra.mxu0 0
        %2037 = vmatprep.subr.bf16.mxu0 0
        %2038 = vmatpush1.bf16.xpose.msra.mxu0 0
        %2039 = vmatprep.subr.bf16.mxu0 0
        %2040 = vmatpush1.bf16.xpose.msra.mxu0 0
        %2041 = vmatprep.subr.bf16.mxu0 0
        %2042 = vmatpush1.bf16.xpose.msra.mxu0 0
        %2043 = vmatprep.subr.bf16.mxu0 0
        %2044 = vmatpush1.bf16.xpose.msra.mxu0 0
        %2045 = vmatprep.subr.bf16.mxu0 0
        %2046 = vmatpush1.bf16.xpose.msra.mxu0 0
        %2047 = vmatprep.subr.bf16.mxu0 0
        %2048 = vmatpush1.bf16.xpose.msra.mxu0 0
        %2049 = vmatprep.mubr.bf16.mxu0 %v742
        %2050 = vmatmul.mubr.bf16.gmra.mrb[0].mxu0 %v741
        %v2051 = vpop.f32.mrb[0].mxu0
        %v2052 = vadd.f32 %v2003, %v2051
        %v2053 = vpop.f32.mrb[0].mxu0
        %v2054 = vpop.f32.mrb[0].mxu0
        %v2055 = vadd.f32 %v2006, %v2054
        %v2056 = vpop.f32.mrb[0].mxu0
        %2057 = vmatprep.mubr.bf16.mxu0 %v766
        %2058 = vmatmul.mubr.bf16.gmra.mrb[0].mxu0 %v765
        %v2059 = vpop.f32.mrb[0].mxu0
        %v2060 = vadd.f32 %v2011, %v2059
        %v2061 = vpop.f32.mrb[0].mxu0
        %v2062 = vpop.f32.mrb[0].mxu0
        %v2063 = vadd.f32 %v2014, %v2062
        %v2064 = vpop.f32.mrb[0].mxu0
        %2065 = vdwg.mxu0
        %2066 = vmatprep.subr.bf16.mxu0 %v1308
        %2067 = vmatpush1.bf16.xpose.msra.mxu0 %v1307
        %2068 = vmatprep.subr.bf16.mxu0 %v1332
        %2069 = vmatpush1.bf16.xpose.msra.mxu0 %v1331
        %2070 = vmatprep.subr.bf16.mxu0 %v1356
        %2071 = vmatpush1.bf16.xpose.msra.mxu0 %v1355
        %2072 = vmatprep.subr.bf16.mxu0 %v1380
        %2073 = vmatpush1.bf16.xpose.msra.mxu0 %v1379
        %2074 = vmatprep.subr.bf16.mxu0 %v1404
        %2075 = vmatpush1.bf16.xpose.msra.mxu0 %v1403
        %2076 = vmatprep.subr.bf16.mxu0 %v1428
        %2077 = vmatpush1.bf16.xpose.msra.mxu0 %v1427
        %2078 = vmatprep.subr.bf16.mxu0 %v1452
        %2079 = vmatpush1.bf16.xpose.msra.mxu0 %v1451
        %2080 = vmatprep.subr.bf16.mxu0 0
        %2081 = vmatpush1.bf16.xpose.msra.mxu0 0
        %2082 = vmatprep.subr.bf16.mxu0 0
        %2083 = vmatpush1.bf16.xpose.msra.mxu0 0
        %2084 = vmatprep.subr.bf16.mxu0 0
        %2085 = vmatpush1.bf16.xpose.msra.mxu0 0
        %2086 = vmatprep.subr.bf16.mxu0 0
        %2087 = vmatpush1.bf16.xpose.msra.mxu0 0
        %2088 = vmatprep.subr.bf16.mxu0 0
        %2089 = vmatpush1.bf16.xpose.msra.mxu0 0
        %2090 = vmatprep.subr.bf16.mxu0 0
        %2091 = vmatpush1.bf16.xpose.msra.mxu0 0
        %2092 = vmatprep.subr.bf16.mxu0 0
        %2093 = vmatpush1.bf16.xpose.msra.mxu0 0
        %2094 = vmatprep.subr.bf16.mxu0 0
        %2095 = vmatpush1.bf16.xpose.msra.mxu0 0
        %2096 = vmatprep.subr.bf16.mxu0 0
        %2097 = vmatpush1.bf16.xpose.msra.mxu0 0
        %2098 = vmatprep.mubr.bf16.mxu0 %v744
        %2099 = vmatmul.mubr.bf16.gmra.mrb[0].mxu0 %v743
        %v2100 = vpop.f32.mrb[0].mxu0
        %v2101 = vadd.f32 %v2052, %v2100
        %v2102 = vpop.f32.mrb[0].mxu0
        %v2103 = vpop.f32.mrb[0].mxu0
        %v2104 = vadd.f32 %v2055, %v2103
        %v2105 = vpop.f32.mrb[0].mxu0
        %2106 = vmatprep.mubr.bf16.mxu0 %v768
        %2107 = vmatmul.mubr.bf16.gmra.mrb[0].mxu0 %v767
        %v2108 = vpop.f32.mrb[0].mxu0
        %v2109 = vadd.f32 %v2060, %v2108
        %v2110 = vpop.f32.mrb[0].mxu0
        %v2111 = vpop.f32.mrb[0].mxu0
        %v2112 = vadd.f32 %v2063, %v2111
        %v2113 = vpop.f32.mrb[0].mxu0
        %2114 = vdwg.mxu0
        %2115 = vmatprep.subr.bf16.mxu0 %v1310
        %2116 = vmatpush1.bf16.xpose.msra.mxu0 %v1309
        %2117 = vmatprep.subr.bf16.mxu0 %v1334
        %2118 = vmatpush1.bf16.xpose.msra.mxu0 %v1333
        %2119 = vmatprep.subr.bf16.mxu0 %v1358
        %2120 = vmatpush1.bf16.xpose.msra.mxu0 %v1357
        %2121 = vmatprep.subr.bf16.mxu0 %v1382
        %2122 = vmatpush1.bf16.xpose.msra.mxu0 %v1381
        %2123 = vmatprep.subr.bf16.mxu0 %v1406
        %2124 = vmatpush1.bf16.xpose.msra.mxu0 %v1405
        %2125 = vmatprep.subr.bf16.mxu0 %v1430
        %2126 = vmatpush1.bf16.xpose.msra.mxu0 %v1429
        %2127 = vmatprep.subr.bf16.mxu0 %v1454
        %2128 = vmatpush1.bf16.xpose.msra.mxu0 %v1453
        %2129 = vmatprep.subr.bf16.mxu0 0
        %2130 = vmatpush1.bf16.xpose.msra.mxu0 0
        %2131 = vmatprep.subr.bf16.mxu0 0
        %2132 = vmatpush1.bf16.xpose.msra.mxu0 0
        %2133 = vmatprep.subr.bf16.mxu0 0
        %2134 = vmatpush1.bf16.xpose.msra.mxu0 0
        %2135 = vmatprep.subr.bf16.mxu0 0
        %2136 = vmatpush1.bf16.xpose.msra.mxu0 0
        %2137 = vmatprep.subr.bf16.mxu0 0
        %2138 = vmatpush1.bf16.xpose.msra.mxu0 0
        %2139 = vmatprep.subr.bf16.mxu0 0
        %2140 = vmatpush1.bf16.xpose.msra.mxu0 0
        %2141 = vmatprep.subr.bf16.mxu0 0
        %2142 = vmatpush1.bf16.xpose.msra.mxu0 0
        %2143 = vmatprep.subr.bf16.mxu0 0
        %2144 = vmatpush1.bf16.xpose.msra.mxu0 0
        %2145 = vmatprep.subr.bf16.mxu0 0
        %2146 = vmatpush1.bf16.xpose.msra.mxu0 0
        %2147 = vmatprep.mubr.bf16.mxu0 %v746
        %2148 = vmatmul.mubr.bf16.gmra.mrb[0].mxu0 %v745
        %v2149 = vpop.f32.mrb[0].mxu0
        %v2150 = vadd.f32 %v2101, %v2149
        %v2151 = vpop.f32.mrb[0].mxu0
        %v2152 = vpop.f32.mrb[0].mxu0
        %v2153 = vadd.f32 %v2104, %v2152
        %v2154 = vpop.f32.mrb[0].mxu0
        %2155 = vmatprep.mubr.bf16.mxu0 %v770
        %2156 = vmatmul.mubr.bf16.gmra.mrb[0].mxu0 %v769
        %v2157 = vpop.f32.mrb[0].mxu0
        %v2158 = vadd.f32 %v2109, %v2157
        %v2159 = vpop.f32.mrb[0].mxu0
        %v2160 = vpop.f32.mrb[0].mxu0
        %v2161 = vadd.f32 %v2112, %v2160
        %v2162 = vpop.f32.mrb[0].mxu0
        %2163 = vdwg.mxu0
        %2164 = vmatprep.subr.bf16.mxu0 %v1312
        %2165 = vmatpush1.bf16.xpose.msra.mxu0 %v1311
        %2166 = vmatprep.subr.bf16.mxu0 %v1336
        %2167 = vmatpush1.bf16.xpose.msra.mxu0 %v1335
        %2168 = vmatprep.subr.bf16.mxu0 %v1360
        %2169 = vmatpush1.bf16.xpose.msra.mxu0 %v1359
        %2170 = vmatprep.subr.bf16.mxu0 %v1384
        %2171 = vmatpush1.bf16.xpose.msra.mxu0 %v1383
        %2172 = vmatprep.subr.bf16.mxu0 %v1408
        %2173 = vmatpush1.bf16.xpose.msra.mxu0 %v1407
        %2174 = vmatprep.subr.bf16.mxu0 %v1432
        %2175 = vmatpush1.bf16.xpose.msra.mxu0 %v1431
        %2176 = vmatprep.subr.bf16.mxu0 %v1456
        %2177 = vmatpush1.bf16.xpose.msra.mxu0 %v1455
        %2178 = vmatprep.subr.bf16.mxu0 0
        %2179 = vmatpush1.bf16.xpose.msra.mxu0 0
        %2180 = vmatprep.subr.bf16.mxu0 0
        %2181 = vmatpush1.bf16.xpose.msra.mxu0 0
        %2182 = vmatprep.subr.bf16.mxu0 0
        %2183 = vmatpush1.bf16.xpose.msra.mxu0 0
        %2184 = vmatprep.subr.bf16.mxu0 0
        %2185 = vmatpush1.bf16.xpose.msra.mxu0 0
        %2186 = vmatprep.subr.bf16.mxu0 0
        %2187 = vmatpush1.bf16.xpose.msra.mxu0 0
        %2188 = vmatprep.subr.bf16.mxu0 0
        %2189 = vmatpush1.bf16.xpose.msra.mxu0 0
        %2190 = vmatprep.subr.bf16.mxu0 0
        %2191 = vmatpush1.bf16.xpose.msra.mxu0 0
        %2192 = vmatprep.subr.bf16.mxu0 0
        %2193 = vmatpush1.bf16.xpose.msra.mxu0 0
        %2194 = vmatprep.subr.bf16.mxu0 0
        %2195 = vmatpush1.bf16.xpose.msra.mxu0 0
        %2196 = vmatprep.mubr.bf16.mxu0 %v748
        %2197 = vmatmul.mubr.bf16.gmra.mrb[0].mxu0 %v747
        %v2198 = vpop.f32.mrb[0].mxu0
        %v2199 = vadd.f32 %v2150, %v2198
        %v2200 = vpop.f32.mrb[0].mxu0
        %v2201 = vpop.f32.mrb[0].mxu0
        %v2202 = vadd.f32 %v2153, %v2201
        %v2203 = vpop.f32.mrb[0].mxu0
        %2204 = vmatprep.mubr.bf16.mxu0 %v772
        %2205 = vmatmul.mubr.bf16.gmra.mrb[0].mxu0 %v771
        %v2206 = vpop.f32.mrb[0].mxu0
        %v2207 = vadd.f32 %v2158, %v2206
        %v2208 = vpop.f32.mrb[0].mxu0
        %v2209 = vpop.f32.mrb[0].mxu0
        %v2210 = vadd.f32 %v2161, %v2209
        %v2211 = vpop.f32.mrb[0].mxu0
        %2212 = vdwg.mxu0
        %v2213 = vadd.f32 %v577, %v2199
        %v2214 = vadd.f32 %v578, %v2202
        %v2215 = vadd.f32 %v579, %v2207
        %v2216 = vadd.f32 %v580, %v2210
        %vm2217 = vcmask 818176
        %2218 = vst.msk [vmem:[#allocation2] sm:$0xff] %vm2217, %v2213
        %2219 = vst.msk [vmem:[#allocation2 + $0x8] sm:$0xff] %vm2217, %v2214
        %2220 = vst.msk [vmem:[#allocation2 + $0x10] sm:$0xff] %vm2217, %v2215
        %2221 = vst.msk [vmem:[#allocation2 + $0x18] sm:$0xff] %vm2217, %v2216
        %s2222 = sld [smem:[#allocation6 + %s358]]
        %p2223 = scmp.eq.s32.totalorder %s2222, 1
        // Predicated region
        $region69: #{textcnn_forward.1} parent=39 // pred_check
          %p2224 = pneg %p2223
        $region70: #{textcnn_forward.1} parent=39 // pred_check_branch
          %2226 = sbr.rel (%p2224) target = $region72
        $region71: #{textcnn_forward.1} parent=39 // pred_region
          %s2227 = sld [smem:[#allocation7 + %s358]]
          %v2228 = vld [vmem:[#allocation2] sm:$0xff]
          %v2229 = vld [vmem:[#allocation2 + $0x8] sm:$0xff]
          %v2230 = vld [vmem:[#allocation2 + $0x10] sm:$0xff]
          %v2231 = vld [vmem:[#allocation2 + $0x18] sm:$0xff]
          %v2232 = vld [vmem:[%s300] sm:$0x1]
          %v2234 = vlaneseq
          %v2235 = vshrl.u32 %v2234, 7
          %v2236 = vsub.s32 0, %v2235
          %v2237 = vrot.slane %v2232, %v2236
          %v2239 = vadd.f32 %v2228, %v2237
          %v2240 = vadd.f32 %v2229, %v2237
          %v2241 = vadd.f32 %v2230, %v2237
          %v2242 = vadd.f32 %v2231, %v2237
          %v2243 = vmax.f32 %v2239, 0.0
          %v2244 = vmax.f32 %v2240, 0.0
          %v2245 = vmax.f32 %v2241, 0.0
          %v2246 = vmax.f32 %v2242, 0.0
          %v2247 = vlaneseq
          %v2248 = vshrl.u32 %v2247, 7
          %v2249 = vadd.s32 %v2248, 8
          %v2250 = vadd.s32 %v2248, 16
          %v2251 = vadd.s32 %v2248, 24
          %s2252 = smul.u32 %s2227, 2
          %v2253 = vstv %s2252
          %vm2254 = vcmp.lt.s32.totalorder %v2248, %v2253
          %vm2255 = vcmp.lt.s32.totalorder %v2249, %v2253
          %vm2256 = vcmp.lt.s32.totalorder %v2250, %v2253
          %vm2257 = vcmp.lt.s32.totalorder %v2251, %v2253
          %v2258 = vsel %vm2254, %v2243, 0.0
          %v2259 = vsel %vm2255, %v2244, 0.0
          %v2260 = vsel %vm2256, %v2245, 0.0
          %v2261 = vsel %vm2257, %v2246, 0.0
          %vm2262 = vcmp.lt.s32.totalorder %v2248, 0
          %v2263 = vsub.s32 0, %v2248
          %v2264 = vsel %vm2262, %v2263, %v2248
          %v2265 = vshrl.u32 %v2264, 1
          %v2266 = vand.u32 %v2264, 1
          %v2267 = vsub.s32 0, %v2266
          %v2268 = vsel %vm2262, %v2267, %v2266
          %vm2269 = vcmp.lt.s32.totalorder %v2249, 0
          %v2270 = vsub.s32 0, %v2249
          %v2271 = vsel %vm2269, %v2270, %v2249
          %v2272 = vshrl.u32 %v2271, 1
          %v2273 = vand.u32 %v2271, 1
          %v2274 = vsub.s32 0, %v2273
          %v2275 = vsel %vm2269, %v2274, %v2273
          %vm2276 = vcmp.lt.s32.totalorder %v2250, 0
          %v2277 = vsub.s32 0, %v2250
          %v2278 = vsel %vm2276, %v2277, %v2250
          %v2279 = vshrl.u32 %v2278, 1
          %v2280 = vand.u32 %v2278, 1
          %v2281 = vsub.s32 0, %v2280
          %v2282 = vsel %vm2276, %v2281, %v2280
          %vm2283 = vcmp.lt.s32.totalorder %v2251, 0
          %v2284 = vsub.s32 0, %v2251
          %v2285 = vsel %vm2283, %v2284, %v2251
          %v2286 = vshrl.u32 %v2285, 1
          %v2287 = vand.u32 %v2285, 1
          %v2288 = vsub.s32 0, %v2287
          %v2289 = vsel %vm2283, %v2288, %v2287
          %vm2290 = vcmp.ne.s32.totalorder %v2268, 0
          %vm2291 = vcmp.ne.s32.totalorder %v2275, 0
          %vm2292 = vcmp.ne.s32.totalorder %v2282, 0
          %vm2293 = vcmp.ne.s32.totalorder %v2289, 0
          %vm2294 = vcmp.lt.s32.totalorder %v2268, 0
          %vm2295 = vcmp.lt.s32.totalorder %v2275, 0
          %vm2296 = vcmp.lt.s32.totalorder %v2282, 0
          %vm2297 = vcmp.lt.s32.totalorder %v2289, 0
          %vm2298 = vmand %vm2294, %vm2290
          %vm2299 = vmand %vm2295, %vm2291
          %vm2300 = vmand %vm2296, %vm2292
          %vm2301 = vmand %vm2297, %vm2293
          %v2302 = vadd.s32 %v2268, 2
          %v2303 = vadd.s32 %v2275, 2
          %v2304 = vadd.s32 %v2282, 2
          %v2305 = vadd.s32 %v2289, 2
          %v2306 = vsel %vm2298, %v2302, %v2268
          %v2307 = vsel %vm2299, %v2303, %v2275
          %v2308 = vsel %vm2300, %v2304, %v2282
          %v2309 = vsel %vm2301, %v2305, %v2289
          %vm2310 = vcmp.eq.s32.totalorder %v2306, 0
          %vm2311 = vcmp.eq.s32.totalorder %v2307, 0
          %vm2312 = vcmp.eq.s32.totalorder %v2308, 0
          %vm2313 = vcmp.eq.s32.totalorder %v2309, 0
          %v2314 = vsel %vm2310, %v2258, 0.0
          %v2315 = vsel %vm2311, %v2259, 0.0
          %v2316 = vsel %vm2312, %v2260, 0.0
          %v2317 = vsel %vm2313, %v2261, 0.0
          %v2318 = vsel %vm2217, %v2314, -inf
          %v2319 = vsel %vm2217, %v2315, -inf
          %v2320 = vsel %vm2217, %v2316, -inf
          %v2321 = vsel %vm2217, %v2317, -inf
          %v2322 = vmax.f32 %v2318, %v2319
          %v2323 = vmax.f32 %v2320, %v2321
          %v2324 = vmax.f32 %v2322, %v2323
          %v2325 = vrot.slane %v2324, 4
          %v2326 = vmax.f32 %v2324, %v2325
          %v2327 = vrot.slane %v2326, 2
          %v2328 = vmax.f32 %v2326, %v2327
          %v2329 = vrot.slane %v2328, 1
          %v2330 = vmax.f32 %v2328, %v2329
          %vm2331 = vcmp.eq.s32.totalorder %v2306, 1
          %vm2332 = vcmp.eq.s32.totalorder %v2307, 1
          %vm2333 = vcmp.eq.s32.totalorder %v2308, 1
          %vm2334 = vcmp.eq.s32.totalorder %v2309, 1
          %v2335 = vsel %vm2331, %v2258, 0.0
          %v2336 = vsel %vm2332, %v2259, 0.0
          %v2337 = vsel %vm2333, %v2260, 0.0
          %v2338 = vsel %vm2334, %v2261, 0.0
          %v2339 = vsel %vm2217, %v2335, -inf
          %v2340 = vsel %vm2217, %v2336, -inf
          %v2341 = vsel %vm2217, %v2337, -inf
          %v2342 = vsel %vm2217, %v2338, -inf
          %v2343 = vmax.f32 %v2339, %v2340
          %v2344 = vmax.f32 %v2341, %v2342
          %v2345 = vmax.f32 %v2343, %v2344
          %v2346 = vrot.slane %v2345, 4
          %v2347 = vmax.f32 %v2345, %v2346
          %v2348 = vrot.slane %v2347, 2
          %v2349 = vmax.f32 %v2347, %v2348
          %v2350 = vrot.slane %v2349, 1
          %v2351 = vmax.f32 %v2349, %v2350
          %vm2352 = vcmask 1040384
          %v2353 = vsel %vm2352, %v2330, %v2351
          %v2354 = vld [vmem:[#allocation17] sm:$0x3]
          %v2355 = vpack.c.bf16 %v2353, %v2353
          %v2356 = vld [vmem:[%s309] sm:$0xf]
          %v2357 = vld [vmem:[%s309 + $0x4] sm:$0xf]
          %v2358 = vld [vmem:[%s309 + $0x8] sm:$0xf]
          %v2359 = vld [vmem:[%s309 + $0xc] sm:$0xf]
          %v2360 = vld [vmem:[%s309 + $0x10] sm:$0xf]
          %v2361 = vld [vmem:[%s309 + $0x14] sm:$0xf]
          %v2362 = vld [vmem:[%s309 + $0x18] sm:$0xf]
          %v2363 = vld [vmem:[%s309 + $0x1c] sm:$0xf]
          %v2364 = vld [vmem:[%s309 + $0x20] sm:$0xf]
          %v2365 = vld [vmem:[%s309 + $0x24] sm:$0xf]
          %v2366 = vld [vmem:[%s309 + $0x28] sm:$0xf]
          %v2367 = vld [vmem:[%s309 + $0x2c] sm:$0xf]
          %v2368 = vld [vmem:[%s309 + $0x30] sm:$0x3]
          %v2382 = vunpack.c.l.b16 %v2356
          %v2383 = vunpack.c.l.b16 %v2357
          %v2384 = vunpack.c.l.b16 %v2358
          %v2385 = vunpack.c.l.b16 %v2359
          %v2386 = vunpack.c.l.b16 %v2360
          %v2387 = vunpack.c.l.b16 %v2361
          %v2388 = vunpack.c.l.b16 %v2362
          %v2389 = vunpack.c.l.b16 %v2363
          %v2390 = vunpack.c.l.b16 %v2364
          %v2391 = vunpack.c.l.b16 %v2365
          %v2392 = vunpack.c.l.b16 %v2366
          %v2393 = vunpack.c.l.b16 %v2367
          %v2394 = vunpack.c.l.b16 %v2368
          %v2395 = vpack.c.b16 %v2383, %v2382
          %v2396 = vpack.c.b16 %v2385, %v2384
          %v2397 = vpack.c.b16 %v2387, %v2386
          %v2398 = vpack.c.b16 %v2389, %v2388
          %v2399 = vpack.c.b16 %v2391, %v2390
          %v2400 = vpack.c.b16 %v2393, %v2392
          %v2401 = vpack.c.b16 %v2394, %v2394
          %v2409 = vsel %vm2217, %v2355, 0
          %vm2411 = vcmask 1041408
          %v2413 = vsel %vm2411, %v2401, 0
          %2415 = vmatprep.subr.bf16.mxu0 0
          %2416 = vmatpush1.bf16.msra.mxu0 %v2395
          %2417 = vmatprep.subr.bf16.mxu0 0
          %2418 = vmatpush1.bf16.msra.mxu0 %v2396
          %2419 = vmatprep.subr.bf16.mxu0 0
          %2420 = vmatpush1.bf16.msra.mxu0 %v2397
          %2421 = vmatprep.subr.bf16.mxu0 0
          %2422 = vmatpush1.bf16.msra.mxu0 %v2398
          %2423 = vmatprep.subr.bf16.mxu0 0
          %2424 = vmatpush1.bf16.msra.mxu0 %v2399
          %2425 = vmatprep.subr.bf16.mxu0 0
          %2426 = vmatpush1.bf16.msra.mxu0 %v2400
          %2427 = vmatprep.subr.bf16.mxu0 0
          %2428 = vmatpush1.bf16.msra.mxu0 %v2413
          %2429 = vmatprep.subr.bf16.mxu0 0
          %2430 = vmatpush1.bf16.msra.mxu0 0
          %2431 = vmatprep.subr.bf16.mxu0 0
          %2432 = vmatpush1.bf16.msra.mxu0 0
          %2433 = vmatprep.subr.bf16.mxu0 0
          %2434 = vmatpush1.bf16.msra.mxu0 0
          %2435 = vmatprep.subr.bf16.mxu0 0
          %2436 = vmatpush1.bf16.msra.mxu0 0
          %2437 = vmatprep.subr.bf16.mxu0 0
          %2438 = vmatpush1.bf16.msra.mxu0 0
          %2439 = vmatprep.subr.bf16.mxu0 0
          %2440 = vmatpush1.bf16.msra.mxu0 0
          %2441 = vmatprep.subr.bf16.mxu0 0
          %2442 = vmatpush1.bf16.msra.mxu0 0
          %2443 = vmatprep.subr.bf16.mxu0 0
          %2444 = vmatpush1.bf16.msra.mxu0 0
          %2445 = vmatprep.subr.bf16.mxu0 0
          %2446 = vmatpush1.bf16.msra.mxu0 0
          %2447 = vmatprep.mubr.bf16.mxu0 0
          %2448 = vmatmul.mubr.bf16.gmra.mrb[0].mxu0 %v2409
          %v2449 = vpop.f32.mrb[0].mxu0
          %v2450 = vadd.f32 0.0, %v2449
          %v2451 = vpop.f32.mrb[0].mxu0
          %v2452 = vpop.f32.mrb[0].mxu0
          %v2453 = vpop.f32.mrb[0].mxu0
          %2454 = vdwg.mxu0
          %v2455 = vadd.f32 %v2354, %v2450
          %2456 = vst [vmem:[#allocation17] sm:$0x3] %v2455
        $region72: #{textcnn_forward.1} parent=39 // pred_fallthru
          _
        %s2457 = sadd.s32 %s358, 1
        %s2458 = sld [smem:[#allocation5 + %s2457]]
        %p2459 = scmp.eq.s32.totalorder %s2458, 1
        // Predicated region
        $region73: #{textcnn_forward.1} parent=39 // pred_check
          %p2460 = pneg %p2459
        $region74: #{textcnn_forward.1} parent=39 // pred_check_branch
          %2462 = sbr.rel (%p2460) target = $region76
        $region75: #{textcnn_forward.1} parent=39 // pred_region
          %2463 = vst.msk [vmem:[#allocation2] sm:$0xff] %vm2217, 0.0
          %2464 = vst.msk [vmem:[#allocation2 + $0x8] sm:$0xff] %vm2217, 0.0
          %2465 = vst.msk [vmem:[#allocation2 + $0x10] sm:$0xff] %vm2217, 0.0
          %2466 = vst.msk [vmem:[#allocation2 + $0x18] sm:$0xff] %vm2217, 0.0
        $region76: #{textcnn_forward.1} parent=39 // pred_fallthru
          _
        %s2467 = sld [smem:[#allocation4 + %s2457]]
        %s2468 = smul.u32 %s2467, 96
        %s2469 = smul.addr %s2468, 4
        %s2470 = scalar_lea.vmem [#allocation8], %s2469
        %v2471 = vld [vmem:[%s2470] sm:$0xff]
        %v2472 = vld [vmem:[%s2470 + $0x8] sm:$0xff]
        %v2473 = vld [vmem:[%s2470 + $0x10] sm:$0xff]
        %v2474 = vld [vmem:[%s2470 + $0x18] sm:$0xff]
        %v2475 = vld [vmem:[%s2470 + $0x20] sm:$0xff]
        %v2476 = vld [vmem:[%s2470 + $0x28] sm:$0xff]
        %v2477 = vld [vmem:[%s2470 + $0x30] sm:$0xff]
        %v2478 = vld [vmem:[%s2470 + $0x38] sm:$0xff]
        %v2479 = vld [vmem:[%s2470 + $0x40] sm:$0xff]
        %v2480 = vld [vmem:[%s2470 + $0x48] sm:$0xff]
        %v2481 = vld [vmem:[%s2470 + $0x50] sm:$0xff]
        %v2482 = vld [vmem:[%s2470 + $0x58] sm:$0xff]
        %v2483 = vld [vmem:[%s2470 + $0x60] sm:$0xff]
        %v2484 = vld [vmem:[%s2470 + $0x68] sm:$0xff]
        %v2485 = vld [vmem:[%s2470 + $0x70] sm:$0xff]
        %v2486 = vld [vmem:[%s2470 + $0x78] sm:$0xff]
        %v2487 = vld [vmem:[%s2470 + $0x80] sm:$0xff]
        %v2488 = vld [vmem:[%s2470 + $0x88] sm:$0xff]
        %v2489 = vld [vmem:[%s2470 + $0x90] sm:$0xff]
        %v2490 = vld [vmem:[%s2470 + $0x98] sm:$0xff]
        %v2491 = vld [vmem:[%s2470 + $0xa0] sm:$0xff]
        %v2492 = vld [vmem:[%s2470 + $0xa8] sm:$0xff]
        %v2493 = vld [vmem:[%s2470 + $0xb0] sm:$0xff]
        %v2494 = vld [vmem:[%s2470 + $0xb8] sm:$0xff]
        %v2495 = vld [vmem:[%s2470 + $0xc0] sm:$0xff]
        %v2496 = vld [vmem:[%s2470 + $0xc8] sm:$0xff]
        %v2497 = vld [vmem:[%s2470 + $0xd0] sm:$0xff]
        %v2498 = vld [vmem:[%s2470 + $0xd8] sm:$0xff]
        %v2499 = vld [vmem:[%s2470 + $0xe0] sm:$0xff]
        %v2500 = vld [vmem:[%s2470 + $0xe8] sm:$0xff]
        %v2501 = vld [vmem:[%s2470 + $0xf0] sm:$0xff]
        %v2502 = vld [vmem:[%s2470 + $0xf8] sm:$0xff]
        %v2503 = vld [vmem:[%s2470 + $0x100] sm:$0xff]
        %v2504 = vld [vmem:[%s2470 + $0x108] sm:$0xff]
        %v2505 = vld [vmem:[%s2470 + $0x110] sm:$0xff]
        %v2506 = vld [vmem:[%s2470 + $0x118] sm:$0xff]
        %v2507 = vld [vmem:[%s2470 + $0x120] sm:$0xff]
        %v2508 = vld [vmem:[%s2470 + $0x128] sm:$0xff]
        %v2509 = vld [vmem:[%s2470 + $0x130] sm:$0xff]
        %v2510 = vld [vmem:[%s2470 + $0x138] sm:$0xff]
        %v2511 = vld [vmem:[%s2470 + $0x140] sm:$0xff]
        %v2512 = vld [vmem:[%s2470 + $0x148] sm:$0xff]
        %v2513 = vld [vmem:[%s2470 + $0x150] sm:$0xff]
        %v2514 = vld [vmem:[%s2470 + $0x158] sm:$0xff]
        %v2515 = vld [vmem:[%s2470 + $0x160] sm:$0xff]
        %v2516 = vld [vmem:[%s2470 + $0x168] sm:$0xff]
        %v2517 = vld [vmem:[%s2470 + $0x170] sm:$0xff]
        %v2518 = vld [vmem:[%s2470 + $0x178] sm:$0xff]
        %s2519 = scalar_lea.vmem %s292, 1248 [#allocation11]
        %v2520 = vld [vmem:[%s2519] sm:$0xff]
        %v2521 = vld [vmem:[%s2519 + $0x8] sm:$0xff]
        %v2522 = vld [vmem:[%s2519 + $0x10] sm:$0xff]
        %v2523 = vld [vmem:[%s2519 + $0x18] sm:$0xff]
        %v2524 = vld [vmem:[%s2519 + $0x20] sm:$0xff]
        %v2525 = vld [vmem:[%s2519 + $0x28] sm:$0xff]
        %v2526 = vld [vmem:[%s2519 + $0x30] sm:$0xff]
        %v2527 = vld [vmem:[%s2519 + $0x38] sm:$0xff]
        %v2528 = vld [vmem:[%s2519 + $0x40] sm:$0xff]
        %v2529 = vld [vmem:[%s2519 + $0x48] sm:$0xff]
        %v2530 = vld [vmem:[%s2519 + $0x50] sm:$0xff]
        %v2531 = vld [vmem:[%s2519 + $0x58] sm:$0xff]
        %v2532 = vld [vmem:[%s2519 + $0x60] sm:$0xff]
        %v2533 = vld [vmem:[%s2519 + $0x68] sm:$0xff]
        %v2534 = vld [vmem:[%s2519 + $0x70] sm:$0xff]
        %v2535 = vld [vmem:[%s2519 + $0x78] sm:$0xff]
        %v2536 = vld [vmem:[%s2519 + $0x80] sm:$0xff]
        %v2537 = vld [vmem:[%s2519 + $0x88] sm:$0xff]
        %v2538 = vld [vmem:[%s2519 + $0x90] sm:$0xff]
        %v2539 = vld [vmem:[%s2519 + $0x98] sm:$0xff]
        %v2540 = vld [vmem:[%s2519 + $0xa0] sm:$0xff]
        %v2541 = vld [vmem:[%s2519 + $0xa8] sm:$0xff]
        %v2542 = vld [vmem:[%s2519 + $0xb0] sm:$0xff]
        %v2543 = vld [vmem:[%s2519 + $0xb8] sm:$0xff]
        %v2544 = vld [vmem:[%s2519 + $0xc0] sm:$0xff]
        %v2545 = vld [vmem:[%s2519 + $0xc8] sm:$0xff]
        %v2546 = vld [vmem:[%s2519 + $0xd0] sm:$0xff]
        %v2547 = vld [vmem:[%s2519 + $0xd8] sm:$0xff]
        %v2548 = vld [vmem:[%s2519 + $0xe0] sm:$0xff]
        %v2549 = vld [vmem:[%s2519 + $0xe8] sm:$0xff]
        %v2550 = vld [vmem:[%s2519 + $0xf0] sm:$0xff]
        %v2551 = vld [vmem:[%s2519 + $0xf8] sm:$0xff]
        %v2552 = vld [vmem:[%s2519 + $0x100] sm:$0xff]
        %v2553 = vld [vmem:[%s2519 + $0x108] sm:$0xff]
        %v2554 = vld [vmem:[%s2519 + $0x110] sm:$0xff]
        %v2555 = vld [vmem:[%s2519 + $0x118] sm:$0xff]
        %v2556 = vld [vmem:[%s2519 + $0x120] sm:$0xff]
        %v2557 = vld [vmem:[%s2519 + $0x128] sm:$0xff]
        %v2558 = vld [vmem:[%s2519 + $0x130] sm:$0xff]
        %v2559 = vld [vmem:[%s2519 + $0x138] sm:$0xff]
        %v2560 = vld [vmem:[%s2519 + $0x140] sm:$0xff]
        %v2561 = vld [vmem:[%s2519 + $0x148] sm:$0xff]
        %v2562 = vld [vmem:[%s2519 + $0x150] sm:$0xff]
        %v2563 = vld [vmem:[%s2519 + $0x158] sm:$0xff]
        %v2564 = vld [vmem:[%s2519 + $0x160] sm:$0xff]
        %v2565 = vld [vmem:[%s2519 + $0x168] sm:$0xff]
        %v2566 = vld [vmem:[%s2519 + $0x170] sm:$0xff]
        %v2567 = vld [vmem:[%s2519 + $0x178] sm:$0xff]
        %v2568 = vld [vmem:[%s2519 + $0x180] sm:$0xff]
        %v2569 = vld [vmem:[%s2519 + $0x188] sm:$0xff]
        %v2570 = vld [vmem:[%s2519 + $0x190] sm:$0xff]
        %v2571 = vld [vmem:[%s2519 + $0x198] sm:$0xff]
        %v2572 = vld [vmem:[%s2519 + $0x1a0] sm:$0xff]
        %v2573 = vld [vmem:[%s2519 + $0x1a8] sm:$0xff]
        %v2574 = vld [vmem:[%s2519 + $0x1b0] sm:$0xff]
        %v2575 = vld [vmem:[%s2519 + $0x1b8] sm:$0xff]
        %v2576 = vld [vmem:[%s2519 + $0x1c0] sm:$0xff]
        %v2577 = vld [vmem:[%s2519 + $0x1c8] sm:$0xff]
        %v2578 = vld [vmem:[%s2519 + $0x1d0] sm:$0xff]
        %v2579 = vld [vmem:[%s2519 + $0x1d8] sm:$0xff]
        %v2580 = vld [vmem:[%s2519 + $0x1e0] sm:$0xff]
        %v2581 = vld [vmem:[%s2519 + $0x1e8] sm:$0xff]
        %v2582 = vld [vmem:[%s2519 + $0x1f0] sm:$0xff]
        %v2583 = vld [vmem:[%s2519 + $0x1f8] sm:$0xff]
        %v2584 = vld [vmem:[%s2519 + $0x200] sm:$0xff]
        %v2585 = vld [vmem:[%s2519 + $0x208] sm:$0xff]
        %v2586 = vld [vmem:[%s2519 + $0x210] sm:$0xff]
        %v2587 = vld [vmem:[%s2519 + $0x218] sm:$0xff]
        %v2588 = vld [vmem:[%s2519 + $0x220] sm:$0xff]
        %v2589 = vld [vmem:[%s2519 + $0x228] sm:$0xff]
        %v2590 = vld [vmem:[%s2519 + $0x230] sm:$0xff]
        %v2591 = vld [vmem:[%s2519 + $0x238] sm:$0xff]
        %v2592 = vld [vmem:[%s2519 + $0x240] sm:$0xff]
        %v2593 = vld [vmem:[%s2519 + $0x248] sm:$0xff]
        %v2594 = vld [vmem:[%s2519 + $0x250] sm:$0xff]
        %v2595 = vld [vmem:[%s2519 + $0x258] sm:$0xff]
        %v2596 = vld [vmem:[%s2519 + $0x260] sm:$0xff]
        %v2597 = vld [vmem:[%s2519 + $0x268] sm:$0xff]
        %v2598 = vld [vmem:[%s2519 + $0x270] sm:$0xff]
        %v2599 = vld [vmem:[%s2519 + $0x278] sm:$0xff]
        %v2600 = vld [vmem:[%s2519 + $0x280] sm:$0xff]
        %v2601 = vld [vmem:[%s2519 + $0x288] sm:$0xff]
        %v2602 = vld [vmem:[%s2519 + $0x290] sm:$0xff]
        %v2603 = vld [vmem:[%s2519 + $0x298] sm:$0xff]
        %v2604 = vld [vmem:[%s2519 + $0x2a0] sm:$0xff]
        %v2605 = vld [vmem:[%s2519 + $0x2a8] sm:$0xff]
        %v2606 = vld [vmem:[%s2519 + $0x2b0] sm:$0xff]
        %v2607 = vld [vmem:[%s2519 + $0x2b8] sm:$0xff]
        %v2608 = vld [vmem:[%s2519 + $0x2c0] sm:$0xff]
        %v2609 = vld [vmem:[%s2519 + $0x2c8] sm:$0xff]
        %v2610 = vld [vmem:[%s2519 + $0x2d0] sm:$0xff]
        %v2611 = vld [vmem:[%s2519 + $0x2d8] sm:$0xff]
        %v2612 = vld [vmem:[%s2519 + $0x2e0] sm:$0xff]
        %v2613 = vld [vmem:[%s2519 + $0x2e8] sm:$0xff]
        %v2614 = vld [vmem:[%s2519 + $0x2f0] sm:$0xff]
        %v2615 = vld [vmem:[%s2519 + $0x2f8] sm:$0xff]
        %v2616 = vld [vmem:[%s2519 + $0x300] sm:$0xff]
        %v2617 = vld [vmem:[%s2519 + $0x308] sm:$0xff]
        %v2618 = vld [vmem:[%s2519 + $0x310] sm:$0xff]
        %v2619 = vld [vmem:[%s2519 + $0x318] sm:$0xff]
        %v2620 = vld [vmem:[%s2519 + $0x320] sm:$0xff]
        %v2621 = vld [vmem:[%s2519 + $0x328] sm:$0xff]
        %v2622 = vld [vmem:[%s2519 + $0x330] sm:$0xff]
        %v2623 = vld [vmem:[%s2519 + $0x338] sm:$0xff]
        %v2624 = vld [vmem:[%s2519 + $0x340] sm:$0xff]
        %v2625 = vld [vmem:[%s2519 + $0x348] sm:$0xff]
        %v2626 = vld [vmem:[%s2519 + $0x350] sm:$0xff]
        %v2627 = vld [vmem:[%s2519 + $0x358] sm:$0xff]
        %v2628 = vld [vmem:[%s2519 + $0x360] sm:$0xff]
        %v2629 = vld [vmem:[%s2519 + $0x368] sm:$0xff]
        %v2630 = vld [vmem:[%s2519 + $0x370] sm:$0xff]
        %v2631 = vld [vmem:[%s2519 + $0x378] sm:$0xff]
        %v2632 = vld [vmem:[%s2519 + $0x380] sm:$0xff]
        %v2633 = vld [vmem:[%s2519 + $0x388] sm:$0xff]
        %v2634 = vld [vmem:[%s2519 + $0x390] sm:$0xff]
        %v2635 = vld [vmem:[%s2519 + $0x398] sm:$0xff]
        %v2636 = vld [vmem:[%s2519 + $0x3a0] sm:$0xff]
        %v2637 = vld [vmem:[%s2519 + $0x3a8] sm:$0xff]
        %v2638 = vld [vmem:[%s2519 + $0x3b0] sm:$0xff]
        %v2639 = vld [vmem:[%s2519 + $0x3b8] sm:$0xff]
        %v2640 = vld [vmem:[%s2519 + $0x3c0] sm:$0xff]
        %v2641 = vld [vmem:[%s2519 + $0x3c8] sm:$0xff]
        %v2642 = vld [vmem:[%s2519 + $0x3d0] sm:$0xff]
        %v2643 = vld [vmem:[%s2519 + $0x3d8] sm:$0xff]
        %v2644 = vld [vmem:[%s2519 + $0x3e0] sm:$0xff]
        %v2645 = vld [vmem:[%s2519 + $0x3e8] sm:$0xff]
        %v2646 = vld [vmem:[%s2519 + $0x3f0] sm:$0xff]
        %v2647 = vld [vmem:[%s2519 + $0x3f8] sm:$0xff]
        %v2648 = vld [vmem:[%s2519 + $0x400] sm:$0xff]
        %v2649 = vld [vmem:[%s2519 + $0x408] sm:$0xff]
        %v2650 = vld [vmem:[%s2519 + $0x410] sm:$0xff]
        %v2651 = vld [vmem:[%s2519 + $0x418] sm:$0xff]
        %v2652 = vld [vmem:[%s2519 + $0x420] sm:$0xff]
        %v2653 = vld [vmem:[%s2519 + $0x428] sm:$0xff]
        %v2654 = vld [vmem:[%s2519 + $0x430] sm:$0xff]
        %v2655 = vld [vmem:[%s2519 + $0x438] sm:$0xff]
        %v2656 = vld [vmem:[%s2519 + $0x440] sm:$0xff]
        %v2657 = vld [vmem:[%s2519 + $0x448] sm:$0xff]
        %v2658 = vld [vmem:[%s2519 + $0x450] sm:$0xff]
        %v2659 = vld [vmem:[%s2519 + $0x458] sm:$0xff]
        %v2660 = vld [vmem:[%s2519 + $0x460] sm:$0xff]
        %v2661 = vld [vmem:[%s2519 + $0x468] sm:$0xff]
        %v2662 = vld [vmem:[%s2519 + $0x470] sm:$0xff]
        %v2663 = vld [vmem:[%s2519 + $0x478] sm:$0xff]
        %v2664 = vld [vmem:[%s2519 + $0x480] sm:$0x33]
        %v2665 = vld [vmem:[%s2519 + $0x488] sm:$0x33]
        %v2666 = vld [vmem:[%s2519 + $0x490] sm:$0x33]
        %v2667 = vld [vmem:[%s2519 + $0x498] sm:$0x33]
        %v2668 = vld [vmem:[%s2519 + $0x4a0] sm:$0x33]
        %v2669 = vld [vmem:[%s2519 + $0x4a8] sm:$0x33]
        %v2670 = vld [vmem:[%s2519 + $0x4b0] sm:$0x33]
        %v2671 = vld [vmem:[%s2519 + $0x4b8] sm:$0x33]
        %v2672 = vld [vmem:[%s2519 + $0x4c0] sm:$0x33]
        %v2673 = vld [vmem:[%s2519 + $0x4c8] sm:$0x33]
        %v2674 = vld [vmem:[%s2519 + $0x4d0] sm:$0x33]
        %v2675 = vld [vmem:[%s2519 + $0x4d8] sm:$0x33]
        %v2676 = vld [vmem:[#allocation2] sm:$0xff]
        %v2677 = vld [vmem:[#allocation2 + $0x8] sm:$0xff]
        %v2678 = vld [vmem:[#allocation2 + $0x10] sm:$0xff]
        %v2679 = vld [vmem:[#allocation2 + $0x18] sm:$0xff]
        %v2728 = vunpack.c.l.b16 %v2471
        %v2729 = vunpack.c.h.b16 %v2471
        %v2730 = vunpack.c.l.b16 %v2472
        %v2731 = vunpack.c.h.b16 %v2472
        %v2732 = vunpack.c.l.b16 %v2473
        %v2733 = vunpack.c.h.b16 %v2473
        %v2734 = vunpack.c.l.b16 %v2474
        %v2735 = vunpack.c.h.b16 %v2474
        %v2736 = vunpack.c.l.b16 %v2475
        %v2737 = vunpack.c.h.b16 %v2475
        %v2738 = vunpack.c.l.b16 %v2476
        %v2739 = vunpack.c.h.b16 %v2476
        %v2740 = vunpack.c.l.b16 %v2477
        %v2741 = vunpack.c.h.b16 %v2477
        %v2742 = vunpack.c.l.b16 %v2478
        %v2743 = vunpack.c.h.b16 %v2478
        %v2744 = vunpack.c.l.b16 %v2479
        %v2745 = vunpack.c.h.b16 %v2479
        %v2746 = vunpack.c.l.b16 %v2480
        %v2747 = vunpack.c.h.b16 %v2480
        %v2748 = vunpack.c.l.b16 %v2481
        %v2749 = vunpack.c.h.b16 %v2481
        %v2750 = vunpack.c.l.b16 %v2482
        %v2751 = vunpack.c.h.b16 %v2482
        %v2752 = vunpack.c.l.b16 %v2483
        %v2753 = vunpack.c.h.b16 %v2483
        %v2754 = vunpack.c.l.b16 %v2484
        %v2755 = vunpack.c.h.b16 %v2484
        %v2756 = vunpack.c.l.b16 %v2485
        %v2757 = vunpack.c.h.b16 %v2485
        %v2758 = vunpack.c.l.b16 %v2486
        %v2759 = vunpack.c.h.b16 %v2486
        %v2760 = vunpack.c.l.b16 %v2487
        %v2761 = vunpack.c.h.b16 %v2487
        %v2762 = vunpack.c.l.b16 %v2488
        %v2763 = vunpack.c.h.b16 %v2488
        %v2764 = vunpack.c.l.b16 %v2489
        %v2765 = vunpack.c.h.b16 %v2489
        %v2766 = vunpack.c.l.b16 %v2490
        %v2767 = vunpack.c.h.b16 %v2490
        %v2768 = vunpack.c.l.b16 %v2491
        %v2769 = vunpack.c.h.b16 %v2491
        %v2770 = vunpack.c.l.b16 %v2492
        %v2771 = vunpack.c.h.b16 %v2492
        %v2772 = vunpack.c.l.b16 %v2493
        %v2773 = vunpack.c.h.b16 %v2493
        %v2774 = vunpack.c.l.b16 %v2494
        %v2775 = vunpack.c.h.b16 %v2494
        %v2776 = vunpack.c.l.b16 %v2495
        %v2777 = vunpack.c.h.b16 %v2495
        %v2778 = vunpack.c.l.b16 %v2496
        %v2779 = vunpack.c.h.b16 %v2496
        %v2780 = vunpack.c.l.b16 %v2497
        %v2781 = vunpack.c.h.b16 %v2497
        %v2782 = vunpack.c.l.b16 %v2498
        %v2783 = vunpack.c.h.b16 %v2498
        %v2784 = vunpack.c.l.b16 %v2499
        %v2785 = vunpack.c.h.b16 %v2499
        %v2786 = vunpack.c.l.b16 %v2500
        %v2787 = vunpack.c.h.b16 %v2500
        %v2788 = vunpack.c.l.b16 %v2501
        %v2789 = vunpack.c.h.b16 %v2501
        %v2790 = vunpack.c.l.b16 %v2502
        %v2791 = vunpack.c.h.b16 %v2502
        %v2792 = vunpack.c.l.b16 %v2503
        %v2793 = vunpack.c.h.b16 %v2503
        %v2794 = vunpack.c.l.b16 %v2504
        %v2795 = vunpack.c.h.b16 %v2504
        %v2796 = vunpack.c.l.b16 %v2505
        %v2797 = vunpack.c.h.b16 %v2505
        %v2798 = vunpack.c.l.b16 %v2506
        %v2799 = vunpack.c.h.b16 %v2506
        %v2800 = vunpack.c.l.b16 %v2507
        %v2801 = vunpack.c.h.b16 %v2507
        %v2802 = vunpack.c.l.b16 %v2508
        %v2803 = vunpack.c.h.b16 %v2508
        %v2804 = vunpack.c.l.b16 %v2509
        %v2805 = vunpack.c.h.b16 %v2509
        %v2806 = vunpack.c.l.b16 %v2510
        %v2807 = vunpack.c.h.b16 %v2510
        %v2808 = vunpack.c.l.b16 %v2511
        %v2809 = vunpack.c.h.b16 %v2511
        %v2810 = vunpack.c.l.b16 %v2512
        %v2811 = vunpack.c.h.b16 %v2512
        %v2812 = vunpack.c.l.b16 %v2513
        %v2813 = vunpack.c.h.b16 %v2513
        %v2814 = vunpack.c.l.b16 %v2514
        %v2815 = vunpack.c.h.b16 %v2514
        %v2816 = vunpack.c.l.b16 %v2515
        %v2817 = vunpack.c.h.b16 %v2515
        %v2818 = vunpack.c.l.b16 %v2516
        %v2819 = vunpack.c.h.b16 %v2516
        %v2820 = vunpack.c.l.b16 %v2517
        %v2821 = vunpack.c.h.b16 %v2517
        %v2822 = vunpack.c.l.b16 %v2518
        %v2823 = vunpack.c.h.b16 %v2518
        %v2824 = vpack.c.b16 %v2752, %v2728
        %v2825 = vpack.c.b16 %v2753, %v2729
        %v2826 = vpack.c.b16 %v2754, %v2730
        %v2827 = vpack.c.b16 %v2755, %v2731
        %v2828 = vpack.c.b16 %v2756, %v2732
        %v2829 = vpack.c.b16 %v2757, %v2733
        %v2830 = vpack.c.b16 %v2758, %v2734
        %v2831 = vpack.c.b16 %v2759, %v2735
        %v2832 = vpack.c.b16 %v2760, %v2736
        %v2833 = vpack.c.b16 %v2761, %v2737
        %v2834 = vpack.c.b16 %v2762, %v2738
        %v2835 = vpack.c.b16 %v2763, %v2739
        %v2836 = vpack.c.b16 %v2764, %v2740
        %v2837 = vpack.c.b16 %v2765, %v2741
        %v2838 = vpack.c.b16 %v2766, %v2742
        %v2839 = vpack.c.b16 %v2767, %v2743
        %v2840 = vpack.c.b16 %v2768, %v2744
        %v2841 = vpack.c.b16 %v2769, %v2745
        %v2842 = vpack.c.b16 %v2770, %v2746
        %v2843 = vpack.c.b16 %v2771, %v2747
        %v2844 = vpack.c.b16 %v2772, %v2748
        %v2845 = vpack.c.b16 %v2773, %v2749
        %v2846 = vpack.c.b16 %v2774, %v2750
        %v2847 = vpack.c.b16 %v2775, %v2751
        %v2848 = vpack.c.b16 %v2800, %v2776
        %v2849 = vpack.c.b16 %v2801, %v2777
        %v2850 = vpack.c.b16 %v2802, %v2778
        %v2851 = vpack.c.b16 %v2803, %v2779
        %v2852 = vpack.c.b16 %v2804, %v2780
        %v2853 = vpack.c.b16 %v2805, %v2781
        %v2854 = vpack.c.b16 %v2806, %v2782
        %v2855 = vpack.c.b16 %v2807, %v2783
        %v2856 = vpack.c.b16 %v2808, %v2784
        %v2857 = vpack.c.b16 %v2809, %v2785
        %v2858 = vpack.c.b16 %v2810, %v2786
        %v2859 = vpack.c.b16 %v2811, %v2787
        %v2860 = vpack.c.b16 %v2812, %v2788
        %v2861 = vpack.c.b16 %v2813, %v2789
        %v2862 = vpack.c.b16 %v2814, %v2790
        %v2863 = vpack.c.b16 %v2815, %v2791
        %v2864 = vpack.c.b16 %v2816, %v2792
        %v2865 = vpack.c.b16 %v2817, %v2793
        %v2866 = vpack.c.b16 %v2818, %v2794
        %v2867 = vpack.c.b16 %v2819, %v2795
        %v2868 = vpack.c.b16 %v2820, %v2796
        %v2869 = vpack.c.b16 %v2821, %v2797
        %v2870 = vpack.c.b16 %v2822, %v2798
        %v2871 = vpack.c.b16 %v2823, %v2799
        %v3076 = vunpack.c.l.b16 %v2520
        %v3077 = vunpack.c.h.b16 %v2520
        %v3078 = vunpack.c.l.b16 %v2521
        %v3079 = vunpack.c.h.b16 %v2521
        %v3080 = vunpack.c.l.b16 %v2522
        %v3081 = vunpack.c.h.b16 %v2522
        %v3082 = vunpack.c.l.b16 %v2523
        %v3083 = vunpack.c.h.b16 %v2523
        %v3084 = vunpack.c.l.b16 %v2524
        %v3085 = vunpack.c.h.b16 %v2524
        %v3086 = vunpack.c.l.b16 %v2525
        %v3087 = vunpack.c.h.b16 %v2525
        %v3088 = vunpack.c.l.b16 %v2526
        %v3089 = vunpack.c.h.b16 %v2526
        %v3090 = vunpack.c.l.b16 %v2527
        %v3091 = vunpack.c.h.b16 %v2527
        %v3092 = vunpack.c.l.b16 %v2528
        %v3093 = vunpack.c.h.b16 %v2528
        %v3094 = vunpack.c.l.b16 %v2529
        %v3095 = vunpack.c.h.b16 %v2529
        %v3096 = vunpack.c.l.b16 %v2530
        %v3097 = vunpack.c.h.b16 %v2530
        %v3098 = vunpack.c.l.b16 %v2531
        %v3099 = vunpack.c.h.b16 %v2531
        %v3100 = vunpack.c.l.b16 %v2532
        %v3101 = vunpack.c.h.b16 %v2532
        %v3102 = vunpack.c.l.b16 %v2533
        %v3103 = vunpack.c.h.b16 %v2533
        %v3104 = vunpack.c.l.b16 %v2534
        %v3105 = vunpack.c.h.b16 %v2534
        %v3106 = vunpack.c.l.b16 %v2535
        %v3107 = vunpack.c.h.b16 %v2535
        %v3108 = vunpack.c.l.b16 %v2536
        %v3109 = vunpack.c.h.b16 %v2536
        %v3110 = vunpack.c.l.b16 %v2537
        %v3111 = vunpack.c.h.b16 %v2537
        %v3112 = vunpack.c.l.b16 %v2538
        %v3113 = vunpack.c.h.b16 %v2538
        %v3114 = vunpack.c.l.b16 %v2539
        %v3115 = vunpack.c.h.b16 %v2539
        %v3116 = vunpack.c.l.b16 %v2540
        %v3117 = vunpack.c.h.b16 %v2540
        %v3118 = vunpack.c.l.b16 %v2541
        %v3119 = vunpack.c.h.b16 %v2541
        %v3120 = vunpack.c.l.b16 %v2542
        %v3121 = vunpack.c.h.b16 %v2542
        %v3122 = vunpack.c.l.b16 %v2543
        %v3123 = vunpack.c.h.b16 %v2543
        %v3124 = vunpack.c.l.b16 %v2544
        %v3125 = vunpack.c.h.b16 %v2544
        %v3126 = vunpack.c.l.b16 %v2545
        %v3127 = vunpack.c.h.b16 %v2545
        %v3128 = vunpack.c.l.b16 %v2546
        %v3129 = vunpack.c.h.b16 %v2546
        %v3130 = vunpack.c.l.b16 %v2547
        %v3131 = vunpack.c.h.b16 %v2547
        %v3132 = vunpack.c.l.b16 %v2548
        %v3133 = vunpack.c.h.b16 %v2548
        %v3134 = vunpack.c.l.b16 %v2549
        %v3135 = vunpack.c.h.b16 %v2549
        %v3136 = vunpack.c.l.b16 %v2550
        %v3137 = vunpack.c.h.b16 %v2550
        %v3138 = vunpack.c.l.b16 %v2551
        %v3139 = vunpack.c.h.b16 %v2551
        %v3140 = vunpack.c.l.b16 %v2552
        %v3141 = vunpack.c.h.b16 %v2552
        %v3142 = vunpack.c.l.b16 %v2553
        %v3143 = vunpack.c.h.b16 %v2553
        %v3144 = vunpack.c.l.b16 %v2554
        %v3145 = vunpack.c.h.b16 %v2554
        %v3146 = vunpack.c.l.b16 %v2555
        %v3147 = vunpack.c.h.b16 %v2555
        %v3148 = vunpack.c.l.b16 %v2556
        %v3149 = vunpack.c.h.b16 %v2556
        %v3150 = vunpack.c.l.b16 %v2557
        %v3151 = vunpack.c.h.b16 %v2557
        %v3152 = vunpack.c.l.b16 %v2558
        %v3153 = vunpack.c.h.b16 %v2558
        %v3154 = vunpack.c.l.b16 %v2559
        %v3155 = vunpack.c.h.b16 %v2559
        %v3156 = vunpack.c.l.b16 %v2560
        %v3157 = vunpack.c.h.b16 %v2560
        %v3158 = vunpack.c.l.b16 %v2561
        %v3159 = vunpack.c.h.b16 %v2561
        %v3160 = vunpack.c.l.b16 %v2562
        %v3161 = vunpack.c.h.b16 %v2562
        %v3162 = vunpack.c.l.b16 %v2563
        %v3163 = vunpack.c.h.b16 %v2563
        %v3164 = vunpack.c.l.b16 %v2564
        %v3165 = vunpack.c.h.b16 %v2564
        %v3166 = vunpack.c.l.b16 %v2565
        %v3167 = vunpack.c.h.b16 %v2565
        %v3168 = vunpack.c.l.b16 %v2566
        %v3169 = vunpack.c.h.b16 %v2566
        %v3170 = vunpack.c.l.b16 %v2567
        %v3171 = vunpack.c.h.b16 %v2567
        %v3172 = vunpack.c.l.b16 %v2568
        %v3173 = vunpack.c.h.b16 %v2568
        %v3174 = vunpack.c.l.b16 %v2569
        %v3175 = vunpack.c.h.b16 %v2569
        %v3176 = vunpack.c.l.b16 %v2570
        %v3177 = vunpack.c.h.b16 %v2570
        %v3178 = vunpack.c.l.b16 %v2571
        %v3179 = vunpack.c.h.b16 %v2571
        %v3180 = vunpack.c.l.b16 %v2572
        %v3181 = vunpack.c.h.b16 %v2572
        %v3182 = vunpack.c.l.b16 %v2573
        %v3183 = vunpack.c.h.b16 %v2573
        %v3184 = vunpack.c.l.b16 %v2574
        %v3185 = vunpack.c.h.b16 %v2574
        %v3186 = vunpack.c.l.b16 %v2575
        %v3187 = vunpack.c.h.b16 %v2575
        %v3188 = vunpack.c.l.b16 %v2576
        %v3189 = vunpack.c.h.b16 %v2576
        %v3190 = vunpack.c.l.b16 %v2577
        %v3191 = vunpack.c.h.b16 %v2577
        %v3192 = vunpack.c.l.b16 %v2578
        %v3193 = vunpack.c.h.b16 %v2578
        %v3194 = vunpack.c.l.b16 %v2579
        %v3195 = vunpack.c.h.b16 %v2579
        %v3196 = vunpack.c.l.b16 %v2580
        %v3197 = vunpack.c.h.b16 %v2580
        %v3198 = vunpack.c.l.b16 %v2581
        %v3199 = vunpack.c.h.b16 %v2581
        %v3200 = vunpack.c.l.b16 %v2582
        %v3201 = vunpack.c.h.b16 %v2582
        %v3202 = vunpack.c.l.b16 %v2583
        %v3203 = vunpack.c.h.b16 %v2583
        %v3204 = vunpack.c.l.b16 %v2584
        %v3205 = vunpack.c.h.b16 %v2584
        %v3206 = vunpack.c.l.b16 %v2585
        %v3207 = vunpack.c.h.b16 %v2585
        %v3208 = vunpack.c.l.b16 %v2586
        %v3209 = vunpack.c.h.b16 %v2586
        %v3210 = vunpack.c.l.b16 %v2587
        %v3211 = vunpack.c.h.b16 %v2587
        %v3212 = vunpack.c.l.b16 %v2588
        %v3213 = vunpack.c.h.b16 %v2588
        %v3214 = vunpack.c.l.b16 %v2589
        %v3215 = vunpack.c.h.b16 %v2589
        %v3216 = vunpack.c.l.b16 %v2590
        %v3217 = vunpack.c.h.b16 %v2590
        %v3218 = vunpack.c.l.b16 %v2591
        %v3219 = vunpack.c.h.b16 %v2591
        %v3220 = vunpack.c.l.b16 %v2592
        %v3221 = vunpack.c.h.b16 %v2592
        %v3222 = vunpack.c.l.b16 %v2593
        %v3223 = vunpack.c.h.b16 %v2593
        %v3224 = vunpack.c.l.b16 %v2594
        %v3225 = vunpack.c.h.b16 %v2594
        %v3226 = vunpack.c.l.b16 %v2595
        %v3227 = vunpack.c.h.b16 %v2595
        %v3228 = vunpack.c.l.b16 %v2596
        %v3229 = vunpack.c.h.b16 %v2596
        %v3230 = vunpack.c.l.b16 %v2597
        %v3231 = vunpack.c.h.b16 %v2597
        %v3232 = vunpack.c.l.b16 %v2598
        %v3233 = vunpack.c.h.b16 %v2598
        %v3234 = vunpack.c.l.b16 %v2599
        %v3235 = vunpack.c.h.b16 %v2599
        %v3236 = vunpack.c.l.b16 %v2600
        %v3237 = vunpack.c.h.b16 %v2600
        %v3238 = vunpack.c.l.b16 %v2601
        %v3239 = vunpack.c.h.b16 %v2601
        %v3240 = vunpack.c.l.b16 %v2602
        %v3241 = vunpack.c.h.b16 %v2602
        %v3242 = vunpack.c.l.b16 %v2603
        %v3243 = vunpack.c.h.b16 %v2603
        %v3244 = vunpack.c.l.b16 %v2604
        %v3245 = vunpack.c.h.b16 %v2604
        %v3246 = vunpack.c.l.b16 %v2605
        %v3247 = vunpack.c.h.b16 %v2605
        %v3248 = vunpack.c.l.b16 %v2606
        %v3249 = vunpack.c.h.b16 %v2606
        %v3250 = vunpack.c.l.b16 %v2607
        %v3251 = vunpack.c.h.b16 %v2607
        %v3252 = vunpack.c.l.b16 %v2608
        %v3253 = vunpack.c.h.b16 %v2608
        %v3254 = vunpack.c.l.b16 %v2609
        %v3255 = vunpack.c.h.b16 %v2609
        %v3256 = vunpack.c.l.b16 %v2610
        %v3257 = vunpack.c.h.b16 %v2610
        %v3258 = vunpack.c.l.b16 %v2611
        %v3259 = vunpack.c.h.b16 %v2611
        %v3260 = vunpack.c.l.b16 %v2612
        %v3261 = vunpack.c.h.b16 %v2612
        %v3262 = vunpack.c.l.b16 %v2613
        %v3263 = vunpack.c.h.b16 %v2613
        %v3264 = vunpack.c.l.b16 %v2614
        %v3265 = vunpack.c.h.b16 %v2614
        %v3266 = vunpack.c.l.b16 %v2615
        %v3267 = vunpack.c.h.b16 %v2615
        %v3268 = vunpack.c.l.b16 %v2616
        %v3269 = vunpack.c.h.b16 %v2616
        %v3270 = vunpack.c.l.b16 %v2617
        %v3271 = vunpack.c.h.b16 %v2617
        %v3272 = vunpack.c.l.b16 %v2618
        %v3273 = vunpack.c.h.b16 %v2618
        %v3274 = vunpack.c.l.b16 %v2619
        %v3275 = vunpack.c.h.b16 %v2619
        %v3276 = vunpack.c.l.b16 %v2620
        %v3277 = vunpack.c.h.b16 %v2620
        %v3278 = vunpack.c.l.b16 %v2621
        %v3279 = vunpack.c.h.b16 %v2621
        %v3280 = vunpack.c.l.b16 %v2622
        %v3281 = vunpack.c.h.b16 %v2622
        %v3282 = vunpack.c.l.b16 %v2623
        %v3283 = vunpack.c.h.b16 %v2623
        %v3284 = vunpack.c.l.b16 %v2624
        %v3285 = vunpack.c.h.b16 %v2624
        %v3286 = vunpack.c.l.b16 %v2625
        %v3287 = vunpack.c.h.b16 %v2625
        %v3288 = vunpack.c.l.b16 %v2626
        %v3289 = vunpack.c.h.b16 %v2626
        %v3290 = vunpack.c.l.b16 %v2627
        %v3291 = vunpack.c.h.b16 %v2627
        %v3292 = vunpack.c.l.b16 %v2628
        %v3293 = vunpack.c.h.b16 %v2628
        %v3294 = vunpack.c.l.b16 %v2629
        %v3295 = vunpack.c.h.b16 %v2629
        %v3296 = vunpack.c.l.b16 %v2630
        %v3297 = vunpack.c.h.b16 %v2630
        %v3298 = vunpack.c.l.b16 %v2631
        %v3299 = vunpack.c.h.b16 %v2631
        %v3300 = vunpack.c.l.b16 %v2632
        %v3301 = vunpack.c.h.b16 %v2632
        %v3302 = vunpack.c.l.b16 %v2633
        %v3303 = vunpack.c.h.b16 %v2633
        %v3304 = vunpack.c.l.b16 %v2634
        %v3305 = vunpack.c.h.b16 %v2634
        %v3306 = vunpack.c.l.b16 %v2635
        %v3307 = vunpack.c.h.b16 %v2635
        %v3308 = vunpack.c.l.b16 %v2636
        %v3309 = vunpack.c.h.b16 %v2636
        %v3310 = vunpack.c.l.b16 %v2637
        %v3311 = vunpack.c.h.b16 %v2637
        %v3312 = vunpack.c.l.b16 %v2638
        %v3313 = vunpack.c.h.b16 %v2638
        %v3314 = vunpack.c.l.b16 %v2639
        %v3315 = vunpack.c.h.b16 %v2639
        %v3316 = vunpack.c.l.b16 %v2640
        %v3317 = vunpack.c.h.b16 %v2640
        %v3318 = vunpack.c.l.b16 %v2641
        %v3319 = vunpack.c.h.b16 %v2641
        %v3320 = vunpack.c.l.b16 %v2642
        %v3321 = vunpack.c.h.b16 %v2642
        %v3322 = vunpack.c.l.b16 %v2643
        %v3323 = vunpack.c.h.b16 %v2643
        %v3324 = vunpack.c.l.b16 %v2644
        %v3325 = vunpack.c.h.b16 %v2644
        %v3326 = vunpack.c.l.b16 %v2645
        %v3327 = vunpack.c.h.b16 %v2645
        %v3328 = vunpack.c.l.b16 %v2646
        %v3329 = vunpack.c.h.b16 %v2646
        %v3330 = vunpack.c.l.b16 %v2647
        %v3331 = vunpack.c.h.b16 %v2647
        %v3332 = vunpack.c.l.b16 %v2648
        %v3333 = vunpack.c.h.b16 %v2648
        %v3334 = vunpack.c.l.b16 %v2649
        %v3335 = vunpack.c.h.b16 %v2649
        %v3336 = vunpack.c.l.b16 %v2650
        %v3337 = vunpack.c.h.b16 %v2650
        %v3338 = vunpack.c.l.b16 %v2651
        %v3339 = vunpack.c.h.b16 %v2651
        %v3340 = vunpack.c.l.b16 %v2652
        %v3341 = vunpack.c.h.b16 %v2652
        %v3342 = vunpack.c.l.b16 %v2653
        %v3343 = vunpack.c.h.b16 %v2653
        %v3344 = vunpack.c.l.b16 %v2654
        %v3345 = vunpack.c.h.b16 %v2654
        %v3346 = vunpack.c.l.b16 %v2655
        %v3347 = vunpack.c.h.b16 %v2655
        %v3348 = vunpack.c.l.b16 %v2656
        %v3349 = vunpack.c.h.b16 %v2656
        %v3350 = vunpack.c.l.b16 %v2657
        %v3351 = vunpack.c.h.b16 %v2657
        %v3352 = vunpack.c.l.b16 %v2658
        %v3353 = vunpack.c.h.b16 %v2658
        %v3354 = vunpack.c.l.b16 %v2659
        %v3355 = vunpack.c.h.b16 %v2659
        %v3356 = vunpack.c.l.b16 %v2660
        %v3357 = vunpack.c.h.b16 %v2660
        %v3358 = vunpack.c.l.b16 %v2661
        %v3359 = vunpack.c.h.b16 %v2661
        %v3360 = vunpack.c.l.b16 %v2662
        %v3361 = vunpack.c.h.b16 %v2662
        %v3362 = vunpack.c.l.b16 %v2663
        %v3363 = vunpack.c.h.b16 %v2663
        %v3364 = vunpack.c.l.b16 %v2664
        %v3365 = vunpack.c.h.b16 %v2664
        %v3366 = vunpack.c.l.b16 %v2665
        %v3367 = vunpack.c.h.b16 %v2665
        %v3368 = vunpack.c.l.b16 %v2666
        %v3369 = vunpack.c.h.b16 %v2666
        %v3370 = vunpack.c.l.b16 %v2667
        %v3371 = vunpack.c.h.b16 %v2667
        %v3372 = vunpack.c.l.b16 %v2668
        %v3373 = vunpack.c.h.b16 %v2668
        %v3374 = vunpack.c.l.b16 %v2669
        %v3375 = vunpack.c.h.b16 %v2669
        %v3376 = vunpack.c.l.b16 %v2670
        %v3377 = vunpack.c.h.b16 %v2670
        %v3378 = vunpack.c.l.b16 %v2671
        %v3379 = vunpack.c.h.b16 %v2671
        %v3380 = vunpack.c.l.b16 %v2672
        %v3381 = vunpack.c.h.b16 %v2672
        %v3382 = vunpack.c.l.b16 %v2673
        %v3383 = vunpack.c.h.b16 %v2673
        %v3384 = vunpack.c.l.b16 %v2674
        %v3385 = vunpack.c.h.b16 %v2674
        %v3386 = vunpack.c.l.b16 %v2675
        %v3387 = vunpack.c.h.b16 %v2675
        %v3388 = vpack.c.b16 %v3100, %v3076
        %v3389 = vpack.c.b16 %v3101, %v3077
        %v3390 = vpack.c.b16 %v3102, %v3078
        %v3391 = vpack.c.b16 %v3103, %v3079
        %v3392 = vpack.c.b16 %v3104, %v3080
        %v3393 = vpack.c.b16 %v3105, %v3081
        %v3394 = vpack.c.b16 %v3106, %v3082
        %v3395 = vpack.c.b16 %v3107, %v3083
        %v3396 = vpack.c.b16 %v3108, %v3084
        %v3397 = vpack.c.b16 %v3109, %v3085
        %v3398 = vpack.c.b16 %v3110, %v3086
        %v3399 = vpack.c.b16 %v3111, %v3087
        %v3400 = vpack.c.b16 %v3112, %v3088
        %v3401 = vpack.c.b16 %v3113, %v3089
        %v3402 = vpack.c.b16 %v3114, %v3090
        %v3403 = vpack.c.b16 %v3115, %v3091
        %v3404 = vpack.c.b16 %v3116, %v3092
        %v3405 = vpack.c.b16 %v3117, %v3093
        %v3406 = vpack.c.b16 %v3118, %v3094
        %v3407 = vpack.c.b16 %v3119, %v3095
        %v3408 = vpack.c.b16 %v3120, %v3096
        %v3409 = vpack.c.b16 %v3121, %v3097
        %v3410 = vpack.c.b16 %v3122, %v3098
        %v3411 = vpack.c.b16 %v3123, %v3099
        %v3412 = vpack.c.b16 %v3148, %v3124
        %v3413 = vpack.c.b16 %v3149, %v3125
        %v3414 = vpack.c.b16 %v3150, %v3126
        %v3415 = vpack.c.b16 %v3151, %v3127
        %v3416 = vpack.c.b16 %v3152, %v3128
        %v3417 = vpack.c.b16 %v3153, %v3129
        %v3418 = vpack.c.b16 %v3154, %v3130
        %v3419 = vpack.c.b16 %v3155, %v3131
        %v3420 = vpack.c.b16 %v3156, %v3132
        %v3421 = vpack.c.b16 %v3157, %v3133
        %v3422 = vpack.c.b16 %v3158, %v3134
        %v3423 = vpack.c.b16 %v3159, %v3135
        %v3424 = vpack.c.b16 %v3160, %v3136
        %v3425 = vpack.c.b16 %v3161, %v3137
        %v3426 = vpack.c.b16 %v3162, %v3138
        %v3427 = vpack.c.b16 %v3163, %v3139
        %v3428 = vpack.c.b16 %v3164, %v3140
        %v3429 = vpack.c.b16 %v3165, %v3141
        %v3430 = vpack.c.b16 %v3166, %v3142
        %v3431 = vpack.c.b16 %v3167, %v3143
        %v3432 = vpack.c.b16 %v3168, %v3144
        %v3433 = vpack.c.b16 %v3169, %v3145
        %v3434 = vpack.c.b16 %v3170, %v3146
        %v3435 = vpack.c.b16 %v3171, %v3147
        %v3436 = vpack.c.b16 %v3196, %v3172
        %v3437 = vpack.c.b16 %v3197, %v3173
        %v3438 = vpack.c.b16 %v3198, %v3174
        %v3439 = vpack.c.b16 %v3199, %v3175
        %v3440 = vpack.c.b16 %v3200, %v3176
        %v3441 = vpack.c.b16 %v3201, %v3177
        %v3442 = vpack.c.b16 %v3202, %v3178
        %v3443 = vpack.c.b16 %v3203, %v3179
        %v3444 = vpack.c.b16 %v3204, %v3180
        %v3445 = vpack.c.b16 %v3205, %v3181
        %v3446 = vpack.c.b16 %v3206, %v3182
        %v3447 = vpack.c.b16 %v3207, %v3183
        %v3448 = vpack.c.b16 %v3208, %v3184
        %v3449 = vpack.c.b16 %v3209, %v3185
        %v3450 = vpack.c.b16 %v3210, %v3186
        %v3451 = vpack.c.b16 %v3211, %v3187
        %v3452 = vpack.c.b16 %v3212, %v3188
        %v3453 = vpack.c.b16 %v3213, %v3189
        %v3454 = vpack.c.b16 %v3214, %v3190
        %v3455 = vpack.c.b16 %v3215, %v3191
        %v3456 = vpack.c.b16 %v3216, %v3192
        %v3457 = vpack.c.b16 %v3217, %v3193
        %v3458 = vpack.c.b16 %v3218, %v3194
        %v3459 = vpack.c.b16 %v3219, %v3195
        %v3460 = vpack.c.b16 %v3244, %v3220
        %v3461 = vpack.c.b16 %v3245, %v3221
        %v3462 = vpack.c.b16 %v3246, %v3222
        %v3463 = vpack.c.b16 %v3247, %v3223
        %v3464 = vpack.c.b16 %v3248, %v3224
        %v3465 = vpack.c.b16 %v3249, %v3225
        %v3466 = vpack.c.b16 %v3250, %v3226
        %v3467 = vpack.c.b16 %v3251, %v3227
        %v3468 = vpack.c.b16 %v3252, %v3228
        %v3469 = vpack.c.b16 %v3253, %v3229
        %v3470 = vpack.c.b16 %v3254, %v3230
        %v3471 = vpack.c.b16 %v3255, %v3231
        %v3472 = vpack.c.b16 %v3256, %v3232
        %v3473 = vpack.c.b16 %v3257, %v3233
        %v3474 = vpack.c.b16 %v3258, %v3234
        %v3475 = vpack.c.b16 %v3259, %v3235
        %v3476 = vpack.c.b16 %v3260, %v3236
        %v3477 = vpack.c.b16 %v3261, %v3237
        %v3478 = vpack.c.b16 %v3262, %v3238
        %v3479 = vpack.c.b16 %v3263, %v3239
        %v3480 = vpack.c.b16 %v3264, %v3240
        %v3481 = vpack.c.b16 %v3265, %v3241
        %v3482 = vpack.c.b16 %v3266, %v3242
        %v3483 = vpack.c.b16 %v3267, %v3243
        %v3484 = vpack.c.b16 %v3292, %v3268
        %v3485 = vpack.c.b16 %v3293, %v3269
        %v3486 = vpack.c.b16 %v3294, %v3270
        %v3487 = vpack.c.b16 %v3295, %v3271
        %v3488 = vpack.c.b16 %v3296, %v3272
        %v3489 = vpack.c.b16 %v3297, %v3273
        %v3490 = vpack.c.b16 %v3298, %v3274
        %v3491 = vpack.c.b16 %v3299, %v3275
        %v3492 = vpack.c.b16 %v3300, %v3276
        %v3493 = vpack.c.b16 %v3301, %v3277
        %v3494 = vpack.c.b16 %v3302, %v3278
        %v3495 = vpack.c.b16 %v3303, %v3279
        %v3496 = vpack.c.b16 %v3304, %v3280
        %v3497 = vpack.c.b16 %v3305, %v3281
        %v3498 = vpack.c.b16 %v3306, %v3282
        %v3499 = vpack.c.b16 %v3307, %v3283
        %v3500 = vpack.c.b16 %v3308, %v3284
        %v3501 = vpack.c.b16 %v3309, %v3285
        %v3502 = vpack.c.b16 %v3310, %v3286
        %v3503 = vpack.c.b16 %v3311, %v3287
        %v3504 = vpack.c.b16 %v3312, %v3288
        %v3505 = vpack.c.b16 %v3313, %v3289
        %v3506 = vpack.c.b16 %v3314, %v3290
        %v3507 = vpack.c.b16 %v3315, %v3291
        %v3508 = vpack.c.b16 %v3340, %v3316
        %v3509 = vpack.c.b16 %v3341, %v3317
        %v3510 = vpack.c.b16 %v3342, %v3318
        %v3511 = vpack.c.b16 %v3343, %v3319
        %v3512 = vpack.c.b16 %v3344, %v3320
        %v3513 = vpack.c.b16 %v3345, %v3321
        %v3514 = vpack.c.b16 %v3346, %v3322
        %v3515 = vpack.c.b16 %v3347, %v3323
        %v3516 = vpack.c.b16 %v3348, %v3324
        %v3517 = vpack.c.b16 %v3349, %v3325
        %v3518 = vpack.c.b16 %v3350, %v3326
        %v3519 = vpack.c.b16 %v3351, %v3327
        %v3520 = vpack.c.b16 %v3352, %v3328
        %v3521 = vpack.c.b16 %v3353, %v3329
        %v3522 = vpack.c.b16 %v3354, %v3330
        %v3523 = vpack.c.b16 %v3355, %v3331
        %v3524 = vpack.c.b16 %v3356, %v3332
        %v3525 = vpack.c.b16 %v3357, %v3333
        %v3526 = vpack.c.b16 %v3358, %v3334
        %v3527 = vpack.c.b16 %v3359, %v3335
        %v3528 = vpack.c.b16 %v3360, %v3336
        %v3529 = vpack.c.b16 %v3361, %v3337
        %v3530 = vpack.c.b16 %v3362, %v3338
        %v3531 = vpack.c.b16 %v3363, %v3339
        %v3532 = vpack.c.b16 %v3364, %v3364
        %v3533 = vpack.c.b16 %v3365, %v3365
        %v3534 = vpack.c.b16 %v3366, %v3366
        %v3535 = vpack.c.b16 %v3367, %v3367
        %v3536 = vpack.c.b16 %v3368, %v3368
        %v3537 = vpack.c.b16 %v3369, %v3369
        %v3538 = vpack.c.b16 %v3370, %v3370
        %v3539 = vpack.c.b16 %v3371, %v3371
        %v3540 = vpack.c.b16 %v3372, %v3372
        %v3541 = vpack.c.b16 %v3373, %v3373
        %v3542 = vpack.c.b16 %v3374, %v3374
        %v3543 = vpack.c.b16 %v3375, %v3375
        %v3544 = vpack.c.b16 %v3376, %v3376
        %v3545 = vpack.c.b16 %v3377, %v3377
        %v3546 = vpack.c.b16 %v3378, %v3378
        %v3547 = vpack.c.b16 %v3379, %v3379
        %v3548 = vpack.c.b16 %v3380, %v3380
        %v3549 = vpack.c.b16 %v3381, %v3381
        %v3550 = vpack.c.b16 %v3382, %v3382
        %v3551 = vpack.c.b16 %v3383, %v3383
        %v3552 = vpack.c.b16 %v3384, %v3384
        %v3553 = vpack.c.b16 %v3385, %v3385
        %v3554 = vpack.c.b16 %v3386, %v3386
        %v3555 = vpack.c.b16 %v3387, %v3387
        %3724 = vmatprep.subr.bf16.mxu0 %v3389
        %3725 = vmatpush1.bf16.xpose.msra.mxu0 %v3388
        %3726 = vmatprep.subr.bf16.mxu0 %v3413
        %3727 = vmatpush1.bf16.xpose.msra.mxu0 %v3412
        %3728 = vmatprep.subr.bf16.mxu0 %v3437
        %3729 = vmatpush1.bf16.xpose.msra.mxu0 %v3436
        %3730 = vmatprep.subr.bf16.mxu0 %v3461
        %3731 = vmatpush1.bf16.xpose.msra.mxu0 %v3460
        %3732 = vmatprep.subr.bf16.mxu0 %v3485
        %3733 = vmatpush1.bf16.xpose.msra.mxu0 %v3484
        %3734 = vmatprep.subr.bf16.mxu0 %v3509
        %3735 = vmatpush1.bf16.xpose.msra.mxu0 %v3508
        %3736 = vmatprep.subr.bf16.mxu0 %v3533
        %3737 = vmatpush1.bf16.xpose.msra.mxu0 %v3532
        %3738 = vmatprep.subr.bf16.mxu0 0
        %3739 = vmatpush1.bf16.xpose.msra.mxu0 0
        %3740 = vmatprep.subr.bf16.mxu0 0
        %3741 = vmatpush1.bf16.xpose.msra.mxu0 0
        %3742 = vmatprep.subr.bf16.mxu0 0
        %3743 = vmatpush1.bf16.xpose.msra.mxu0 0
        %3744 = vmatprep.subr.bf16.mxu0 0
        %3745 = vmatpush1.bf16.xpose.msra.mxu0 0
        %3746 = vmatprep.subr.bf16.mxu0 0
        %3747 = vmatpush1.bf16.xpose.msra.mxu0 0
        %3748 = vmatprep.subr.bf16.mxu0 0
        %3749 = vmatpush1.bf16.xpose.msra.mxu0 0
        %3750 = vmatprep.subr.bf16.mxu0 0
        %3751 = vmatpush1.bf16.xpose.msra.mxu0 0
        %3752 = vmatprep.subr.bf16.mxu0 0
        %3753 = vmatpush1.bf16.xpose.msra.mxu0 0
        %3754 = vmatprep.subr.bf16.mxu0 0
        %3755 = vmatpush1.bf16.xpose.msra.mxu0 0
        %3756 = vmatprep.mubr.bf16.mxu0 %v2825
        %3757 = vmatmul.mubr.bf16.gmra.mrb[0].mxu0 %v2824
        %v3758 = vpop.f32.mrb[0].mxu0
        %v3759 = vadd.f32 0.0, %v3758
        %v3760 = vpop.f32.mrb[0].mxu0
        %v3761 = vpop.f32.mrb[0].mxu0
        %v3762 = vadd.f32 0.0, %v3761
        %v3763 = vpop.f32.mrb[0].mxu0
        %3764 = vmatprep.mubr.bf16.mxu0 %v2849
        %3765 = vmatmul.mubr.bf16.gmra.mrb[0].mxu0 %v2848
        %v3766 = vpop.f32.mrb[0].mxu0
        %v3767 = vadd.f32 0.0, %v3766
        %v3768 = vpop.f32.mrb[0].mxu0
        %v3769 = vpop.f32.mrb[0].mxu0
        %v3770 = vadd.f32 0.0, %v3769
        %v3771 = vpop.f32.mrb[0].mxu0
        %3772 = vdwg.mxu0
        %3773 = vmatprep.subr.bf16.mxu0 %v3391
        %3774 = vmatpush1.bf16.xpose.msra.mxu0 %v3390
        %3775 = vmatprep.subr.bf16.mxu0 %v3415
        %3776 = vmatpush1.bf16.xpose.msra.mxu0 %v3414
        %3777 = vmatprep.subr.bf16.mxu0 %v3439
        %3778 = vmatpush1.bf16.xpose.msra.mxu0 %v3438
        %3779 = vmatprep.subr.bf16.mxu0 %v3463
        %3780 = vmatpush1.bf16.xpose.msra.mxu0 %v3462
        %3781 = vmatprep.subr.bf16.mxu0 %v3487
        %3782 = vmatpush1.bf16.xpose.msra.mxu0 %v3486
        %3783 = vmatprep.subr.bf16.mxu0 %v3511
        %3784 = vmatpush1.bf16.xpose.msra.mxu0 %v3510
        %3785 = vmatprep.subr.bf16.mxu0 %v3535
        %3786 = vmatpush1.bf16.xpose.msra.mxu0 %v3534
        %3787 = vmatprep.subr.bf16.mxu0 0
        %3788 = vmatpush1.bf16.xpose.msra.mxu0 0
        %3789 = vmatprep.subr.bf16.mxu0 0
        %3790 = vmatpush1.bf16.xpose.msra.mxu0 0
        %3791 = vmatprep.subr.bf16.mxu0 0
        %3792 = vmatpush1.bf16.xpose.msra.mxu0 0
        %3793 = vmatprep.subr.bf16.mxu0 0
        %3794 = vmatpush1.bf16.xpose.msra.mxu0 0
        %3795 = vmatprep.subr.bf16.mxu0 0
        %3796 = vmatpush1.bf16.xpose.msra.mxu0 0
        %3797 = vmatprep.subr.bf16.mxu0 0
        %3798 = vmatpush1.bf16.xpose.msra.mxu0 0
        %3799 = vmatprep.subr.bf16.mxu0 0
        %3800 = vmatpush1.bf16.xpose.msra.mxu0 0
        %3801 = vmatprep.subr.bf16.mxu0 0
        %3802 = vmatpush1.bf16.xpose.msra.mxu0 0
        %3803 = vmatprep.subr.bf16.mxu0 0
        %3804 = vmatpush1.bf16.xpose.msra.mxu0 0
        %3805 = vmatprep.mubr.bf16.mxu0 %v2827
        %3806 = vmatmul.mubr.bf16.gmra.mrb[0].mxu0 %v2826
        %v3807 = vpop.f32.mrb[0].mxu0
        %v3808 = vadd.f32 %v3759, %v3807
        %v3809 = vpop.f32.mrb[0].mxu0
        %v3810 = vpop.f32.mrb[0].mxu0
        %v3811 = vadd.f32 %v3762, %v3810
        %v3812 = vpop.f32.mrb[0].mxu0
        %3813 = vmatprep.mubr.bf16.mxu0 %v2851
        %3814 = vmatmul.mubr.bf16.gmra.mrb[0].mxu0 %v2850
        %v3815 = vpop.f32.mrb[0].mxu0
        %v3816 = vadd.f32 %v3767, %v3815
        %v3817 = vpop.f32.mrb[0].mxu0
        %v3818 = vpop.f32.mrb[0].mxu0
        %v3819 = vadd.f32 %v3770, %v3818
        %v3820 = vpop.f32.mrb[0].mxu0
        %3821 = vdwg.mxu0
        %3822 = vmatprep.subr.bf16.mxu0 %v3393
        %3823 = vmatpush1.bf16.xpose.msra.mxu0 %v3392
        %3824 = vmatprep.subr.bf16.mxu0 %v3417
        %3825 = vmatpush1.bf16.xpose.msra.mxu0 %v3416
        %3826 = vmatprep.subr.bf16.mxu0 %v3441
        %3827 = vmatpush1.bf16.xpose.msra.mxu0 %v3440
        %3828 = vmatprep.subr.bf16.mxu0 %v3465
        %3829 = vmatpush1.bf16.xpose.msra.mxu0 %v3464
        %3830 = vmatprep.subr.bf16.mxu0 %v3489
        %3831 = vmatpush1.bf16.xpose.msra.mxu0 %v3488
        %3832 = vmatprep.subr.bf16.mxu0 %v3513
        %3833 = vmatpush1.bf16.xpose.msra.mxu0 %v3512
        %3834 = vmatprep.subr.bf16.mxu0 %v3537
        %3835 = vmatpush1.bf16.xpose.msra.mxu0 %v3536
        %3836 = vmatprep.subr.bf16.mxu0 0
        %3837 = vmatpush1.bf16.xpose.msra.mxu0 0
        %3838 = vmatprep.subr.bf16.mxu0 0
        %3839 = vmatpush1.bf16.xpose.msra.mxu0 0
        %3840 = vmatprep.subr.bf16.mxu0 0
        %3841 = vmatpush1.bf16.xpose.msra.mxu0 0
        %3842 = vmatprep.subr.bf16.mxu0 0
        %3843 = vmatpush1.bf16.xpose.msra.mxu0 0
        %3844 = vmatprep.subr.bf16.mxu0 0
        %3845 = vmatpush1.bf16.xpose.msra.mxu0 0
        %3846 = vmatprep.subr.bf16.mxu0 0
        %3847 = vmatpush1.bf16.xpose.msra.mxu0 0
        %3848 = vmatprep.subr.bf16.mxu0 0
        %3849 = vmatpush1.bf16.xpose.msra.mxu0 0
        %3850 = vmatprep.subr.bf16.mxu0 0
        %3851 = vmatpush1.bf16.xpose.msra.mxu0 0
        %3852 = vmatprep.subr.bf16.mxu0 0
        %3853 = vmatpush1.bf16.xpose.msra.mxu0 0
        %3854 = vmatprep.mubr.bf16.mxu0 %v2829
        %3855 = vmatmul.mubr.bf16.gmra.mrb[0].mxu0 %v2828
        %v3856 = vpop.f32.mrb[0].mxu0
        %v3857 = vadd.f32 %v3808, %v3856
        %v3858 = vpop.f32.mrb[0].mxu0
        %v3859 = vpop.f32.mrb[0].mxu0
        %v3860 = vadd.f32 %v3811, %v3859
        %v3861 = vpop.f32.mrb[0].mxu0
        %3862 = vmatprep.mubr.bf16.mxu0 %v2853
        %3863 = vmatmul.mubr.bf16.gmra.mrb[0].mxu0 %v2852
        %v3864 = vpop.f32.mrb[0].mxu0
        %v3865 = vadd.f32 %v3816, %v3864
        %v3866 = vpop.f32.mrb[0].mxu0
        %v3867 = vpop.f32.mrb[0].mxu0
        %v3868 = vadd.f32 %v3819, %v3867
        %v3869 = vpop.f32.mrb[0].mxu0
        %3870 = vdwg.mxu0
        %3871 = vmatprep.subr.bf16.mxu0 %v3395
        %3872 = vmatpush1.bf16.xpose.msra.mxu0 %v3394
        %3873 = vmatprep.subr.bf16.mxu0 %v3419
        %3874 = vmatpush1.bf16.xpose.msra.mxu0 %v3418
        %3875 = vmatprep.subr.bf16.mxu0 %v3443
        %3876 = vmatpush1.bf16.xpose.msra.mxu0 %v3442
        %3877 = vmatprep.subr.bf16.mxu0 %v3467
        %3878 = vmatpush1.bf16.xpose.msra.mxu0 %v3466
        %3879 = vmatprep.subr.bf16.mxu0 %v3491
        %3880 = vmatpush1.bf16.xpose.msra.mxu0 %v3490
        %3881 = vmatprep.subr.bf16.mxu0 %v3515
        %3882 = vmatpush1.bf16.xpose.msra.mxu0 %v3514
        %3883 = vmatprep.subr.bf16.mxu0 %v3539
        %3884 = vmatpush1.bf16.xpose.msra.mxu0 %v3538
        %3885 = vmatprep.subr.bf16.mxu0 0
        %3886 = vmatpush1.bf16.xpose.msra.mxu0 0
        %3887 = vmatprep.subr.bf16.mxu0 0
        %3888 = vmatpush1.bf16.xpose.msra.mxu0 0
        %3889 = vmatprep.subr.bf16.mxu0 0
        %3890 = vmatpush1.bf16.xpose.msra.mxu0 0
        %3891 = vmatprep.subr.bf16.mxu0 0
        %3892 = vmatpush1.bf16.xpose.msra.mxu0 0
        %3893 = vmatprep.subr.bf16.mxu0 0
        %3894 = vmatpush1.bf16.xpose.msra.mxu0 0
        %3895 = vmatprep.subr.bf16.mxu0 0
        %3896 = vmatpush1.bf16.xpose.msra.mxu0 0
        %3897 = vmatprep.subr.bf16.mxu0 0
        %3898 = vmatpush1.bf16.xpose.msra.mxu0 0
        %3899 = vmatprep.subr.bf16.mxu0 0
        %3900 = vmatpush1.bf16.xpose.msra.mxu0 0
        %3901 = vmatprep.subr.bf16.mxu0 0
        %3902 = vmatpush1.bf16.xpose.msra.mxu0 0
        %3903 = vmatprep.mubr.bf16.mxu0 %v2831
        %3904 = vmatmul.mubr.bf16.gmra.mrb[0].mxu0 %v2830
        %v3905 = vpop.f32.mrb[0].mxu0
        %v3906 = vadd.f32 %v3857, %v3905
        %v3907 = vpop.f32.mrb[0].mxu0
        %v3908 = vpop.f32.mrb[0].mxu0
        %v3909 = vadd.f32 %v3860, %v3908
        %v3910 = vpop.f32.mrb[0].mxu0
        %3911 = vmatprep.mubr.bf16.mxu0 %v2855
        %3912 = vmatmul.mubr.bf16.gmra.mrb[0].mxu0 %v2854
        %v3913 = vpop.f32.mrb[0].mxu0
        %v3914 = vadd.f32 %v3865, %v3913
        %v3915 = vpop.f32.mrb[0].mxu0
        %v3916 = vpop.f32.mrb[0].mxu0
        %v3917 = vadd.f32 %v3868, %v3916
        %v3918 = vpop.f32.mrb[0].mxu0
        %3919 = vdwg.mxu0
        %3920 = vmatprep.subr.bf16.mxu0 %v3397
        %3921 = vmatpush1.bf16.xpose.msra.mxu0 %v3396
        %3922 = vmatprep.subr.bf16.mxu0 %v3421
        %3923 = vmatpush1.bf16.xpose.msra.mxu0 %v3420
        %3924 = vmatprep.subr.bf16.mxu0 %v3445
        %3925 = vmatpush1.bf16.xpose.msra.mxu0 %v3444
        %3926 = vmatprep.subr.bf16.mxu0 %v3469
        %3927 = vmatpush1.bf16.xpose.msra.mxu0 %v3468
        %3928 = vmatprep.subr.bf16.mxu0 %v3493
        %3929 = vmatpush1.bf16.xpose.msra.mxu0 %v3492
        %3930 = vmatprep.subr.bf16.mxu0 %v3517
        %3931 = vmatpush1.bf16.xpose.msra.mxu0 %v3516
        %3932 = vmatprep.subr.bf16.mxu0 %v3541
        %3933 = vmatpush1.bf16.xpose.msra.mxu0 %v3540
        %3934 = vmatprep.subr.bf16.mxu0 0
        %3935 = vmatpush1.bf16.xpose.msra.mxu0 0
        %3936 = vmatprep.subr.bf16.mxu0 0
        %3937 = vmatpush1.bf16.xpose.msra.mxu0 0
        %3938 = vmatprep.subr.bf16.mxu0 0
        %3939 = vmatpush1.bf16.xpose.msra.mxu0 0
        %3940 = vmatprep.subr.bf16.mxu0 0
        %3941 = vmatpush1.bf16.xpose.msra.mxu0 0
        %3942 = vmatprep.subr.bf16.mxu0 0
        %3943 = vmatpush1.bf16.xpose.msra.mxu0 0
        %3944 = vmatprep.subr.bf16.mxu0 0
        %3945 = vmatpush1.bf16.xpose.msra.mxu0 0
        %3946 = vmatprep.subr.bf16.mxu0 0
        %3947 = vmatpush1.bf16.xpose.msra.mxu0 0
        %3948 = vmatprep.subr.bf16.mxu0 0
        %3949 = vmatpush1.bf16.xpose.msra.mxu0 0
        %3950 = vmatprep.subr.bf16.mxu0 0
        %3951 = vmatpush1.bf16.xpose.msra.mxu0 0
        %3952 = vmatprep.mubr.bf16.mxu0 %v2833
        %3953 = vmatmul.mubr.bf16.gmra.mrb[0].mxu0 %v2832
        %v3954 = vpop.f32.mrb[0].mxu0
        %v3955 = vadd.f32 %v3906, %v3954
        %v3956 = vpop.f32.mrb[0].mxu0
        %v3957 = vpop.f32.mrb[0].mxu0
        %v3958 = vadd.f32 %v3909, %v3957
        %v3959 = vpop.f32.mrb[0].mxu0
        %3960 = vmatprep.mubr.bf16.mxu0 %v2857
        %3961 = vmatmul.mubr.bf16.gmra.mrb[0].mxu0 %v2856
        %v3962 = vpop.f32.mrb[0].mxu0
        %v3963 = vadd.f32 %v3914, %v3962
        %v3964 = vpop.f32.mrb[0].mxu0
        %v3965 = vpop.f32.mrb[0].mxu0
        %v3966 = vadd.f32 %v3917, %v3965
        %v3967 = vpop.f32.mrb[0].mxu0
        %3968 = vdwg.mxu0
        %3969 = vmatprep.subr.bf16.mxu0 %v3399
        %3970 = vmatpush1.bf16.xpose.msra.mxu0 %v3398
        %3971 = vmatprep.subr.bf16.mxu0 %v3423
        %3972 = vmatpush1.bf16.xpose.msra.mxu0 %v3422
        %3973 = vmatprep.subr.bf16.mxu0 %v3447
        %3974 = vmatpush1.bf16.xpose.msra.mxu0 %v3446
        %3975 = vmatprep.subr.bf16.mxu0 %v3471
        %3976 = vmatpush1.bf16.xpose.msra.mxu0 %v3470
        %3977 = vmatprep.subr.bf16.mxu0 %v3495
        %3978 = vmatpush1.bf16.xpose.msra.mxu0 %v3494
        %3979 = vmatprep.subr.bf16.mxu0 %v3519
        %3980 = vmatpush1.bf16.xpose.msra.mxu0 %v3518
        %3981 = vmatprep.subr.bf16.mxu0 %v3543
        %3982 = vmatpush1.bf16.xpose.msra.mxu0 %v3542
        %3983 = vmatprep.subr.bf16.mxu0 0
        %3984 = vmatpush1.bf16.xpose.msra.mxu0 0
        %3985 = vmatprep.subr.bf16.mxu0 0
        %3986 = vmatpush1.bf16.xpose.msra.mxu0 0
        %3987 = vmatprep.subr.bf16.mxu0 0
        %3988 = vmatpush1.bf16.xpose.msra.mxu0 0
        %3989 = vmatprep.subr.bf16.mxu0 0
        %3990 = vmatpush1.bf16.xpose.msra.mxu0 0
        %3991 = vmatprep.subr.bf16.mxu0 0
        %3992 = vmatpush1.bf16.xpose.msra.mxu0 0
        %3993 = vmatprep.subr.bf16.mxu0 0
        %3994 = vmatpush1.bf16.xpose.msra.mxu0 0
        %3995 = vmatprep.subr.bf16.mxu0 0
        %3996 = vmatpush1.bf16.xpose.msra.mxu0 0
        %3997 = vmatprep.subr.bf16.mxu0 0
        %3998 = vmatpush1.bf16.xpose.msra.mxu0 0
        %3999 = vmatprep.subr.bf16.mxu0 0
        %4000 = vmatpush1.bf16.xpose.msra.mxu0 0
        %4001 = vmatprep.mubr.bf16.mxu0 %v2835
        %4002 = vmatmul.mubr.bf16.gmra.mrb[0].mxu0 %v2834
        %v4003 = vpop.f32.mrb[0].mxu0
        %v4004 = vadd.f32 %v3955, %v4003
        %v4005 = vpop.f32.mrb[0].mxu0
        %v4006 = vpop.f32.mrb[0].mxu0
        %v4007 = vadd.f32 %v3958, %v4006
        %v4008 = vpop.f32.mrb[0].mxu0
        %4009 = vmatprep.mubr.bf16.mxu0 %v2859
        %4010 = vmatmul.mubr.bf16.gmra.mrb[0].mxu0 %v2858
        %v4011 = vpop.f32.mrb[0].mxu0
        %v4012 = vadd.f32 %v3963, %v4011
        %v4013 = vpop.f32.mrb[0].mxu0
        %v4014 = vpop.f32.mrb[0].mxu0
        %v4015 = vadd.f32 %v3966, %v4014
        %v4016 = vpop.f32.mrb[0].mxu0
        %4017 = vdwg.mxu0
        %4018 = vmatprep.subr.bf16.mxu0 %v3401
        %4019 = vmatpush1.bf16.xpose.msra.mxu0 %v3400
        %4020 = vmatprep.subr.bf16.mxu0 %v3425
        %4021 = vmatpush1.bf16.xpose.msra.mxu0 %v3424
        %4022 = vmatprep.subr.bf16.mxu0 %v3449
        %4023 = vmatpush1.bf16.xpose.msra.mxu0 %v3448
        %4024 = vmatprep.subr.bf16.mxu0 %v3473
        %4025 = vmatpush1.bf16.xpose.msra.mxu0 %v3472
        %4026 = vmatprep.subr.bf16.mxu0 %v3497
        %4027 = vmatpush1.bf16.xpose.msra.mxu0 %v3496
        %4028 = vmatprep.subr.bf16.mxu0 %v3521
        %4029 = vmatpush1.bf16.xpose.msra.mxu0 %v3520
        %4030 = vmatprep.subr.bf16.mxu0 %v3545
        %4031 = vmatpush1.bf16.xpose.msra.mxu0 %v3544
        %4032 = vmatprep.subr.bf16.mxu0 0
        %4033 = vmatpush1.bf16.xpose.msra.mxu0 0
        %4034 = vmatprep.subr.bf16.mxu0 0
        %4035 = vmatpush1.bf16.xpose.msra.mxu0 0
        %4036 = vmatprep.subr.bf16.mxu0 0
        %4037 = vmatpush1.bf16.xpose.msra.mxu0 0
        %4038 = vmatprep.subr.bf16.mxu0 0
        %4039 = vmatpush1.bf16.xpose.msra.mxu0 0
        %4040 = vmatprep.subr.bf16.mxu0 0
        %4041 = vmatpush1.bf16.xpose.msra.mxu0 0
        %4042 = vmatprep.subr.bf16.mxu0 0
        %4043 = vmatpush1.bf16.xpose.msra.mxu0 0
        %4044 = vmatprep.subr.bf16.mxu0 0
        %4045 = vmatpush1.bf16.xpose.msra.mxu0 0
        %4046 = vmatprep.subr.bf16.mxu0 0
        %4047 = vmatpush1.bf16.xpose.msra.mxu0 0
        %4048 = vmatprep.subr.bf16.mxu0 0
        %4049 = vmatpush1.bf16.xpose.msra.mxu0 0
        %4050 = vmatprep.mubr.bf16.mxu0 %v2837
        %4051 = vmatmul.mubr.bf16.gmra.mrb[0].mxu0 %v2836
        %v4052 = vpop.f32.mrb[0].mxu0
        %v4053 = vadd.f32 %v4004, %v4052
        %v4054 = vpop.f32.mrb[0].mxu0
        %v4055 = vpop.f32.mrb[0].mxu0
        %v4056 = vadd.f32 %v4007, %v4055
        %v4057 = vpop.f32.mrb[0].mxu0
        %4058 = vmatprep.mubr.bf16.mxu0 %v2861
        %4059 = vmatmul.mubr.bf16.gmra.mrb[0].mxu0 %v2860
        %v4060 = vpop.f32.mrb[0].mxu0
        %v4061 = vadd.f32 %v4012, %v4060
        %v4062 = vpop.f32.mrb[0].mxu0
        %v4063 = vpop.f32.mrb[0].mxu0
        %v4064 = vadd.f32 %v4015, %v4063
        %v4065 = vpop.f32.mrb[0].mxu0
        %4066 = vdwg.mxu0
        %4067 = vmatprep.subr.bf16.mxu0 %v3403
        %4068 = vmatpush1.bf16.xpose.msra.mxu0 %v3402
        %4069 = vmatprep.subr.bf16.mxu0 %v3427
        %4070 = vmatpush1.bf16.xpose.msra.mxu0 %v3426
        %4071 = vmatprep.subr.bf16.mxu0 %v3451
        %4072 = vmatpush1.bf16.xpose.msra.mxu0 %v3450
        %4073 = vmatprep.subr.bf16.mxu0 %v3475
        %4074 = vmatpush1.bf16.xpose.msra.mxu0 %v3474
        %4075 = vmatprep.subr.bf16.mxu0 %v3499
        %4076 = vmatpush1.bf16.xpose.msra.mxu0 %v3498
        %4077 = vmatprep.subr.bf16.mxu0 %v3523
        %4078 = vmatpush1.bf16.xpose.msra.mxu0 %v3522
        %4079 = vmatprep.subr.bf16.mxu0 %v3547
        %4080 = vmatpush1.bf16.xpose.msra.mxu0 %v3546
        %4081 = vmatprep.subr.bf16.mxu0 0
        %4082 = vmatpush1.bf16.xpose.msra.mxu0 0
        %4083 = vmatprep.subr.bf16.mxu0 0
        %4084 = vmatpush1.bf16.xpose.msra.mxu0 0
        %4085 = vmatprep.subr.bf16.mxu0 0
        %4086 = vmatpush1.bf16.xpose.msra.mxu0 0
        %4087 = vmatprep.subr.bf16.mxu0 0
        %4088 = vmatpush1.bf16.xpose.msra.mxu0 0
        %4089 = vmatprep.subr.bf16.mxu0 0
        %4090 = vmatpush1.bf16.xpose.msra.mxu0 0
        %4091 = vmatprep.subr.bf16.mxu0 0
        %4092 = vmatpush1.bf16.xpose.msra.mxu0 0
        %4093 = vmatprep.subr.bf16.mxu0 0
        %4094 = vmatpush1.bf16.xpose.msra.mxu0 0
        %4095 = vmatprep.subr.bf16.mxu0 0
        %4096 = vmatpush1.bf16.xpose.msra.mxu0 0
        %4097 = vmatprep.subr.bf16.mxu0 0
        %4098 = vmatpush1.bf16.xpose.msra.mxu0 0
        %4099 = vmatprep.mubr.bf16.mxu0 %v2839
        %4100 = vmatmul.mubr.bf16.gmra.mrb[0].mxu0 %v2838
        %v4101 = vpop.f32.mrb[0].mxu0
        %v4102 = vadd.f32 %v4053, %v4101
        %v4103 = vpop.f32.mrb[0].mxu0
        %v4104 = vpop.f32.mrb[0].mxu0
        %v4105 = vadd.f32 %v4056, %v4104
        %v4106 = vpop.f32.mrb[0].mxu0
        %4107 = vmatprep.mubr.bf16.mxu0 %v2863
        %4108 = vmatmul.mubr.bf16.gmra.mrb[0].mxu0 %v2862
        %v4109 = vpop.f32.mrb[0].mxu0
        %v4110 = vadd.f32 %v4061, %v4109
        %v4111 = vpop.f32.mrb[0].mxu0
        %v4112 = vpop.f32.mrb[0].mxu0
        %v4113 = vadd.f32 %v4064, %v4112
        %v4114 = vpop.f32.mrb[0].mxu0
        %4115 = vdwg.mxu0
        %4116 = vmatprep.subr.bf16.mxu0 %v3405
        %4117 = vmatpush1.bf16.xpose.msra.mxu0 %v3404
        %4118 = vmatprep.subr.bf16.mxu0 %v3429
        %4119 = vmatpush1.bf16.xpose.msra.mxu0 %v3428
        %4120 = vmatprep.subr.bf16.mxu0 %v3453
        %4121 = vmatpush1.bf16.xpose.msra.mxu0 %v3452
        %4122 = vmatprep.subr.bf16.mxu0 %v3477
        %4123 = vmatpush1.bf16.xpose.msra.mxu0 %v3476
        %4124 = vmatprep.subr.bf16.mxu0 %v3501
        %4125 = vmatpush1.bf16.xpose.msra.mxu0 %v3500
        %4126 = vmatprep.subr.bf16.mxu0 %v3525
        %4127 = vmatpush1.bf16.xpose.msra.mxu0 %v3524
        %4128 = vmatprep.subr.bf16.mxu0 %v3549
        %4129 = vmatpush1.bf16.xpose.msra.mxu0 %v3548
        %4130 = vmatprep.subr.bf16.mxu0 0
        %4131 = vmatpush1.bf16.xpose.msra.mxu0 0
        %4132 = vmatprep.subr.bf16.mxu0 0
        %4133 = vmatpush1.bf16.xpose.msra.mxu0 0
        %4134 = vmatprep.subr.bf16.mxu0 0
        %4135 = vmatpush1.bf16.xpose.msra.mxu0 0
        %4136 = vmatprep.subr.bf16.mxu0 0
        %4137 = vmatpush1.bf16.xpose.msra.mxu0 0
        %4138 = vmatprep.subr.bf16.mxu0 0
        %4139 = vmatpush1.bf16.xpose.msra.mxu0 0
        %4140 = vmatprep.subr.bf16.mxu0 0
        %4141 = vmatpush1.bf16.xpose.msra.mxu0 0
        %4142 = vmatprep.subr.bf16.mxu0 0
        %4143 = vmatpush1.bf16.xpose.msra.mxu0 0
        %4144 = vmatprep.subr.bf16.mxu0 0
        %4145 = vmatpush1.bf16.xpose.msra.mxu0 0
        %4146 = vmatprep.subr.bf16.mxu0 0
        %4147 = vmatpush1.bf16.xpose.msra.mxu0 0
        %4148 = vmatprep.mubr.bf16.mxu0 %v2841
        %4149 = vmatmul.mubr.bf16.gmra.mrb[0].mxu0 %v2840
        %v4150 = vpop.f32.mrb[0].mxu0
        %v4151 = vadd.f32 %v4102, %v4150
        %v4152 = vpop.f32.mrb[0].mxu0
        %v4153 = vpop.f32.mrb[0].mxu0
        %v4154 = vadd.f32 %v4105, %v4153
        %v4155 = vpop.f32.mrb[0].mxu0
        %4156 = vmatprep.mubr.bf16.mxu0 %v2865
        %4157 = vmatmul.mubr.bf16.gmra.mrb[0].mxu0 %v2864
        %v4158 = vpop.f32.mrb[0].mxu0
        %v4159 = vadd.f32 %v4110, %v4158
        %v4160 = vpop.f32.mrb[0].mxu0
        %v4161 = vpop.f32.mrb[0].mxu0
        %v4162 = vadd.f32 %v4113, %v4161
        %v4163 = vpop.f32.mrb[0].mxu0
        %4164 = vdwg.mxu0
        %4165 = vmatprep.subr.bf16.mxu0 %v3407
        %4166 = vmatpush1.bf16.xpose.msra.mxu0 %v3406
        %4167 = vmatprep.subr.bf16.mxu0 %v3431
        %4168 = vmatpush1.bf16.xpose.msra.mxu0 %v3430
        %4169 = vmatprep.subr.bf16.mxu0 %v3455
        %4170 = vmatpush1.bf16.xpose.msra.mxu0 %v3454
        %4171 = vmatprep.subr.bf16.mxu0 %v3479
        %4172 = vmatpush1.bf16.xpose.msra.mxu0 %v3478
        %4173 = vmatprep.subr.bf16.mxu0 %v3503
        %4174 = vmatpush1.bf16.xpose.msra.mxu0 %v3502
        %4175 = vmatprep.subr.bf16.mxu0 %v3527
        %4176 = vmatpush1.bf16.xpose.msra.mxu0 %v3526
        %4177 = vmatprep.subr.bf16.mxu0 %v3551
        %4178 = vmatpush1.bf16.xpose.msra.mxu0 %v3550
        %4179 = vmatprep.subr.bf16.mxu0 0
        %4180 = vmatpush1.bf16.xpose.msra.mxu0 0
        %4181 = vmatprep.subr.bf16.mxu0 0
        %4182 = vmatpush1.bf16.xpose.msra.mxu0 0
        %4183 = vmatprep.subr.bf16.mxu0 0
        %4184 = vmatpush1.bf16.xpose.msra.mxu0 0
        %4185 = vmatprep.subr.bf16.mxu0 0
        %4186 = vmatpush1.bf16.xpose.msra.mxu0 0
        %4187 = vmatprep.subr.bf16.mxu0 0
        %4188 = vmatpush1.bf16.xpose.msra.mxu0 0
        %4189 = vmatprep.subr.bf16.mxu0 0
        %4190 = vmatpush1.bf16.xpose.msra.mxu0 0
        %4191 = vmatprep.subr.bf16.mxu0 0
        %4192 = vmatpush1.bf16.xpose.msra.mxu0 0
        %4193 = vmatprep.subr.bf16.mxu0 0
        %4194 = vmatpush1.bf16.xpose.msra.mxu0 0
        %4195 = vmatprep.subr.bf16.mxu0 0
        %4196 = vmatpush1.bf16.xpose.msra.mxu0 0
        %4197 = vmatprep.mubr.bf16.mxu0 %v2843
        %4198 = vmatmul.mubr.bf16.gmra.mrb[0].mxu0 %v2842
        %v4199 = vpop.f32.mrb[0].mxu0
        %v4200 = vadd.f32 %v4151, %v4199
        %v4201 = vpop.f32.mrb[0].mxu0
        %v4202 = vpop.f32.mrb[0].mxu0
        %v4203 = vadd.f32 %v4154, %v4202
        %v4204 = vpop.f32.mrb[0].mxu0
        %4205 = vmatprep.mubr.bf16.mxu0 %v2867
        %4206 = vmatmul.mubr.bf16.gmra.mrb[0].mxu0 %v2866
        %v4207 = vpop.f32.mrb[0].mxu0
        %v4208 = vadd.f32 %v4159, %v4207
        %v4209 = vpop.f32.mrb[0].mxu0
        %v4210 = vpop.f32.mrb[0].mxu0
        %v4211 = vadd.f32 %v4162, %v4210
        %v4212 = vpop.f32.mrb[0].mxu0
        %4213 = vdwg.mxu0
        %4214 = vmatprep.subr.bf16.mxu0 %v3409
        %4215 = vmatpush1.bf16.xpose.msra.mxu0 %v3408
        %4216 = vmatprep.subr.bf16.mxu0 %v3433
        %4217 = vmatpush1.bf16.xpose.msra.mxu0 %v3432
        %4218 = vmatprep.subr.bf16.mxu0 %v3457
        %4219 = vmatpush1.bf16.xpose.msra.mxu0 %v3456
        %4220 = vmatprep.subr.bf16.mxu0 %v3481
        %4221 = vmatpush1.bf16.xpose.msra.mxu0 %v3480
        %4222 = vmatprep.subr.bf16.mxu0 %v3505
        %4223 = vmatpush1.bf16.xpose.msra.mxu0 %v3504
        %4224 = vmatprep.subr.bf16.mxu0 %v3529
        %4225 = vmatpush1.bf16.xpose.msra.mxu0 %v3528
        %4226 = vmatprep.subr.bf16.mxu0 %v3553
        %4227 = vmatpush1.bf16.xpose.msra.mxu0 %v3552
        %4228 = vmatprep.subr.bf16.mxu0 0
        %4229 = vmatpush1.bf16.xpose.msra.mxu0 0
        %4230 = vmatprep.subr.bf16.mxu0 0
        %4231 = vmatpush1.bf16.xpose.msra.mxu0 0
        %4232 = vmatprep.subr.bf16.mxu0 0
        %4233 = vmatpush1.bf16.xpose.msra.mxu0 0
        %4234 = vmatprep.subr.bf16.mxu0 0
        %4235 = vmatpush1.bf16.xpose.msra.mxu0 0
        %4236 = vmatprep.subr.bf16.mxu0 0
        %4237 = vmatpush1.bf16.xpose.msra.mxu0 0
        %4238 = vmatprep.subr.bf16.mxu0 0
        %4239 = vmatpush1.bf16.xpose.msra.mxu0 0
        %4240 = vmatprep.subr.bf16.mxu0 0
        %4241 = vmatpush1.bf16.xpose.msra.mxu0 0
        %4242 = vmatprep.subr.bf16.mxu0 0
        %4243 = vmatpush1.bf16.xpose.msra.mxu0 0
        %4244 = vmatprep.subr.bf16.mxu0 0
        %4245 = vmatpush1.bf16.xpose.msra.mxu0 0
        %4246 = vmatprep.mubr.bf16.mxu0 %v2845
        %4247 = vmatmul.mubr.bf16.gmra.mrb[0].mxu0 %v2844
        %v4248 = vpop.f32.mrb[0].mxu0
        %v4249 = vadd.f32 %v4200, %v4248
        %v4250 = vpop.f32.mrb[0].mxu0
        %v4251 = vpop.f32.mrb[0].mxu0
        %v4252 = vadd.f32 %v4203, %v4251
        %v4253 = vpop.f32.mrb[0].mxu0
        %4254 = vmatprep.mubr.bf16.mxu0 %v2869
        %4255 = vmatmul.mubr.bf16.gmra.mrb[0].mxu0 %v2868
        %v4256 = vpop.f32.mrb[0].mxu0
        %v4257 = vadd.f32 %v4208, %v4256
        %v4258 = vpop.f32.mrb[0].mxu0
        %v4259 = vpop.f32.mrb[0].mxu0
        %v4260 = vadd.f32 %v4211, %v4259
        %v4261 = vpop.f32.mrb[0].mxu0
        %4262 = vdwg.mxu0
        %4263 = vmatprep.subr.bf16.mxu0 %v3411
        %4264 = vmatpush1.bf16.xpose.msra.mxu0 %v3410
        %4265 = vmatprep.subr.bf16.mxu0 %v3435
        %4266 = vmatpush1.bf16.xpose.msra.mxu0 %v3434
        %4267 = vmatprep.subr.bf16.mxu0 %v3459
        %4268 = vmatpush1.bf16.xpose.msra.mxu0 %v3458
        %4269 = vmatprep.subr.bf16.mxu0 %v3483
        %4270 = vmatpush1.bf16.xpose.msra.mxu0 %v3482
        %4271 = vmatprep.subr.bf16.mxu0 %v3507
        %4272 = vmatpush1.bf16.xpose.msra.mxu0 %v3506
        %4273 = vmatprep.subr.bf16.mxu0 %v3531
        %4274 = vmatpush1.bf16.xpose.msra.mxu0 %v3530
        %4275 = vmatprep.subr.bf16.mxu0 %v3555
        %4276 = vmatpush1.bf16.xpose.msra.mxu0 %v3554
        %4277 = vmatprep.subr.bf16.mxu0 0
        %4278 = vmatpush1.bf16.xpose.msra.mxu0 0
        %4279 = vmatprep.subr.bf16.mxu0 0
        %4280 = vmatpush1.bf16.xpose.msra.mxu0 0
        %4281 = vmatprep.subr.bf16.mxu0 0
        %4282 = vmatpush1.bf16.xpose.msra.mxu0 0
        %4283 = vmatprep.subr.bf16.mxu0 0
        %4284 = vmatpush1.bf16.xpose.msra.mxu0 0
        %4285 = vmatprep.subr.bf16.mxu0 0
        %4286 = vmatpush1.bf16.xpose.msra.mxu0 0
        %4287 = vmatprep.subr.bf16.mxu0 0
        %4288 = vmatpush1.bf16.xpose.msra.mxu0 0
        %4289 = vmatprep.subr.bf16.mxu0 0
        %4290 = vmatpush1.bf16.xpose.msra.mxu0 0
        %4291 = vmatprep.subr.bf16.mxu0 0
        %4292 = vmatpush1.bf16.xpose.msra.mxu0 0
        %4293 = vmatprep.subr.bf16.mxu0 0
        %4294 = vmatpush1.bf16.xpose.msra.mxu0 0
        %4295 = vmatprep.mubr.bf16.mxu0 %v2847
        %4296 = vmatmul.mubr.bf16.gmra.mrb[0].mxu0 %v2846
        %v4297 = vpop.f32.mrb[0].mxu0
        %v4298 = vadd.f32 %v4249, %v4297
        %v4299 = vpop.f32.mrb[0].mxu0
        %v4300 = vpop.f32.mrb[0].mxu0
        %v4301 = vadd.f32 %v4252, %v4300
        %v4302 = vpop.f32.mrb[0].mxu0
        %4303 = vmatprep.mubr.bf16.mxu0 %v2871
        %4304 = vmatmul.mubr.bf16.gmra.mrb[0].mxu0 %v2870
        %v4305 = vpop.f32.mrb[0].mxu0
        %v4306 = vadd.f32 %v4257, %v4305
        %v4307 = vpop.f32.mrb[0].mxu0
        %v4308 = vpop.f32.mrb[0].mxu0
        %v4309 = vadd.f32 %v4260, %v4308
        %v4310 = vpop.f32.mrb[0].mxu0
        %4311 = vdwg.mxu0
        %v4312 = vadd.f32 %v2676, %v4298
        %v4313 = vadd.f32 %v2677, %v4301
        %v4314 = vadd.f32 %v2678, %v4306
        %v4315 = vadd.f32 %v2679, %v4309
        %4316 = vst.msk [vmem:[#allocation2] sm:$0xff] %vm2217, %v4312
        %4317 = vst.msk [vmem:[#allocation2 + $0x8] sm:$0xff] %vm2217, %v4313
        %4318 = vst.msk [vmem:[#allocation2 + $0x10] sm:$0xff] %vm2217, %v4314
        %4319 = vst.msk [vmem:[#allocation2 + $0x18] sm:$0xff] %vm2217, %v4315
        %s4320 = sld [smem:[#allocation6 + %s2457]]
        %p4321 = scmp.eq.s32.totalorder %s4320, 1
        // Predicated region
        $region77: #{textcnn_forward.1} parent=39 // pred_check
          %p4322 = pneg %p4321
        $region78: #{textcnn_forward.1} parent=39 // pred_check_branch
          %4324 = sbr.rel (%p4322) target = $region80
        $region79: #{textcnn_forward.1} parent=39 // pred_region
          %s4325 = sld [smem:[#allocation7 + %s2457]]
          %v4326 = vld [vmem:[#allocation2] sm:$0xff]
          %v4327 = vld [vmem:[#allocation2 + $0x8] sm:$0xff]
          %v4328 = vld [vmem:[#allocation2 + $0x10] sm:$0xff]
          %v4329 = vld [vmem:[#allocation2 + $0x18] sm:$0xff]
          %v4330 = vld [vmem:[%s300] sm:$0x1]
          %v4332 = vlaneseq
          %v4333 = vshrl.u32 %v4332, 7
          %v4334 = vsub.s32 0, %v4333
          %v4335 = vrot.slane %v4330, %v4334
          %v4337 = vadd.f32 %v4326, %v4335
          %v4338 = vadd.f32 %v4327, %v4335
          %v4339 = vadd.f32 %v4328, %v4335
          %v4340 = vadd.f32 %v4329, %v4335
          %v4341 = vmax.f32 %v4337, 0.0
          %v4342 = vmax.f32 %v4338, 0.0
          %v4343 = vmax.f32 %v4339, 0.0
          %v4344 = vmax.f32 %v4340, 0.0
          %v4345 = vlaneseq
          %v4346 = vshrl.u32 %v4345, 7
          %v4347 = vadd.s32 %v4346, 8
          %v4348 = vadd.s32 %v4346, 16
          %v4349 = vadd.s32 %v4346, 24
          %s4350 = smul.u32 %s4325, 2
          %v4351 = vstv %s4350
          %vm4352 = vcmp.lt.s32.totalorder %v4346, %v4351
          %vm4353 = vcmp.lt.s32.totalorder %v4347, %v4351
          %vm4354 = vcmp.lt.s32.totalorder %v4348, %v4351
          %vm4355 = vcmp.lt.s32.totalorder %v4349, %v4351
          %v4356 = vsel %vm4352, %v4341, 0.0
          %v4357 = vsel %vm4353, %v4342, 0.0
          %v4358 = vsel %vm4354, %v4343, 0.0
          %v4359 = vsel %vm4355, %v4344, 0.0
          %vm4360 = vcmp.lt.s32.totalorder %v4346, 0
          %v4361 = vsub.s32 0, %v4346
          %v4362 = vsel %vm4360, %v4361, %v4346
          %v4363 = vshrl.u32 %v4362, 1
          %v4364 = vand.u32 %v4362, 1
          %v4365 = vsub.s32 0, %v4364
          %v4366 = vsel %vm4360, %v4365, %v4364
          %vm4367 = vcmp.lt.s32.totalorder %v4347, 0
          %v4368 = vsub.s32 0, %v4347
          %v4369 = vsel %vm4367, %v4368, %v4347
          %v4370 = vshrl.u32 %v4369, 1
          %v4371 = vand.u32 %v4369, 1
          %v4372 = vsub.s32 0, %v4371
          %v4373 = vsel %vm4367, %v4372, %v4371
          %vm4374 = vcmp.lt.s32.totalorder %v4348, 0
          %v4375 = vsub.s32 0, %v4348
          %v4376 = vsel %vm4374, %v4375, %v4348
          %v4377 = vshrl.u32 %v4376, 1
          %v4378 = vand.u32 %v4376, 1
          %v4379 = vsub.s32 0, %v4378
          %v4380 = vsel %vm4374, %v4379, %v4378
          %vm4381 = vcmp.lt.s32.totalorder %v4349, 0
          %v4382 = vsub.s32 0, %v4349
          %v4383 = vsel %vm4381, %v4382, %v4349
          %v4384 = vshrl.u32 %v4383, 1
          %v4385 = vand.u32 %v4383, 1
          %v4386 = vsub.s32 0, %v4385
          %v4387 = vsel %vm4381, %v4386, %v4385
          %vm4388 = vcmp.ne.s32.totalorder %v4366, 0
          %vm4389 = vcmp.ne.s32.totalorder %v4373, 0
          %vm4390 = vcmp.ne.s32.totalorder %v4380, 0
          %vm4391 = vcmp.ne.s32.totalorder %v4387, 0
          %vm4392 = vcmp.lt.s32.totalorder %v4366, 0
          %vm4393 = vcmp.lt.s32.totalorder %v4373, 0
          %vm4394 = vcmp.lt.s32.totalorder %v4380, 0
          %vm4395 = vcmp.lt.s32.totalorder %v4387, 0
          %vm4396 = vmand %vm4392, %vm4388
          %vm4397 = vmand %vm4393, %vm4389
          %vm4398 = vmand %vm4394, %vm4390
          %vm4399 = vmand %vm4395, %vm4391
          %v4400 = vadd.s32 %v4366, 2
          %v4401 = vadd.s32 %v4373, 2
          %v4402 = vadd.s32 %v4380, 2
          %v4403 = vadd.s32 %v4387, 2
          %v4404 = vsel %vm4396, %v4400, %v4366
          %v4405 = vsel %vm4397, %v4401, %v4373
          %v4406 = vsel %vm4398, %v4402, %v4380
          %v4407 = vsel %vm4399, %v4403, %v4387
          %vm4408 = vcmp.eq.s32.totalorder %v4404, 0
          %vm4409 = vcmp.eq.s32.totalorder %v4405, 0
          %vm4410 = vcmp.eq.s32.totalorder %v4406, 0
          %vm4411 = vcmp.eq.s32.totalorder %v4407, 0
          %v4412 = vsel %vm4408, %v4356, 0.0
          %v4413 = vsel %vm4409, %v4357, 0.0
          %v4414 = vsel %vm4410, %v4358, 0.0
          %v4415 = vsel %vm4411, %v4359, 0.0
          %v4416 = vsel %vm2217, %v4412, -inf
          %v4417 = vsel %vm2217, %v4413, -inf
          %v4418 = vsel %vm2217, %v4414, -inf
          %v4419 = vsel %vm2217, %v4415, -inf
          %v4420 = vmax.f32 %v4416, %v4417
          %v4421 = vmax.f32 %v4418, %v4419
          %v4422 = vmax.f32 %v4420, %v4421
          %v4423 = vrot.slane %v4422, 4
          %v4424 = vmax.f32 %v4422, %v4423
          %v4425 = vrot.slane %v4424, 2
          %v4426 = vmax.f32 %v4424, %v4425
          %v4427 = vrot.slane %v4426, 1
          %v4428 = vmax.f32 %v4426, %v4427
          %vm4429 = vcmp.eq.s32.totalorder %v4404, 1
          %vm4430 = vcmp.eq.s32.totalorder %v4405, 1
          %vm4431 = vcmp.eq.s32.totalorder %v4406, 1
          %vm4432 = vcmp.eq.s32.totalorder %v4407, 1
          %v4433 = vsel %vm4429, %v4356, 0.0
          %v4434 = vsel %vm4430, %v4357, 0.0
          %v4435 = vsel %vm4431, %v4358, 0.0
          %v4436 = vsel %vm4432, %v4359, 0.0
          %v4437 = vsel %vm2217, %v4433, -inf
          %v4438 = vsel %vm2217, %v4434, -inf
          %v4439 = vsel %vm2217, %v4435, -inf
          %v4440 = vsel %vm2217, %v4436, -inf
          %v4441 = vmax.f32 %v4437, %v4438
          %v4442 = vmax.f32 %v4439, %v4440
          %v4443 = vmax.f32 %v4441, %v4442
          %v4444 = vrot.slane %v4443, 4
          %v4445 = vmax.f32 %v4443, %v4444
          %v4446 = vrot.slane %v4445, 2
          %v4447 = vmax.f32 %v4445, %v4446
          %v4448 = vrot.slane %v4447, 1
          %v4449 = vmax.f32 %v4447, %v4448
          %vm4450 = vcmask 1040384
          %v4451 = vsel %vm4450, %v4428, %v4449
          %v4452 = vld [vmem:[#allocation17] sm:$0x3]
          %v4453 = vpack.c.bf16 %v4451, %v4451
          %v4454 = vld [vmem:[%s309] sm:$0xf]
          %v4455 = vld [vmem:[%s309 + $0x4] sm:$0xf]
          %v4456 = vld [vmem:[%s309 + $0x8] sm:$0xf]
          %v4457 = vld [vmem:[%s309 + $0xc] sm:$0xf]
          %v4458 = vld [vmem:[%s309 + $0x10] sm:$0xf]
          %v4459 = vld [vmem:[%s309 + $0x14] sm:$0xf]
          %v4460 = vld [vmem:[%s309 + $0x18] sm:$0xf]
          %v4461 = vld [vmem:[%s309 + $0x1c] sm:$0xf]
          %v4462 = vld [vmem:[%s309 + $0x20] sm:$0xf]
          %v4463 = vld [vmem:[%s309 + $0x24] sm:$0xf]
          %v4464 = vld [vmem:[%s309 + $0x28] sm:$0xf]
          %v4465 = vld [vmem:[%s309 + $0x2c] sm:$0xf]
          %v4466 = vld [vmem:[%s309 + $0x30] sm:$0x3]
          %v4480 = vunpack.c.l.b16 %v4454
          %v4481 = vunpack.c.l.b16 %v4455
          %v4482 = vunpack.c.l.b16 %v4456
          %v4483 = vunpack.c.l.b16 %v4457
          %v4484 = vunpack.c.l.b16 %v4458
          %v4485 = vunpack.c.l.b16 %v4459
          %v4486 = vunpack.c.l.b16 %v4460
          %v4487 = vunpack.c.l.b16 %v4461
          %v4488 = vunpack.c.l.b16 %v4462
          %v4489 = vunpack.c.l.b16 %v4463
          %v4490 = vunpack.c.l.b16 %v4464
          %v4491 = vunpack.c.l.b16 %v4465
          %v4492 = vunpack.c.l.b16 %v4466
          %v4493 = vpack.c.b16 %v4481, %v4480
          %v4494 = vpack.c.b16 %v4483, %v4482
          %v4495 = vpack.c.b16 %v4485, %v4484
          %v4496 = vpack.c.b16 %v4487, %v4486
          %v4497 = vpack.c.b16 %v4489, %v4488
          %v4498 = vpack.c.b16 %v4491, %v4490
          %v4499 = vpack.c.b16 %v4492, %v4492
          %v4507 = vsel %vm2217, %v4453, 0
          %vm4509 = vcmask 1041408
          %v4511 = vsel %vm4509, %v4499, 0
          %4513 = vmatprep.subr.bf16.mxu0 0
          %4514 = vmatpush1.bf16.msra.mxu0 %v4493
          %4515 = vmatprep.subr.bf16.mxu0 0
          %4516 = vmatpush1.bf16.msra.mxu0 %v4494
          %4517 = vmatprep.subr.bf16.mxu0 0
          %4518 = vmatpush1.bf16.msra.mxu0 %v4495
          %4519 = vmatprep.subr.bf16.mxu0 0
          %4520 = vmatpush1.bf16.msra.mxu0 %v4496
          %4521 = vmatprep.subr.bf16.mxu0 0
          %4522 = vmatpush1.bf16.msra.mxu0 %v4497
          %4523 = vmatprep.subr.bf16.mxu0 0
          %4524 = vmatpush1.bf16.msra.mxu0 %v4498
          %4525 = vmatprep.subr.bf16.mxu0 0
          %4526 = vmatpush1.bf16.msra.mxu0 %v4511
          %4527 = vmatprep.subr.bf16.mxu0 0
          %4528 = vmatpush1.bf16.msra.mxu0 0
          %4529 = vmatprep.subr.bf16.mxu0 0
          %4530 = vmatpush1.bf16.msra.mxu0 0
          %4531 = vmatprep.subr.bf16.mxu0 0
          %4532 = vmatpush1.bf16.msra.mxu0 0
          %4533 = vmatprep.subr.bf16.mxu0 0
          %4534 = vmatpush1.bf16.msra.mxu0 0
          %4535 = vmatprep.subr.bf16.mxu0 0
          %4536 = vmatpush1.bf16.msra.mxu0 0
          %4537 = vmatprep.subr.bf16.mxu0 0
          %4538 = vmatpush1.bf16.msra.mxu0 0
          %4539 = vmatprep.subr.bf16.mxu0 0
          %4540 = vmatpush1.bf16.msra.mxu0 0
          %4541 = vmatprep.subr.bf16.mxu0 0
          %4542 = vmatpush1.bf16.msra.mxu0 0
          %4543 = vmatprep.subr.bf16.mxu0 0
          %4544 = vmatpush1.bf16.msra.mxu0 0
          %4545 = vmatprep.mubr.bf16.mxu0 0
          %4546 = vmatmul.mubr.bf16.gmra.mrb[0].mxu0 %v4507
          %v4547 = vpop.f32.mrb[0].mxu0
          %v4548 = vadd.f32 0.0, %v4547
          %v4549 = vpop.f32.mrb[0].mxu0
          %v4550 = vpop.f32.mrb[0].mxu0
          %v4551 = vpop.f32.mrb[0].mxu0
          %4552 = vdwg.mxu0
          %v4553 = vadd.f32 %v4452, %v4548
          %4554 = vst [vmem:[#allocation17] sm:$0x3] %v4553
        $region80: #{textcnn_forward.1} parent=39 // pred_fallthru
          _
        %s4555 = sadd.s32 %s358, 2
        %s4556 = sld [smem:[#allocation5 + %s4555]]
        %p4557 = scmp.eq.s32.totalorder %s4556, 1
        // Predicated region
        $region81: #{textcnn_forward.1} parent=39 // pred_check
          %p4558 = pneg %p4557
        $region82: #{textcnn_forward.1} parent=39 // pred_check_branch
          %4560 = sbr.rel (%p4558) target = $region84
        $region83: #{textcnn_forward.1} parent=39 // pred_region
          %4561 = vst.msk [vmem:[#allocation2] sm:$0xff] %vm2217, 0.0
          %4562 = vst.msk [vmem:[#allocation2 + $0x8] sm:$0xff] %vm2217, 0.0
          %4563 = vst.msk [vmem:[#allocation2 + $0x10] sm:$0xff] %vm2217, 0.0
          %4564 = vst.msk [vmem:[#allocation2 + $0x18] sm:$0xff] %vm2217, 0.0
        $region84: #{textcnn_forward.1} parent=39 // pred_fallthru
          _
        %s4565 = sld [smem:[#allocation4 + %s4555]]
        %s4566 = smul.u32 %s4565, 96
        %s4567 = smul.addr %s4566, 4
        %s4568 = scalar_lea.vmem [#allocation8], %s4567
        %v4569 = vld [vmem:[%s4568] sm:$0xff]
        %v4570 = vld [vmem:[%s4568 + $0x8] sm:$0xff]
        %v4571 = vld [vmem:[%s4568 + $0x10] sm:$0xff]
        %v4572 = vld [vmem:[%s4568 + $0x18] sm:$0xff]
        %v4573 = vld [vmem:[%s4568 + $0x20] sm:$0xff]
        %v4574 = vld [vmem:[%s4568 + $0x28] sm:$0xff]
        %v4575 = vld [vmem:[%s4568 + $0x30] sm:$0xff]
        %v4576 = vld [vmem:[%s4568 + $0x38] sm:$0xff]
        %v4577 = vld [vmem:[%s4568 + $0x40] sm:$0xff]
        %v4578 = vld [vmem:[%s4568 + $0x48] sm:$0xff]
        %v4579 = vld [vmem:[%s4568 + $0x50] sm:$0xff]
        %v4580 = vld [vmem:[%s4568 + $0x58] sm:$0xff]
        %v4581 = vld [vmem:[%s4568 + $0x60] sm:$0xff]
        %v4582 = vld [vmem:[%s4568 + $0x68] sm:$0xff]
        %v4583 = vld [vmem:[%s4568 + $0x70] sm:$0xff]
        %v4584 = vld [vmem:[%s4568 + $0x78] sm:$0xff]
        %v4585 = vld [vmem:[%s4568 + $0x80] sm:$0xff]
        %v4586 = vld [vmem:[%s4568 + $0x88] sm:$0xff]
        %v4587 = vld [vmem:[%s4568 + $0x90] sm:$0xff]
        %v4588 = vld [vmem:[%s4568 + $0x98] sm:$0xff]
        %v4589 = vld [vmem:[%s4568 + $0xa0] sm:$0xff]
        %v4590 = vld [vmem:[%s4568 + $0xa8] sm:$0xff]
        %v4591 = vld [vmem:[%s4568 + $0xb0] sm:$0xff]
        %v4592 = vld [vmem:[%s4568 + $0xb8] sm:$0xff]
        %v4593 = vld [vmem:[%s4568 + $0xc0] sm:$0xff]
        %v4594 = vld [vmem:[%s4568 + $0xc8] sm:$0xff]
        %v4595 = vld [vmem:[%s4568 + $0xd0] sm:$0xff]
        %v4596 = vld [vmem:[%s4568 + $0xd8] sm:$0xff]
        %v4597 = vld [vmem:[%s4568 + $0xe0] sm:$0xff]
        %v4598 = vld [vmem:[%s4568 + $0xe8] sm:$0xff]
        %v4599 = vld [vmem:[%s4568 + $0xf0] sm:$0xff]
        %v4600 = vld [vmem:[%s4568 + $0xf8] sm:$0xff]
        %v4601 = vld [vmem:[%s4568 + $0x100] sm:$0xff]
        %v4602 = vld [vmem:[%s4568 + $0x108] sm:$0xff]
        %v4603 = vld [vmem:[%s4568 + $0x110] sm:$0xff]
        %v4604 = vld [vmem:[%s4568 + $0x118] sm:$0xff]
        %v4605 = vld [vmem:[%s4568 + $0x120] sm:$0xff]
        %v4606 = vld [vmem:[%s4568 + $0x128] sm:$0xff]
        %v4607 = vld [vmem:[%s4568 + $0x130] sm:$0xff]
        %v4608 = vld [vmem:[%s4568 + $0x138] sm:$0xff]
        %v4609 = vld [vmem:[%s4568 + $0x140] sm:$0xff]
        %v4610 = vld [vmem:[%s4568 + $0x148] sm:$0xff]
        %v4611 = vld [vmem:[%s4568 + $0x150] sm:$0xff]
        %v4612 = vld [vmem:[%s4568 + $0x158] sm:$0xff]
        %v4613 = vld [vmem:[%s4568 + $0x160] sm:$0xff]
        %v4614 = vld [vmem:[%s4568 + $0x168] sm:$0xff]
        %v4615 = vld [vmem:[%s4568 + $0x170] sm:$0xff]
        %v4616 = vld [vmem:[%s4568 + $0x178] sm:$0xff]
        %s4617 = scalar_lea.vmem %s292, 2496 [#allocation11]
        %v4618 = vld [vmem:[%s4617] sm:$0xff]
        %v4619 = vld [vmem:[%s4617 + $0x8] sm:$0xff]
        %v4620 = vld [vmem:[%s4617 + $0x10] sm:$0xff]
        %v4621 = vld [vmem:[%s4617 + $0x18] sm:$0xff]
        %v4622 = vld [vmem:[%s4617 + $0x20] sm:$0xff]
        %v4623 = vld [vmem:[%s4617 + $0x28] sm:$0xff]
        %v4624 = vld [vmem:[%s4617 + $0x30] sm:$0xff]
        %v4625 = vld [vmem:[%s4617 + $0x38] sm:$0xff]
        %v4626 = vld [vmem:[%s4617 + $0x40] sm:$0xff]
        %v4627 = vld [vmem:[%s4617 + $0x48] sm:$0xff]
        %v4628 = vld [vmem:[%s4617 + $0x50] sm:$0xff]
        %v4629 = vld [vmem:[%s4617 + $0x58] sm:$0xff]
        %v4630 = vld [vmem:[%s4617 + $0x60] sm:$0xff]
        %v4631 = vld [vmem:[%s4617 + $0x68] sm:$0xff]
        %v4632 = vld [vmem:[%s4617 + $0x70] sm:$0xff]
        %v4633 = vld [vmem:[%s4617 + $0x78] sm:$0xff]
        %v4634 = vld [vmem:[%s4617 + $0x80] sm:$0xff]
        %v4635 = vld [vmem:[%s4617 + $0x88] sm:$0xff]
        %v4636 = vld [vmem:[%s4617 + $0x90] sm:$0xff]
        %v4637 = vld [vmem:[%s4617 + $0x98] sm:$0xff]
        %v4638 = vld [vmem:[%s4617 + $0xa0] sm:$0xff]
        %v4639 = vld [vmem:[%s4617 + $0xa8] sm:$0xff]
        %v4640 = vld [vmem:[%s4617 + $0xb0] sm:$0xff]
        %v4641 = vld [vmem:[%s4617 + $0xb8] sm:$0xff]
        %v4642 = vld [vmem:[%s4617 + $0xc0] sm:$0xff]
        %v4643 = vld [vmem:[%s4617 + $0xc8] sm:$0xff]
        %v4644 = vld [vmem:[%s4617 + $0xd0] sm:$0xff]
        %v4645 = vld [vmem:[%s4617 + $0xd8] sm:$0xff]
        %v4646 = vld [vmem:[%s4617 + $0xe0] sm:$0xff]
        %v4647 = vld [vmem:[%s4617 + $0xe8] sm:$0xff]
        %v4648 = vld [vmem:[%s4617 + $0xf0] sm:$0xff]
        %v4649 = vld [vmem:[%s4617 + $0xf8] sm:$0xff]
        %v4650 = vld [vmem:[%s4617 + $0x100] sm:$0xff]
        %v4651 = vld [vmem:[%s4617 + $0x108] sm:$0xff]
        %v4652 = vld [vmem:[%s4617 + $0x110] sm:$0xff]
        %v4653 = vld [vmem:[%s4617 + $0x118] sm:$0xff]
        %v4654 = vld [vmem:[%s4617 + $0x120] sm:$0xff]
        %v4655 = vld [vmem:[%s4617 + $0x128] sm:$0xff]
        %v4656 = vld [vmem:[%s4617 + $0x130] sm:$0xff]
        %v4657 = vld [vmem:[%s4617 + $0x138] sm:$0xff]
        %v4658 = vld [vmem:[%s4617 + $0x140] sm:$0xff]
        %v4659 = vld [vmem:[%s4617 + $0x148] sm:$0xff]
        %v4660 = vld [vmem:[%s4617 + $0x150] sm:$0xff]
        %v4661 = vld [vmem:[%s4617 + $0x158] sm:$0xff]
        %v4662 = vld [vmem:[%s4617 + $0x160] sm:$0xff]
        %v4663 = vld [vmem:[%s4617 + $0x168] sm:$0xff]
        %v4664 = vld [vmem:[%s4617 + $0x170] sm:$0xff]
        %v4665 = vld [vmem:[%s4617 + $0x178] sm:$0xff]
        %v4666 = vld [vmem:[%s4617 + $0x180] sm:$0xff]
        %v4667 = vld [vmem:[%s4617 + $0x188] sm:$0xff]
        %v4668 = vld [vmem:[%s4617 + $0x190] sm:$0xff]
        %v4669 = vld [vmem:[%s4617 + $0x198] sm:$0xff]
        %v4670 = vld [vmem:[%s4617 + $0x1a0] sm:$0xff]
        %v4671 = vld [vmem:[%s4617 + $0x1a8] sm:$0xff]
        %v4672 = vld [vmem:[%s4617 + $0x1b0] sm:$0xff]
        %v4673 = vld [vmem:[%s4617 + $0x1b8] sm:$0xff]
        %v4674 = vld [vmem:[%s4617 + $0x1c0] sm:$0xff]
        %v4675 = vld [vmem:[%s4617 + $0x1c8] sm:$0xff]
        %v4676 = vld [vmem:[%s4617 + $0x1d0] sm:$0xff]
        %v4677 = vld [vmem:[%s4617 + $0x1d8] sm:$0xff]
        %v4678 = vld [vmem:[%s4617 + $0x1e0] sm:$0xff]
        %v4679 = vld [vmem:[%s4617 + $0x1e8] sm:$0xff]
        %v4680 = vld [vmem:[%s4617 + $0x1f0] sm:$0xff]
        %v4681 = vld [vmem:[%s4617 + $0x1f8] sm:$0xff]
        %v4682 = vld [vmem:[%s4617 + $0x200] sm:$0xff]
        %v4683 = vld [vmem:[%s4617 + $0x208] sm:$0xff]
        %v4684 = vld [vmem:[%s4617 + $0x210] sm:$0xff]
        %v4685 = vld [vmem:[%s4617 + $0x218] sm:$0xff]
        %v4686 = vld [vmem:[%s4617 + $0x220] sm:$0xff]
        %v4687 = vld [vmem:[%s4617 + $0x228] sm:$0xff]
        %v4688 = vld [vmem:[%s4617 + $0x230] sm:$0xff]
        %v4689 = vld [vmem:[%s4617 + $0x238] sm:$0xff]
        %v4690 = vld [vmem:[%s4617 + $0x240] sm:$0xff]
        %v4691 = vld [vmem:[%s4617 + $0x248] sm:$0xff]
        %v4692 = vld [vmem:[%s4617 + $0x250] sm:$0xff]
        %v4693 = vld [vmem:[%s4617 + $0x258] sm:$0xff]
        %v4694 = vld [vmem:[%s4617 + $0x260] sm:$0xff]
        %v4695 = vld [vmem:[%s4617 + $0x268] sm:$0xff]
        %v4696 = vld [vmem:[%s4617 + $0x270] sm:$0xff]
        %v4697 = vld [vmem:[%s4617 + $0x278] sm:$0xff]
        %v4698 = vld [vmem:[%s4617 + $0x280] sm:$0xff]
        %v4699 = vld [vmem:[%s4617 + $0x288] sm:$0xff]
        %v4700 = vld [vmem:[%s4617 + $0x290] sm:$0xff]
        %v4701 = vld [vmem:[%s4617 + $0x298] sm:$0xff]
        %v4702 = vld [vmem:[%s4617 + $0x2a0] sm:$0xff]
        %v4703 = vld [vmem:[%s4617 + $0x2a8] sm:$0xff]
        %v4704 = vld [vmem:[%s4617 + $0x2b0] sm:$0xff]
        %v4705 = vld [vmem:[%s4617 + $0x2b8] sm:$0xff]
        %v4706 = vld [vmem:[%s4617 + $0x2c0] sm:$0xff]
        %v4707 = vld [vmem:[%s4617 + $0x2c8] sm:$0xff]
        %v4708 = vld [vmem:[%s4617 + $0x2d0] sm:$0xff]
        %v4709 = vld [vmem:[%s4617 + $0x2d8] sm:$0xff]
        %v4710 = vld [vmem:[%s4617 + $0x2e0] sm:$0xff]
        %v4711 = vld [vmem:[%s4617 + $0x2e8] sm:$0xff]
        %v4712 = vld [vmem:[%s4617 + $0x2f0] sm:$0xff]
        %v4713 = vld [vmem:[%s4617 + $0x2f8] sm:$0xff]
        %v4714 = vld [vmem:[%s4617 + $0x300] sm:$0xff]
        %v4715 = vld [vmem:[%s4617 + $0x308] sm:$0xff]
        %v4716 = vld [vmem:[%s4617 + $0x310] sm:$0xff]
        %v4717 = vld [vmem:[%s4617 + $0x318] sm:$0xff]
        %v4718 = vld [vmem:[%s4617 + $0x320] sm:$0xff]
        %v4719 = vld [vmem:[%s4617 + $0x328] sm:$0xff]
        %v4720 = vld [vmem:[%s4617 + $0x330] sm:$0xff]
        %v4721 = vld [vmem:[%s4617 + $0x338] sm:$0xff]
        %v4722 = vld [vmem:[%s4617 + $0x340] sm:$0xff]
        %v4723 = vld [vmem:[%s4617 + $0x348] sm:$0xff]
        %v4724 = vld [vmem:[%s4617 + $0x350] sm:$0xff]
        %v4725 = vld [vmem:[%s4617 + $0x358] sm:$0xff]
        %v4726 = vld [vmem:[%s4617 + $0x360] sm:$0xff]
        %v4727 = vld [vmem:[%s4617 + $0x368] sm:$0xff]
        %v4728 = vld [vmem:[%s4617 + $0x370] sm:$0xff]
        %v4729 = vld [vmem:[%s4617 + $0x378] sm:$0xff]
        %v4730 = vld [vmem:[%s4617 + $0x380] sm:$0xff]
        %v4731 = vld [vmem:[%s4617 + $0x388] sm:$0xff]
        %v4732 = vld [vmem:[%s4617 + $0x390] sm:$0xff]
        %v4733 = vld [vmem:[%s4617 + $0x398] sm:$0xff]
        %v4734 = vld [vmem:[%s4617 + $0x3a0] sm:$0xff]
        %v4735 = vld [vmem:[%s4617 + $0x3a8] sm:$0xff]
        %v4736 = vld [vmem:[%s4617 + $0x3b0] sm:$0xff]
        %v4737 = vld [vmem:[%s4617 + $0x3b8] sm:$0xff]
        %v4738 = vld [vmem:[%s4617 + $0x3c0] sm:$0xff]
        %v4739 = vld [vmem:[%s4617 + $0x3c8] sm:$0xff]
        %v4740 = vld [vmem:[%s4617 + $0x3d0] sm:$0xff]
        %v4741 = vld [vmem:[%s4617 + $0x3d8] sm:$0xff]
        %v4742 = vld [vmem:[%s4617 + $0x3e0] sm:$0xff]
        %v4743 = vld [vmem:[%s4617 + $0x3e8] sm:$0xff]
        %v4744 = vld [vmem:[%s4617 + $0x3f0] sm:$0xff]
        %v4745 = vld [vmem:[%s4617 + $0x3f8] sm:$0xff]
        %v4746 = vld [vmem:[%s4617 + $0x400] sm:$0xff]
        %v4747 = vld [vmem:[%s4617 + $0x408] sm:$0xff]
        %v4748 = vld [vmem:[%s4617 + $0x410] sm:$0xff]
        %v4749 = vld [vmem:[%s4617 + $0x418] sm:$0xff]
        %v4750 = vld [vmem:[%s4617 + $0x420] sm:$0xff]
        %v4751 = vld [vmem:[%s4617 + $0x428] sm:$0xff]
        %v4752 = vld [vmem:[%s4617 + $0x430] sm:$0xff]
        %v4753 = vld [vmem:[%s4617 + $0x438] sm:$0xff]
        %v4754 = vld [vmem:[%s4617 + $0x440] sm:$0xff]
        %v4755 = vld [vmem:[%s4617 + $0x448] sm:$0xff]
        %v4756 = vld [vmem:[%s4617 + $0x450] sm:$0xff]
        %v4757 = vld [vmem:[%s4617 + $0x458] sm:$0xff]
        %v4758 = vld [vmem:[%s4617 + $0x460] sm:$0xff]
        %v4759 = vld [vmem:[%s4617 + $0x468] sm:$0xff]
        %v4760 = vld [vmem:[%s4617 + $0x470] sm:$0xff]
        %v4761 = vld [vmem:[%s4617 + $0x478] sm:$0xff]
        %v4762 = vld [vmem:[%s4617 + $0x480] sm:$0x33]
        %v4763 = vld [vmem:[%s4617 + $0x488] sm:$0x33]
        %v4764 = vld [vmem:[%s4617 + $0x490] sm:$0x33]
        %v4765 = vld [vmem:[%s4617 + $0x498] sm:$0x33]
        %v4766 = vld [vmem:[%s4617 + $0x4a0] sm:$0x33]
        %v4767 = vld [vmem:[%s4617 + $0x4a8] sm:$0x33]
        %v4768 = vld [vmem:[%s4617 + $0x4b0] sm:$0x33]
        %v4769 = vld [vmem:[%s4617 + $0x4b8] sm:$0x33]
        %v4770 = vld [vmem:[%s4617 + $0x4c0] sm:$0x33]
        %v4771 = vld [vmem:[%s4617 + $0x4c8] sm:$0x33]
        %v4772 = vld [vmem:[%s4617 + $0x4d0] sm:$0x33]
        %v4773 = vld [vmem:[%s4617 + $0x4d8] sm:$0x33]
        %v4774 = vld [vmem:[#allocation2] sm:$0xff]
        %v4775 = vld [vmem:[#allocation2 + $0x8] sm:$0xff]
        %v4776 = vld [vmem:[#allocation2 + $0x10] sm:$0xff]
        %v4777 = vld [vmem:[#allocation2 + $0x18] sm:$0xff]
        %v4826 = vunpack.c.l.b16 %v4569
        %v4827 = vunpack.c.h.b16 %v4569
        %v4828 = vunpack.c.l.b16 %v4570
        %v4829 = vunpack.c.h.b16 %v4570
        %v4830 = vunpack.c.l.b16 %v4571
        %v4831 = vunpack.c.h.b16 %v4571
        %v4832 = vunpack.c.l.b16 %v4572
        %v4833 = vunpack.c.h.b16 %v4572
        %v4834 = vunpack.c.l.b16 %v4573
        %v4835 = vunpack.c.h.b16 %v4573
        %v4836 = vunpack.c.l.b16 %v4574
        %v4837 = vunpack.c.h.b16 %v4574
        %v4838 = vunpack.c.l.b16 %v4575
        %v4839 = vunpack.c.h.b16 %v4575
        %v4840 = vunpack.c.l.b16 %v4576
        %v4841 = vunpack.c.h.b16 %v4576
        %v4842 = vunpack.c.l.b16 %v4577
        %v4843 = vunpack.c.h.b16 %v4577
        %v4844 = vunpack.c.l.b16 %v4578
        %v4845 = vunpack.c.h.b16 %v4578
        %v4846 = vunpack.c.l.b16 %v4579
        %v4847 = vunpack.c.h.b16 %v4579
        %v4848 = vunpack.c.l.b16 %v4580
        %v4849 = vunpack.c.h.b16 %v4580
        %v4850 = vunpack.c.l.b16 %v4581
        %v4851 = vunpack.c.h.b16 %v4581
        %v4852 = vunpack.c.l.b16 %v4582
        %v4853 = vunpack.c.h.b16 %v4582
        %v4854 = vunpack.c.l.b16 %v4583
        %v4855 = vunpack.c.h.b16 %v4583
        %v4856 = vunpack.c.l.b16 %v4584
        %v4857 = vunpack.c.h.b16 %v4584
        %v4858 = vunpack.c.l.b16 %v4585
        %v4859 = vunpack.c.h.b16 %v4585
        %v4860 = vunpack.c.l.b16 %v4586
        %v4861 = vunpack.c.h.b16 %v4586
        %v4862 = vunpack.c.l.b16 %v4587
        %v4863 = vunpack.c.h.b16 %v4587
        %v4864 = vunpack.c.l.b16 %v4588
        %v4865 = vunpack.c.h.b16 %v4588
        %v4866 = vunpack.c.l.b16 %v4589
        %v4867 = vunpack.c.h.b16 %v4589
        %v4868 = vunpack.c.l.b16 %v4590
        %v4869 = vunpack.c.h.b16 %v4590
        %v4870 = vunpack.c.l.b16 %v4591
        %v4871 = vunpack.c.h.b16 %v4591
        %v4872 = vunpack.c.l.b16 %v4592
        %v4873 = vunpack.c.h.b16 %v4592
        %v4874 = vunpack.c.l.b16 %v4593
        %v4875 = vunpack.c.h.b16 %v4593
        %v4876 = vunpack.c.l.b16 %v4594
        %v4877 = vunpack.c.h.b16 %v4594
        %v4878 = vunpack.c.l.b16 %v4595
        %v4879 = vunpack.c.h.b16 %v4595
        %v4880 = vunpack.c.l.b16 %v4596
        %v4881 = vunpack.c.h.b16 %v4596
        %v4882 = vunpack.c.l.b16 %v4597
        %v4883 = vunpack.c.h.b16 %v4597
        %v4884 = vunpack.c.l.b16 %v4598
        %v4885 = vunpack.c.h.b16 %v4598
        %v4886 = vunpack.c.l.b16 %v4599
        %v4887 = vunpack.c.h.b16 %v4599
        %v4888 = vunpack.c.l.b16 %v4600
        %v4889 = vunpack.c.h.b16 %v4600
        %v4890 = vunpack.c.l.b16 %v4601
        %v4891 = vunpack.c.h.b16 %v4601
        %v4892 = vunpack.c.l.b16 %v4602
        %v4893 = vunpack.c.h.b16 %v4602
        %v4894 = vunpack.c.l.b16 %v4603
        %v4895 = vunpack.c.h.b16 %v4603
        %v4896 = vunpack.c.l.b16 %v4604
        %v4897 = vunpack.c.h.b16 %v4604
        %v4898 = vunpack.c.l.b16 %v4605
        %v4899 = vunpack.c.h.b16 %v4605
        %v4900 = vunpack.c.l.b16 %v4606
        %v4901 = vunpack.c.h.b16 %v4606
        %v4902 = vunpack.c.l.b16 %v4607
        %v4903 = vunpack.c.h.b16 %v4607
        %v4904 = vunpack.c.l.b16 %v4608
        %v4905 = vunpack.c.h.b16 %v4608
        %v4906 = vunpack.c.l.b16 %v4609
        %v4907 = vunpack.c.h.b16 %v4609
        %v4908 = vunpack.c.l.b16 %v4610
        %v4909 = vunpack.c.h.b16 %v4610
        %v4910 = vunpack.c.l.b16 %v4611
        %v4911 = vunpack.c.h.b16 %v4611
        %v4912 = vunpack.c.l.b16 %v4612
        %v4913 = vunpack.c.h.b16 %v4612
        %v4914 = vunpack.c.l.b16 %v4613
        %v4915 = vunpack.c.h.b16 %v4613
        %v4916 = vunpack.c.l.b16 %v4614
        %v4917 = vunpack.c.h.b16 %v4614
        %v4918 = vunpack.c.l.b16 %v4615
        %v4919 = vunpack.c.h.b16 %v4615
        %v4920 = vunpack.c.l.b16 %v4616
        %v4921 = vunpack.c.h.b16 %v4616
        %v4922 = vpack.c.b16 %v4850, %v4826
        %v4923 = vpack.c.b16 %v4851, %v4827
        %v4924 = vpack.c.b16 %v4852, %v4828
        %v4925 = vpack.c.b16 %v4853, %v4829
        %v4926 = vpack.c.b16 %v4854, %v4830
        %v4927 = vpack.c.b16 %v4855, %v4831
        %v4928 = vpack.c.b16 %v4856, %v4832
        %v4929 = vpack.c.b16 %v4857, %v4833
        %v4930 = vpack.c.b16 %v4858, %v4834
        %v4931 = vpack.c.b16 %v4859, %v4835
        %v4932 = vpack.c.b16 %v4860, %v4836
        %v4933 = vpack.c.b16 %v4861, %v4837
        %v4934 = vpack.c.b16 %v4862, %v4838
        %v4935 = vpack.c.b16 %v4863, %v4839
        %v4936 = vpack.c.b16 %v4864, %v4840
        %v4937 = vpack.c.b16 %v4865, %v4841
        %v4938 = vpack.c.b16 %v4866, %v4842
        %v4939 = vpack.c.b16 %v4867, %v4843
        %v4940 = vpack.c.b16 %v4868, %v4844
        %v4941 = vpack.c.b16 %v4869, %v4845
        %v4942 = vpack.c.b16 %v4870, %v4846
        %v4943 = vpack.c.b16 %v4871, %v4847
        %v4944 = vpack.c.b16 %v4872, %v4848
        %v4945 = vpack.c.b16 %v4873, %v4849
        %v4946 = vpack.c.b16 %v4898, %v4874
        %v4947 = vpack.c.b16 %v4899, %v4875
        %v4948 = vpack.c.b16 %v4900, %v4876
        %v4949 = vpack.c.b16 %v4901, %v4877
        %v4950 = vpack.c.b16 %v4902, %v4878
        %v4951 = vpack.c.b16 %v4903, %v4879
        %v4952 = vpack.c.b16 %v4904, %v4880
        %v4953 = vpack.c.b16 %v4905, %v4881
        %v4954 = vpack.c.b16 %v4906, %v4882
        %v4955 = vpack.c.b16 %v4907, %v4883
        %v4956 = vpack.c.b16 %v4908, %v4884
        %v4957 = vpack.c.b16 %v4909, %v4885
        %v4958 = vpack.c.b16 %v4910, %v4886
        %v4959 = vpack.c.b16 %v4911, %v4887
        %v4960 = vpack.c.b16 %v4912, %v4888
        %v4961 = vpack.c.b16 %v4913, %v4889
        %v4962 = vpack.c.b16 %v4914, %v4890
        %v4963 = vpack.c.b16 %v4915, %v4891
        %v4964 = vpack.c.b16 %v4916, %v4892
        %v4965 = vpack.c.b16 %v4917, %v4893
        %v4966 = vpack.c.b16 %v4918, %v4894
        %v4967 = vpack.c.b16 %v4919, %v4895
        %v4968 = vpack.c.b16 %v4920, %v4896
        %v4969 = vpack.c.b16 %v4921, %v4897
        %v5174 = vunpack.c.l.b16 %v4618
        %v5175 = vunpack.c.h.b16 %v4618
        %v5176 = vunpack.c.l.b16 %v4619
        %v5177 = vunpack.c.h.b16 %v4619
        %v5178 = vunpack.c.l.b16 %v4620
        %v5179 = vunpack.c.h.b16 %v4620
        %v5180 = vunpack.c.l.b16 %v4621
        %v5181 = vunpack.c.h.b16 %v4621
        %v5182 = vunpack.c.l.b16 %v4622
        %v5183 = vunpack.c.h.b16 %v4622
        %v5184 = vunpack.c.l.b16 %v4623
        %v5185 = vunpack.c.h.b16 %v4623
        %v5186 = vunpack.c.l.b16 %v4624
        %v5187 = vunpack.c.h.b16 %v4624
        %v5188 = vunpack.c.l.b16 %v4625
        %v5189 = vunpack.c.h.b16 %v4625
        %v5190 = vunpack.c.l.b16 %v4626
        %v5191 = vunpack.c.h.b16 %v4626
        %v5192 = vunpack.c.l.b16 %v4627
        %v5193 = vunpack.c.h.b16 %v4627
        %v5194 = vunpack.c.l.b16 %v4628
        %v5195 = vunpack.c.h.b16 %v4628
        %v5196 = vunpack.c.l.b16 %v4629
        %v5197 = vunpack.c.h.b16 %v4629
        %v5198 = vunpack.c.l.b16 %v4630
        %v5199 = vunpack.c.h.b16 %v4630
        %v5200 = vunpack.c.l.b16 %v4631
        %v5201 = vunpack.c.h.b16 %v4631
        %v5202 = vunpack.c.l.b16 %v4632
        %v5203 = vunpack.c.h.b16 %v4632
        %v5204 = vunpack.c.l.b16 %v4633
        %v5205 = vunpack.c.h.b16 %v4633
        %v5206 = vunpack.c.l.b16 %v4634
        %v5207 = vunpack.c.h.b16 %v4634
        %v5208 = vunpack.c.l.b16 %v4635
        %v5209 = vunpack.c.h.b16 %v4635
        %v5210 = vunpack.c.l.b16 %v4636
        %v5211 = vunpack.c.h.b16 %v4636
        %v5212 = vunpack.c.l.b16 %v4637
        %v5213 = vunpack.c.h.b16 %v4637
        %v5214 = vunpack.c.l.b16 %v4638
        %v5215 = vunpack.c.h.b16 %v4638
        %v5216 = vunpack.c.l.b16 %v4639
        %v5217 = vunpack.c.h.b16 %v4639
        %v5218 = vunpack.c.l.b16 %v4640
        %v5219 = vunpack.c.h.b16 %v4640
        %v5220 = vunpack.c.l.b16 %v4641
        %v5221 = vunpack.c.h.b16 %v4641
        %v5222 = vunpack.c.l.b16 %v4642
        %v5223 = vunpack.c.h.b16 %v4642
        %v5224 = vunpack.c.l.b16 %v4643
        %v5225 = vunpack.c.h.b16 %v4643
        %v5226 = vunpack.c.l.b16 %v4644
        %v5227 = vunpack.c.h.b16 %v4644
        %v5228 = vunpack.c.l.b16 %v4645
        %v5229 = vunpack.c.h.b16 %v4645
        %v5230 = vunpack.c.l.b16 %v4646
        %v5231 = vunpack.c.h.b16 %v4646
        %v5232 = vunpack.c.l.b16 %v4647
        %v5233 = vunpack.c.h.b16 %v4647
        %v5234 = vunpack.c.l.b16 %v4648
        %v5235 = vunpack.c.h.b16 %v4648
        %v5236 = vunpack.c.l.b16 %v4649
        %v5237 = vunpack.c.h.b16 %v4649
        %v5238 = vunpack.c.l.b16 %v4650
        %v5239 = vunpack.c.h.b16 %v4650
        %v5240 = vunpack.c.l.b16 %v4651
        %v5241 = vunpack.c.h.b16 %v4651
        %v5242 = vunpack.c.l.b16 %v4652
        %v5243 = vunpack.c.h.b16 %v4652
        %v5244 = vunpack.c.l.b16 %v4653
        %v5245 = vunpack.c.h.b16 %v4653
        %v5246 = vunpack.c.l.b16 %v4654
        %v5247 = vunpack.c.h.b16 %v4654
        %v5248 = vunpack.c.l.b16 %v4655
        %v5249 = vunpack.c.h.b16 %v4655
        %v5250 = vunpack.c.l.b16 %v4656
        %v5251 = vunpack.c.h.b16 %v4656
        %v5252 = vunpack.c.l.b16 %v4657
        %v5253 = vunpack.c.h.b16 %v4657
        %v5254 = vunpack.c.l.b16 %v4658
        %v5255 = vunpack.c.h.b16 %v4658
        %v5256 = vunpack.c.l.b16 %v4659
        %v5257 = vunpack.c.h.b16 %v4659
        %v5258 = vunpack.c.l.b16 %v4660
        %v5259 = vunpack.c.h.b16 %v4660
        %v5260 = vunpack.c.l.b16 %v4661
        %v5261 = vunpack.c.h.b16 %v4661
        %v5262 = vunpack.c.l.b16 %v4662
        %v5263 = vunpack.c.h.b16 %v4662
        %v5264 = vunpack.c.l.b16 %v4663
        %v5265 = vunpack.c.h.b16 %v4663
        %v5266 = vunpack.c.l.b16 %v4664
        %v5267 = vunpack.c.h.b16 %v4664
        %v5268 = vunpack.c.l.b16 %v4665
        %v5269 = vunpack.c.h.b16 %v4665
        %v5270 = vunpack.c.l.b16 %v4666
        %v5271 = vunpack.c.h.b16 %v4666
        %v5272 = vunpack.c.l.b16 %v4667
        %v5273 = vunpack.c.h.b16 %v4667
        %v5274 = vunpack.c.l.b16 %v4668
        %v5275 = vunpack.c.h.b16 %v4668
        %v5276 = vunpack.c.l.b16 %v4669
        %v5277 = vunpack.c.h.b16 %v4669
        %v5278 = vunpack.c.l.b16 %v4670
        %v5279 = vunpack.c.h.b16 %v4670
        %v5280 = vunpack.c.l.b16 %v4671
        %v5281 = vunpack.c.h.b16 %v4671
        %v5282 = vunpack.c.l.b16 %v4672
        %v5283 = vunpack.c.h.b16 %v4672
        %v5284 = vunpack.c.l.b16 %v4673
        %v5285 = vunpack.c.h.b16 %v4673
        %v5286 = vunpack.c.l.b16 %v4674
        %v5287 = vunpack.c.h.b16 %v4674
        %v5288 = vunpack.c.l.b16 %v4675
        %v5289 = vunpack.c.h.b16 %v4675
        %v5290 = vunpack.c.l.b16 %v4676
        %v5291 = vunpack.c.h.b16 %v4676
        %v5292 = vunpack.c.l.b16 %v4677
        %v5293 = vunpack.c.h.b16 %v4677
        %v5294 = vunpack.c.l.b16 %v4678
        %v5295 = vunpack.c.h.b16 %v4678
        %v5296 = vunpack.c.l.b16 %v4679
        %v5297 = vunpack.c.h.b16 %v4679
        %v5298 = vunpack.c.l.b16 %v4680
        %v5299 = vunpack.c.h.b16 %v4680
        %v5300 = vunpack.c.l.b16 %v4681
        %v5301 = vunpack.c.h.b16 %v4681
        %v5302 = vunpack.c.l.b16 %v4682
        %v5303 = vunpack.c.h.b16 %v4682
        %v5304 = vunpack.c.l.b16 %v4683
        %v5305 = vunpack.c.h.b16 %v4683
        %v5306 = vunpack.c.l.b16 %v4684
        %v5307 = vunpack.c.h.b16 %v4684
        %v5308 = vunpack.c.l.b16 %v4685
        %v5309 = vunpack.c.h.b16 %v4685
        %v5310 = vunpack.c.l.b16 %v4686
        %v5311 = vunpack.c.h.b16 %v4686
        %v5312 = vunpack.c.l.b16 %v4687
        %v5313 = vunpack.c.h.b16 %v4687
        %v5314 = vunpack.c.l.b16 %v4688
        %v5315 = vunpack.c.h.b16 %v4688
        %v5316 = vunpack.c.l.b16 %v4689
        %v5317 = vunpack.c.h.b16 %v4689
        %v5318 = vunpack.c.l.b16 %v4690
        %v5319 = vunpack.c.h.b16 %v4690
        %v5320 = vunpack.c.l.b16 %v4691
        %v5321 = vunpack.c.h.b16 %v4691
        %v5322 = vunpack.c.l.b16 %v4692
        %v5323 = vunpack.c.h.b16 %v4692
        %v5324 = vunpack.c.l.b16 %v4693
        %v5325 = vunpack.c.h.b16 %v4693
        %v5326 = vunpack.c.l.b16 %v4694
        %v5327 = vunpack.c.h.b16 %v4694
        %v5328 = vunpack.c.l.b16 %v4695
        %v5329 = vunpack.c.h.b16 %v4695
        %v5330 = vunpack.c.l.b16 %v4696
        %v5331 = vunpack.c.h.b16 %v4696
        %v5332 = vunpack.c.l.b16 %v4697
        %v5333 = vunpack.c.h.b16 %v4697
        %v5334 = vunpack.c.l.b16 %v4698
        %v5335 = vunpack.c.h.b16 %v4698
        %v5336 = vunpack.c.l.b16 %v4699
        %v5337 = vunpack.c.h.b16 %v4699
        %v5338 = vunpack.c.l.b16 %v4700
        %v5339 = vunpack.c.h.b16 %v4700
        %v5340 = vunpack.c.l.b16 %v4701
        %v5341 = vunpack.c.h.b16 %v4701
        %v5342 = vunpack.c.l.b16 %v4702
        %v5343 = vunpack.c.h.b16 %v4702
        %v5344 = vunpack.c.l.b16 %v4703
        %v5345 = vunpack.c.h.b16 %v4703
        %v5346 = vunpack.c.l.b16 %v4704
        %v5347 = vunpack.c.h.b16 %v4704
        %v5348 = vunpack.c.l.b16 %v4705
        %v5349 = vunpack.c.h.b16 %v4705
        %v5350 = vunpack.c.l.b16 %v4706
        %v5351 = vunpack.c.h.b16 %v4706
        %v5352 = vunpack.c.l.b16 %v4707
        %v5353 = vunpack.c.h.b16 %v4707
        %v5354 = vunpack.c.l.b16 %v4708
        %v5355 = vunpack.c.h.b16 %v4708
        %v5356 = vunpack.c.l.b16 %v4709
        %v5357 = vunpack.c.h.b16 %v4709
        %v5358 = vunpack.c.l.b16 %v4710
        %v5359 = vunpack.c.h.b16 %v4710
        %v5360 = vunpack.c.l.b16 %v4711
        %v5361 = vunpack.c.h.b16 %v4711
        %v5362 = vunpack.c.l.b16 %v4712
        %v5363 = vunpack.c.h.b16 %v4712
        %v5364 = vunpack.c.l.b16 %v4713
        %v5365 = vunpack.c.h.b16 %v4713
        %v5366 = vunpack.c.l.b16 %v4714
        %v5367 = vunpack.c.h.b16 %v4714
        %v5368 = vunpack.c.l.b16 %v4715
        %v5369 = vunpack.c.h.b16 %v4715
        %v5370 = vunpack.c.l.b16 %v4716
        %v5371 = vunpack.c.h.b16 %v4716
        %v5372 = vunpack.c.l.b16 %v4717
        %v5373 = vunpack.c.h.b16 %v4717
        %v5374 = vunpack.c.l.b16 %v4718
        %v5375 = vunpack.c.h.b16 %v4718
        %v5376 = vunpack.c.l.b16 %v4719
        %v5377 = vunpack.c.h.b16 %v4719
        %v5378 = vunpack.c.l.b16 %v4720
        %v5379 = vunpack.c.h.b16 %v4720
        %v5380 = vunpack.c.l.b16 %v4721
        %v5381 = vunpack.c.h.b16 %v4721
        %v5382 = vunpack.c.l.b16 %v4722
        %v5383 = vunpack.c.h.b16 %v4722
        %v5384 = vunpack.c.l.b16 %v4723
        %v5385 = vunpack.c.h.b16 %v4723
        %v5386 = vunpack.c.l.b16 %v4724
        %v5387 = vunpack.c.h.b16 %v4724
        %v5388 = vunpack.c.l.b16 %v4725
        %v5389 = vunpack.c.h.b16 %v4725
        %v5390 = vunpack.c.l.b16 %v4726
        %v5391 = vunpack.c.h.b16 %v4726
        %v5392 = vunpack.c.l.b16 %v4727
        %v5393 = vunpack.c.h.b16 %v4727
        %v5394 = vunpack.c.l.b16 %v4728
        %v5395 = vunpack.c.h.b16 %v4728
        %v5396 = vunpack.c.l.b16 %v4729
        %v5397 = vunpack.c.h.b16 %v4729
        %v5398 = vunpack.c.l.b16 %v4730
        %v5399 = vunpack.c.h.b16 %v4730
        %v5400 = vunpack.c.l.b16 %v4731
        %v5401 = vunpack.c.h.b16 %v4731
        %v5402 = vunpack.c.l.b16 %v4732
        %v5403 = vunpack.c.h.b16 %v4732
        %v5404 = vunpack.c.l.b16 %v4733
        %v5405 = vunpack.c.h.b16 %v4733
        %v5406 = vunpack.c.l.b16 %v4734
        %v5407 = vunpack.c.h.b16 %v4734
        %v5408 = vunpack.c.l.b16 %v4735
        %v5409 = vunpack.c.h.b16 %v4735
        %v5410 = vunpack.c.l.b16 %v4736
        %v5411 = vunpack.c.h.b16 %v4736
        %v5412 = vunpack.c.l.b16 %v4737
        %v5413 = vunpack.c.h.b16 %v4737
        %v5414 = vunpack.c.l.b16 %v4738
        %v5415 = vunpack.c.h.b16 %v4738
        %v5416 = vunpack.c.l.b16 %v4739
        %v5417 = vunpack.c.h.b16 %v4739
        %v5418 = vunpack.c.l.b16 %v4740
        %v5419 = vunpack.c.h.b16 %v4740
        %v5420 = vunpack.c.l.b16 %v4741
        %v5421 = vunpack.c.h.b16 %v4741
        %v5422 = vunpack.c.l.b16 %v4742
        %v5423 = vunpack.c.h.b16 %v4742
        %v5424 = vunpack.c.l.b16 %v4743
        %v5425 = vunpack.c.h.b16 %v4743
        %v5426 = vunpack.c.l.b16 %v4744
        %v5427 = vunpack.c.h.b16 %v4744
        %v5428 = vunpack.c.l.b16 %v4745
        %v5429 = vunpack.c.h.b16 %v4745
        %v5430 = vunpack.c.l.b16 %v4746
        %v5431 = vunpack.c.h.b16 %v4746
        %v5432 = vunpack.c.l.b16 %v4747
        %v5433 = vunpack.c.h.b16 %v4747
        %v5434 = vunpack.c.l.b16 %v4748
        %v5435 = vunpack.c.h.b16 %v4748
        %v5436 = vunpack.c.l.b16 %v4749
        %v5437 = vunpack.c.h.b16 %v4749
        %v5438 = vunpack.c.l.b16 %v4750
        %v5439 = vunpack.c.h.b16 %v4750
        %v5440 = vunpack.c.l.b16 %v4751
        %v5441 = vunpack.c.h.b16 %v4751
        %v5442 = vunpack.c.l.b16 %v4752
        %v5443 = vunpack.c.h.b16 %v4752
        %v5444 = vunpack.c.l.b16 %v4753
        %v5445 = vunpack.c.h.b16 %v4753
        %v5446 = vunpack.c.l.b16 %v4754
        %v5447 = vunpack.c.h.b16 %v4754
        %v5448 = vunpack.c.l.b16 %v4755
        %v5449 = vunpack.c.h.b16 %v4755
        %v5450 = vunpack.c.l.b16 %v4756
        %v5451 = vunpack.c.h.b16 %v4756
        %v5452 = vunpack.c.l.b16 %v4757
        %v5453 = vunpack.c.h.b16 %v4757
        %v5454 = vunpack.c.l.b16 %v4758
        %v5455 = vunpack.c.h.b16 %v4758
        %v5456 = vunpack.c.l.b16 %v4759
        %v5457 = vunpack.c.h.b16 %v4759
        %v5458 = vunpack.c.l.b16 %v4760
        %v5459 = vunpack.c.h.b16 %v4760
        %v5460 = vunpack.c.l.b16 %v4761
        %v5461 = vunpack.c.h.b16 %v4761
        %v5462 = vunpack.c.l.b16 %v4762
        %v5463 = vunpack.c.h.b16 %v4762
        %v5464 = vunpack.c.l.b16 %v4763
        %v5465 = vunpack.c.h.b16 %v4763
        %v5466 = vunpack.c.l.b16 %v4764
        %v5467 = vunpack.c.h.b16 %v4764
        %v5468 = vunpack.c.l.b16 %v4765
        %v5469 = vunpack.c.h.b16 %v4765
        %v5470 = vunpack.c.l.b16 %v4766
        %v5471 = vunpack.c.h.b16 %v4766
        %v5472 = vunpack.c.l.b16 %v4767
        %v5473 = vunpack.c.h.b16 %v4767
        %v5474 = vunpack.c.l.b16 %v4768
        %v5475 = vunpack.c.h.b16 %v4768
        %v5476 = vunpack.c.l.b16 %v4769
        %v5477 = vunpack.c.h.b16 %v4769
        %v5478 = vunpack.c.l.b16 %v4770
        %v5479 = vunpack.c.h.b16 %v4770
        %v5480 = vunpack.c.l.b16 %v4771
        %v5481 = vunpack.c.h.b16 %v4771
        %v5482 = vunpack.c.l.b16 %v4772
        %v5483 = vunpack.c.h.b16 %v4772
        %v5484 = vunpack.c.l.b16 %v4773
        %v5485 = vunpack.c.h.b16 %v4773
        %v5486 = vpack.c.b16 %v5198, %v5174
        %v5487 = vpack.c.b16 %v5199, %v5175
        %v5488 = vpack.c.b16 %v5200, %v5176
        %v5489 = vpack.c.b16 %v5201, %v5177
        %v5490 = vpack.c.b16 %v5202, %v5178
        %v5491 = vpack.c.b16 %v5203, %v5179
        %v5492 = vpack.c.b16 %v5204, %v5180
        %v5493 = vpack.c.b16 %v5205, %v5181
        %v5494 = vpack.c.b16 %v5206, %v5182
        %v5495 = vpack.c.b16 %v5207, %v5183
        %v5496 = vpack.c.b16 %v5208, %v5184
        %v5497 = vpack.c.b16 %v5209, %v5185
        %v5498 = vpack.c.b16 %v5210, %v5186
        %v5499 = vpack.c.b16 %v5211, %v5187
        %v5500 = vpack.c.b16 %v5212, %v5188
        %v5501 = vpack.c.b16 %v5213, %v5189
        %v5502 = vpack.c.b16 %v5214, %v5190
        %v5503 = vpack.c.b16 %v5215, %v5191
        %v5504 = vpack.c.b16 %v5216, %v5192
        %v5505 = vpack.c.b16 %v5217, %v5193
        %v5506 = vpack.c.b16 %v5218, %v5194
        %v5507 = vpack.c.b16 %v5219, %v5195
        %v5508 = vpack.c.b16 %v5220, %v5196
        %v5509 = vpack.c.b16 %v5221, %v5197
        %v5510 = vpack.c.b16 %v5246, %v5222
        %v5511 = vpack.c.b16 %v5247, %v5223
        %v5512 = vpack.c.b16 %v5248, %v5224
        %v5513 = vpack.c.b16 %v5249, %v5225
        %v5514 = vpack.c.b16 %v5250, %v5226
        %v5515 = vpack.c.b16 %v5251, %v5227
        %v5516 = vpack.c.b16 %v5252, %v5228
        %v5517 = vpack.c.b16 %v5253, %v5229
        %v5518 = vpack.c.b16 %v5254, %v5230
        %v5519 = vpack.c.b16 %v5255, %v5231
        %v5520 = vpack.c.b16 %v5256, %v5232
        %v5521 = vpack.c.b16 %v5257, %v5233
        %v5522 = vpack.c.b16 %v5258, %v5234
        %v5523 = vpack.c.b16 %v5259, %v5235
        %v5524 = vpack.c.b16 %v5260, %v5236
        %v5525 = vpack.c.b16 %v5261, %v5237
        %v5526 = vpack.c.b16 %v5262, %v5238
        %v5527 = vpack.c.b16 %v5263, %v5239
        %v5528 = vpack.c.b16 %v5264, %v5240
        %v5529 = vpack.c.b16 %v5265, %v5241
        %v5530 = vpack.c.b16 %v5266, %v5242
        %v5531 = vpack.c.b16 %v5267, %v5243
        %v5532 = vpack.c.b16 %v5268, %v5244
        %v5533 = vpack.c.b16 %v5269, %v5245
        %v5534 = vpack.c.b16 %v5294, %v5270
        %v5535 = vpack.c.b16 %v5295, %v5271
        %v5536 = vpack.c.b16 %v5296, %v5272
        %v5537 = vpack.c.b16 %v5297, %v5273
        %v5538 = vpack.c.b16 %v5298, %v5274
        %v5539 = vpack.c.b16 %v5299, %v5275
        %v5540 = vpack.c.b16 %v5300, %v5276
        %v5541 = vpack.c.b16 %v5301, %v5277
        %v5542 = vpack.c.b16 %v5302, %v5278
        %v5543 = vpack.c.b16 %v5303, %v5279
        %v5544 = vpack.c.b16 %v5304, %v5280
        %v5545 = vpack.c.b16 %v5305, %v5281
        %v5546 = vpack.c.b16 %v5306, %v5282
        %v5547 = vpack.c.b16 %v5307, %v5283
        %v5548 = vpack.c.b16 %v5308, %v5284
        %v5549 = vpack.c.b16 %v5309, %v5285
        %v5550 = vpack.c.b16 %v5310, %v5286
        %v5551 = vpack.c.b16 %v5311, %v5287
        %v5552 = vpack.c.b16 %v5312, %v5288
        %v5553 = vpack.c.b16 %v5313, %v5289
        %v5554 = vpack.c.b16 %v5314, %v5290
        %v5555 = vpack.c.b16 %v5315, %v5291
        %v5556 = vpack.c.b16 %v5316, %v5292
        %v5557 = vpack.c.b16 %v5317, %v5293
        %v5558 = vpack.c.b16 %v5342, %v5318
        %v5559 = vpack.c.b16 %v5343, %v5319
        %v5560 = vpack.c.b16 %v5344, %v5320
        %v5561 = vpack.c.b16 %v5345, %v5321
        %v5562 = vpack.c.b16 %v5346, %v5322
        %v5563 = vpack.c.b16 %v5347, %v5323
        %v5564 = vpack.c.b16 %v5348, %v5324
        %v5565 = vpack.c.b16 %v5349, %v5325
        %v5566 = vpack.c.b16 %v5350, %v5326
        %v5567 = vpack.c.b16 %v5351, %v5327
        %v5568 = vpack.c.b16 %v5352, %v5328
        %v5569 = vpack.c.b16 %v5353, %v5329
        %v5570 = vpack.c.b16 %v5354, %v5330
        %v5571 = vpack.c.b16 %v5355, %v5331
        %v5572 = vpack.c.b16 %v5356, %v5332
        %v5573 = vpack.c.b16 %v5357, %v5333
        %v5574 = vpack.c.b16 %v5358, %v5334
        %v5575 = vpack.c.b16 %v5359, %v5335
        %v5576 = vpack.c.b16 %v5360, %v5336
        %v5577 = vpack.c.b16 %v5361, %v5337
        %v5578 = vpack.c.b16 %v5362, %v5338
        %v5579 = vpack.c.b16 %v5363, %v5339
        %v5580 = vpack.c.b16 %v5364, %v5340
        %v5581 = vpack.c.b16 %v5365, %v5341
        %v5582 = vpack.c.b16 %v5390, %v5366
        %v5583 = vpack.c.b16 %v5391, %v5367
        %v5584 = vpack.c.b16 %v5392, %v5368
        %v5585 = vpack.c.b16 %v5393, %v5369
        %v5586 = vpack.c.b16 %v5394, %v5370
        %v5587 = vpack.c.b16 %v5395, %v5371
        %v5588 = vpack.c.b16 %v5396, %v5372
        %v5589 = vpack.c.b16 %v5397, %v5373
        %v5590 = vpack.c.b16 %v5398, %v5374
        %v5591 = vpack.c.b16 %v5399, %v5375
        %v5592 = vpack.c.b16 %v5400, %v5376
        %v5593 = vpack.c.b16 %v5401, %v5377
        %v5594 = vpack.c.b16 %v5402, %v5378
        %v5595 = vpack.c.b16 %v5403, %v5379
        %v5596 = vpack.c.b16 %v5404, %v5380
        %v5597 = vpack.c.b16 %v5405, %v5381
        %v5598 = vpack.c.b16 %v5406, %v5382
        %v5599 = vpack.c.b16 %v5407, %v5383
        %v5600 = vpack.c.b16 %v5408, %v5384
        %v5601 = vpack.c.b16 %v5409, %v5385
        %v5602 = vpack.c.b16 %v5410, %v5386
        %v5603 = vpack.c.b16 %v5411, %v5387
        %v5604 = vpack.c.b16 %v5412, %v5388
        %v5605 = vpack.c.b16 %v5413, %v5389
        %v5606 = vpack.c.b16 %v5438, %v5414
        %v5607 = vpack.c.b16 %v5439, %v5415
        %v5608 = vpack.c.b16 %v5440, %v5416
        %v5609 = vpack.c.b16 %v5441, %v5417
        %v5610 = vpack.c.b16 %v5442, %v5418
        %v5611 = vpack.c.b16 %v5443, %v5419
        %v5612 = vpack.c.b16 %v5444, %v5420
        %v5613 = vpack.c.b16 %v5445, %v5421
        %v5614 = vpack.c.b16 %v5446, %v5422
        %v5615 = vpack.c.b16 %v5447, %v5423
        %v5616 = vpack.c.b16 %v5448, %v5424
        %v5617 = vpack.c.b16 %v5449, %v5425
        %v5618 = vpack.c.b16 %v5450, %v5426
        %v5619 = vpack.c.b16 %v5451, %v5427
        %v5620 = vpack.c.b16 %v5452, %v5428
        %v5621 = vpack.c.b16 %v5453, %v5429
        %v5622 = vpack.c.b16 %v5454, %v5430
        %v5623 = vpack.c.b16 %v5455, %v5431
        %v5624 = vpack.c.b16 %v5456, %v5432
        %v5625 = vpack.c.b16 %v5457, %v5433
        %v5626 = vpack.c.b16 %v5458, %v5434
        %v5627 = vpack.c.b16 %v5459, %v5435
        %v5628 = vpack.c.b16 %v5460, %v5436
        %v5629 = vpack.c.b16 %v5461, %v5437
        %v5630 = vpack.c.b16 %v5462, %v5462
        %v5631 = vpack.c.b16 %v5463, %v5463
        %v5632 = vpack.c.b16 %v5464, %v5464
        %v5633 = vpack.c.b16 %v5465, %v5465
        %v5634 = vpack.c.b16 %v5466, %v5466
        %v5635 = vpack.c.b16 %v5467, %v5467
        %v5636 = vpack.c.b16 %v5468, %v5468
        %v5637 = vpack.c.b16 %v5469, %v5469
        %v5638 = vpack.c.b16 %v5470, %v5470
        %v5639 = vpack.c.b16 %v5471, %v5471
        %v5640 = vpack.c.b16 %v5472, %v5472
        %v5641 = vpack.c.b16 %v5473, %v5473
        %v5642 = vpack.c.b16 %v5474, %v5474
        %v5643 = vpack.c.b16 %v5475, %v5475
        %v5644 = vpack.c.b16 %v5476, %v5476
        %v5645 = vpack.c.b16 %v5477, %v5477
        %v5646 = vpack.c.b16 %v5478, %v5478
        %v5647 = vpack.c.b16 %v5479, %v5479
        %v5648 = vpack.c.b16 %v5480, %v5480
        %v5649 = vpack.c.b16 %v5481, %v5481
        %v5650 = vpack.c.b16 %v5482, %v5482
        %v5651 = vpack.c.b16 %v5483, %v5483
        %v5652 = vpack.c.b16 %v5484, %v5484
        %v5653 = vpack.c.b16 %v5485, %v5485
        %5822 = vmatprep.subr.bf16.mxu0 %v5487
        %5823 = vmatpush1.bf16.xpose.msra.mxu0 %v5486
        %5824 = vmatprep.subr.bf16.mxu0 %v5511
        %5825 = vmatpush1.bf16.xpose.msra.mxu0 %v5510
        %5826 = vmatprep.subr.bf16.mxu0 %v5535
        %5827 = vmatpush1.bf16.xpose.msra.mxu0 %v5534
        %5828 = vmatprep.subr.bf16.mxu0 %v5559
        %5829 = vmatpush1.bf16.xpose.msra.mxu0 %v5558
        %5830 = vmatprep.subr.bf16.mxu0 %v5583
        %5831 = vmatpush1.bf16.xpose.msra.mxu0 %v5582
        %5832 = vmatprep.subr.bf16.mxu0 %v5607
        %5833 = vmatpush1.bf16.xpose.msra.mxu0 %v5606
        %5834 = vmatprep.subr.bf16.mxu0 %v5631
        %5835 = vmatpush1.bf16.xpose.msra.mxu0 %v5630
        %5836 = vmatprep.subr.bf16.mxu0 0
        %5837 = vmatpush1.bf16.xpose.msra.mxu0 0
        %5838 = vmatprep.subr.bf16.mxu0 0
        %5839 = vmatpush1.bf16.xpose.msra.mxu0 0
        %5840 = vmatprep.subr.bf16.mxu0 0
        %5841 = vmatpush1.bf16.xpose.msra.mxu0 0
        %5842 = vmatprep.subr.bf16.mxu0 0
        %5843 = vmatpush1.bf16.xpose.msra.mxu0 0
        %5844 = vmatprep.subr.bf16.mxu0 0
        %5845 = vmatpush1.bf16.xpose.msra.mxu0 0
        %5846 = vmatprep.subr.bf16.mxu0 0
        %5847 = vmatpush1.bf16.xpose.msra.mxu0 0
        %5848 = vmatprep.subr.bf16.mxu0 0
        %5849 = vmatpush1.bf16.xpose.msra.mxu0 0
        %5850 = vmatprep.subr.bf16.mxu0 0
        %5851 = vmatpush1.bf16.xpose.msra.mxu0 0
        %5852 = vmatprep.subr.bf16.mxu0 0
        %5853 = vmatpush1.bf16.xpose.msra.mxu0 0
        %5854 = vmatprep.mubr.bf16.mxu0 %v4923
        %5855 = vmatmul.mubr.bf16.gmra.mrb[0].mxu0 %v4922
        %v5856 = vpop.f32.mrb[0].mxu0
        %v5857 = vadd.f32 0.0, %v5856
        %v5858 = vpop.f32.mrb[0].mxu0
        %v5859 = vpop.f32.mrb[0].mxu0
        %v5860 = vadd.f32 0.0, %v5859
        %v5861 = vpop.f32.mrb[0].mxu0
        %5862 = vmatprep.mubr.bf16.mxu0 %v4947
        %5863 = vmatmul.mubr.bf16.gmra.mrb[0].mxu0 %v4946
        %v5864 = vpop.f32.mrb[0].mxu0
        %v5865 = vadd.f32 0.0, %v5864
        %v5866 = vpop.f32.mrb[0].mxu0
        %v5867 = vpop.f32.mrb[0].mxu0
        %v5868 = vadd.f32 0.0, %v5867
        %v5869 = vpop.f32.mrb[0].mxu0
        %5870 = vdwg.mxu0
        %5871 = vmatprep.subr.bf16.mxu0 %v5489
        %5872 = vmatpush1.bf16.xpose.msra.mxu0 %v5488
        %5873 = vmatprep.subr.bf16.mxu0 %v5513
        %5874 = vmatpush1.bf16.xpose.msra.mxu0 %v5512
        %5875 = vmatprep.subr.bf16.mxu0 %v5537
        %5876 = vmatpush1.bf16.xpose.msra.mxu0 %v5536
        %5877 = vmatprep.subr.bf16.mxu0 %v5561
        %5878 = vmatpush1.bf16.xpose.msra.mxu0 %v5560
        %5879 = vmatprep.subr.bf16.mxu0 %v5585
        %5880 = vmatpush1.bf16.xpose.msra.mxu0 %v5584
        %5881 = vmatprep.subr.bf16.mxu0 %v5609
        %5882 = vmatpush1.bf16.xpose.msra.mxu0 %v5608
        %5883 = vmatprep.subr.bf16.mxu0 %v5633
        %5884 = vmatpush1.bf16.xpose.msra.mxu0 %v5632
        %5885 = vmatprep.subr.bf16.mxu0 0
        %5886 = vmatpush1.bf16.xpose.msra.mxu0 0
        %5887 = vmatprep.subr.bf16.mxu0 0
        %5888 = vmatpush1.bf16.xpose.msra.mxu0 0
        %5889 = vmatprep.subr.bf16.mxu0 0
        %5890 = vmatpush1.bf16.xpose.msra.mxu0 0
        %5891 = vmatprep.subr.bf16.mxu0 0
        %5892 = vmatpush1.bf16.xpose.msra.mxu0 0
        %5893 = vmatprep.subr.bf16.mxu0 0
        %5894 = vmatpush1.bf16.xpose.msra.mxu0 0
        %5895 = vmatprep.subr.bf16.mxu0 0
        %5896 = vmatpush1.bf16.xpose.msra.mxu0 0
        %5897 = vmatprep.subr.bf16.mxu0 0
        %5898 = vmatpush1.bf16.xpose.msra.mxu0 0
        %5899 = vmatprep.subr.bf16.mxu0 0
        %5900 = vmatpush1.bf16.xpose.msra.mxu0 0
        %5901 = vmatprep.subr.bf16.mxu0 0
        %5902 = vmatpush1.bf16.xpose.msra.mxu0 0
        %5903 = vmatprep.mubr.bf16.mxu0 %v4925
        %5904 = vmatmul.mubr.bf16.gmra.mrb[0].mxu0 %v4924
        %v5905 = vpop.f32.mrb[0].mxu0
        %v5906 = vadd.f32 %v5857, %v5905
        %v5907 = vpop.f32.mrb[0].mxu0
        %v5908 = vpop.f32.mrb[0].mxu0
        %v5909 = vadd.f32 %v5860, %v5908
        %v5910 = vpop.f32.mrb[0].mxu0
        %5911 = vmatprep.mubr.bf16.mxu0 %v4949
        %5912 = vmatmul.mubr.bf16.gmra.mrb[0].mxu0 %v4948
        %v5913 = vpop.f32.mrb[0].mxu0
        %v5914 = vadd.f32 %v5865, %v5913
        %v5915 = vpop.f32.mrb[0].mxu0
        %v5916 = vpop.f32.mrb[0].mxu0
        %v5917 = vadd.f32 %v5868, %v5916
        %v5918 = vpop.f32.mrb[0].mxu0
        %5919 = vdwg.mxu0
        %5920 = vmatprep.subr.bf16.mxu0 %v5491
        %5921 = vmatpush1.bf16.xpose.msra.mxu0 %v5490
        %5922 = vmatprep.subr.bf16.mxu0 %v5515
        %5923 = vmatpush1.bf16.xpose.msra.mxu0 %v5514
        %5924 = vmatprep.subr.bf16.mxu0 %v5539
        %5925 = vmatpush1.bf16.xpose.msra.mxu0 %v5538
        %5926 = vmatprep.subr.bf16.mxu0 %v5563
        %5927 = vmatpush1.bf16.xpose.msra.mxu0 %v5562
        %5928 = vmatprep.subr.bf16.mxu0 %v5587
        %5929 = vmatpush1.bf16.xpose.msra.mxu0 %v5586
        %5930 = vmatprep.subr.bf16.mxu0 %v5611
        %5931 = vmatpush1.bf16.xpose.msra.mxu0 %v5610
        %5932 = vmatprep.subr.bf16.mxu0 %v5635
        %5933 = vmatpush1.bf16.xpose.msra.mxu0 %v5634
        %5934 = vmatprep.subr.bf16.mxu0 0
        %5935 = vmatpush1.bf16.xpose.msra.mxu0 0
        %5936 = vmatprep.subr.bf16.mxu0 0
        %5937 = vmatpush1.bf16.xpose.msra.mxu0 0
        %5938 = vmatprep.subr.bf16.mxu0 0
        %5939 = vmatpush1.bf16.xpose.msra.mxu0 0
        %5940 = vmatprep.subr.bf16.mxu0 0
        %5941 = vmatpush1.bf16.xpose.msra.mxu0 0
        %5942 = vmatprep.subr.bf16.mxu0 0
        %5943 = vmatpush1.bf16.xpose.msra.mxu0 0
        %5944 = vmatprep.subr.bf16.mxu0 0
        %5945 = vmatpush1.bf16.xpose.msra.mxu0 0
        %5946 = vmatprep.subr.bf16.mxu0 0
        %5947 = vmatpush1.bf16.xpose.msra.mxu0 0
        %5948 = vmatprep.subr.bf16.mxu0 0
        %5949 = vmatpush1.bf16.xpose.msra.mxu0 0
        %5950 = vmatprep.subr.bf16.mxu0 0
        %5951 = vmatpush1.bf16.xpose.msra.mxu0 0
        %5952 = vmatprep.mubr.bf16.mxu0 %v4927
        %5953 = vmatmul.mubr.bf16.gmra.mrb[0].mxu0 %v4926
        %v5954 = vpop.f32.mrb[0].mxu0
        %v5955 = vadd.f32 %v5906, %v5954
        %v5956 = vpop.f32.mrb[0].mxu0
        %v5957 = vpop.f32.mrb[0].mxu0
        %v5958 = vadd.f32 %v5909, %v5957
        %v5959 = vpop.f32.mrb[0].mxu0
        %5960 = vmatprep.mubr.bf16.mxu0 %v4951
        %5961 = vmatmul.mubr.bf16.gmra.mrb[0].mxu0 %v4950
        %v5962 = vpop.f32.mrb[0].mxu0
        %v5963 = vadd.f32 %v5914, %v5962
        %v5964 = vpop.f32.mrb[0].mxu0
        %v5965 = vpop.f32.mrb[0].mxu0
        %v5966 = vadd.f32 %v5917, %v5965
        %v5967 = vpop.f32.mrb[0].mxu0
        %5968 = vdwg.mxu0
        %5969 = vmatprep.subr.bf16.mxu0 %v5493
        %5970 = vmatpush1.bf16.xpose.msra.mxu0 %v5492
        %5971 = vmatprep.subr.bf16.mxu0 %v5517
        %5972 = vmatpush1.bf16.xpose.msra.mxu0 %v5516
        %5973 = vmatprep.subr.bf16.mxu0 %v5541
        %5974 = vmatpush1.bf16.xpose.msra.mxu0 %v5540
        %5975 = vmatprep.subr.bf16.mxu0 %v5565
        %5976 = vmatpush1.bf16.xpose.msra.mxu0 %v5564
        %5977 = vmatprep.subr.bf16.mxu0 %v5589
        %5978 = vmatpush1.bf16.xpose.msra.mxu0 %v5588
        %5979 = vmatprep.subr.bf16.mxu0 %v5613
        %5980 = vmatpush1.bf16.xpose.msra.mxu0 %v5612
        %5981 = vmatprep.subr.bf16.mxu0 %v5637
        %5982 = vmatpush1.bf16.xpose.msra.mxu0 %v5636
        %5983 = vmatprep.subr.bf16.mxu0 0
        %5984 = vmatpush1.bf16.xpose.msra.mxu0 0
        %5985 = vmatprep.subr.bf16.mxu0 0
        %5986 = vmatpush1.bf16.xpose.msra.mxu0 0
        %5987 = vmatprep.subr.bf16.mxu0 0
        %5988 = vmatpush1.bf16.xpose.msra.mxu0 0
        %5989 = vmatprep.subr.bf16.mxu0 0
        %5990 = vmatpush1.bf16.xpose.msra.mxu0 0
        %5991 = vmatprep.subr.bf16.mxu0 0
        %5992 = vmatpush1.bf16.xpose.msra.mxu0 0
        %5993 = vmatprep.subr.bf16.mxu0 0
        %5994 = vmatpush1.bf16.xpose.msra.mxu0 0
        %5995 = vmatprep.subr.bf16.mxu0 0
        %5996 = vmatpush1.bf16.xpose.msra.mxu0 0
        %5997 = vmatprep.subr.bf16.mxu0 0
        %5998 = vmatpush1.bf16.xpose.msra.mxu0 0
        %5999 = vmatprep.subr.bf16.mxu0 0
        %6000 = vmatpush1.bf16.xpose.msra.mxu0 0
        %6001 = vmatprep.mubr.bf16.mxu0 %v4929
        %6002 = vmatmul.mubr.bf16.gmra.mrb[0].mxu0 %v4928
        %v6003 = vpop.f32.mrb[0].mxu0
        %v6004 = vadd.f32 %v5955, %v6003
        %v6005 = vpop.f32.mrb[0].mxu0
        %v6006 = vpop.f32.mrb[0].mxu0
        %v6007 = vadd.f32 %v5958, %v6006
        %v6008 = vpop.f32.mrb[0].mxu0
        %6009 = vmatprep.mubr.bf16.mxu0 %v4953
        %6010 = vmatmul.mubr.bf16.gmra.mrb[0].mxu0 %v4952
        %v6011 = vpop.f32.mrb[0].mxu0
        %v6012 = vadd.f32 %v5963, %v6011
        %v6013 = vpop.f32.mrb[0].mxu0
        %v6014 = vpop.f32.mrb[0].mxu0
        %v6015 = vadd.f32 %v5966, %v6014
        %v6016 = vpop.f32.mrb[0].mxu0
        %6017 = vdwg.mxu0
        %6018 = vmatprep.subr.bf16.mxu0 %v5495
        %6019 = vmatpush1.bf16.xpose.msra.mxu0 %v5494
        %6020 = vmatprep.subr.bf16.mxu0 %v5519
        %6021 = vmatpush1.bf16.xpose.msra.mxu0 %v5518
        %6022 = vmatprep.subr.bf16.mxu0 %v5543
        %6023 = vmatpush1.bf16.xpose.msra.mxu0 %v5542
        %6024 = vmatprep.subr.bf16.mxu0 %v5567
        %6025 = vmatpush1.bf16.xpose.msra.mxu0 %v5566
        %6026 = vmatprep.subr.bf16.mxu0 %v5591
        %6027 = vmatpush1.bf16.xpose.msra.mxu0 %v5590
        %6028 = vmatprep.subr.bf16.mxu0 %v5615
        %6029 = vmatpush1.bf16.xpose.msra.mxu0 %v5614
        %6030 = vmatprep.subr.bf16.mxu0 %v5639
        %6031 = vmatpush1.bf16.xpose.msra.mxu0 %v5638
        %6032 = vmatprep.subr.bf16.mxu0 0
        %6033 = vmatpush1.bf16.xpose.msra.mxu0 0
        %6034 = vmatprep.subr.bf16.mxu0 0
        %6035 = vmatpush1.bf16.xpose.msra.mxu0 0
        %6036 = vmatprep.subr.bf16.mxu0 0
        %6037 = vmatpush1.bf16.xpose.msra.mxu0 0
        %6038 = vmatprep.subr.bf16.mxu0 0
        %6039 = vmatpush1.bf16.xpose.msra.mxu0 0
        %6040 = vmatprep.subr.bf16.mxu0 0
        %6041 = vmatpush1.bf16.xpose.msra.mxu0 0
        %6042 = vmatprep.subr.bf16.mxu0 0
        %6043 = vmatpush1.bf16.xpose.msra.mxu0 0
        %6044 = vmatprep.subr.bf16.mxu0 0
        %6045 = vmatpush1.bf16.xpose.msra.mxu0 0
        %6046 = vmatprep.subr.bf16.mxu0 0
        %6047 = vmatpush1.bf16.xpose.msra.mxu0 0
        %6048 = vmatprep.subr.bf16.mxu0 0
        %6049 = vmatpush1.bf16.xpose.msra.mxu0 0
        %6050 = vmatprep.mubr.bf16.mxu0 %v4931
        %6051 = vmatmul.mubr.bf16.gmra.mrb[0].mxu0 %v4930
        %v6052 = vpop.f32.mrb[0].mxu0
        %v6053 = vadd.f32 %v6004, %v6052
        %v6054 = vpop.f32.mrb[0].mxu0
        %v6055 = vpop.f32.mrb[0].mxu0
        %v6056 = vadd.f32 %v6007, %v6055
        %v6057 = vpop.f32.mrb[0].mxu0
        %6058 = vmatprep.mubr.bf16.mxu0 %v4955
        %6059 = vmatmul.mubr.bf16.gmra.mrb[0].mxu0 %v4954
        %v6060 = vpop.f32.mrb[0].mxu0
        %v6061 = vadd.f32 %v6012, %v6060
        %v6062 = vpop.f32.mrb[0].mxu0
        %v6063 = vpop.f32.mrb[0].mxu0
        %v6064 = vadd.f32 %v6015, %v6063
        %v6065 = vpop.f32.mrb[0].mxu0
        %6066 = vdwg.mxu0
        %6067 = vmatprep.subr.bf16.mxu0 %v5497
        %6068 = vmatpush1.bf16.xpose.msra.mxu0 %v5496
        %6069 = vmatprep.subr.bf16.mxu0 %v5521
        %6070 = vmatpush1.bf16.xpose.msra.mxu0 %v5520
        %6071 = vmatprep.subr.bf16.mxu0 %v5545
        %6072 = vmatpush1.bf16.xpose.msra.mxu0 %v5544
        %6073 = vmatprep.subr.bf16.mxu0 %v5569
        %6074 = vmatpush1.bf16.xpose.msra.mxu0 %v5568
        %6075 = vmatprep.subr.bf16.mxu0 %v5593
        %6076 = vmatpush1.bf16.xpose.msra.mxu0 %v5592
        %6077 = vmatprep.subr.bf16.mxu0 %v5617
        %6078 = vmatpush1.bf16.xpose.msra.mxu0 %v5616
        %6079 = vmatprep.subr.bf16.mxu0 %v5641
        %6080 = vmatpush1.bf16.xpose.msra.mxu0 %v5640
        %6081 = vmatprep.subr.bf16.mxu0 0
        %6082 = vmatpush1.bf16.xpose.msra.mxu0 0
        %6083 = vmatprep.subr.bf16.mxu0 0
        %6084 = vmatpush1.bf16.xpose.msra.mxu0 0
        %6085 = vmatprep.subr.bf16.mxu0 0
        %6086 = vmatpush1.bf16.xpose.msra.mxu0 0
        %6087 = vmatprep.subr.bf16.mxu0 0
        %6088 = vmatpush1.bf16.xpose.msra.mxu0 0
        %6089 = vmatprep.subr.bf16.mxu0 0
        %6090 = vmatpush1.bf16.xpose.msra.mxu0 0
        %6091 = vmatprep.subr.bf16.mxu0 0
        %6092 = vmatpush1.bf16.xpose.msra.mxu0 0
        %6093 = vmatprep.subr.bf16.mxu0 0
        %6094 = vmatpush1.bf16.xpose.msra.mxu0 0
        %6095 = vmatprep.subr.bf16.mxu0 0
        %6096 = vmatpush1.bf16.xpose.msra.mxu0 0
        %6097 = vmatprep.subr.bf16.mxu0 0
        %6098 = vmatpush1.bf16.xpose.msra.mxu0 0
        %6099 = vmatprep.mubr.bf16.mxu0 %v4933
        %6100 = vmatmul.mubr.bf16.gmra.mrb[0].mxu0 %v4932
        %v6101 = vpop.f32.mrb[0].mxu0
        %v6102 = vadd.f32 %v6053, %v6101
        %v6103 = vpop.f32.mrb[0].mxu0
        %v6104 = vpop.f32.mrb[0].mxu0
        %v6105 = vadd.f32 %v6056, %v6104
        %v6106 = vpop.f32.mrb[0].mxu0
        %6107 = vmatprep.mubr.bf16.mxu0 %v4957
        %6108 = vmatmul.mubr.bf16.gmra.mrb[0].mxu0 %v4956
        %v6109 = vpop.f32.mrb[0].mxu0
        %v6110 = vadd.f32 %v6061, %v6109
        %v6111 = vpop.f32.mrb[0].mxu0
        %v6112 = vpop.f32.mrb[0].mxu0
        %v6113 = vadd.f32 %v6064, %v6112
        %v6114 = vpop.f32.mrb[0].mxu0
        %6115 = vdwg.mxu0
        %6116 = vmatprep.subr.bf16.mxu0 %v5499
        %6117 = vmatpush1.bf16.xpose.msra.mxu0 %v5498
        %6118 = vmatprep.subr.bf16.mxu0 %v5523
        %6119 = vmatpush1.bf16.xpose.msra.mxu0 %v5522
        %6120 = vmatprep.subr.bf16.mxu0 %v5547
        %6121 = vmatpush1.bf16.xpose.msra.mxu0 %v5546
        %6122 = vmatprep.subr.bf16.mxu0 %v5571
        %6123 = vmatpush1.bf16.xpose.msra.mxu0 %v5570
        %6124 = vmatprep.subr.bf16.mxu0 %v5595
        %6125 = vmatpush1.bf16.xpose.msra.mxu0 %v5594
        %6126 = vmatprep.subr.bf16.mxu0 %v5619
        %6127 = vmatpush1.bf16.xpose.msra.mxu0 %v5618
        %6128 = vmatprep.subr.bf16.mxu0 %v5643
        %6129 = vmatpush1.bf16.xpose.msra.mxu0 %v5642
        %6130 = vmatprep.subr.bf16.mxu0 0
        %6131 = vmatpush1.bf16.xpose.msra.mxu0 0
        %6132 = vmatprep.subr.bf16.mxu0 0
        %6133 = vmatpush1.bf16.xpose.msra.mxu0 0
        %6134 = vmatprep.subr.bf16.mxu0 0
        %6135 = vmatpush1.bf16.xpose.msra.mxu0 0
        %6136 = vmatprep.subr.bf16.mxu0 0
        %6137 = vmatpush1.bf16.xpose.msra.mxu0 0
        %6138 = vmatprep.subr.bf16.mxu0 0
        %6139 = vmatpush1.bf16.xpose.msra.mxu0 0
        %6140 = vmatprep.subr.bf16.mxu0 0
        %6141 = vmatpush1.bf16.xpose.msra.mxu0 0
        %6142 = vmatprep.subr.bf16.mxu0 0
        %6143 = vmatpush1.bf16.xpose.msra.mxu0 0
        %6144 = vmatprep.subr.bf16.mxu0 0
        %6145 = vmatpush1.bf16.xpose.msra.mxu0 0
        %6146 = vmatprep.subr.bf16.mxu0 0
        %6147 = vmatpush1.bf16.xpose.msra.mxu0 0
        %6148 = vmatprep.mubr.bf16.mxu0 %v4935
        %6149 = vmatmul.mubr.bf16.gmra.mrb[0].mxu0 %v4934
        %v6150 = vpop.f32.mrb[0].mxu0
        %v6151 = vadd.f32 %v6102, %v6150
        %v6152 = vpop.f32.mrb[0].mxu0
        %v6153 = vpop.f32.mrb[0].mxu0
        %v6154 = vadd.f32 %v6105, %v6153
        %v6155 = vpop.f32.mrb[0].mxu0
        %6156 = vmatprep.mubr.bf16.mxu0 %v4959
        %6157 = vmatmul.mubr.bf16.gmra.mrb[0].mxu0 %v4958
        %v6158 = vpop.f32.mrb[0].mxu0
        %v6159 = vadd.f32 %v6110, %v6158
        %v6160 = vpop.f32.mrb[0].mxu0
        %v6161 = vpop.f32.mrb[0].mxu0
        %v6162 = vadd.f32 %v6113, %v6161
        %v6163 = vpop.f32.mrb[0].mxu0
        %6164 = vdwg.mxu0
        %6165 = vmatprep.subr.bf16.mxu0 %v5501
        %6166 = vmatpush1.bf16.xpose.msra.mxu0 %v5500
        %6167 = vmatprep.subr.bf16.mxu0 %v5525
        %6168 = vmatpush1.bf16.xpose.msra.mxu0 %v5524
        %6169 = vmatprep.subr.bf16.mxu0 %v5549
        %6170 = vmatpush1.bf16.xpose.msra.mxu0 %v5548
        %6171 = vmatprep.subr.bf16.mxu0 %v5573
        %6172 = vmatpush1.bf16.xpose.msra.mxu0 %v5572
        %6173 = vmatprep.subr.bf16.mxu0 %v5597
        %6174 = vmatpush1.bf16.xpose.msra.mxu0 %v5596
        %6175 = vmatprep.subr.bf16.mxu0 %v5621
        %6176 = vmatpush1.bf16.xpose.msra.mxu0 %v5620
        %6177 = vmatprep.subr.bf16.mxu0 %v5645
        %6178 = vmatpush1.bf16.xpose.msra.mxu0 %v5644
        %6179 = vmatprep.subr.bf16.mxu0 0
        %6180 = vmatpush1.bf16.xpose.msra.mxu0 0
        %6181 = vmatprep.subr.bf16.mxu0 0
        %6182 = vmatpush1.bf16.xpose.msra.mxu0 0
        %6183 = vmatprep.subr.bf16.mxu0 0
        %6184 = vmatpush1.bf16.xpose.msra.mxu0 0
        %6185 = vmatprep.subr.bf16.mxu0 0
        %6186 = vmatpush1.bf16.xpose.msra.mxu0 0
        %6187 = vmatprep.subr.bf16.mxu0 0
        %6188 = vmatpush1.bf16.xpose.msra.mxu0 0
        %6189 = vmatprep.subr.bf16.mxu0 0
        %6190 = vmatpush1.bf16.xpose.msra.mxu0 0
        %6191 = vmatprep.subr.bf16.mxu0 0
        %6192 = vmatpush1.bf16.xpose.msra.mxu0 0
        %6193 = vmatprep.subr.bf16.mxu0 0
        %6194 = vmatpush1.bf16.xpose.msra.mxu0 0
        %6195 = vmatprep.subr.bf16.mxu0 0
        %6196 = vmatpush1.bf16.xpose.msra.mxu0 0
        %6197 = vmatprep.mubr.bf16.mxu0 %v4937
        %6198 = vmatmul.mubr.bf16.gmra.mrb[0].mxu0 %v4936
        %v6199 = vpop.f32.mrb[0].mxu0
        %v6200 = vadd.f32 %v6151, %v6199
        %v6201 = vpop.f32.mrb[0].mxu0
        %v6202 = vpop.f32.mrb[0].mxu0
        %v6203 = vadd.f32 %v6154, %v6202
        %v6204 = vpop.f32.mrb[0].mxu0
        %6205 = vmatprep.mubr.bf16.mxu0 %v4961
        %6206 = vmatmul.mubr.bf16.gmra.mrb[0].mxu0 %v4960
        %v6207 = vpop.f32.mrb[0].mxu0
        %v6208 = vadd.f32 %v6159, %v6207
        %v6209 = vpop.f32.mrb[0].mxu0
        %v6210 = vpop.f32.mrb[0].mxu0
        %v6211 = vadd.f32 %v6162, %v6210
        %v6212 = vpop.f32.mrb[0].mxu0
        %6213 = vdwg.mxu0
        %6214 = vmatprep.subr.bf16.mxu0 %v5503
        %6215 = vmatpush1.bf16.xpose.msra.mxu0 %v5502
        %6216 = vmatprep.subr.bf16.mxu0 %v5527
        %6217 = vmatpush1.bf16.xpose.msra.mxu0 %v5526
        %6218 = vmatprep.subr.bf16.mxu0 %v5551
        %6219 = vmatpush1.bf16.xpose.msra.mxu0 %v5550
        %6220 = vmatprep.subr.bf16.mxu0 %v5575
        %6221 = vmatpush1.bf16.xpose.msra.mxu0 %v5574
        %6222 = vmatprep.subr.bf16.mxu0 %v5599
        %6223 = vmatpush1.bf16.xpose.msra.mxu0 %v5598
        %6224 = vmatprep.subr.bf16.mxu0 %v5623
        %6225 = vmatpush1.bf16.xpose.msra.mxu0 %v5622
        %6226 = vmatprep.subr.bf16.mxu0 %v5647
        %6227 = vmatpush1.bf16.xpose.msra.mxu0 %v5646
        %6228 = vmatprep.subr.bf16.mxu0 0
        %6229 = vmatpush1.bf16.xpose.msra.mxu0 0
        %6230 = vmatprep.subr.bf16.mxu0 0
        %6231 = vmatpush1.bf16.xpose.msra.mxu0 0
        %6232 = vmatprep.subr.bf16.mxu0 0
        %6233 = vmatpush1.bf16.xpose.msra.mxu0 0
        %6234 = vmatprep.subr.bf16.mxu0 0
        %6235 = vmatpush1.bf16.xpose.msra.mxu0 0
        %6236 = vmatprep.subr.bf16.mxu0 0
        %6237 = vmatpush1.bf16.xpose.msra.mxu0 0
        %6238 = vmatprep.subr.bf16.mxu0 0
        %6239 = vmatpush1.bf16.xpose.msra.mxu0 0
        %6240 = vmatprep.subr.bf16.mxu0 0
        %6241 = vmatpush1.bf16.xpose.msra.mxu0 0
        %6242 = vmatprep.subr.bf16.mxu0 0
        %6243 = vmatpush1.bf16.xpose.msra.mxu0 0
        %6244 = vmatprep.subr.bf16.mxu0 0
        %6245 = vmatpush1.bf16.xpose.msra.mxu0 0
        %6246 = vmatprep.mubr.bf16.mxu0 %v4939
        %6247 = vmatmul.mubr.bf16.gmra.mrb[0].mxu0 %v4938
        %v6248 = vpop.f32.mrb[0].mxu0
        %v6249 = vadd.f32 %v6200, %v6248
        %v6250 = vpop.f32.mrb[0].mxu0
        %v6251 = vpop.f32.mrb[0].mxu0
        %v6252 = vadd.f32 %v6203, %v6251
        %v6253 = vpop.f32.mrb[0].mxu0
        %6254 = vmatprep.mubr.bf16.mxu0 %v4963
        %6255 = vmatmul.mubr.bf16.gmra.mrb[0].mxu0 %v4962
        %v6256 = vpop.f32.mrb[0].mxu0
        %v6257 = vadd.f32 %v6208, %v6256
        %v6258 = vpop.f32.mrb[0].mxu0
        %v6259 = vpop.f32.mrb[0].mxu0
        %v6260 = vadd.f32 %v6211, %v6259
        %v6261 = vpop.f32.mrb[0].mxu0
        %6262 = vdwg.mxu0
        %6263 = vmatprep.subr.bf16.mxu0 %v5505
        %6264 = vmatpush1.bf16.xpose.msra.mxu0 %v5504
        %6265 = vmatprep.subr.bf16.mxu0 %v5529
        %6266 = vmatpush1.bf16.xpose.msra.mxu0 %v5528
        %6267 = vmatprep.subr.bf16.mxu0 %v5553
        %6268 = vmatpush1.bf16.xpose.msra.mxu0 %v5552
        %6269 = vmatprep.subr.bf16.mxu0 %v5577
        %6270 = vmatpush1.bf16.xpose.msra.mxu0 %v5576
        %6271 = vmatprep.subr.bf16.mxu0 %v5601
        %6272 = vmatpush1.bf16.xpose.msra.mxu0 %v5600
        %6273 = vmatprep.subr.bf16.mxu0 %v5625
        %6274 = vmatpush1.bf16.xpose.msra.mxu0 %v5624
        %6275 = vmatprep.subr.bf16.mxu0 %v5649
        %6276 = vmatpush1.bf16.xpose.msra.mxu0 %v5648
        %6277 = vmatprep.subr.bf16.mxu0 0
        %6278 = vmatpush1.bf16.xpose.msra.mxu0 0
        %6279 = vmatprep.subr.bf16.mxu0 0
        %6280 = vmatpush1.bf16.xpose.msra.mxu0 0
        %6281 = vmatprep.subr.bf16.mxu0 0
        %6282 = vmatpush1.bf16.xpose.msra.mxu0 0
        %6283 = vmatprep.subr.bf16.mxu0 0
        %6284 = vmatpush1.bf16.xpose.msra.mxu0 0
        %6285 = vmatprep.subr.bf16.mxu0 0
        %6286 = vmatpush1.bf16.xpose.msra.mxu0 0
        %6287 = vmatprep.subr.bf16.mxu0 0
        %6288 = vmatpush1.bf16.xpose.msra.mxu0 0
        %6289 = vmatprep.subr.bf16.mxu0 0
        %6290 = vmatpush1.bf16.xpose.msra.mxu0 0
        %6291 = vmatprep.subr.bf16.mxu0 0
        %6292 = vmatpush1.bf16.xpose.msra.mxu0 0
        %6293 = vmatprep.subr.bf16.mxu0 0
        %6294 = vmatpush1.bf16.xpose.msra.mxu0 0
        %6295 = vmatprep.mubr.bf16.mxu0 %v4941
        %6296 = vmatmul.mubr.bf16.gmra.mrb[0].mxu0 %v4940
        %v6297 = vpop.f32.mrb[0].mxu0
        %v6298 = vadd.f32 %v6249, %v6297
        %v6299 = vpop.f32.mrb[0].mxu0
        %v6300 = vpop.f32.mrb[0].mxu0
        %v6301 = vadd.f32 %v6252, %v6300
        %v6302 = vpop.f32.mrb[0].mxu0
        %6303 = vmatprep.mubr.bf16.mxu0 %v4965
        %6304 = vmatmul.mubr.bf16.gmra.mrb[0].mxu0 %v4964
        %v6305 = vpop.f32.mrb[0].mxu0
        %v6306 = vadd.f32 %v6257, %v6305
        %v6307 = vpop.f32.mrb[0].mxu0
        %v6308 = vpop.f32.mrb[0].mxu0
        %v6309 = vadd.f32 %v6260, %v6308
        %v6310 = vpop.f32.mrb[0].mxu0
        %6311 = vdwg.mxu0
        %6312 = vmatprep.subr.bf16.mxu0 %v5507
        %6313 = vmatpush1.bf16.xpose.msra.mxu0 %v5506
        %6314 = vmatprep.subr.bf16.mxu0 %v5531
        %6315 = vmatpush1.bf16.xpose.msra.mxu0 %v5530
        %6316 = vmatprep.subr.bf16.mxu0 %v5555
        %6317 = vmatpush1.bf16.xpose.msra.mxu0 %v5554
        %6318 = vmatprep.subr.bf16.mxu0 %v5579
        %6319 = vmatpush1.bf16.xpose.msra.mxu0 %v5578
        %6320 = vmatprep.subr.bf16.mxu0 %v5603
        %6321 = vmatpush1.bf16.xpose.msra.mxu0 %v5602
        %6322 = vmatprep.subr.bf16.mxu0 %v5627
        %6323 = vmatpush1.bf16.xpose.msra.mxu0 %v5626
        %6324 = vmatprep.subr.bf16.mxu0 %v5651
        %6325 = vmatpush1.bf16.xpose.msra.mxu0 %v5650
        %6326 = vmatprep.subr.bf16.mxu0 0
        %6327 = vmatpush1.bf16.xpose.msra.mxu0 0
        %6328 = vmatprep.subr.bf16.mxu0 0
        %6329 = vmatpush1.bf16.xpose.msra.mxu0 0
        %6330 = vmatprep.subr.bf16.mxu0 0
        %6331 = vmatpush1.bf16.xpose.msra.mxu0 0
        %6332 = vmatprep.subr.bf16.mxu0 0
        %6333 = vmatpush1.bf16.xpose.msra.mxu0 0
        %6334 = vmatprep.subr.bf16.mxu0 0
        %6335 = vmatpush1.bf16.xpose.msra.mxu0 0
        %6336 = vmatprep.subr.bf16.mxu0 0
        %6337 = vmatpush1.bf16.xpose.msra.mxu0 0
        %6338 = vmatprep.subr.bf16.mxu0 0
        %6339 = vmatpush1.bf16.xpose.msra.mxu0 0
        %6340 = vmatprep.subr.bf16.mxu0 0
        %6341 = vmatpush1.bf16.xpose.msra.mxu0 0
        %6342 = vmatprep.subr.bf16.mxu0 0
        %6343 = vmatpush1.bf16.xpose.msra.mxu0 0
        %6344 = vmatprep.mubr.bf16.mxu0 %v4943
        %6345 = vmatmul.mubr.bf16.gmra.mrb[0].mxu0 %v4942
        %v6346 = vpop.f32.mrb[0].mxu0
        %v6347 = vadd.f32 %v6298, %v6346
        %v6348 = vpop.f32.mrb[0].mxu0
        %v6349 = vpop.f32.mrb[0].mxu0
        %v6350 = vadd.f32 %v6301, %v6349
        %v6351 = vpop.f32.mrb[0].mxu0
        %6352 = vmatprep.mubr.bf16.mxu0 %v4967
        %6353 = vmatmul.mubr.bf16.gmra.mrb[0].mxu0 %v4966
        %v6354 = vpop.f32.mrb[0].mxu0
        %v6355 = vadd.f32 %v6306, %v6354
        %v6356 = vpop.f32.mrb[0].mxu0
        %v6357 = vpop.f32.mrb[0].mxu0
        %v6358 = vadd.f32 %v6309, %v6357
        %v6359 = vpop.f32.mrb[0].mxu0
        %6360 = vdwg.mxu0
        %6361 = vmatprep.subr.bf16.mxu0 %v5509
        %6362 = vmatpush1.bf16.xpose.msra.mxu0 %v5508
        %6363 = vmatprep.subr.bf16.mxu0 %v5533
        %6364 = vmatpush1.bf16.xpose.msra.mxu0 %v5532
        %6365 = vmatprep.subr.bf16.mxu0 %v5557
        %6366 = vmatpush1.bf16.xpose.msra.mxu0 %v5556
        %6367 = vmatprep.subr.bf16.mxu0 %v5581
        %6368 = vmatpush1.bf16.xpose.msra.mxu0 %v5580
        %6369 = vmatprep.subr.bf16.mxu0 %v5605
        %6370 = vmatpush1.bf16.xpose.msra.mxu0 %v5604
        %6371 = vmatprep.subr.bf16.mxu0 %v5629
        %6372 = vmatpush1.bf16.xpose.msra.mxu0 %v5628
        %6373 = vmatprep.subr.bf16.mxu0 %v5653
        %6374 = vmatpush1.bf16.xpose.msra.mxu0 %v5652
        %6375 = vmatprep.subr.bf16.mxu0 0
        %6376 = vmatpush1.bf16.xpose.msra.mxu0 0
        %6377 = vmatprep.subr.bf16.mxu0 0
        %6378 = vmatpush1.bf16.xpose.msra.mxu0 0
        %6379 = vmatprep.subr.bf16.mxu0 0
        %6380 = vmatpush1.bf16.xpose.msra.mxu0 0
        %6381 = vmatprep.subr.bf16.mxu0 0
        %6382 = vmatpush1.bf16.xpose.msra.mxu0 0
        %6383 = vmatprep.subr.bf16.mxu0 0
        %6384 = vmatpush1.bf16.xpose.msra.mxu0 0
        %6385 = vmatprep.subr.bf16.mxu0 0
        %6386 = vmatpush1.bf16.xpose.msra.mxu0 0
        %6387 = vmatprep.subr.bf16.mxu0 0
        %6388 = vmatpush1.bf16.xpose.msra.mxu0 0
        %6389 = vmatprep.subr.bf16.mxu0 0
        %6390 = vmatpush1.bf16.xpose.msra.mxu0 0
        %6391 = vmatprep.subr.bf16.mxu0 0
        %6392 = vmatpush1.bf16.xpose.msra.mxu0 0
        %6393 = vmatprep.mubr.bf16.mxu0 %v4945
        %6394 = vmatmul.mubr.bf16.gmra.mrb[0].mxu0 %v4944
        %v6395 = vpop.f32.mrb[0].mxu0
        %v6396 = vadd.f32 %v6347, %v6395
        %v6397 = vpop.f32.mrb[0].mxu0
        %v6398 = vpop.f32.mrb[0].mxu0
        %v6399 = vadd.f32 %v6350, %v6398
        %v6400 = vpop.f32.mrb[0].mxu0
        %6401 = vmatprep.mubr.bf16.mxu0 %v4969
        %6402 = vmatmul.mubr.bf16.gmra.mrb[0].mxu0 %v4968
        %v6403 = vpop.f32.mrb[0].mxu0
        %v6404 = vadd.f32 %v6355, %v6403
        %v6405 = vpop.f32.mrb[0].mxu0
        %v6406 = vpop.f32.mrb[0].mxu0
        %v6407 = vadd.f32 %v6358, %v6406
        %v6408 = vpop.f32.mrb[0].mxu0
        %6409 = vdwg.mxu0
        %v6410 = vadd.f32 %v4774, %v6396
        %v6411 = vadd.f32 %v4775, %v6399
        %v6412 = vadd.f32 %v4776, %v6404
        %v6413 = vadd.f32 %v4777, %v6407
        %6414 = vst.msk [vmem:[#allocation2] sm:$0xff] %vm2217, %v6410
        %6415 = vst.msk [vmem:[#allocation2 + $0x8] sm:$0xff] %vm2217, %v6411
        %6416 = vst.msk [vmem:[#allocation2 + $0x10] sm:$0xff] %vm2217, %v6412
        %6417 = vst.msk [vmem:[#allocation2 + $0x18] sm:$0xff] %vm2217, %v6413
        %s6418 = sld [smem:[#allocation6 + %s4555]]
        %p6419 = scmp.eq.s32.totalorder %s6418, 1
        // Predicated region
        $region85: #{textcnn_forward.1} parent=39 // pred_check
          %p6420 = pneg %p6419
        $region86: #{textcnn_forward.1} parent=39 // pred_check_branch
          %6422 = sbr.rel (%p6420) target = $region88
        $region87: #{textcnn_forward.1} parent=39 // pred_region
          %s6423 = sld [smem:[#allocation7 + %s4555]]
          %v6424 = vld [vmem:[#allocation2] sm:$0xff]
          %v6425 = vld [vmem:[#allocation2 + $0x8] sm:$0xff]
          %v6426 = vld [vmem:[#allocation2 + $0x10] sm:$0xff]
          %v6427 = vld [vmem:[#allocation2 + $0x18] sm:$0xff]
          %v6428 = vld [vmem:[%s300] sm:$0x1]
          %v6430 = vlaneseq
          %v6431 = vshrl.u32 %v6430, 7
          %v6432 = vsub.s32 0, %v6431
          %v6433 = vrot.slane %v6428, %v6432
          %v6435 = vadd.f32 %v6424, %v6433
          %v6436 = vadd.f32 %v6425, %v6433
          %v6437 = vadd.f32 %v6426, %v6433
          %v6438 = vadd.f32 %v6427, %v6433
          %v6439 = vmax.f32 %v6435, 0.0
          %v6440 = vmax.f32 %v6436, 0.0
          %v6441 = vmax.f32 %v6437, 0.0
          %v6442 = vmax.f32 %v6438, 0.0
          %v6443 = vlaneseq
          %v6444 = vshrl.u32 %v6443, 7
          %v6445 = vadd.s32 %v6444, 8
          %v6446 = vadd.s32 %v6444, 16
          %v6447 = vadd.s32 %v6444, 24
          %s6448 = smul.u32 %s6423, 2
          %v6449 = vstv %s6448
          %vm6450 = vcmp.lt.s32.totalorder %v6444, %v6449
          %vm6451 = vcmp.lt.s32.totalorder %v6445, %v6449
          %vm6452 = vcmp.lt.s32.totalorder %v6446, %v6449
          %vm6453 = vcmp.lt.s32.totalorder %v6447, %v6449
          %v6454 = vsel %vm6450, %v6439, 0.0
          %v6455 = vsel %vm6451, %v6440, 0.0
          %v6456 = vsel %vm6452, %v6441, 0.0
          %v6457 = vsel %vm6453, %v6442, 0.0
          %vm6458 = vcmp.lt.s32.totalorder %v6444, 0
          %v6459 = vsub.s32 0, %v6444
          %v6460 = vsel %vm6458, %v6459, %v6444
          %v6461 = vshrl.u32 %v6460, 1
          %v6462 = vand.u32 %v6460, 1
          %v6463 = vsub.s32 0, %v6462
          %v6464 = vsel %vm6458, %v6463, %v6462
          %vm6465 = vcmp.lt.s32.totalorder %v6445, 0
          %v6466 = vsub.s32 0, %v6445
          %v6467 = vsel %vm6465, %v6466, %v6445
          %v6468 = vshrl.u32 %v6467, 1
          %v6469 = vand.u32 %v6467, 1
          %v6470 = vsub.s32 0, %v6469
          %v6471 = vsel %vm6465, %v6470, %v6469
          %vm6472 = vcmp.lt.s32.totalorder %v6446, 0
          %v6473 = vsub.s32 0, %v6446
          %v6474 = vsel %vm6472, %v6473, %v6446
          %v6475 = vshrl.u32 %v6474, 1
          %v6476 = vand.u32 %v6474, 1
          %v6477 = vsub.s32 0, %v6476
          %v6478 = vsel %vm6472, %v6477, %v6476
          %vm6479 = vcmp.lt.s32.totalorder %v6447, 0
          %v6480 = vsub.s32 0, %v6447
          %v6481 = vsel %vm6479, %v6480, %v6447
          %v6482 = vshrl.u32 %v6481, 1
          %v6483 = vand.u32 %v6481, 1
          %v6484 = vsub.s32 0, %v6483
          %v6485 = vsel %vm6479, %v6484, %v6483
          %vm6486 = vcmp.ne.s32.totalorder %v6464, 0
          %vm6487 = vcmp.ne.s32.totalorder %v6471, 0
          %vm6488 = vcmp.ne.s32.totalorder %v6478, 0
          %vm6489 = vcmp.ne.s32.totalorder %v6485, 0
          %vm6490 = vcmp.lt.s32.totalorder %v6464, 0
          %vm6491 = vcmp.lt.s32.totalorder %v6471, 0
          %vm6492 = vcmp.lt.s32.totalorder %v6478, 0
          %vm6493 = vcmp.lt.s32.totalorder %v6485, 0
          %vm6494 = vmand %vm6490, %vm6486
          %vm6495 = vmand %vm6491, %vm6487
          %vm6496 = vmand %vm6492, %vm6488
          %vm6497 = vmand %vm6493, %vm6489
          %v6498 = vadd.s32 %v6464, 2
          %v6499 = vadd.s32 %v6471, 2
          %v6500 = vadd.s32 %v6478, 2
          %v6501 = vadd.s32 %v6485, 2
          %v6502 = vsel %vm6494, %v6498, %v6464
          %v6503 = vsel %vm6495, %v6499, %v6471
          %v6504 = vsel %vm6496, %v6500, %v6478
          %v6505 = vsel %vm6497, %v6501, %v6485
          %vm6506 = vcmp.eq.s32.totalorder %v6502, 0
          %vm6507 = vcmp.eq.s32.totalorder %v6503, 0
          %vm6508 = vcmp.eq.s32.totalorder %v6504, 0
          %vm6509 = vcmp.eq.s32.totalorder %v6505, 0
          %v6510 = vsel %vm6506, %v6454, 0.0
          %v6511 = vsel %vm6507, %v6455, 0.0
          %v6512 = vsel %vm6508, %v6456, 0.0
          %v6513 = vsel %vm6509, %v6457, 0.0
          %v6514 = vsel %vm2217, %v6510, -inf
          %v6515 = vsel %vm2217, %v6511, -inf
          %v6516 = vsel %vm2217, %v6512, -inf
          %v6517 = vsel %vm2217, %v6513, -inf
          %v6518 = vmax.f32 %v6514, %v6515
          %v6519 = vmax.f32 %v6516, %v6517
          %v6520 = vmax.f32 %v6518, %v6519
          %v6521 = vrot.slane %v6520, 4
          %v6522 = vmax.f32 %v6520, %v6521
          %v6523 = vrot.slane %v6522, 2
          %v6524 = vmax.f32 %v6522, %v6523
          %v6525 = vrot.slane %v6524, 1
          %v6526 = vmax.f32 %v6524, %v6525
          %vm6527 = vcmp.eq.s32.totalorder %v6502, 1
          %vm6528 = vcmp.eq.s32.totalorder %v6503, 1
          %vm6529 = vcmp.eq.s32.totalorder %v6504, 1
          %vm6530 = vcmp.eq.s32.totalorder %v6505, 1
          %v6531 = vsel %vm6527, %v6454, 0.0
          %v6532 = vsel %vm6528, %v6455, 0.0
          %v6533 = vsel %vm6529, %v6456, 0.0
          %v6534 = vsel %vm6530, %v6457, 0.0
          %v6535 = vsel %vm2217, %v6531, -inf
          %v6536 = vsel %vm2217, %v6532, -inf
          %v6537 = vsel %vm2217, %v6533, -inf
          %v6538 = vsel %vm2217, %v6534, -inf
          %v6539 = vmax.f32 %v6535, %v6536
          %v6540 = vmax.f32 %v6537, %v6538
          %v6541 = vmax.f32 %v6539, %v6540
          %v6542 = vrot.slane %v6541, 4
          %v6543 = vmax.f32 %v6541, %v6542
          %v6544 = vrot.slane %v6543, 2
          %v6545 = vmax.f32 %v6543, %v6544
          %v6546 = vrot.slane %v6545, 1
          %v6547 = vmax.f32 %v6545, %v6546
          %vm6548 = vcmask 1040384
          %v6549 = vsel %vm6548, %v6526, %v6547
          %v6550 = vld [vmem:[#allocation17] sm:$0x3]
          %v6551 = vpack.c.bf16 %v6549, %v6549
          %v6552 = vld [vmem:[%s309] sm:$0xf]
          %v6553 = vld [vmem:[%s309 + $0x4] sm:$0xf]
          %v6554 = vld [vmem:[%s309 + $0x8] sm:$0xf]
          %v6555 = vld [vmem:[%s309 + $0xc] sm:$0xf]
          %v6556 = vld [vmem:[%s309 + $0x10] sm:$0xf]
          %v6557 = vld [vmem:[%s309 + $0x14] sm:$0xf]
          %v6558 = vld [vmem:[%s309 + $0x18] sm:$0xf]
          %v6559 = vld [vmem:[%s309 + $0x1c] sm:$0xf]
          %v6560 = vld [vmem:[%s309 + $0x20] sm:$0xf]
          %v6561 = vld [vmem:[%s309 + $0x24] sm:$0xf]
          %v6562 = vld [vmem:[%s309 + $0x28] sm:$0xf]
          %v6563 = vld [vmem:[%s309 + $0x2c] sm:$0xf]
          %v6564 = vld [vmem:[%s309 + $0x30] sm:$0x3]
          %v6578 = vunpack.c.l.b16 %v6552
          %v6579 = vunpack.c.l.b16 %v6553
          %v6580 = vunpack.c.l.b16 %v6554
          %v6581 = vunpack.c.l.b16 %v6555
          %v6582 = vunpack.c.l.b16 %v6556
          %v6583 = vunpack.c.l.b16 %v6557
          %v6584 = vunpack.c.l.b16 %v6558
          %v6585 = vunpack.c.l.b16 %v6559
          %v6586 = vunpack.c.l.b16 %v6560
          %v6587 = vunpack.c.l.b16 %v6561
          %v6588 = vunpack.c.l.b16 %v6562
          %v6589 = vunpack.c.l.b16 %v6563
          %v6590 = vunpack.c.l.b16 %v6564
          %v6591 = vpack.c.b16 %v6579, %v6578
          %v6592 = vpack.c.b16 %v6581, %v6580
          %v6593 = vpack.c.b16 %v6583, %v6582
          %v6594 = vpack.c.b16 %v6585, %v6584
          %v6595 = vpack.c.b16 %v6587, %v6586
          %v6596 = vpack.c.b16 %v6589, %v6588
          %v6597 = vpack.c.b16 %v6590, %v6590
          %v6605 = vsel %vm2217, %v6551, 0
          %vm6607 = vcmask 1041408
          %v6609 = vsel %vm6607, %v6597, 0
          %6611 = vmatprep.subr.bf16.mxu0 0
          %6612 = vmatpush1.bf16.msra.mxu0 %v6591
          %6613 = vmatprep.subr.bf16.mxu0 0
          %6614 = vmatpush1.bf16.msra.mxu0 %v6592
          %6615 = vmatprep.subr.bf16.mxu0 0
          %6616 = vmatpush1.bf16.msra.mxu0 %v6593
          %6617 = vmatprep.subr.bf16.mxu0 0
          %6618 = vmatpush1.bf16.msra.mxu0 %v6594
          %6619 = vmatprep.subr.bf16.mxu0 0
          %6620 = vmatpush1.bf16.msra.mxu0 %v6595
          %6621 = vmatprep.subr.bf16.mxu0 0
          %6622 = vmatpush1.bf16.msra.mxu0 %v6596
          %6623 = vmatprep.subr.bf16.mxu0 0
          %6624 = vmatpush1.bf16.msra.mxu0 %v6609
          %6625 = vmatprep.subr.bf16.mxu0 0
          %6626 = vmatpush1.bf16.msra.mxu0 0
          %6627 = vmatprep.subr.bf16.mxu0 0
          %6628 = vmatpush1.bf16.msra.mxu0 0
          %6629 = vmatprep.subr.bf16.mxu0 0
          %6630 = vmatpush1.bf16.msra.mxu0 0
          %6631 = vmatprep.subr.bf16.mxu0 0
          %6632 = vmatpush1.bf16.msra.mxu0 0
          %6633 = vmatprep.subr.bf16.mxu0 0
          %6634 = vmatpush1.bf16.msra.mxu0 0
          %6635 = vmatprep.subr.bf16.mxu0 0
          %6636 = vmatpush1.bf16.msra.mxu0 0
          %6637 = vmatprep.subr.bf16.mxu0 0
          %6638 = vmatpush1.bf16.msra.mxu0 0
          %6639 = vmatprep.subr.bf16.mxu0 0
          %6640 = vmatpush1.bf16.msra.mxu0 0
          %6641 = vmatprep.subr.bf16.mxu0 0
          %6642 = vmatpush1.bf16.msra.mxu0 0
          %6643 = vmatprep.mubr.bf16.mxu0 0
          %6644 = vmatmul.mubr.bf16.gmra.mrb[0].mxu0 %v6605
          %v6645 = vpop.f32.mrb[0].mxu0
          %v6646 = vadd.f32 0.0, %v6645
          %v6647 = vpop.f32.mrb[0].mxu0
          %v6648 = vpop.f32.mrb[0].mxu0
          %v6649 = vpop.f32.mrb[0].mxu0
          %6650 = vdwg.mxu0
          %v6651 = vadd.f32 %v6550, %v6646
          %6652 = vst [vmem:[#allocation17] sm:$0x3] %v6651
        $region88: #{textcnn_forward.1} parent=39 // pred_fallthru
          _
        %s6653 = sadd.s32 %s358, 3
        %s6654 = sld [smem:[#allocation5 + %s6653]]
        %p6655 = scmp.eq.s32.totalorder %s6654, 1
        // Predicated region
        $region89: #{textcnn_forward.1} parent=39 // pred_check
          %p6656 = pneg %p6655
        $region90: #{textcnn_forward.1} parent=39 // pred_check_branch
          %6658 = sbr.rel (%p6656) target = $region92
        $region91: #{textcnn_forward.1} parent=39 // pred_region
          %6659 = vst.msk [vmem:[#allocation2] sm:$0xff] %vm2217, 0.0
          %6660 = vst.msk [vmem:[#allocation2 + $0x8] sm:$0xff] %vm2217, 0.0
          %6661 = vst.msk [vmem:[#allocation2 + $0x10] sm:$0xff] %vm2217, 0.0
          %6662 = vst.msk [vmem:[#allocation2 + $0x18] sm:$0xff] %vm2217, 0.0
        $region92: #{textcnn_forward.1} parent=39 // pred_fallthru
          _
        %s6663 = sld [smem:[#allocation4 + %s6653]]
        %s6664 = smul.u32 %s6663, 96
        %s6665 = smul.addr %s6664, 4
        %s6666 = scalar_lea.vmem [#allocation8], %s6665
        %v6667 = vld [vmem:[%s6666] sm:$0xff]
        %v6668 = vld [vmem:[%s6666 + $0x8] sm:$0xff]
        %v6669 = vld [vmem:[%s6666 + $0x10] sm:$0xff]
        %v6670 = vld [vmem:[%s6666 + $0x18] sm:$0xff]
        %v6671 = vld [vmem:[%s6666 + $0x20] sm:$0xff]
        %v6672 = vld [vmem:[%s6666 + $0x28] sm:$0xff]
        %v6673 = vld [vmem:[%s6666 + $0x30] sm:$0xff]
        %v6674 = vld [vmem:[%s6666 + $0x38] sm:$0xff]
        %v6675 = vld [vmem:[%s6666 + $0x40] sm:$0xff]
        %v6676 = vld [vmem:[%s6666 + $0x48] sm:$0xff]
        %v6677 = vld [vmem:[%s6666 + $0x50] sm:$0xff]
        %v6678 = vld [vmem:[%s6666 + $0x58] sm:$0xff]
        %v6679 = vld [vmem:[%s6666 + $0x60] sm:$0xff]
        %v6680 = vld [vmem:[%s6666 + $0x68] sm:$0xff]
        %v6681 = vld [vmem:[%s6666 + $0x70] sm:$0xff]
        %v6682 = vld [vmem:[%s6666 + $0x78] sm:$0xff]
        %v6683 = vld [vmem:[%s6666 + $0x80] sm:$0xff]
        %v6684 = vld [vmem:[%s6666 + $0x88] sm:$0xff]
        %v6685 = vld [vmem:[%s6666 + $0x90] sm:$0xff]
        %v6686 = vld [vmem:[%s6666 + $0x98] sm:$0xff]
        %v6687 = vld [vmem:[%s6666 + $0xa0] sm:$0xff]
        %v6688 = vld [vmem:[%s6666 + $0xa8] sm:$0xff]
        %v6689 = vld [vmem:[%s6666 + $0xb0] sm:$0xff]
        %v6690 = vld [vmem:[%s6666 + $0xb8] sm:$0xff]
        %v6691 = vld [vmem:[%s6666 + $0xc0] sm:$0xff]
        %v6692 = vld [vmem:[%s6666 + $0xc8] sm:$0xff]
        %v6693 = vld [vmem:[%s6666 + $0xd0] sm:$0xff]
        %v6694 = vld [vmem:[%s6666 + $0xd8] sm:$0xff]
        %v6695 = vld [vmem:[%s6666 + $0xe0] sm:$0xff]
        %v6696 = vld [vmem:[%s6666 + $0xe8] sm:$0xff]
        %v6697 = vld [vmem:[%s6666 + $0xf0] sm:$0xff]
        %v6698 = vld [vmem:[%s6666 + $0xf8] sm:$0xff]
        %v6699 = vld [vmem:[%s6666 + $0x100] sm:$0xff]
        %v6700 = vld [vmem:[%s6666 + $0x108] sm:$0xff]
        %v6701 = vld [vmem:[%s6666 + $0x110] sm:$0xff]
        %v6702 = vld [vmem:[%s6666 + $0x118] sm:$0xff]
        %v6703 = vld [vmem:[%s6666 + $0x120] sm:$0xff]
        %v6704 = vld [vmem:[%s6666 + $0x128] sm:$0xff]
        %v6705 = vld [vmem:[%s6666 + $0x130] sm:$0xff]
        %v6706 = vld [vmem:[%s6666 + $0x138] sm:$0xff]
        %v6707 = vld [vmem:[%s6666 + $0x140] sm:$0xff]
        %v6708 = vld [vmem:[%s6666 + $0x148] sm:$0xff]
        %v6709 = vld [vmem:[%s6666 + $0x150] sm:$0xff]
        %v6710 = vld [vmem:[%s6666 + $0x158] sm:$0xff]
        %v6711 = vld [vmem:[%s6666 + $0x160] sm:$0xff]
        %v6712 = vld [vmem:[%s6666 + $0x168] sm:$0xff]
        %v6713 = vld [vmem:[%s6666 + $0x170] sm:$0xff]
        %v6714 = vld [vmem:[%s6666 + $0x178] sm:$0xff]
        %s6715 = scalar_lea.vmem %s292, 3744 [#allocation11]
        %v6716 = vld [vmem:[%s6715] sm:$0xff]
        %v6717 = vld [vmem:[%s6715 + $0x8] sm:$0xff]
        %v6718 = vld [vmem:[%s6715 + $0x10] sm:$0xff]
        %v6719 = vld [vmem:[%s6715 + $0x18] sm:$0xff]
        %v6720 = vld [vmem:[%s6715 + $0x20] sm:$0xff]
        %v6721 = vld [vmem:[%s6715 + $0x28] sm:$0xff]
        %v6722 = vld [vmem:[%s6715 + $0x30] sm:$0xff]
        %v6723 = vld [vmem:[%s6715 + $0x38] sm:$0xff]
        %v6724 = vld [vmem:[%s6715 + $0x40] sm:$0xff]
        %v6725 = vld [vmem:[%s6715 + $0x48] sm:$0xff]
        %v6726 = vld [vmem:[%s6715 + $0x50] sm:$0xff]
        %v6727 = vld [vmem:[%s6715 + $0x58] sm:$0xff]
        %v6728 = vld [vmem:[%s6715 + $0x60] sm:$0xff]
        %v6729 = vld [vmem:[%s6715 + $0x68] sm:$0xff]
        %v6730 = vld [vmem:[%s6715 + $0x70] sm:$0xff]
        %v6731 = vld [vmem:[%s6715 + $0x78] sm:$0xff]
        %v6732 = vld [vmem:[%s6715 + $0x80] sm:$0xff]
        %v6733 = vld [vmem:[%s6715 + $0x88] sm:$0xff]
        %v6734 = vld [vmem:[%s6715 + $0x90] sm:$0xff]
        %v6735 = vld [vmem:[%s6715 + $0x98] sm:$0xff]
        %v6736 = vld [vmem:[%s6715 + $0xa0] sm:$0xff]
        %v6737 = vld [vmem:[%s6715 + $0xa8] sm:$0xff]
        %v6738 = vld [vmem:[%s6715 + $0xb0] sm:$0xff]
        %v6739 = vld [vmem:[%s6715 + $0xb8] sm:$0xff]
        %v6740 = vld [vmem:[%s6715 + $0xc0] sm:$0xff]
        %v6741 = vld [vmem:[%s6715 + $0xc8] sm:$0xff]
        %v6742 = vld [vmem:[%s6715 + $0xd0] sm:$0xff]
        %v6743 = vld [vmem:[%s6715 + $0xd8] sm:$0xff]
        %v6744 = vld [vmem:[%s6715 + $0xe0] sm:$0xff]
        %v6745 = vld [vmem:[%s6715 + $0xe8] sm:$0xff]
        %v6746 = vld [vmem:[%s6715 + $0xf0] sm:$0xff]
        %v6747 = vld [vmem:[%s6715 + $0xf8] sm:$0xff]
        %v6748 = vld [vmem:[%s6715 + $0x100] sm:$0xff]
        %v6749 = vld [vmem:[%s6715 + $0x108] sm:$0xff]
        %v6750 = vld [vmem:[%s6715 + $0x110] sm:$0xff]
        %v6751 = vld [vmem:[%s6715 + $0x118] sm:$0xff]
        %v6752 = vld [vmem:[%s6715 + $0x120] sm:$0xff]
        %v6753 = vld [vmem:[%s6715 + $0x128] sm:$0xff]
        %v6754 = vld [vmem:[%s6715 + $0x130] sm:$0xff]
        %v6755 = vld [vmem:[%s6715 + $0x138] sm:$0xff]
        %v6756 = vld [vmem:[%s6715 + $0x140] sm:$0xff]
        %v6757 = vld [vmem:[%s6715 + $0x148] sm:$0xff]
        %v6758 = vld [vmem:[%s6715 + $0x150] sm:$0xff]
        %v6759 = vld [vmem:[%s6715 + $0x158] sm:$0xff]
        %v6760 = vld [vmem:[%s6715 + $0x160] sm:$0xff]
        %v6761 = vld [vmem:[%s6715 + $0x168] sm:$0xff]
        %v6762 = vld [vmem:[%s6715 + $0x170] sm:$0xff]
        %v6763 = vld [vmem:[%s6715 + $0x178] sm:$0xff]
        %v6764 = vld [vmem:[%s6715 + $0x180] sm:$0xff]
        %v6765 = vld [vmem:[%s6715 + $0x188] sm:$0xff]
        %v6766 = vld [vmem:[%s6715 + $0x190] sm:$0xff]
        %v6767 = vld [vmem:[%s6715 + $0x198] sm:$0xff]
        %v6768 = vld [vmem:[%s6715 + $0x1a0] sm:$0xff]
        %v6769 = vld [vmem:[%s6715 + $0x1a8] sm:$0xff]
        %v6770 = vld [vmem:[%s6715 + $0x1b0] sm:$0xff]
        %v6771 = vld [vmem:[%s6715 + $0x1b8] sm:$0xff]
        %v6772 = vld [vmem:[%s6715 + $0x1c0] sm:$0xff]
        %v6773 = vld [vmem:[%s6715 + $0x1c8] sm:$0xff]
        %v6774 = vld [vmem:[%s6715 + $0x1d0] sm:$0xff]
        %v6775 = vld [vmem:[%s6715 + $0x1d8] sm:$0xff]
        %v6776 = vld [vmem:[%s6715 + $0x1e0] sm:$0xff]
        %v6777 = vld [vmem:[%s6715 + $0x1e8] sm:$0xff]
        %v6778 = vld [vmem:[%s6715 + $0x1f0] sm:$0xff]
        %v6779 = vld [vmem:[%s6715 + $0x1f8] sm:$0xff]
        %v6780 = vld [vmem:[%s6715 + $0x200] sm:$0xff]
        %v6781 = vld [vmem:[%s6715 + $0x208] sm:$0xff]
        %v6782 = vld [vmem:[%s6715 + $0x210] sm:$0xff]
        %v6783 = vld [vmem:[%s6715 + $0x218] sm:$0xff]
        %v6784 = vld [vmem:[%s6715 + $0x220] sm:$0xff]
        %v6785 = vld [vmem:[%s6715 + $0x228] sm:$0xff]
        %v6786 = vld [vmem:[%s6715 + $0x230] sm:$0xff]
        %v6787 = vld [vmem:[%s6715 + $0x238] sm:$0xff]
        %v6788 = vld [vmem:[%s6715 + $0x240] sm:$0xff]
        %v6789 = vld [vmem:[%s6715 + $0x248] sm:$0xff]
        %v6790 = vld [vmem:[%s6715 + $0x250] sm:$0xff]
        %v6791 = vld [vmem:[%s6715 + $0x258] sm:$0xff]
        %v6792 = vld [vmem:[%s6715 + $0x260] sm:$0xff]
        %v6793 = vld [vmem:[%s6715 + $0x268] sm:$0xff]
        %v6794 = vld [vmem:[%s6715 + $0x270] sm:$0xff]
        %v6795 = vld [vmem:[%s6715 + $0x278] sm:$0xff]
        %v6796 = vld [vmem:[%s6715 + $0x280] sm:$0xff]
        %v6797 = vld [vmem:[%s6715 + $0x288] sm:$0xff]
        %v6798 = vld [vmem:[%s6715 + $0x290] sm:$0xff]
        %v6799 = vld [vmem:[%s6715 + $0x298] sm:$0xff]
        %v6800 = vld [vmem:[%s6715 + $0x2a0] sm:$0xff]
        %v6801 = vld [vmem:[%s6715 + $0x2a8] sm:$0xff]
        %v6802 = vld [vmem:[%s6715 + $0x2b0] sm:$0xff]
        %v6803 = vld [vmem:[%s6715 + $0x2b8] sm:$0xff]
        %v6804 = vld [vmem:[%s6715 + $0x2c0] sm:$0xff]
        %v6805 = vld [vmem:[%s6715 + $0x2c8] sm:$0xff]
        %v6806 = vld [vmem:[%s6715 + $0x2d0] sm:$0xff]
        %v6807 = vld [vmem:[%s6715 + $0x2d8] sm:$0xff]
        %v6808 = vld [vmem:[%s6715 + $0x2e0] sm:$0xff]
        %v6809 = vld [vmem:[%s6715 + $0x2e8] sm:$0xff]
        %v6810 = vld [vmem:[%s6715 + $0x2f0] sm:$0xff]
        %v6811 = vld [vmem:[%s6715 + $0x2f8] sm:$0xff]
        %v6812 = vld [vmem:[%s6715 + $0x300] sm:$0xff]
        %v6813 = vld [vmem:[%s6715 + $0x308] sm:$0xff]
        %v6814 = vld [vmem:[%s6715 + $0x310] sm:$0xff]
        %v6815 = vld [vmem:[%s6715 + $0x318] sm:$0xff]
        %v6816 = vld [vmem:[%s6715 + $0x320] sm:$0xff]
        %v6817 = vld [vmem:[%s6715 + $0x328] sm:$0xff]
        %v6818 = vld [vmem:[%s6715 + $0x330] sm:$0xff]
        %v6819 = vld [vmem:[%s6715 + $0x338] sm:$0xff]
        %v6820 = vld [vmem:[%s6715 + $0x340] sm:$0xff]
        %v6821 = vld [vmem:[%s6715 + $0x348] sm:$0xff]
        %v6822 = vld [vmem:[%s6715 + $0x350] sm:$0xff]
        %v6823 = vld [vmem:[%s6715 + $0x358] sm:$0xff]
        %v6824 = vld [vmem:[%s6715 + $0x360] sm:$0xff]
        %v6825 = vld [vmem:[%s6715 + $0x368] sm:$0xff]
        %v6826 = vld [vmem:[%s6715 + $0x370] sm:$0xff]
        %v6827 = vld [vmem:[%s6715 + $0x378] sm:$0xff]
        %v6828 = vld [vmem:[%s6715 + $0x380] sm:$0xff]
        %v6829 = vld [vmem:[%s6715 + $0x388] sm:$0xff]
        %v6830 = vld [vmem:[%s6715 + $0x390] sm:$0xff]
        %v6831 = vld [vmem:[%s6715 + $0x398] sm:$0xff]
        %v6832 = vld [vmem:[%s6715 + $0x3a0] sm:$0xff]
        %v6833 = vld [vmem:[%s6715 + $0x3a8] sm:$0xff]
        %v6834 = vld [vmem:[%s6715 + $0x3b0] sm:$0xff]
        %v6835 = vld [vmem:[%s6715 + $0x3b8] sm:$0xff]
        %v6836 = vld [vmem:[%s6715 + $0x3c0] sm:$0xff]
        %v6837 = vld [vmem:[%s6715 + $0x3c8] sm:$0xff]
        %v6838 = vld [vmem:[%s6715 + $0x3d0] sm:$0xff]
        %v6839 = vld [vmem:[%s6715 + $0x3d8] sm:$0xff]
        %v6840 = vld [vmem:[%s6715 + $0x3e0] sm:$0xff]
        %v6841 = vld [vmem:[%s6715 + $0x3e8] sm:$0xff]
        %v6842 = vld [vmem:[%s6715 + $0x3f0] sm:$0xff]
        %v6843 = vld [vmem:[%s6715 + $0x3f8] sm:$0xff]
        %v6844 = vld [vmem:[%s6715 + $0x400] sm:$0xff]
        %v6845 = vld [vmem:[%s6715 + $0x408] sm:$0xff]
        %v6846 = vld [vmem:[%s6715 + $0x410] sm:$0xff]
        %v6847 = vld [vmem:[%s6715 + $0x418] sm:$0xff]
        %v6848 = vld [vmem:[%s6715 + $0x420] sm:$0xff]
        %v6849 = vld [vmem:[%s6715 + $0x428] sm:$0xff]
        %v6850 = vld [vmem:[%s6715 + $0x430] sm:$0xff]
        %v6851 = vld [vmem:[%s6715 + $0x438] sm:$0xff]
        %v6852 = vld [vmem:[%s6715 + $0x440] sm:$0xff]
        %v6853 = vld [vmem:[%s6715 + $0x448] sm:$0xff]
        %v6854 = vld [vmem:[%s6715 + $0x450] sm:$0xff]
        %v6855 = vld [vmem:[%s6715 + $0x458] sm:$0xff]
        %v6856 = vld [vmem:[%s6715 + $0x460] sm:$0xff]
        %v6857 = vld [vmem:[%s6715 + $0x468] sm:$0xff]
        %v6858 = vld [vmem:[%s6715 + $0x470] sm:$0xff]
        %v6859 = vld [vmem:[%s6715 + $0x478] sm:$0xff]
        %v6860 = vld [vmem:[%s6715 + $0x480] sm:$0x33]
        %v6861 = vld [vmem:[%s6715 + $0x488] sm:$0x33]
        %v6862 = vld [vmem:[%s6715 + $0x490] sm:$0x33]
        %v6863 = vld [vmem:[%s6715 + $0x498] sm:$0x33]
        %v6864 = vld [vmem:[%s6715 + $0x4a0] sm:$0x33]
        %v6865 = vld [vmem:[%s6715 + $0x4a8] sm:$0x33]
        %v6866 = vld [vmem:[%s6715 + $0x4b0] sm:$0x33]
        %v6867 = vld [vmem:[%s6715 + $0x4b8] sm:$0x33]
        %v6868 = vld [vmem:[%s6715 + $0x4c0] sm:$0x33]
        %v6869 = vld [vmem:[%s6715 + $0x4c8] sm:$0x33]
        %v6870 = vld [vmem:[%s6715 + $0x4d0] sm:$0x33]
        %v6871 = vld [vmem:[%s6715 + $0x4d8] sm:$0x33]
        %v6872 = vld [vmem:[#allocation2] sm:$0xff]
        %v6873 = vld [vmem:[#allocation2 + $0x8] sm:$0xff]
        %v6874 = vld [vmem:[#allocation2 + $0x10] sm:$0xff]
        %v6875 = vld [vmem:[#allocation2 + $0x18] sm:$0xff]
        %v6924 = vunpack.c.l.b16 %v6667
        %v6925 = vunpack.c.h.b16 %v6667
        %v6926 = vunpack.c.l.b16 %v6668
        %v6927 = vunpack.c.h.b16 %v6668
        %v6928 = vunpack.c.l.b16 %v6669
        %v6929 = vunpack.c.h.b16 %v6669
        %v6930 = vunpack.c.l.b16 %v6670
        %v6931 = vunpack.c.h.b16 %v6670
        %v6932 = vunpack.c.l.b16 %v6671
        %v6933 = vunpack.c.h.b16 %v6671
        %v6934 = vunpack.c.l.b16 %v6672
        %v6935 = vunpack.c.h.b16 %v6672
        %v6936 = vunpack.c.l.b16 %v6673
        %v6937 = vunpack.c.h.b16 %v6673
        %v6938 = vunpack.c.l.b16 %v6674
        %v6939 = vunpack.c.h.b16 %v6674
        %v6940 = vunpack.c.l.b16 %v6675
        %v6941 = vunpack.c.h.b16 %v6675
        %v6942 = vunpack.c.l.b16 %v6676
        %v6943 = vunpack.c.h.b16 %v6676
        %v6944 = vunpack.c.l.b16 %v6677
        %v6945 = vunpack.c.h.b16 %v6677
        %v6946 = vunpack.c.l.b16 %v6678
        %v6947 = vunpack.c.h.b16 %v6678
        %v6948 = vunpack.c.l.b16 %v6679
        %v6949 = vunpack.c.h.b16 %v6679
        %v6950 = vunpack.c.l.b16 %v6680
        %v6951 = vunpack.c.h.b16 %v6680
        %v6952 = vunpack.c.l.b16 %v6681
        %v6953 = vunpack.c.h.b16 %v6681
        %v6954 = vunpack.c.l.b16 %v6682
        %v6955 = vunpack.c.h.b16 %v6682
        %v6956 = vunpack.c.l.b16 %v6683
        %v6957 = vunpack.c.h.b16 %v6683
        %v6958 = vunpack.c.l.b16 %v6684
        %v6959 = vunpack.c.h.b16 %v6684
        %v6960 = vunpack.c.l.b16 %v6685
        %v6961 = vunpack.c.h.b16 %v6685
        %v6962 = vunpack.c.l.b16 %v6686
        %v6963 = vunpack.c.h.b16 %v6686
        %v6964 = vunpack.c.l.b16 %v6687
        %v6965 = vunpack.c.h.b16 %v6687
        %v6966 = vunpack.c.l.b16 %v6688
        %v6967 = vunpack.c.h.b16 %v6688
        %v6968 = vunpack.c.l.b16 %v6689
        %v6969 = vunpack.c.h.b16 %v6689
        %v6970 = vunpack.c.l.b16 %v6690
        %v6971 = vunpack.c.h.b16 %v6690
        %v6972 = vunpack.c.l.b16 %v6691
        %v6973 = vunpack.c.h.b16 %v6691
        %v6974 = vunpack.c.l.b16 %v6692
        %v6975 = vunpack.c.h.b16 %v6692
        %v6976 = vunpack.c.l.b16 %v6693
        %v6977 = vunpack.c.h.b16 %v6693
        %v6978 = vunpack.c.l.b16 %v6694
        %v6979 = vunpack.c.h.b16 %v6694
        %v6980 = vunpack.c.l.b16 %v6695
        %v6981 = vunpack.c.h.b16 %v6695
        %v6982 = vunpack.c.l.b16 %v6696
        %v6983 = vunpack.c.h.b16 %v6696
        %v6984 = vunpack.c.l.b16 %v6697
        %v6985 = vunpack.c.h.b16 %v6697
        %v6986 = vunpack.c.l.b16 %v6698
        %v6987 = vunpack.c.h.b16 %v6698
        %v6988 = vunpack.c.l.b16 %v6699
        %v6989 = vunpack.c.h.b16 %v6699
        %v6990 = vunpack.c.l.b16 %v6700
        %v6991 = vunpack.c.h.b16 %v6700
        %v6992 = vunpack.c.l.b16 %v6701
        %v6993 = vunpack.c.h.b16 %v6701
        %v6994 = vunpack.c.l.b16 %v6702
        %v6995 = vunpack.c.h.b16 %v6702
        %v6996 = vunpack.c.l.b16 %v6703
        %v6997 = vunpack.c.h.b16 %v6703
        %v6998 = vunpack.c.l.b16 %v6704
        %v6999 = vunpack.c.h.b16 %v6704
        %v7000 = vunpack.c.l.b16 %v6705
        %v7001 = vunpack.c.h.b16 %v6705
        %v7002 = vunpack.c.l.b16 %v6706
        %v7003 = vunpack.c.h.b16 %v6706
        %v7004 = vunpack.c.l.b16 %v6707
        %v7005 = vunpack.c.h.b16 %v6707
        %v7006 = vunpack.c.l.b16 %v6708
        %v7007 = vunpack.c.h.b16 %v6708
        %v7008 = vunpack.c.l.b16 %v6709
        %v7009 = vunpack.c.h.b16 %v6709
        %v7010 = vunpack.c.l.b16 %v6710
        %v7011 = vunpack.c.h.b16 %v6710
        %v7012 = vunpack.c.l.b16 %v6711
        %v7013 = vunpack.c.h.b16 %v6711
        %v7014 = vunpack.c.l.b16 %v6712
        %v7015 = vunpack.c.h.b16 %v6712
        %v7016 = vunpack.c.l.b16 %v6713
        %v7017 = vunpack.c.h.b16 %v6713
        %v7018 = vunpack.c.l.b16 %v6714
        %v7019 = vunpack.c.h.b16 %v6714
        %v7020 = vpack.c.b16 %v6948, %v6924
        %v7021 = vpack.c.b16 %v6949, %v6925
        %v7022 = vpack.c.b16 %v6950, %v6926
        %v7023 = vpack.c.b16 %v6951, %v6927
        %v7024 = vpack.c.b16 %v6952, %v6928
        %v7025 = vpack.c.b16 %v6953, %v6929
        %v7026 = vpack.c.b16 %v6954, %v6930
        %v7027 = vpack.c.b16 %v6955, %v6931
        %v7028 = vpack.c.b16 %v6956, %v6932
        %v7029 = vpack.c.b16 %v6957, %v6933
        %v7030 = vpack.c.b16 %v6958, %v6934
        %v7031 = vpack.c.b16 %v6959, %v6935
        %v7032 = vpack.c.b16 %v6960, %v6936
        %v7033 = vpack.c.b16 %v6961, %v6937
        %v7034 = vpack.c.b16 %v6962, %v6938
        %v7035 = vpack.c.b16 %v6963, %v6939
        %v7036 = vpack.c.b16 %v6964, %v6940
        %v7037 = vpack.c.b16 %v6965, %v6941
        %v7038 = vpack.c.b16 %v6966, %v6942
        %v7039 = vpack.c.b16 %v6967, %v6943
        %v7040 = vpack.c.b16 %v6968, %v6944
        %v7041 = vpack.c.b16 %v6969, %v6945
        %v7042 = vpack.c.b16 %v6970, %v6946
        %v7043 = vpack.c.b16 %v6971, %v6947
        %v7044 = vpack.c.b16 %v6996, %v6972
        %v7045 = vpack.c.b16 %v6997, %v6973
        %v7046 = vpack.c.b16 %v6998, %v6974
        %v7047 = vpack.c.b16 %v6999, %v6975
        %v7048 = vpack.c.b16 %v7000, %v6976
        %v7049 = vpack.c.b16 %v7001, %v6977
        %v7050 = vpack.c.b16 %v7002, %v6978
        %v7051 = vpack.c.b16 %v7003, %v6979
        %v7052 = vpack.c.b16 %v7004, %v6980
        %v7053 = vpack.c.b16 %v7005, %v6981
        %v7054 = vpack.c.b16 %v7006, %v6982
        %v7055 = vpack.c.b16 %v7007, %v6983
        %v7056 = vpack.c.b16 %v7008, %v6984
        %v7057 = vpack.c.b16 %v7009, %v6985
        %v7058 = vpack.c.b16 %v7010, %v6986
        %v7059 = vpack.c.b16 %v7011, %v6987
        %v7060 = vpack.c.b16 %v7012, %v6988
        %v7061 = vpack.c.b16 %v7013, %v6989
        %v7062 = vpack.c.b16 %v7014, %v6990
        %v7063 = vpack.c.b16 %v7015, %v6991
        %v7064 = vpack.c.b16 %v7016, %v6992
        %v7065 = vpack.c.b16 %v7017, %v6993
        %v7066 = vpack.c.b16 %v7018, %v6994
        %v7067 = vpack.c.b16 %v7019, %v6995
        %v7272 = vunpack.c.l.b16 %v6716
        %v7273 = vunpack.c.h.b16 %v6716
        %v7274 = vunpack.c.l.b16 %v6717
        %v7275 = vunpack.c.h.b16 %v6717
        %v7276 = vunpack.c.l.b16 %v6718
        %v7277 = vunpack.c.h.b16 %v6718
        %v7278 = vunpack.c.l.b16 %v6719
        %v7279 = vunpack.c.h.b16 %v6719
        %v7280 = vunpack.c.l.b16 %v6720
        %v7281 = vunpack.c.h.b16 %v6720
        %v7282 = vunpack.c.l.b16 %v6721
        %v7283 = vunpack.c.h.b16 %v6721
        %v7284 = vunpack.c.l.b16 %v6722
        %v7285 = vunpack.c.h.b16 %v6722
        %v7286 = vunpack.c.l.b16 %v6723
        %v7287 = vunpack.c.h.b16 %v6723
        %v7288 = vunpack.c.l.b16 %v6724
        %v7289 = vunpack.c.h.b16 %v6724
        %v7290 = vunpack.c.l.b16 %v6725
        %v7291 = vunpack.c.h.b16 %v6725
        %v7292 = vunpack.c.l.b16 %v6726
        %v7293 = vunpack.c.h.b16 %v6726
        %v7294 = vunpack.c.l.b16 %v6727
        %v7295 = vunpack.c.h.b16 %v6727
        %v7296 = vunpack.c.l.b16 %v6728
        %v7297 = vunpack.c.h.b16 %v6728
        %v7298 = vunpack.c.l.b16 %v6729
        %v7299 = vunpack.c.h.b16 %v6729
        %v7300 = vunpack.c.l.b16 %v6730
        %v7301 = vunpack.c.h.b16 %v6730
        %v7302 = vunpack.c.l.b16 %v6731
        %v7303 = vunpack.c.h.b16 %v6731
        %v7304 = vunpack.c.l.b16 %v6732
        %v7305 = vunpack.c.h.b16 %v6732
        %v7306 = vunpack.c.l.b16 %v6733
        %v7307 = vunpack.c.h.b16 %v6733
        %v7308 = vunpack.c.l.b16 %v6734
        %v7309 = vunpack.c.h.b16 %v6734
        %v7310 = vunpack.c.l.b16 %v6735
        %v7311 = vunpack.c.h.b16 %v6735
        %v7312 = vunpack.c.l.b16 %v6736
        %v7313 = vunpack.c.h.b16 %v6736
        %v7314 = vunpack.c.l.b16 %v6737
        %v7315 = vunpack.c.h.b16 %v6737
        %v7316 = vunpack.c.l.b16 %v6738
        %v7317 = vunpack.c.h.b16 %v6738
        %v7318 = vunpack.c.l.b16 %v6739
        %v7319 = vunpack.c.h.b16 %v6739
        %v7320 = vunpack.c.l.b16 %v6740
        %v7321 = vunpack.c.h.b16 %v6740
        %v7322 = vunpack.c.l.b16 %v6741
        %v7323 = vunpack.c.h.b16 %v6741
        %v7324 = vunpack.c.l.b16 %v6742
        %v7325 = vunpack.c.h.b16 %v6742
        %v7326 = vunpack.c.l.b16 %v6743
        %v7327 = vunpack.c.h.b16 %v6743
        %v7328 = vunpack.c.l.b16 %v6744
        %v7329 = vunpack.c.h.b16 %v6744
        %v7330 = vunpack.c.l.b16 %v6745
        %v7331 = vunpack.c.h.b16 %v6745
        %v7332 = vunpack.c.l.b16 %v6746
        %v7333 = vunpack.c.h.b16 %v6746
        %v7334 = vunpack.c.l.b16 %v6747
        %v7335 = vunpack.c.h.b16 %v6747
        %v7336 = vunpack.c.l.b16 %v6748
        %v7337 = vunpack.c.h.b16 %v6748
        %v7338 = vunpack.c.l.b16 %v6749
        %v7339 = vunpack.c.h.b16 %v6749
        %v7340 = vunpack.c.l.b16 %v6750
        %v7341 = vunpack.c.h.b16 %v6750
        %v7342 = vunpack.c.l.b16 %v6751
        %v7343 = vunpack.c.h.b16 %v6751
        %v7344 = vunpack.c.l.b16 %v6752
        %v7345 = vunpack.c.h.b16 %v6752
        %v7346 = vunpack.c.l.b16 %v6753
        %v7347 = vunpack.c.h.b16 %v6753
        %v7348 = vunpack.c.l.b16 %v6754
        %v7349 = vunpack.c.h.b16 %v6754
        %v7350 = vunpack.c.l.b16 %v6755
        %v7351 = vunpack.c.h.b16 %v6755
        %v7352 = vunpack.c.l.b16 %v6756
        %v7353 = vunpack.c.h.b16 %v6756
        %v7354 = vunpack.c.l.b16 %v6757
        %v7355 = vunpack.c.h.b16 %v6757
        %v7356 = vunpack.c.l.b16 %v6758
        %v7357 = vunpack.c.h.b16 %v6758
        %v7358 = vunpack.c.l.b16 %v6759
        %v7359 = vunpack.c.h.b16 %v6759
        %v7360 = vunpack.c.l.b16 %v6760
        %v7361 = vunpack.c.h.b16 %v6760
        %v7362 = vunpack.c.l.b16 %v6761
        %v7363 = vunpack.c.h.b16 %v6761
        %v7364 = vunpack.c.l.b16 %v6762
        %v7365 = vunpack.c.h.b16 %v6762
        %v7366 = vunpack.c.l.b16 %v6763
        %v7367 = vunpack.c.h.b16 %v6763
        %v7368 = vunpack.c.l.b16 %v6764
        %v7369 = vunpack.c.h.b16 %v6764
        %v7370 = vunpack.c.l.b16 %v6765
        %v7371 = vunpack.c.h.b16 %v6765
        %v7372 = vunpack.c.l.b16 %v6766
        %v7373 = vunpack.c.h.b16 %v6766
        %v7374 = vunpack.c.l.b16 %v6767
        %v7375 = vunpack.c.h.b16 %v6767
        %v7376 = vunpack.c.l.b16 %v6768
        %v7377 = vunpack.c.h.b16 %v6768
        %v7378 = vunpack.c.l.b16 %v6769
        %v7379 = vunpack.c.h.b16 %v6769
        %v7380 = vunpack.c.l.b16 %v6770
        %v7381 = vunpack.c.h.b16 %v6770
        %v7382 = vunpack.c.l.b16 %v6771
        %v7383 = vunpack.c.h.b16 %v6771
        %v7384 = vunpack.c.l.b16 %v6772
        %v7385 = vunpack.c.h.b16 %v6772
        %v7386 = vunpack.c.l.b16 %v6773
        %v7387 = vunpack.c.h.b16 %v6773
        %v7388 = vunpack.c.l.b16 %v6774
        %v7389 = vunpack.c.h.b16 %v6774
        %v7390 = vunpack.c.l.b16 %v6775
        %v7391 = vunpack.c.h.b16 %v6775
        %v7392 = vunpack.c.l.b16 %v6776
        %v7393 = vunpack.c.h.b16 %v6776
        %v7394 = vunpack.c.l.b16 %v6777
        %v7395 = vunpack.c.h.b16 %v6777
        %v7396 = vunpack.c.l.b16 %v6778
        %v7397 = vunpack.c.h.b16 %v6778
        %v7398 = vunpack.c.l.b16 %v6779
        %v7399 = vunpack.c.h.b16 %v6779
        %v7400 = vunpack.c.l.b16 %v6780
        %v7401 = vunpack.c.h.b16 %v6780
        %v7402 = vunpack.c.l.b16 %v6781
        %v7403 = vunpack.c.h.b16 %v6781
        %v7404 = vunpack.c.l.b16 %v6782
        %v7405 = vunpack.c.h.b16 %v6782
        %v7406 = vunpack.c.l.b16 %v6783
        %v7407 = vunpack.c.h.b16 %v6783
        %v7408 = vunpack.c.l.b16 %v6784
        %v7409 = vunpack.c.h.b16 %v6784
        %v7410 = vunpack.c.l.b16 %v6785
        %v7411 = vunpack.c.h.b16 %v6785
        %v7412 = vunpack.c.l.b16 %v6786
        %v7413 = vunpack.c.h.b16 %v6786
        %v7414 = vunpack.c.l.b16 %v6787
        %v7415 = vunpack.c.h.b16 %v6787
        %v7416 = vunpack.c.l.b16 %v6788
        %v7417 = vunpack.c.h.b16 %v6788
        %v7418 = vunpack.c.l.b16 %v6789
        %v7419 = vunpack.c.h.b16 %v6789
        %v7420 = vunpack.c.l.b16 %v6790
        %v7421 = vunpack.c.h.b16 %v6790
        %v7422 = vunpack.c.l.b16 %v6791
        %v7423 = vunpack.c.h.b16 %v6791
        %v7424 = vunpack.c.l.b16 %v6792
        %v7425 = vunpack.c.h.b16 %v6792
        %v7426 = vunpack.c.l.b16 %v6793
        %v7427 = vunpack.c.h.b16 %v6793
        %v7428 = vunpack.c.l.b16 %v6794
        %v7429 = vunpack.c.h.b16 %v6794
        %v7430 = vunpack.c.l.b16 %v6795
        %v7431 = vunpack.c.h.b16 %v6795
        %v7432 = vunpack.c.l.b16 %v6796
        %v7433 = vunpack.c.h.b16 %v6796
        %v7434 = vunpack.c.l.b16 %v6797
        %v7435 = vunpack.c.h.b16 %v6797
        %v7436 = vunpack.c.l.b16 %v6798
        %v7437 = vunpack.c.h.b16 %v6798
        %v7438 = vunpack.c.l.b16 %v6799
        %v7439 = vunpack.c.h.b16 %v6799
        %v7440 = vunpack.c.l.b16 %v6800
        %v7441 = vunpack.c.h.b16 %v6800
        %v7442 = vunpack.c.l.b16 %v6801
        %v7443 = vunpack.c.h.b16 %v6801
        %v7444 = vunpack.c.l.b16 %v6802
        %v7445 = vunpack.c.h.b16 %v6802
        %v7446 = vunpack.c.l.b16 %v6803
        %v7447 = vunpack.c.h.b16 %v6803
        %v7448 = vunpack.c.l.b16 %v6804
        %v7449 = vunpack.c.h.b16 %v6804
        %v7450 = vunpack.c.l.b16 %v6805
        %v7451 = vunpack.c.h.b16 %v6805
        %v7452 = vunpack.c.l.b16 %v6806
        %v7453 = vunpack.c.h.b16 %v6806
        %v7454 = vunpack.c.l.b16 %v6807
        %v7455 = vunpack.c.h.b16 %v6807
        %v7456 = vunpack.c.l.b16 %v6808
        %v7457 = vunpack.c.h.b16 %v6808
        %v7458 = vunpack.c.l.b16 %v6809
        %v7459 = vunpack.c.h.b16 %v6809
        %v7460 = vunpack.c.l.b16 %v6810
        %v7461 = vunpack.c.h.b16 %v6810
        %v7462 = vunpack.c.l.b16 %v6811
        %v7463 = vunpack.c.h.b16 %v6811
        %v7464 = vunpack.c.l.b16 %v6812
        %v7465 = vunpack.c.h.b16 %v6812
        %v7466 = vunpack.c.l.b16 %v6813
        %v7467 = vunpack.c.h.b16 %v6813
        %v7468 = vunpack.c.l.b16 %v6814
        %v7469 = vunpack.c.h.b16 %v6814
        %v7470 = vunpack.c.l.b16 %v6815
        %v7471 = vunpack.c.h.b16 %v6815
        %v7472 = vunpack.c.l.b16 %v6816
        %v7473 = vunpack.c.h.b16 %v6816
        %v7474 = vunpack.c.l.b16 %v6817
        %v7475 = vunpack.c.h.b16 %v6817
        %v7476 = vunpack.c.l.b16 %v6818
        %v7477 = vunpack.c.h.b16 %v6818
        %v7478 = vunpack.c.l.b16 %v6819
        %v7479 = vunpack.c.h.b16 %v6819
        %v7480 = vunpack.c.l.b16 %v6820
        %v7481 = vunpack.c.h.b16 %v6820
        %v7482 = vunpack.c.l.b16 %v6821
        %v7483 = vunpack.c.h.b16 %v6821
        %v7484 = vunpack.c.l.b16 %v6822
        %v7485 = vunpack.c.h.b16 %v6822
        %v7486 = vunpack.c.l.b16 %v6823
        %v7487 = vunpack.c.h.b16 %v6823
        %v7488 = vunpack.c.l.b16 %v6824
        %v7489 = vunpack.c.h.b16 %v6824
        %v7490 = vunpack.c.l.b16 %v6825
        %v7491 = vunpack.c.h.b16 %v6825
        %v7492 = vunpack.c.l.b16 %v6826
        %v7493 = vunpack.c.h.b16 %v6826
        %v7494 = vunpack.c.l.b16 %v6827
        %v7495 = vunpack.c.h.b16 %v6827
        %v7496 = vunpack.c.l.b16 %v6828
        %v7497 = vunpack.c.h.b16 %v6828
        %v7498 = vunpack.c.l.b16 %v6829
        %v7499 = vunpack.c.h.b16 %v6829
        %v7500 = vunpack.c.l.b16 %v6830
        %v7501 = vunpack.c.h.b16 %v6830
        %v7502 = vunpack.c.l.b16 %v6831
        %v7503 = vunpack.c.h.b16 %v6831
        %v7504 = vunpack.c.l.b16 %v6832
        %v7505 = vunpack.c.h.b16 %v6832
        %v7506 = vunpack.c.l.b16 %v6833
        %v7507 = vunpack.c.h.b16 %v6833
        %v7508 = vunpack.c.l.b16 %v6834
        %v7509 = vunpack.c.h.b16 %v6834
        %v7510 = vunpack.c.l.b16 %v6835
        %v7511 = vunpack.c.h.b16 %v6835
        %v7512 = vunpack.c.l.b16 %v6836
        %v7513 = vunpack.c.h.b16 %v6836
        %v7514 = vunpack.c.l.b16 %v6837
        %v7515 = vunpack.c.h.b16 %v6837
        %v7516 = vunpack.c.l.b16 %v6838
        %v7517 = vunpack.c.h.b16 %v6838
        %v7518 = vunpack.c.l.b16 %v6839
        %v7519 = vunpack.c.h.b16 %v6839
        %v7520 = vunpack.c.l.b16 %v6840
        %v7521 = vunpack.c.h.b16 %v6840
        %v7522 = vunpack.c.l.b16 %v6841
        %v7523 = vunpack.c.h.b16 %v6841
        %v7524 = vunpack.c.l.b16 %v6842
        %v7525 = vunpack.c.h.b16 %v6842
        %v7526 = vunpack.c.l.b16 %v6843
        %v7527 = vunpack.c.h.b16 %v6843
        %v7528 = vunpack.c.l.b16 %v6844
        %v7529 = vunpack.c.h.b16 %v6844
        %v7530 = vunpack.c.l.b16 %v6845
        %v7531 = vunpack.c.h.b16 %v6845
        %v7532 = vunpack.c.l.b16 %v6846
        %v7533 = vunpack.c.h.b16 %v6846
        %v7534 = vunpack.c.l.b16 %v6847
        %v7535 = vunpack.c.h.b16 %v6847
        %v7536 = vunpack.c.l.b16 %v6848
        %v7537 = vunpack.c.h.b16 %v6848
        %v7538 = vunpack.c.l.b16 %v6849
        %v7539 = vunpack.c.h.b16 %v6849
        %v7540 = vunpack.c.l.b16 %v6850
        %v7541 = vunpack.c.h.b16 %v6850
        %v7542 = vunpack.c.l.b16 %v6851
        %v7543 = vunpack.c.h.b16 %v6851
        %v7544 = vunpack.c.l.b16 %v6852
        %v7545 = vunpack.c.h.b16 %v6852
        %v7546 = vunpack.c.l.b16 %v6853
        %v7547 = vunpack.c.h.b16 %v6853
        %v7548 = vunpack.c.l.b16 %v6854
        %v7549 = vunpack.c.h.b16 %v6854
        %v7550 = vunpack.c.l.b16 %v6855
        %v7551 = vunpack.c.h.b16 %v6855
        %v7552 = vunpack.c.l.b16 %v6856
        %v7553 = vunpack.c.h.b16 %v6856
        %v7554 = vunpack.c.l.b16 %v6857
        %v7555 = vunpack.c.h.b16 %v6857
        %v7556 = vunpack.c.l.b16 %v6858
        %v7557 = vunpack.c.h.b16 %v6858
        %v7558 = vunpack.c.l.b16 %v6859
        %v7559 = vunpack.c.h.b16 %v6859
        %v7560 = vunpack.c.l.b16 %v6860
        %v7561 = vunpack.c.h.b16 %v6860
        %v7562 = vunpack.c.l.b16 %v6861
        %v7563 = vunpack.c.h.b16 %v6861
        %v7564 = vunpack.c.l.b16 %v6862
        %v7565 = vunpack.c.h.b16 %v6862
        %v7566 = vunpack.c.l.b16 %v6863
        %v7567 = vunpack.c.h.b16 %v6863
        %v7568 = vunpack.c.l.b16 %v6864
        %v7569 = vunpack.c.h.b16 %v6864
        %v7570 = vunpack.c.l.b16 %v6865
        %v7571 = vunpack.c.h.b16 %v6865
        %v7572 = vunpack.c.l.b16 %v6866
        %v7573 = vunpack.c.h.b16 %v6866
        %v7574 = vunpack.c.l.b16 %v6867
        %v7575 = vunpack.c.h.b16 %v6867
        %v7576 = vunpack.c.l.b16 %v6868
        %v7577 = vunpack.c.h.b16 %v6868
        %v7578 = vunpack.c.l.b16 %v6869
        %v7579 = vunpack.c.h.b16 %v6869
        %v7580 = vunpack.c.l.b16 %v6870
        %v7581 = vunpack.c.h.b16 %v6870
        %v7582 = vunpack.c.l.b16 %v6871
        %v7583 = vunpack.c.h.b16 %v6871
        %v7584 = vpack.c.b16 %v7296, %v7272
        %v7585 = vpack.c.b16 %v7297, %v7273
        %v7586 = vpack.c.b16 %v7298, %v7274
        %v7587 = vpack.c.b16 %v7299, %v7275
        %v7588 = vpack.c.b16 %v7300, %v7276
        %v7589 = vpack.c.b16 %v7301, %v7277
        %v7590 = vpack.c.b16 %v7302, %v7278
        %v7591 = vpack.c.b16 %v7303, %v7279
        %v7592 = vpack.c.b16 %v7304, %v7280
        %v7593 = vpack.c.b16 %v7305, %v7281
        %v7594 = vpack.c.b16 %v7306, %v7282
        %v7595 = vpack.c.b16 %v7307, %v7283
        %v7596 = vpack.c.b16 %v7308, %v7284
        %v7597 = vpack.c.b16 %v7309, %v7285
        %v7598 = vpack.c.b16 %v7310, %v7286
        %v7599 = vpack.c.b16 %v7311, %v7287
        %v7600 = vpack.c.b16 %v7312, %v7288
        %v7601 = vpack.c.b16 %v7313, %v7289
        %v7602 = vpack.c.b16 %v7314, %v7290
        %v7603 = vpack.c.b16 %v7315, %v7291
        %v7604 = vpack.c.b16 %v7316, %v7292
        %v7605 = vpack.c.b16 %v7317, %v7293
        %v7606 = vpack.c.b16 %v7318, %v7294
        %v7607 = vpack.c.b16 %v7319, %v7295
        %v7608 = vpack.c.b16 %v7344, %v7320
        %v7609 = vpack.c.b16 %v7345, %v7321
        %v7610 = vpack.c.b16 %v7346, %v7322
        %v7611 = vpack.c.b16 %v7347, %v7323
        %v7612 = vpack.c.b16 %v7348, %v7324
        %v7613 = vpack.c.b16 %v7349, %v7325
        %v7614 = vpack.c.b16 %v7350, %v7326
        %v7615 = vpack.c.b16 %v7351, %v7327
        %v7616 = vpack.c.b16 %v7352, %v7328
        %v7617 = vpack.c.b16 %v7353, %v7329
        %v7618 = vpack.c.b16 %v7354, %v7330
        %v7619 = vpack.c.b16 %v7355, %v7331
        %v7620 = vpack.c.b16 %v7356, %v7332
        %v7621 = vpack.c.b16 %v7357, %v7333
        %v7622 = vpack.c.b16 %v7358, %v7334
        %v7623 = vpack.c.b16 %v7359, %v7335
        %v7624 = vpack.c.b16 %v7360, %v7336
        %v7625 = vpack.c.b16 %v7361, %v7337
        %v7626 = vpack.c.b16 %v7362, %v7338
        %v7627 = vpack.c.b16 %v7363, %v7339
        %v7628 = vpack.c.b16 %v7364, %v7340
        %v7629 = vpack.c.b16 %v7365, %v7341
        %v7630 = vpack.c.b16 %v7366, %v7342
        %v7631 = vpack.c.b16 %v7367, %v7343
        %v7632 = vpack.c.b16 %v7392, %v7368
        %v7633 = vpack.c.b16 %v7393, %v7369
        %v7634 = vpack.c.b16 %v7394, %v7370
        %v7635 = vpack.c.b16 %v7395, %v7371
        %v7636 = vpack.c.b16 %v7396, %v7372
        %v7637 = vpack.c.b16 %v7397, %v7373
        %v7638 = vpack.c.b16 %v7398, %v7374
        %v7639 = vpack.c.b16 %v7399, %v7375
        %v7640 = vpack.c.b16 %v7400, %v7376
        %v7641 = vpack.c.b16 %v7401, %v7377
        %v7642 = vpack.c.b16 %v7402, %v7378
        %v7643 = vpack.c.b16 %v7403, %v7379
        %v7644 = vpack.c.b16 %v7404, %v7380
        %v7645 = vpack.c.b16 %v7405, %v7381
        %v7646 = vpack.c.b16 %v7406, %v7382
        %v7647 = vpack.c.b16 %v7407, %v7383
        %v7648 = vpack.c.b16 %v7408, %v7384
        %v7649 = vpack.c.b16 %v7409, %v7385
        %v7650 = vpack.c.b16 %v7410, %v7386
        %v7651 = vpack.c.b16 %v7411, %v7387
        %v7652 = vpack.c.b16 %v7412, %v7388
        %v7653 = vpack.c.b16 %v7413, %v7389
        %v7654 = vpack.c.b16 %v7414, %v7390
        %v7655 = vpack.c.b16 %v7415, %v7391
        %v7656 = vpack.c.b16 %v7440, %v7416
        %v7657 = vpack.c.b16 %v7441, %v7417
        %v7658 = vpack.c.b16 %v7442, %v7418
        %v7659 = vpack.c.b16 %v7443, %v7419
        %v7660 = vpack.c.b16 %v7444, %v7420
        %v7661 = vpack.c.b16 %v7445, %v7421
        %v7662 = vpack.c.b16 %v7446, %v7422
        %v7663 = vpack.c.b16 %v7447, %v7423
        %v7664 = vpack.c.b16 %v7448, %v7424
        %v7665 = vpack.c.b16 %v7449, %v7425
        %v7666 = vpack.c.b16 %v7450, %v7426
        %v7667 = vpack.c.b16 %v7451, %v7427
        %v7668 = vpack.c.b16 %v7452, %v7428
        %v7669 = vpack.c.b16 %v7453, %v7429
        %v7670 = vpack.c.b16 %v7454, %v7430
        %v7671 = vpack.c.b16 %v7455, %v7431
        %v7672 = vpack.c.b16 %v7456, %v7432
        %v7673 = vpack.c.b16 %v7457, %v7433
        %v7674 = vpack.c.b16 %v7458, %v7434
        %v7675 = vpack.c.b16 %v7459, %v7435
        %v7676 = vpack.c.b16 %v7460, %v7436
        %v7677 = vpack.c.b16 %v7461, %v7437
        %v7678 = vpack.c.b16 %v7462, %v7438
        %v7679 = vpack.c.b16 %v7463, %v7439
        %v7680 = vpack.c.b16 %v7488, %v7464
        %v7681 = vpack.c.b16 %v7489, %v7465
        %v7682 = vpack.c.b16 %v7490, %v7466
        %v7683 = vpack.c.b16 %v7491, %v7467
        %v7684 = vpack.c.b16 %v7492, %v7468
        %v7685 = vpack.c.b16 %v7493, %v7469
        %v7686 = vpack.c.b16 %v7494, %v7470
        %v7687 = vpack.c.b16 %v7495, %v7471
        %v7688 = vpack.c.b16 %v7496, %v7472
        %v7689 = vpack.c.b16 %v7497, %v7473
        %v7690 = vpack.c.b16 %v7498, %v7474
        %v7691 = vpack.c.b16 %v7499, %v7475
        %v7692 = vpack.c.b16 %v7500, %v7476
        %v7693 = vpack.c.b16 %v7501, %v7477
        %v7694 = vpack.c.b16 %v7502, %v7478
        %v7695 = vpack.c.b16 %v7503, %v7479
        %v7696 = vpack.c.b16 %v7504, %v7480
        %v7697 = vpack.c.b16 %v7505, %v7481
        %v7698 = vpack.c.b16 %v7506, %v7482
        %v7699 = vpack.c.b16 %v7507, %v7483
        %v7700 = vpack.c.b16 %v7508, %v7484
        %v7701 = vpack.c.b16 %v7509, %v7485
        %v7702 = vpack.c.b16 %v7510, %v7486
        %v7703 = vpack.c.b16 %v7511, %v7487
        %v7704 = vpack.c.b16 %v7536, %v7512
        %v7705 = vpack.c.b16 %v7537, %v7513
        %v7706 = vpack.c.b16 %v7538, %v7514
        %v7707 = vpack.c.b16 %v7539, %v7515
        %v7708 = vpack.c.b16 %v7540, %v7516
        %v7709 = vpack.c.b16 %v7541, %v7517
        %v7710 = vpack.c.b16 %v7542, %v7518
        %v7711 = vpack.c.b16 %v7543, %v7519
        %v7712 = vpack.c.b16 %v7544, %v7520
        %v7713 = vpack.c.b16 %v7545, %v7521
        %v7714 = vpack.c.b16 %v7546, %v7522
        %v7715 = vpack.c.b16 %v7547, %v7523
        %v7716 = vpack.c.b16 %v7548, %v7524
        %v7717 = vpack.c.b16 %v7549, %v7525
        %v7718 = vpack.c.b16 %v7550, %v7526
        %v7719 = vpack.c.b16 %v7551, %v7527
        %v7720 = vpack.c.b16 %v7552, %v7528
        %v7721 = vpack.c.b16 %v7553, %v7529
        %v7722 = vpack.c.b16 %v7554, %v7530
        %v7723 = vpack.c.b16 %v7555, %v7531
        %v7724 = vpack.c.b16 %v7556, %v7532
        %v7725 = vpack.c.b16 %v7557, %v7533
        %v7726 = vpack.c.b16 %v7558, %v7534
        %v7727 = vpack.c.b16 %v7559, %v7535
        %v7728 = vpack.c.b16 %v7560, %v7560
        %v7729 = vpack.c.b16 %v7561, %v7561
        %v7730 = vpack.c.b16 %v7562, %v7562
        %v7731 = vpack.c.b16 %v7563, %v7563
        %v7732 = vpack.c.b16 %v7564, %v7564
        %v7733 = vpack.c.b16 %v7565, %v7565
        %v7734 = vpack.c.b16 %v7566, %v7566
        %v7735 = vpack.c.b16 %v7567, %v7567
        %v7736 = vpack.c.b16 %v7568, %v7568
        %v7737 = vpack.c.b16 %v7569, %v7569
        %v7738 = vpack.c.b16 %v7570, %v7570
        %v7739 = vpack.c.b16 %v7571, %v7571
        %v7740 = vpack.c.b16 %v7572, %v7572
        %v7741 = vpack.c.b16 %v7573, %v7573
        %v7742 = vpack.c.b16 %v7574, %v7574
        %v7743 = vpack.c.b16 %v7575, %v7575
        %v7744 = vpack.c.b16 %v7576, %v7576
        %v7745 = vpack.c.b16 %v7577, %v7577
        %v7746 = vpack.c.b16 %v7578, %v7578
        %v7747 = vpack.c.b16 %v7579, %v7579
        %v7748 = vpack.c.b16 %v7580, %v7580
        %v7749 = vpack.c.b16 %v7581, %v7581
        %v7750 = vpack.c.b16 %v7582, %v7582
        %v7751 = vpack.c.b16 %v7583, %v7583
        %7920 = vmatprep.subr.bf16.mxu0 %v7585
        %7921 = vmatpush1.bf16.xpose.msra.mxu0 %v7584
        %7922 = vmatprep.subr.bf16.mxu0 %v7609
        %7923 = vmatpush1.bf16.xpose.msra.mxu0 %v7608
        %7924 = vmatprep.subr.bf16.mxu0 %v7633
        %7925 = vmatpush1.bf16.xpose.msra.mxu0 %v7632
        %7926 = vmatprep.subr.bf16.mxu0 %v7657
        %7927 = vmatpush1.bf16.xpose.msra.mxu0 %v7656
        %7928 = vmatprep.subr.bf16.mxu0 %v7681
        %7929 = vmatpush1.bf16.xpose.msra.mxu0 %v7680
        %7930 = vmatprep.subr.bf16.mxu0 %v7705
        %7931 = vmatpush1.bf16.xpose.msra.mxu0 %v7704
        %7932 = vmatprep.subr.bf16.mxu0 %v7729
        %7933 = vmatpush1.bf16.xpose.msra.mxu0 %v7728
        %7934 = vmatprep.subr.bf16.mxu0 0
        %7935 = vmatpush1.bf16.xpose.msra.mxu0 0
        %7936 = vmatprep.subr.bf16.mxu0 0
        %7937 = vmatpush1.bf16.xpose.msra.mxu0 0
        %7938 = vmatprep.subr.bf16.mxu0 0
        %7939 = vmatpush1.bf16.xpose.msra.mxu0 0
        %7940 = vmatprep.subr.bf16.mxu0 0
        %7941 = vmatpush1.bf16.xpose.msra.mxu0 0
        %7942 = vmatprep.subr.bf16.mxu0 0
        %7943 = vmatpush1.bf16.xpose.msra.mxu0 0
        %7944 = vmatprep.subr.bf16.mxu0 0
        %7945 = vmatpush1.bf16.xpose.msra.mxu0 0
        %7946 = vmatprep.subr.bf16.mxu0 0
        %7947 = vmatpush1.bf16.xpose.msra.mxu0 0
        %7948 = vmatprep.subr.bf16.mxu0 0
        %7949 = vmatpush1.bf16.xpose.msra.mxu0 0
        %7950 = vmatprep.subr.bf16.mxu0 0
        %7951 = vmatpush1.bf16.xpose.msra.mxu0 0
        %7952 = vmatprep.mubr.bf16.mxu0 %v7021
        %7953 = vmatmul.mubr.bf16.gmra.mrb[0].mxu0 %v7020
        %v7954 = vpop.f32.mrb[0].mxu0
        %v7955 = vadd.f32 0.0, %v7954
        %v7956 = vpop.f32.mrb[0].mxu0
        %v7957 = vpop.f32.mrb[0].mxu0
        %v7958 = vadd.f32 0.0, %v7957
        %v7959 = vpop.f32.mrb[0].mxu0
        %7960 = vmatprep.mubr.bf16.mxu0 %v7045
        %7961 = vmatmul.mubr.bf16.gmra.mrb[0].mxu0 %v7044
        %v7962 = vpop.f32.mrb[0].mxu0
        %v7963 = vadd.f32 0.0, %v7962
        %v7964 = vpop.f32.mrb[0].mxu0
        %v7965 = vpop.f32.mrb[0].mxu0
        %v7966 = vadd.f32 0.0, %v7965
        %v7967 = vpop.f32.mrb[0].mxu0
        %7968 = vdwg.mxu0
        %7969 = vmatprep.subr.bf16.mxu0 %v7587
        %7970 = vmatpush1.bf16.xpose.msra.mxu0 %v7586
        %7971 = vmatprep.subr.bf16.mxu0 %v7611
        %7972 = vmatpush1.bf16.xpose.msra.mxu0 %v7610
        %7973 = vmatprep.subr.bf16.mxu0 %v7635
        %7974 = vmatpush1.bf16.xpose.msra.mxu0 %v7634
        %7975 = vmatprep.subr.bf16.mxu0 %v7659
        %7976 = vmatpush1.bf16.xpose.msra.mxu0 %v7658
        %7977 = vmatprep.subr.bf16.mxu0 %v7683
        %7978 = vmatpush1.bf16.xpose.msra.mxu0 %v7682
        %7979 = vmatprep.subr.bf16.mxu0 %v7707
        %7980 = vmatpush1.bf16.xpose.msra.mxu0 %v7706
        %7981 = vmatprep.subr.bf16.mxu0 %v7731
        %7982 = vmatpush1.bf16.xpose.msra.mxu0 %v7730
        %7983 = vmatprep.subr.bf16.mxu0 0
        %7984 = vmatpush1.bf16.xpose.msra.mxu0 0
        %7985 = vmatprep.subr.bf16.mxu0 0
        %7986 = vmatpush1.bf16.xpose.msra.mxu0 0
        %7987 = vmatprep.subr.bf16.mxu0 0
        %7988 = vmatpush1.bf16.xpose.msra.mxu0 0
        %7989 = vmatprep.subr.bf16.mxu0 0
        %7990 = vmatpush1.bf16.xpose.msra.mxu0 0
        %7991 = vmatprep.subr.bf16.mxu0 0
        %7992 = vmatpush1.bf16.xpose.msra.mxu0 0
        %7993 = vmatprep.subr.bf16.mxu0 0
        %7994 = vmatpush1.bf16.xpose.msra.mxu0 0
        %7995 = vmatprep.subr.bf16.mxu0 0
        %7996 = vmatpush1.bf16.xpose.msra.mxu0 0
        %7997 = vmatprep.subr.bf16.mxu0 0
        %7998 = vmatpush1.bf16.xpose.msra.mxu0 0
        %7999 = vmatprep.subr.bf16.mxu0 0
        %8000 = vmatpush1.bf16.xpose.msra.mxu0 0
        %8001 = vmatprep.mubr.bf16.mxu0 %v7023
        %8002 = vmatmul.mubr.bf16.gmra.mrb[0].mxu0 %v7022
        %v8003 = vpop.f32.mrb[0].mxu0
        %v8004 = vadd.f32 %v7955, %v8003
        %v8005 = vpop.f32.mrb[0].mxu0
        %v8006 = vpop.f32.mrb[0].mxu0
        %v8007 = vadd.f32 %v7958, %v8006
        %v8008 = vpop.f32.mrb[0].mxu0
        %8009 = vmatprep.mubr.bf16.mxu0 %v7047
        %8010 = vmatmul.mubr.bf16.gmra.mrb[0].mxu0 %v7046
        %v8011 = vpop.f32.mrb[0].mxu0
        %v8012 = vadd.f32 %v7963, %v8011
        %v8013 = vpop.f32.mrb[0].mxu0
        %v8014 = vpop.f32.mrb[0].mxu0
        %v8015 = vadd.f32 %v7966, %v8014
        %v8016 = vpop.f32.mrb[0].mxu0
        %8017 = vdwg.mxu0
        %8018 = vmatprep.subr.bf16.mxu0 %v7589
        %8019 = vmatpush1.bf16.xpose.msra.mxu0 %v7588
        %8020 = vmatprep.subr.bf16.mxu0 %v7613
        %8021 = vmatpush1.bf16.xpose.msra.mxu0 %v7612
        %8022 = vmatprep.subr.bf16.mxu0 %v7637
        %8023 = vmatpush1.bf16.xpose.msra.mxu0 %v7636
        %8024 = vmatprep.subr.bf16.mxu0 %v7661
        %8025 = vmatpush1.bf16.xpose.msra.mxu0 %v7660
        %8026 = vmatprep.subr.bf16.mxu0 %v7685
        %8027 = vmatpush1.bf16.xpose.msra.mxu0 %v7684
        %8028 = vmatprep.subr.bf16.mxu0 %v7709
        %8029 = vmatpush1.bf16.xpose.msra.mxu0 %v7708
        %8030 = vmatprep.subr.bf16.mxu0 %v7733
        %8031 = vmatpush1.bf16.xpose.msra.mxu0 %v7732
        %8032 = vmatprep.subr.bf16.mxu0 0
        %8033 = vmatpush1.bf16.xpose.msra.mxu0 0
        %8034 = vmatprep.subr.bf16.mxu0 0
        %8035 = vmatpush1.bf16.xpose.msra.mxu0 0
        %8036 = vmatprep.subr.bf16.mxu0 0
        %8037 = vmatpush1.bf16.xpose.msra.mxu0 0
        %8038 = vmatprep.subr.bf16.mxu0 0
        %8039 = vmatpush1.bf16.xpose.msra.mxu0 0
        %8040 = vmatprep.subr.bf16.mxu0 0
        %8041 = vmatpush1.bf16.xpose.msra.mxu0 0
        %8042 = vmatprep.subr.bf16.mxu0 0
        %8043 = vmatpush1.bf16.xpose.msra.mxu0 0
        %8044 = vmatprep.subr.bf16.mxu0 0
        %8045 = vmatpush1.bf16.xpose.msra.mxu0 0
        %8046 = vmatprep.subr.bf16.mxu0 0
        %8047 = vmatpush1.bf16.xpose.msra.mxu0 0
        %8048 = vmatprep.subr.bf16.mxu0 0
        %8049 = vmatpush1.bf16.xpose.msra.mxu0 0
        %8050 = vmatprep.mubr.bf16.mxu0 %v7025
        %8051 = vmatmul.mubr.bf16.gmra.mrb[0].mxu0 %v7024
        %v8052 = vpop.f32.mrb[0].mxu0
        %v8053 = vadd.f32 %v8004, %v8052
        %v8054 = vpop.f32.mrb[0].mxu0
        %v8055 = vpop.f32.mrb[0].mxu0
        %v8056 = vadd.f32 %v8007, %v8055
        %v8057 = vpop.f32.mrb[0].mxu0
        %8058 = vmatprep.mubr.bf16.mxu0 %v7049
        %8059 = vmatmul.mubr.bf16.gmra.mrb[0].mxu0 %v7048
        %v8060 = vpop.f32.mrb[0].mxu0
        %v8061 = vadd.f32 %v8012, %v8060
        %v8062 = vpop.f32.mrb[0].mxu0
        %v8063 = vpop.f32.mrb[0].mxu0
        %v8064 = vadd.f32 %v8015, %v8063
        %v8065 = vpop.f32.mrb[0].mxu0
        %8066 = vdwg.mxu0
        %8067 = vmatprep.subr.bf16.mxu0 %v7591
        %8068 = vmatpush1.bf16.xpose.msra.mxu0 %v7590
        %8069 = vmatprep.subr.bf16.mxu0 %v7615
        %8070 = vmatpush1.bf16.xpose.msra.mxu0 %v7614
        %8071 = vmatprep.subr.bf16.mxu0 %v7639
        %8072 = vmatpush1.bf16.xpose.msra.mxu0 %v7638
        %8073 = vmatprep.subr.bf16.mxu0 %v7663
        %8074 = vmatpush1.bf16.xpose.msra.mxu0 %v7662
        %8075 = vmatprep.subr.bf16.mxu0 %v7687
        %8076 = vmatpush1.bf16.xpose.msra.mxu0 %v7686
        %8077 = vmatprep.subr.bf16.mxu0 %v7711
        %8078 = vmatpush1.bf16.xpose.msra.mxu0 %v7710
        %8079 = vmatprep.subr.bf16.mxu0 %v7735
        %8080 = vmatpush1.bf16.xpose.msra.mxu0 %v7734
        %8081 = vmatprep.subr.bf16.mxu0 0
        %8082 = vmatpush1.bf16.xpose.msra.mxu0 0
        %8083 = vmatprep.subr.bf16.mxu0 0
        %8084 = vmatpush1.bf16.xpose.msra.mxu0 0
        %8085 = vmatprep.subr.bf16.mxu0 0
        %8086 = vmatpush1.bf16.xpose.msra.mxu0 0
        %8087 = vmatprep.subr.bf16.mxu0 0
        %8088 = vmatpush1.bf16.xpose.msra.mxu0 0
        %8089 = vmatprep.subr.bf16.mxu0 0
        %8090 = vmatpush1.bf16.xpose.msra.mxu0 0
        %8091 = vmatprep.subr.bf16.mxu0 0
        %8092 = vmatpush1.bf16.xpose.msra.mxu0 0
        %8093 = vmatprep.subr.bf16.mxu0 0
        %8094 = vmatpush1.bf16.xpose.msra.mxu0 0
        %8095 = vmatprep.subr.bf16.mxu0 0
        %8096 = vmatpush1.bf16.xpose.msra.mxu0 0
        %8097 = vmatprep.subr.bf16.mxu0 0
        %8098 = vmatpush1.bf16.xpose.msra.mxu0 0
        %8099 = vmatprep.mubr.bf16.mxu0 %v7027
        %8100 = vmatmul.mubr.bf16.gmra.mrb[0].mxu0 %v7026
        %v8101 = vpop.f32.mrb[0].mxu0
        %v8102 = vadd.f32 %v8053, %v8101
        %v8103 = vpop.f32.mrb[0].mxu0
        %v8104 = vpop.f32.mrb[0].mxu0
        %v8105 = vadd.f32 %v8056, %v8104
        %v8106 = vpop.f32.mrb[0].mxu0
        %8107 = vmatprep.mubr.bf16.mxu0 %v7051
        %8108 = vmatmul.mubr.bf16.gmra.mrb[0].mxu0 %v7050
        %v8109 = vpop.f32.mrb[0].mxu0
        %v8110 = vadd.f32 %v8061, %v8109
        %v8111 = vpop.f32.mrb[0].mxu0
        %v8112 = vpop.f32.mrb[0].mxu0
        %v8113 = vadd.f32 %v8064, %v8112
        %v8114 = vpop.f32.mrb[0].mxu0
        %8115 = vdwg.mxu0
        %8116 = vmatprep.subr.bf16.mxu0 %v7593
        %8117 = vmatpush1.bf16.xpose.msra.mxu0 %v7592
        %8118 = vmatprep.subr.bf16.mxu0 %v7617
        %8119 = vmatpush1.bf16.xpose.msra.mxu0 %v7616
        %8120 = vmatprep.subr.bf16.mxu0 %v7641
        %8121 = vmatpush1.bf16.xpose.msra.mxu0 %v7640
        %8122 = vmatprep.subr.bf16.mxu0 %v7665
        %8123 = vmatpush1.bf16.xpose.msra.mxu0 %v7664
        %8124 = vmatprep.subr.bf16.mxu0 %v7689
        %8125 = vmatpush1.bf16.xpose.msra.mxu0 %v7688
        %8126 = vmatprep.subr.bf16.mxu0 %v7713
        %8127 = vmatpush1.bf16.xpose.msra.mxu0 %v7712
        %8128 = vmatprep.subr.bf16.mxu0 %v7737
        %8129 = vmatpush1.bf16.xpose.msra.mxu0 %v7736
        %8130 = vmatprep.subr.bf16.mxu0 0
        %8131 = vmatpush1.bf16.xpose.msra.mxu0 0
        %8132 = vmatprep.subr.bf16.mxu0 0
        %8133 = vmatpush1.bf16.xpose.msra.mxu0 0
        %8134 = vmatprep.subr.bf16.mxu0 0
        %8135 = vmatpush1.bf16.xpose.msra.mxu0 0
        %8136 = vmatprep.subr.bf16.mxu0 0
        %8137 = vmatpush1.bf16.xpose.msra.mxu0 0
        %8138 = vmatprep.subr.bf16.mxu0 0
        %8139 = vmatpush1.bf16.xpose.msra.mxu0 0
        %8140 = vmatprep.subr.bf16.mxu0 0
        %8141 = vmatpush1.bf16.xpose.msra.mxu0 0
        %8142 = vmatprep.subr.bf16.mxu0 0
        %8143 = vmatpush1.bf16.xpose.msra.mxu0 0
        %8144 = vmatprep.subr.bf16.mxu0 0
        %8145 = vmatpush1.bf16.xpose.msra.mxu0 0
        %8146 = vmatprep.subr.bf16.mxu0 0
        %8147 = vmatpush1.bf16.xpose.msra.mxu0 0
        %8148 = vmatprep.mubr.bf16.mxu0 %v7029
        %8149 = vmatmul.mubr.bf16.gmra.mrb[0].mxu0 %v7028
        %v8150 = vpop.f32.mrb[0].mxu0
        %v8151 = vadd.f32 %v8102, %v8150
        %v8152 = vpop.f32.mrb[0].mxu0
        %v8153 = vpop.f32.mrb[0].mxu0
        %v8154 = vadd.f32 %v8105, %v8153
        %v8155 = vpop.f32.mrb[0].mxu0
        %8156 = vmatprep.mubr.bf16.mxu0 %v7053
        %8157 = vmatmul.mubr.bf16.gmra.mrb[0].mxu0 %v7052
        %v8158 = vpop.f32.mrb[0].mxu0
        %v8159 = vadd.f32 %v8110, %v8158
        %v8160 = vpop.f32.mrb[0].mxu0
        %v8161 = vpop.f32.mrb[0].mxu0
        %v8162 = vadd.f32 %v8113, %v8161
        %v8163 = vpop.f32.mrb[0].mxu0
        %8164 = vdwg.mxu0
        %8165 = vmatprep.subr.bf16.mxu0 %v7595
        %8166 = vmatpush1.bf16.xpose.msra.mxu0 %v7594
        %8167 = vmatprep.subr.bf16.mxu0 %v7619
        %8168 = vmatpush1.bf16.xpose.msra.mxu0 %v7618
        %8169 = vmatprep.subr.bf16.mxu0 %v7643
        %8170 = vmatpush1.bf16.xpose.msra.mxu0 %v7642
        %8171 = vmatprep.subr.bf16.mxu0 %v7667
        %8172 = vmatpush1.bf16.xpose.msra.mxu0 %v7666
        %8173 = vmatprep.subr.bf16.mxu0 %v7691
        %8174 = vmatpush1.bf16.xpose.msra.mxu0 %v7690
        %8175 = vmatprep.subr.bf16.mxu0 %v7715
        %8176 = vmatpush1.bf16.xpose.msra.mxu0 %v7714
        %8177 = vmatprep.subr.bf16.mxu0 %v7739
        %8178 = vmatpush1.bf16.xpose.msra.mxu0 %v7738
        %8179 = vmatprep.subr.bf16.mxu0 0
        %8180 = vmatpush1.bf16.xpose.msra.mxu0 0
        %8181 = vmatprep.subr.bf16.mxu0 0
        %8182 = vmatpush1.bf16.xpose.msra.mxu0 0
        %8183 = vmatprep.subr.bf16.mxu0 0
        %8184 = vmatpush1.bf16.xpose.msra.mxu0 0
        %8185 = vmatprep.subr.bf16.mxu0 0
        %8186 = vmatpush1.bf16.xpose.msra.mxu0 0
        %8187 = vmatprep.subr.bf16.mxu0 0
        %8188 = vmatpush1.bf16.xpose.msra.mxu0 0
        %8189 = vmatprep.subr.bf16.mxu0 0
        %8190 = vmatpush1.bf16.xpose.msra.mxu0 0
        %8191 = vmatprep.subr.bf16.mxu0 0
        %8192 = vmatpush1.bf16.xpose.msra.mxu0 0
        %8193 = vmatprep.subr.bf16.mxu0 0
        %8194 = vmatpush1.bf16.xpose.msra.mxu0 0
        %8195 = vmatprep.subr.bf16.mxu0 0
        %8196 = vmatpush1.bf16.xpose.msra.mxu0 0
        %8197 = vmatprep.mubr.bf16.mxu0 %v7031
        %8198 = vmatmul.mubr.bf16.gmra.mrb[0].mxu0 %v7030
        %v8199 = vpop.f32.mrb[0].mxu0
        %v8200 = vadd.f32 %v8151, %v8199
        %v8201 = vpop.f32.mrb[0].mxu0
        %v8202 = vpop.f32.mrb[0].mxu0
        %v8203 = vadd.f32 %v8154, %v8202
        %v8204 = vpop.f32.mrb[0].mxu0
        %8205 = vmatprep.mubr.bf16.mxu0 %v7055
        %8206 = vmatmul.mubr.bf16.gmra.mrb[0].mxu0 %v7054
        %v8207 = vpop.f32.mrb[0].mxu0
        %v8208 = vadd.f32 %v8159, %v8207
        %v8209 = vpop.f32.mrb[0].mxu0
        %v8210 = vpop.f32.mrb[0].mxu0
        %v8211 = vadd.f32 %v8162, %v8210
        %v8212 = vpop.f32.mrb[0].mxu0
        %8213 = vdwg.mxu0
        %8214 = vmatprep.subr.bf16.mxu0 %v7597
        %8215 = vmatpush1.bf16.xpose.msra.mxu0 %v7596
        %8216 = vmatprep.subr.bf16.mxu0 %v7621
        %8217 = vmatpush1.bf16.xpose.msra.mxu0 %v7620
        %8218 = vmatprep.subr.bf16.mxu0 %v7645
        %8219 = vmatpush1.bf16.xpose.msra.mxu0 %v7644
        %8220 = vmatprep.subr.bf16.mxu0 %v7669
        %8221 = vmatpush1.bf16.xpose.msra.mxu0 %v7668
        %8222 = vmatprep.subr.bf16.mxu0 %v7693
        %8223 = vmatpush1.bf16.xpose.msra.mxu0 %v7692
        %8224 = vmatprep.subr.bf16.mxu0 %v7717
        %8225 = vmatpush1.bf16.xpose.msra.mxu0 %v7716
        %8226 = vmatprep.subr.bf16.mxu0 %v7741
        %8227 = vmatpush1.bf16.xpose.msra.mxu0 %v7740
        %8228 = vmatprep.subr.bf16.mxu0 0
        %8229 = vmatpush1.bf16.xpose.msra.mxu0 0
        %8230 = vmatprep.subr.bf16.mxu0 0
        %8231 = vmatpush1.bf16.xpose.msra.mxu0 0
        %8232 = vmatprep.subr.bf16.mxu0 0
        %8233 = vmatpush1.bf16.xpose.msra.mxu0 0
        %8234 = vmatprep.subr.bf16.mxu0 0
        %8235 = vmatpush1.bf16.xpose.msra.mxu0 0
        %8236 = vmatprep.subr.bf16.mxu0 0
        %8237 = vmatpush1.bf16.xpose.msra.mxu0 0
        %8238 = vmatprep.subr.bf16.mxu0 0
        %8239 = vmatpush1.bf16.xpose.msra.mxu0 0
        %8240 = vmatprep.subr.bf16.mxu0 0
        %8241 = vmatpush1.bf16.xpose.msra.mxu0 0
        %8242 = vmatprep.subr.bf16.mxu0 0
        %8243 = vmatpush1.bf16.xpose.msra.mxu0 0
        %8244 = vmatprep.subr.bf16.mxu0 0
        %8245 = vmatpush1.bf16.xpose.msra.mxu0 0
        %8246 = vmatprep.mubr.bf16.mxu0 %v7033
        %8247 = vmatmul.mubr.bf16.gmra.mrb[0].mxu0 %v7032
        %v8248 = vpop.f32.mrb[0].mxu0
        %v8249 = vadd.f32 %v8200, %v8248
        %v8250 = vpop.f32.mrb[0].mxu0
        %v8251 = vpop.f32.mrb[0].mxu0
        %v8252 = vadd.f32 %v8203, %v8251
        %v8253 = vpop.f32.mrb[0].mxu0
        %8254 = vmatprep.mubr.bf16.mxu0 %v7057
        %8255 = vmatmul.mubr.bf16.gmra.mrb[0].mxu0 %v7056
        %v8256 = vpop.f32.mrb[0].mxu0
        %v8257 = vadd.f32 %v8208, %v8256
        %v8258 = vpop.f32.mrb[0].mxu0
        %v8259 = vpop.f32.mrb[0].mxu0
        %v8260 = vadd.f32 %v8211, %v8259
        %v8261 = vpop.f32.mrb[0].mxu0
        %8262 = vdwg.mxu0
        %8263 = vmatprep.subr.bf16.mxu0 %v7599
        %8264 = vmatpush1.bf16.xpose.msra.mxu0 %v7598
        %8265 = vmatprep.subr.bf16.mxu0 %v7623
        %8266 = vmatpush1.bf16.xpose.msra.mxu0 %v7622
        %8267 = vmatprep.subr.bf16.mxu0 %v7647
        %8268 = vmatpush1.bf16.xpose.msra.mxu0 %v7646
        %8269 = vmatprep.subr.bf16.mxu0 %v7671
        %8270 = vmatpush1.bf16.xpose.msra.mxu0 %v7670
        %8271 = vmatprep.subr.bf16.mxu0 %v7695
        %8272 = vmatpush1.bf16.xpose.msra.mxu0 %v7694
        %8273 = vmatprep.subr.bf16.mxu0 %v7719
        %8274 = vmatpush1.bf16.xpose.msra.mxu0 %v7718
        %8275 = vmatprep.subr.bf16.mxu0 %v7743
        %8276 = vmatpush1.bf16.xpose.msra.mxu0 %v7742
        %8277 = vmatprep.subr.bf16.mxu0 0
        %8278 = vmatpush1.bf16.xpose.msra.mxu0 0
        %8279 = vmatprep.subr.bf16.mxu0 0
        %8280 = vmatpush1.bf16.xpose.msra.mxu0 0
        %8281 = vmatprep.subr.bf16.mxu0 0
        %8282 = vmatpush1.bf16.xpose.msra.mxu0 0
        %8283 = vmatprep.subr.bf16.mxu0 0
        %8284 = vmatpush1.bf16.xpose.msra.mxu0 0
        %8285 = vmatprep.subr.bf16.mxu0 0
        %8286 = vmatpush1.bf16.xpose.msra.mxu0 0
        %8287 = vmatprep.subr.bf16.mxu0 0
        %8288 = vmatpush1.bf16.xpose.msra.mxu0 0
        %8289 = vmatprep.subr.bf16.mxu0 0
        %8290 = vmatpush1.bf16.xpose.msra.mxu0 0
        %8291 = vmatprep.subr.bf16.mxu0 0
        %8292 = vmatpush1.bf16.xpose.msra.mxu0 0
        %8293 = vmatprep.subr.bf16.mxu0 0
        %8294 = vmatpush1.bf16.xpose.msra.mxu0 0
        %8295 = vmatprep.mubr.bf16.mxu0 %v7035
        %8296 = vmatmul.mubr.bf16.gmra.mrb[0].mxu0 %v7034
        %v8297 = vpop.f32.mrb[0].mxu0
        %v8298 = vadd.f32 %v8249, %v8297
        %v8299 = vpop.f32.mrb[0].mxu0
        %v8300 = vpop.f32.mrb[0].mxu0
        %v8301 = vadd.f32 %v8252, %v8300
        %v8302 = vpop.f32.mrb[0].mxu0
        %8303 = vmatprep.mubr.bf16.mxu0 %v7059
        %8304 = vmatmul.mubr.bf16.gmra.mrb[0].mxu0 %v7058
        %v8305 = vpop.f32.mrb[0].mxu0
        %v8306 = vadd.f32 %v8257, %v8305
        %v8307 = vpop.f32.mrb[0].mxu0
        %v8308 = vpop.f32.mrb[0].mxu0
        %v8309 = vadd.f32 %v8260, %v8308
        %v8310 = vpop.f32.mrb[0].mxu0
        %8311 = vdwg.mxu0
        %8312 = vmatprep.subr.bf16.mxu0 %v7601
        %8313 = vmatpush1.bf16.xpose.msra.mxu0 %v7600
        %8314 = vmatprep.subr.bf16.mxu0 %v7625
        %8315 = vmatpush1.bf16.xpose.msra.mxu0 %v7624
        %8316 = vmatprep.subr.bf16.mxu0 %v7649
        %8317 = vmatpush1.bf16.xpose.msra.mxu0 %v7648
        %8318 = vmatprep.subr.bf16.mxu0 %v7673
        %8319 = vmatpush1.bf16.xpose.msra.mxu0 %v7672
        %8320 = vmatprep.subr.bf16.mxu0 %v7697
        %8321 = vmatpush1.bf16.xpose.msra.mxu0 %v7696
        %8322 = vmatprep.subr.bf16.mxu0 %v7721
        %8323 = vmatpush1.bf16.xpose.msra.mxu0 %v7720
        %8324 = vmatprep.subr.bf16.mxu0 %v7745
        %8325 = vmatpush1.bf16.xpose.msra.mxu0 %v7744
        %8326 = vmatprep.subr.bf16.mxu0 0
        %8327 = vmatpush1.bf16.xpose.msra.mxu0 0
        %8328 = vmatprep.subr.bf16.mxu0 0
        %8329 = vmatpush1.bf16.xpose.msra.mxu0 0
        %8330 = vmatprep.subr.bf16.mxu0 0
        %8331 = vmatpush1.bf16.xpose.msra.mxu0 0
        %8332 = vmatprep.subr.bf16.mxu0 0
        %8333 = vmatpush1.bf16.xpose.msra.mxu0 0
        %8334 = vmatprep.subr.bf16.mxu0 0
        %8335 = vmatpush1.bf16.xpose.msra.mxu0 0
        %8336 = vmatprep.subr.bf16.mxu0 0
        %8337 = vmatpush1.bf16.xpose.msra.mxu0 0
        %8338 = vmatprep.subr.bf16.mxu0 0
        %8339 = vmatpush1.bf16.xpose.msra.mxu0 0
        %8340 = vmatprep.subr.bf16.mxu0 0
        %8341 = vmatpush1.bf16.xpose.msra.mxu0 0
        %8342 = vmatprep.subr.bf16.mxu0 0
        %8343 = vmatpush1.bf16.xpose.msra.mxu0 0
        %8344 = vmatprep.mubr.bf16.mxu0 %v7037
        %8345 = vmatmul.mubr.bf16.gmra.mrb[0].mxu0 %v7036
        %v8346 = vpop.f32.mrb[0].mxu0
        %v8347 = vadd.f32 %v8298, %v8346
        %v8348 = vpop.f32.mrb[0].mxu0
        %v8349 = vpop.f32.mrb[0].mxu0
        %v8350 = vadd.f32 %v8301, %v8349
        %v8351 = vpop.f32.mrb[0].mxu0
        %8352 = vmatprep.mubr.bf16.mxu0 %v7061
        %8353 = vmatmul.mubr.bf16.gmra.mrb[0].mxu0 %v7060
        %v8354 = vpop.f32.mrb[0].mxu0
        %v8355 = vadd.f32 %v8306, %v8354
        %v8356 = vpop.f32.mrb[0].mxu0
        %v8357 = vpop.f32.mrb[0].mxu0
        %v8358 = vadd.f32 %v8309, %v8357
        %v8359 = vpop.f32.mrb[0].mxu0
        %8360 = vdwg.mxu0
        %8361 = vmatprep.subr.bf16.mxu0 %v7603
        %8362 = vmatpush1.bf16.xpose.msra.mxu0 %v7602
        %8363 = vmatprep.subr.bf16.mxu0 %v7627
        %8364 = vmatpush1.bf16.xpose.msra.mxu0 %v7626
        %8365 = vmatprep.subr.bf16.mxu0 %v7651
        %8366 = vmatpush1.bf16.xpose.msra.mxu0 %v7650
        %8367 = vmatprep.subr.bf16.mxu0 %v7675
        %8368 = vmatpush1.bf16.xpose.msra.mxu0 %v7674
        %8369 = vmatprep.subr.bf16.mxu0 %v7699
        %8370 = vmatpush1.bf16.xpose.msra.mxu0 %v7698
        %8371 = vmatprep.subr.bf16.mxu0 %v7723
        %8372 = vmatpush1.bf16.xpose.msra.mxu0 %v7722
        %8373 = vmatprep.subr.bf16.mxu0 %v7747
        %8374 = vmatpush1.bf16.xpose.msra.mxu0 %v7746
        %8375 = vmatprep.subr.bf16.mxu0 0
        %8376 = vmatpush1.bf16.xpose.msra.mxu0 0
        %8377 = vmatprep.subr.bf16.mxu0 0
        %8378 = vmatpush1.bf16.xpose.msra.mxu0 0
        %8379 = vmatprep.subr.bf16.mxu0 0
        %8380 = vmatpush1.bf16.xpose.msra.mxu0 0
        %8381 = vmatprep.subr.bf16.mxu0 0
        %8382 = vmatpush1.bf16.xpose.msra.mxu0 0
        %8383 = vmatprep.subr.bf16.mxu0 0
        %8384 = vmatpush1.bf16.xpose.msra.mxu0 0
        %8385 = vmatprep.subr.bf16.mxu0 0
        %8386 = vmatpush1.bf16.xpose.msra.mxu0 0
        %8387 = vmatprep.subr.bf16.mxu0 0
        %8388 = vmatpush1.bf16.xpose.msra.mxu0 0
        %8389 = vmatprep.subr.bf16.mxu0 0
        %8390 = vmatpush1.bf16.xpose.msra.mxu0 0
        %8391 = vmatprep.subr.bf16.mxu0 0
        %8392 = vmatpush1.bf16.xpose.msra.mxu0 0
        %8393 = vmatprep.mubr.bf16.mxu0 %v7039
        %8394 = vmatmul.mubr.bf16.gmra.mrb[0].mxu0 %v7038
        %v8395 = vpop.f32.mrb[0].mxu0
        %v8396 = vadd.f32 %v8347, %v8395
        %v8397 = vpop.f32.mrb[0].mxu0
        %v8398 = vpop.f32.mrb[0].mxu0
        %v8399 = vadd.f32 %v8350, %v8398
        %v8400 = vpop.f32.mrb[0].mxu0
        %8401 = vmatprep.mubr.bf16.mxu0 %v7063
        %8402 = vmatmul.mubr.bf16.gmra.mrb[0].mxu0 %v7062
        %v8403 = vpop.f32.mrb[0].mxu0
        %v8404 = vadd.f32 %v8355, %v8403
        %v8405 = vpop.f32.mrb[0].mxu0
        %v8406 = vpop.f32.mrb[0].mxu0
        %v8407 = vadd.f32 %v8358, %v8406
        %v8408 = vpop.f32.mrb[0].mxu0
        %8409 = vdwg.mxu0
        %8410 = vmatprep.subr.bf16.mxu0 %v7605
        %8411 = vmatpush1.bf16.xpose.msra.mxu0 %v7604
        %8412 = vmatprep.subr.bf16.mxu0 %v7629
        %8413 = vmatpush1.bf16.xpose.msra.mxu0 %v7628
        %8414 = vmatprep.subr.bf16.mxu0 %v7653
        %8415 = vmatpush1.bf16.xpose.msra.mxu0 %v7652
        %8416 = vmatprep.subr.bf16.mxu0 %v7677
        %8417 = vmatpush1.bf16.xpose.msra.mxu0 %v7676
        %8418 = vmatprep.subr.bf16.mxu0 %v7701
        %8419 = vmatpush1.bf16.xpose.msra.mxu0 %v7700
        %8420 = vmatprep.subr.bf16.mxu0 %v7725
        %8421 = vmatpush1.bf16.xpose.msra.mxu0 %v7724
        %8422 = vmatprep.subr.bf16.mxu0 %v7749
        %8423 = vmatpush1.bf16.xpose.msra.mxu0 %v7748
        %8424 = vmatprep.subr.bf16.mxu0 0
        %8425 = vmatpush1.bf16.xpose.msra.mxu0 0
        %8426 = vmatprep.subr.bf16.mxu0 0
        %8427 = vmatpush1.bf16.xpose.msra.mxu0 0
        %8428 = vmatprep.subr.bf16.mxu0 0
        %8429 = vmatpush1.bf16.xpose.msra.mxu0 0
        %8430 = vmatprep.subr.bf16.mxu0 0
        %8431 = vmatpush1.bf16.xpose.msra.mxu0 0
        %8432 = vmatprep.subr.bf16.mxu0 0
        %8433 = vmatpush1.bf16.xpose.msra.mxu0 0
        %8434 = vmatprep.subr.bf16.mxu0 0
        %8435 = vmatpush1.bf16.xpose.msra.mxu0 0
        %8436 = vmatprep.subr.bf16.mxu0 0
        %8437 = vmatpush1.bf16.xpose.msra.mxu0 0
        %8438 = vmatprep.subr.bf16.mxu0 0
        %8439 = vmatpush1.bf16.xpose.msra.mxu0 0
        %8440 = vmatprep.subr.bf16.mxu0 0
        %8441 = vmatpush1.bf16.xpose.msra.mxu0 0
        %8442 = vmatprep.mubr.bf16.mxu0 %v7041
        %8443 = vmatmul.mubr.bf16.gmra.mrb[0].mxu0 %v7040
        %v8444 = vpop.f32.mrb[0].mxu0
        %v8445 = vadd.f32 %v8396, %v8444
        %v8446 = vpop.f32.mrb[0].mxu0
        %v8447 = vpop.f32.mrb[0].mxu0
        %v8448 = vadd.f32 %v8399, %v8447
        %v8449 = vpop.f32.mrb[0].mxu0
        %8450 = vmatprep.mubr.bf16.mxu0 %v7065
        %8451 = vmatmul.mubr.bf16.gmra.mrb[0].mxu0 %v7064
        %v8452 = vpop.f32.mrb[0].mxu0
        %v8453 = vadd.f32 %v8404, %v8452
        %v8454 = vpop.f32.mrb[0].mxu0
        %v8455 = vpop.f32.mrb[0].mxu0
        %v8456 = vadd.f32 %v8407, %v8455
        %v8457 = vpop.f32.mrb[0].mxu0
        %8458 = vdwg.mxu0
        %8459 = vmatprep.subr.bf16.mxu0 %v7607
        %8460 = vmatpush1.bf16.xpose.msra.mxu0 %v7606
        %8461 = vmatprep.subr.bf16.mxu0 %v7631
        %8462 = vmatpush1.bf16.xpose.msra.mxu0 %v7630
        %8463 = vmatprep.subr.bf16.mxu0 %v7655
        %8464 = vmatpush1.bf16.xpose.msra.mxu0 %v7654
        %8465 = vmatprep.subr.bf16.mxu0 %v7679
        %8466 = vmatpush1.bf16.xpose.msra.mxu0 %v7678
        %8467 = vmatprep.subr.bf16.mxu0 %v7703
        %8468 = vmatpush1.bf16.xpose.msra.mxu0 %v7702
        %8469 = vmatprep.subr.bf16.mxu0 %v7727
        %8470 = vmatpush1.bf16.xpose.msra.mxu0 %v7726
        %8471 = vmatprep.subr.bf16.mxu0 %v7751
        %8472 = vmatpush1.bf16.xpose.msra.mxu0 %v7750
        %8473 = vmatprep.subr.bf16.mxu0 0
        %8474 = vmatpush1.bf16.xpose.msra.mxu0 0
        %8475 = vmatprep.subr.bf16.mxu0 0
        %8476 = vmatpush1.bf16.xpose.msra.mxu0 0
        %8477 = vmatprep.subr.bf16.mxu0 0
        %8478 = vmatpush1.bf16.xpose.msra.mxu0 0
        %8479 = vmatprep.subr.bf16.mxu0 0
        %8480 = vmatpush1.bf16.xpose.msra.mxu0 0
        %8481 = vmatprep.subr.bf16.mxu0 0
        %8482 = vmatpush1.bf16.xpose.msra.mxu0 0
        %8483 = vmatprep.subr.bf16.mxu0 0
        %8484 = vmatpush1.bf16.xpose.msra.mxu0 0
        %8485 = vmatprep.subr.bf16.mxu0 0
        %8486 = vmatpush1.bf16.xpose.msra.mxu0 0
        %8487 = vmatprep.subr.bf16.mxu0 0
        %8488 = vmatpush1.bf16.xpose.msra.mxu0 0
        %8489 = vmatprep.subr.bf16.mxu0 0
        %8490 = vmatpush1.bf16.xpose.msra.mxu0 0
        %8491 = vmatprep.mubr.bf16.mxu0 %v7043
        %8492 = vmatmul.mubr.bf16.gmra.mrb[0].mxu0 %v7042
        %v8493 = vpop.f32.mrb[0].mxu0
        %v8494 = vadd.f32 %v8445, %v8493
        %v8495 = vpop.f32.mrb[0].mxu0
        %v8496 = vpop.f32.mrb[0].mxu0
        %v8497 = vadd.f32 %v8448, %v8496
        %v8498 = vpop.f32.mrb[0].mxu0
        %8499 = vmatprep.mubr.bf16.mxu0 %v7067
        %8500 = vmatmul.mubr.bf16.gmra.mrb[0].mxu0 %v7066
        %v8501 = vpop.f32.mrb[0].mxu0
        %v8502 = vadd.f32 %v8453, %v8501
        %v8503 = vpop.f32.mrb[0].mxu0
        %v8504 = vpop.f32.mrb[0].mxu0
        %v8505 = vadd.f32 %v8456, %v8504
        %v8506 = vpop.f32.mrb[0].mxu0
        %8507 = vdwg.mxu0
        %v8508 = vadd.f32 %v6872, %v8494
        %v8509 = vadd.f32 %v6873, %v8497
        %v8510 = vadd.f32 %v6874, %v8502
        %v8511 = vadd.f32 %v6875, %v8505
        %8512 = vst.msk [vmem:[#allocation2] sm:$0xff] %vm2217, %v8508
        %8513 = vst.msk [vmem:[#allocation2 + $0x8] sm:$0xff] %vm2217, %v8509
        %8514 = vst.msk [vmem:[#allocation2 + $0x10] sm:$0xff] %vm2217, %v8510
        %8515 = vst.msk [vmem:[#allocation2 + $0x18] sm:$0xff] %vm2217, %v8511
        %s8516 = sld [smem:[#allocation6 + %s6653]]
        %p8517 = scmp.eq.s32.totalorder %s8516, 1
        // Predicated region
        $region93: #{textcnn_forward.1} parent=39 // pred_check
          %p8518 = pneg %p8517
        $region94: #{textcnn_forward.1} parent=39 // pred_check_branch
          %8520 = sbr.rel (%p8518) target = $region96
        $region95: #{textcnn_forward.1} parent=39 // pred_region
          %s8521 = sld [smem:[#allocation7 + %s6653]]
          %v8522 = vld [vmem:[#allocation2] sm:$0xff]
          %v8523 = vld [vmem:[#allocation2 + $0x8] sm:$0xff]
          %v8524 = vld [vmem:[#allocation2 + $0x10] sm:$0xff]
          %v8525 = vld [vmem:[#allocation2 + $0x18] sm:$0xff]
          %v8526 = vld [vmem:[%s300] sm:$0x1]
          %v8528 = vlaneseq
          %v8529 = vshrl.u32 %v8528, 7
          %v8530 = vsub.s32 0, %v8529
          %v8531 = vrot.slane %v8526, %v8530
          %v8533 = vadd.f32 %v8522, %v8531
          %v8534 = vadd.f32 %v8523, %v8531
          %v8535 = vadd.f32 %v8524, %v8531
          %v8536 = vadd.f32 %v8525, %v8531
          %v8537 = vmax.f32 %v8533, 0.0
          %v8538 = vmax.f32 %v8534, 0.0
          %v8539 = vmax.f32 %v8535, 0.0
          %v8540 = vmax.f32 %v8536, 0.0
          %v8541 = vlaneseq
          %v8542 = vshrl.u32 %v8541, 7
          %v8543 = vadd.s32 %v8542, 8
          %v8544 = vadd.s32 %v8542, 16
          %v8545 = vadd.s32 %v8542, 24
          %s8546 = smul.u32 %s8521, 2
          %v8547 = vstv %s8546
          %vm8548 = vcmp.lt.s32.totalorder %v8542, %v8547
          %vm8549 = vcmp.lt.s32.totalorder %v8543, %v8547
          %vm8550 = vcmp.lt.s32.totalorder %v8544, %v8547
          %vm8551 = vcmp.lt.s32.totalorder %v8545, %v8547
          %v8552 = vsel %vm8548, %v8537, 0.0
          %v8553 = vsel %vm8549, %v8538, 0.0
          %v8554 = vsel %vm8550, %v8539, 0.0
          %v8555 = vsel %vm8551, %v8540, 0.0
          %vm8556 = vcmp.lt.s32.totalorder %v8542, 0
          %v8557 = vsub.s32 0, %v8542
          %v8558 = vsel %vm8556, %v8557, %v8542
          %v8559 = vshrl.u32 %v8558, 1
          %v8560 = vand.u32 %v8558, 1
          %v8561 = vsub.s32 0, %v8560
          %v8562 = vsel %vm8556, %v8561, %v8560
          %vm8563 = vcmp.lt.s32.totalorder %v8543, 0
          %v8564 = vsub.s32 0, %v8543
          %v8565 = vsel %vm8563, %v8564, %v8543
          %v8566 = vshrl.u32 %v8565, 1
          %v8567 = vand.u32 %v8565, 1
          %v8568 = vsub.s32 0, %v8567
          %v8569 = vsel %vm8563, %v8568, %v8567
          %vm8570 = vcmp.lt.s32.totalorder %v8544, 0
          %v8571 = vsub.s32 0, %v8544
          %v8572 = vsel %vm8570, %v8571, %v8544
          %v8573 = vshrl.u32 %v8572, 1
          %v8574 = vand.u32 %v8572, 1
          %v8575 = vsub.s32 0, %v8574
          %v8576 = vsel %vm8570, %v8575, %v8574
          %vm8577 = vcmp.lt.s32.totalorder %v8545, 0
          %v8578 = vsub.s32 0, %v8545
          %v8579 = vsel %vm8577, %v8578, %v8545
          %v8580 = vshrl.u32 %v8579, 1
          %v8581 = vand.u32 %v8579, 1
          %v8582 = vsub.s32 0, %v8581
          %v8583 = vsel %vm8577, %v8582, %v8581
          %vm8584 = vcmp.ne.s32.totalorder %v8562, 0
          %vm8585 = vcmp.ne.s32.totalorder %v8569, 0
          %vm8586 = vcmp.ne.s32.totalorder %v8576, 0
          %vm8587 = vcmp.ne.s32.totalorder %v8583, 0
          %vm8588 = vcmp.lt.s32.totalorder %v8562, 0
          %vm8589 = vcmp.lt.s32.totalorder %v8569, 0
          %vm8590 = vcmp.lt.s32.totalorder %v8576, 0
          %vm8591 = vcmp.lt.s32.totalorder %v8583, 0
          %vm8592 = vmand %vm8588, %vm8584
          %vm8593 = vmand %vm8589, %vm8585
          %vm8594 = vmand %vm8590, %vm8586
          %vm8595 = vmand %vm8591, %vm8587
          %v8596 = vadd.s32 %v8562, 2
          %v8597 = vadd.s32 %v8569, 2
          %v8598 = vadd.s32 %v8576, 2
          %v8599 = vadd.s32 %v8583, 2
          %v8600 = vsel %vm8592, %v8596, %v8562
          %v8601 = vsel %vm8593, %v8597, %v8569
          %v8602 = vsel %vm8594, %v8598, %v8576
          %v8603 = vsel %vm8595, %v8599, %v8583
          %vm8604 = vcmp.eq.s32.totalorder %v8600, 0
          %vm8605 = vcmp.eq.s32.totalorder %v8601, 0
          %vm8606 = vcmp.eq.s32.totalorder %v8602, 0
          %vm8607 = vcmp.eq.s32.totalorder %v8603, 0
          %v8608 = vsel %vm8604, %v8552, 0.0
          %v8609 = vsel %vm8605, %v8553, 0.0
          %v8610 = vsel %vm8606, %v8554, 0.0
          %v8611 = vsel %vm8607, %v8555, 0.0
          %v8612 = vsel %vm2217, %v8608, -inf
          %v8613 = vsel %vm2217, %v8609, -inf
          %v8614 = vsel %vm2217, %v8610, -inf
          %v8615 = vsel %vm2217, %v8611, -inf
          %v8616 = vmax.f32 %v8612, %v8613
          %v8617 = vmax.f32 %v8614, %v8615
          %v8618 = vmax.f32 %v8616, %v8617
          %v8619 = vrot.slane %v8618, 4
          %v8620 = vmax.f32 %v8618, %v8619
          %v8621 = vrot.slane %v8620, 2
          %v8622 = vmax.f32 %v8620, %v8621
          %v8623 = vrot.slane %v8622, 1
          %v8624 = vmax.f32 %v8622, %v8623
          %vm8625 = vcmp.eq.s32.totalorder %v8600, 1
          %vm8626 = vcmp.eq.s32.totalorder %v8601, 1
          %vm8627 = vcmp.eq.s32.totalorder %v8602, 1
          %vm8628 = vcmp.eq.s32.totalorder %v8603, 1
          %v8629 = vsel %vm8625, %v8552, 0.0
          %v8630 = vsel %vm8626, %v8553, 0.0
          %v8631 = vsel %vm8627, %v8554, 0.0
          %v8632 = vsel %vm8628, %v8555, 0.0
          %v8633 = vsel %vm2217, %v8629, -inf
          %v8634 = vsel %vm2217, %v8630, -inf
          %v8635 = vsel %vm2217, %v8631, -inf
          %v8636 = vsel %vm2217, %v8632, -inf
          %v8637 = vmax.f32 %v8633, %v8634
          %v8638 = vmax.f32 %v8635, %v8636
          %v8639 = vmax.f32 %v8637, %v8638
          %v8640 = vrot.slane %v8639, 4
          %v8641 = vmax.f32 %v8639, %v8640
          %v8642 = vrot.slane %v8641, 2
          %v8643 = vmax.f32 %v8641, %v8642
          %v8644 = vrot.slane %v8643, 1
          %v8645 = vmax.f32 %v8643, %v8644
          %vm8646 = vcmask 1040384
          %v8647 = vsel %vm8646, %v8624, %v8645
          %v8648 = vld [vmem:[#allocation17] sm:$0x3]
          %v8649 = vpack.c.bf16 %v8647, %v8647
          %v8650 = vld [vmem:[%s309] sm:$0xf]
          %v8651 = vld [vmem:[%s309 + $0x4] sm:$0xf]
          %v8652 = vld [vmem:[%s309 + $0x8] sm:$0xf]
          %v8653 = vld [vmem:[%s309 + $0xc] sm:$0xf]
          %v8654 = vld [vmem:[%s309 + $0x10] sm:$0xf]
          %v8655 = vld [vmem:[%s309 + $0x14] sm:$0xf]
          %v8656 = vld [vmem:[%s309 + $0x18] sm:$0xf]
          %v8657 = vld [vmem:[%s309 + $0x1c] sm:$0xf]
          %v8658 = vld [vmem:[%s309 + $0x20] sm:$0xf]
          %v8659 = vld [vmem:[%s309 + $0x24] sm:$0xf]
          %v8660 = vld [vmem:[%s309 + $0x28] sm:$0xf]
          %v8661 = vld [vmem:[%s309 + $0x2c] sm:$0xf]
          %v8662 = vld [vmem:[%s309 + $0x30] sm:$0x3]
          %v8676 = vunpack.c.l.b16 %v8650
          %v8677 = vunpack.c.l.b16 %v8651
          %v8678 = vunpack.c.l.b16 %v8652
          %v8679 = vunpack.c.l.b16 %v8653
          %v8680 = vunpack.c.l.b16 %v8654
          %v8681 = vunpack.c.l.b16 %v8655
          %v8682 = vunpack.c.l.b16 %v8656
          %v8683 = vunpack.c.l.b16 %v8657
          %v8684 = vunpack.c.l.b16 %v8658
          %v8685 = vunpack.c.l.b16 %v8659
          %v8686 = vunpack.c.l.b16 %v8660
          %v8687 = vunpack.c.l.b16 %v8661
          %v8688 = vunpack.c.l.b16 %v8662
          %v8689 = vpack.c.b16 %v8677, %v8676
          %v8690 = vpack.c.b16 %v8679, %v8678
          %v8691 = vpack.c.b16 %v8681, %v8680
          %v8692 = vpack.c.b16 %v8683, %v8682
          %v8693 = vpack.c.b16 %v8685, %v8684
          %v8694 = vpack.c.b16 %v8687, %v8686
          %v8695 = vpack.c.b16 %v8688, %v8688
          %v8703 = vsel %vm2217, %v8649, 0
          %vm8705 = vcmask 1041408
          %v8707 = vsel %vm8705, %v8695, 0
          %8709 = vmatprep.subr.bf16.mxu0 0
          %8710 = vmatpush1.bf16.msra.mxu0 %v8689
          %8711 = vmatprep.subr.bf16.mxu0 0
          %8712 = vmatpush1.bf16.msra.mxu0 %v8690
          %8713 = vmatprep.subr.bf16.mxu0 0
          %8714 = vmatpush1.bf16.msra.mxu0 %v8691
          %8715 = vmatprep.subr.bf16.mxu0 0
          %8716 = vmatpush1.bf16.msra.mxu0 %v8692
          %8717 = vmatprep.subr.bf16.mxu0 0
          %8718 = vmatpush1.bf16.msra.mxu0 %v8693
          %8719 = vmatprep.subr.bf16.mxu0 0
          %8720 = vmatpush1.bf16.msra.mxu0 %v8694
          %8721 = vmatprep.subr.bf16.mxu0 0
          %8722 = vmatpush1.bf16.msra.mxu0 %v8707
          %8723 = vmatprep.subr.bf16.mxu0 0
          %8724 = vmatpush1.bf16.msra.mxu0 0
          %8725 = vmatprep.subr.bf16.mxu0 0
          %8726 = vmatpush1.bf16.msra.mxu0 0
          %8727 = vmatprep.subr.bf16.mxu0 0
          %8728 = vmatpush1.bf16.msra.mxu0 0
          %8729 = vmatprep.subr.bf16.mxu0 0
          %8730 = vmatpush1.bf16.msra.mxu0 0
          %8731 = vmatprep.subr.bf16.mxu0 0
          %8732 = vmatpush1.bf16.msra.mxu0 0
          %8733 = vmatprep.subr.bf16.mxu0 0
          %8734 = vmatpush1.bf16.msra.mxu0 0
          %8735 = vmatprep.subr.bf16.mxu0 0
          %8736 = vmatpush1.bf16.msra.mxu0 0
          %8737 = vmatprep.subr.bf16.mxu0 0
          %8738 = vmatpush1.bf16.msra.mxu0 0
          %8739 = vmatprep.subr.bf16.mxu0 0
          %8740 = vmatpush1.bf16.msra.mxu0 0
          %8741 = vmatprep.mubr.bf16.mxu0 0
          %8742 = vmatmul.mubr.bf16.gmra.mrb[0].mxu0 %v8703
          %v8743 = vpop.f32.mrb[0].mxu0
          %v8744 = vadd.f32 0.0, %v8743
          %v8745 = vpop.f32.mrb[0].mxu0
          %v8746 = vpop.f32.mrb[0].mxu0
          %v8747 = vpop.f32.mrb[0].mxu0
          %8748 = vdwg.mxu0
          %v8749 = vadd.f32 %v8648, %v8744
          %8750 = vst [vmem:[#allocation17] sm:$0x3] %v8749
        $region96: #{textcnn_forward.1} parent=39 // pred_fallthru
          _
        // Predicated region
        $region97: #{textcnn_forward.1} parent=39 // pred_check
          %p8751 = pneg %p171
        $region98: #{textcnn_forward.1} parent=39 // pred_check_branch
          %8753 = sbr.rel (%p8751) target = $region100
        $region99: #{textcnn_forward.1} parent=39 // pred_region
          %s8755 = ssub.s32 32, 32
          %8756 = vsyncadd [#allocation10], %s8755
          %s8758 = sshll.u32 [#allocation17], 4
          %s8759 = int_to_ptr.vmem [resolvable:$true] %s8758
          %8761 = dma.vmem_to_hbm [thread:$0]  %s8759, 32, %s9, [#allocation10]
        $region100: #{textcnn_forward.1} parent=39 // pred_fallthru
          _
        // Predicated region
        $region101: #{textcnn_forward.1} parent=39 // pred_check
          %p8762 = pneg %p171
        $region102: #{textcnn_forward.1} parent=39 // pred_check_branch
          %8764 = sbr.rel (%p8762) target = $region104
        $region103: #{textcnn_forward.1} parent=39 // pred_region
          %8765 = dma.done [#allocation10], 32
        $region104: #{textcnn_forward.1} parent=39 // pred_fallthru
          _
      $region40: #{textcnn_forward.1} parent=5 // pred_fallthru
        _
      %p8766 = scmp.le.s32.totalorder 2, %s33
      // Predicated region
      $region105: #{textcnn_forward.1} parent=5 // pred_check
        %p8767 = pneg %p8766
      $region106: #{textcnn_forward.1} parent=5 // pred_check_branch
        %8769 = sbr.rel (%p8767) target = $region108
      $region107: #{textcnn_forward.1} parent=5 // pred_region
        %s8770 = ssub.s32 %s33, 2
      $region108: #{textcnn_forward.1} parent=5 // pred_fallthru
        _
    $region6: #{textcnn_forward.1} parent=1 // loop_footer
      %s37 = sadd.s32 1, %s33
    $region7: #{textcnn_forward.1} parent=1 // loop_footer_branch
      %32 = sbr.rel target = $region3
    $region8: #{textcnn_forward.1} parent=1 // loop_exit
      _
    %8771 = vsyncpa [#allocation9], 1
    %s8772 = scalar_lea.sflag [#allocation9], 1
    %8773 = vsyncpa %s8772, 1
    %8774 = vsyncpa [#allocation12], 1
    %s8775 = scalar_lea.sflag [#allocation12], 1
    %8776 = vsyncpa %s8775, 1
    %8777 = vsyncpa [#allocation15], 1
    %s8778 = scalar_lea.sflag [#allocation15], 1
    %8779 = vsyncpa %s8778, 1
    %8780 = vsyncpa [#allocation10], 1
    %s8781 = scalar_lea.sflag [#allocation10], 1
    %8782 = vsyncpa %s8781, 1

</llo_original>
